<compile_context>
chip_gen: v7x
topology: tpu7x:2x2x1
jax: 0.10.0
libtpu: 0.0.40
codegen_flags: <defaults>
</compile_context>

<pallas_src>
import jax
import jax.numpy as jnp
from jax.experimental import pallas as pl
from jax.experimental.pallas import tpu as pltpu


E_CONFIG = (32, "M", 64, "M")   # 16x16 -> conv -> pool -> 8x8 -> conv -> pool -> 4x4
EMBEDDING_DIM = 64              # must equal last conv width (x.view(B, embedding_dim))
INPUT_DIM = 6                   # Embedder default input_dim=6


def _round_up(n, m):
    return ((n + m - 1) // m) * m


# ---------------------------------------------------------------------------
# Fused Pallas kernel (one batch block per grid step):
#   conv1 (one big matmul, pool parities folded into M) + bias + ReLU
#   -> conv2 as 9 accumulated matmuls on shifted taps
#   -> relu(global spatial max + bias)
# ---------------------------------------------------------------------------

def _shift_spatial(t, dy, dx):
    """t: (Bb, 8, 8, C). Returns u with u[:, i, j] = t[:, i+dy, j+dx] (zero out of bounds)."""
    bb, hh, ww, cc = t.shape
    if dy == 1:
        t = jnp.concatenate([t[:, 1:, :, :], jnp.zeros((bb, 1, ww, cc), t.dtype)], axis=1)
    elif dy == -1:
        t = jnp.concatenate([jnp.zeros((bb, 1, ww, cc), t.dtype), t[:, :-1, :, :]], axis=1)
    if dx == 1:
        t = jnp.concatenate([t[:, :, 1:, :], jnp.zeros((bb, hh, 1, cc), t.dtype)], axis=2)
    elif dx == -1:
        t = jnp.concatenate([jnp.zeros((bb, hh, 1, cc), t.dtype), t[:, :, :-1, :]], axis=2)
    return t


def _embedder_fused_kernel(patches_ref, w1_ref, b1_ref, w2_ref, b2_ref, o_ref):
    """One batch block (Bb examples) per grid step.

    patches_ref: (Bb, 256, Kp) bf16 conv1 im2col built in the wrapper.
                 row = parity_plane*64 + (8x8 pooled position); K = (ky,kx,cin), zero-padded.
    w1_ref     : (Kp, C1)    bf16 (rows zero-padded to Kp)
    b1_ref     : (1, C1)     f32
    w2_ref     : (9, C1, C2) bf16, tap-major (ky*3 + kx)
    b2_ref     : (1, C2)     f32
    o_ref      : (Bb, C2)    f32 embedding block
    """
    bb, _, kp = patches_ref.shape
    c1 = w1_ref.shape[-1]
    c2 = w2_ref.shape[-1]

    # ---- stage 1: conv3x3 over all four 2x2-pool parities as ONE MXU matmul,
    #      M = Bb*256 (batch and parity folded into M), K = Kp (padded), N = C1.
    lhs1 = patches_ref[...].reshape(bb * 256, kp)
    h1 = jnp.dot(lhs1, w1_ref[...], preferred_element_type=jnp.float32)     # (Bb*256, C1)
    h1 = h1.reshape(bb, 4, 64, c1)
    # maxpool2x2 == max over the 4 parity planes; per-channel bias and ReLU commute with it.
    p1 = jnp.maximum(jnp.max(h1, axis=1) + b1_ref[...], 0.0)                # (Bb, 64, C1)
    p1 = p1.astype(jnp.bfloat16).reshape(bb, 8, 8, c1)                      # pooled 8x8 map

    # ---- stage 2: conv3x3(same) as 9 accumulated (Bb*64, C1) @ (C1, C2) MXU matmuls.
    # Shifted taps are built by whole-row / single-sublane shifts with zero fill; no
    # padded VMEM scratch, no scratch zeroing, no lane-offset concatenation.
    acc = None
    for dy in (-1, 0, 1):
        for dx in (-1, 0, 1):
            k = (dy + 1) * 3 + (dx + 1)
            tap = _shift_spatial(p1, dy, dx).reshape(bb * 64, c1)
            part = jnp.dot(tap, w2_ref[k], preferred_element_type=jnp.float32)
            acc = part if acc is None else acc + part                       # (Bb*64, C2) f32

    # ReLU -> maxpool2x2 -> adaptive_max_pool2d(1) -> ReLU
    #   == relu(max over all 64 spatial positions + b2)  (max/ReLU monotone, bias per-channel)
    h2 = acc.reshape(bb, 64, c2)
    emb = jnp.maximum(jnp.max(h2, axis=1) + b2_ref[...], 0.0)               # (Bb, C2)
    o_ref[...] = emb.astype(o_ref.dtype)


# ---------------------------------------------------------------------------
# Wrapper: layout glue only (NCHW->NHWC, conv1 im2col, K/batch padding, weight flatten)
# ---------------------------------------------------------------------------

def embedder_forward(x_nchw, params, embedding_dim=EMBEDDING_DIM, block_b=32):
    """x_nchw: (B, Cin, 16, 16); params: [(w1, b1), (w2, b2)] in PyTorch OIHW layout."""
    (w1, b1), (w2, b2) = params
    B, Cin, H, W = x_nchw.shape
    assert (H, W) == (16, 16)              # two 2x2 pools -> 4x4 (mirrors `assert w == 4`)
    C1 = w1.shape[0]
    C2 = w2.shape[0]
    assert C2 == embedding_dim

    # ---- conv1 im2col in the wrapper (cheap XLA slices; negligible HBM traffic).
    # patches1[b, plane*64 + i*8 + j, (ky*3+kx)*Cin + c] = padded_x[b, 2i+yr+ky, 2j+xr+kx, c]
    x = jnp.transpose(x_nchw, (0, 2, 3, 1)).astype(jnp.float32)             # NHWC
    xp = jnp.pad(x, ((0, 0), (1, 1), (1, 1), (0, 0)))                       # (B, 18, 18, Cin)
    planes = []
    for yr in range(2):
        for xr in range(2):
            taps = []
            for ky in range(3):
                for kx in range(3):
                    a, c = yr + ky, xr + kx
                    taps.append(xp[:, a:a + 15:2, c:c + 15:2, :])           # (B, 8, 8, Cin)
            planes.append(jnp.concatenate(taps, axis=-1).reshape(B, 64, 9 * Cin))
    patches1 = jnp.stack(planes, axis=1).reshape(B, 256, 9 * Cin)
    Kp = _round_up(9 * Cin, 64)                                             # 54 -> 64
    patches1 = jnp.pad(patches1, ((0, 0), (0, 0), (0, Kp - 9 * Cin))).astype(jnp.bfloat16)

    # ---- weights: (Cout, Cin, 3, 3) -> matmul layout; bf16 MXU operands, f32 biases.
    w1f = jnp.transpose(w1, (2, 3, 1, 0)).reshape(9 * Cin, C1)
    w1f = jnp.pad(w1f, ((0, Kp - 9 * Cin), (0, 0))).astype(jnp.bfloat16)    # (Kp, C1)
    w2f = jnp.transpose(w2, (2, 3, 1, 0)).reshape(9, C1, C2).astype(jnp.bfloat16)
    b1r = b1.reshape(1, C1).astype(jnp.float32)
    b2r = b2.reshape(1, C2).astype(jnp.float32)

    # ---- batch blocking: Bblk examples per grid step; pad B up, slice the result back.
    bblk = _round_up(min(block_b, _round_up(B, 8)), 8)
    Bp = _round_up(B, bblk)
    if Bp != B:
        patches1 = jnp.pad(patches1, ((0, Bp - B), (0, 0), (0, 0)))

    out = pl.pallas_call(
        _embedder_fused_kernel,
        out_shape=jax.ShapeDtypeStruct((Bp, C2), jnp.float32),
        grid_spec=pltpu.PrefetchScalarGridSpec(
            num_scalar_prefetch=0,
            grid=(Bp // bblk,),
            in_specs=[
                pl.BlockSpec((bblk, 256, Kp), lambda b: (b, 0, 0)),
                # Grid-invariant index maps: Pallas DMAs these only once.
                pl.BlockSpec((Kp, C1), lambda b: (0, 0)),
                pl.BlockSpec((1, C1), lambda b: (0, 0)),
                pl.BlockSpec((9, C1, C2), lambda b: (0, 0, 0)),
                pl.BlockSpec((1, C2), lambda b: (0, 0)),
            ],
            out_specs=pl.BlockSpec((bblk, C2), lambda b: (b, 0)),
        ),
        compiler_params=pltpu.CompilerParams(dimension_semantics=("parallel",)),
    )(patches1, w1f, b1r, w2f, b2r)
    return out[:B]


# ---------------------------------------------------------------------------
# Params init (PyTorch Conv2d-style) and pure-JAX reference for verification
# ---------------------------------------------------------------------------

def init_params(key, e_config=E_CONFIG, input_dim=INPUT_DIM):
    params = []
    cin = input_dim
    for v in e_config:
        if v == "M":
            continue
        key, kw, kb = jax.random.split(key, 3)
        bound = 1.0 / float((cin * 9) ** 0.5)
        w = jax.random.uniform(kw, (v, cin, 3, 3), jnp.float32, -bound, bound)
        b = jax.random.uniform(kb, (v,), jnp.float32, -bound, bound)
        params.append((w, b))
        cin = v
    return params


def embedder_reference(x_nchw, params, e_config=E_CONFIG):
    x = x_nchw
    pi = 0
    for v in e_config:
        if v == "M":
            x = jax.lax.reduce_window(x, -jnp.inf, jax.lax.max,
                                      (1, 1, 2, 2), (1, 1, 2, 2), "VALID")
        else:
            w, b = params[pi]; pi += 1
            x = jax.lax.conv_general_dilated(
                x, w, window_strides=(1, 1), padding=((1, 1), (1, 1)),
                dimension_numbers=("NCHW", "OIHW", "NCHW"),
                precision=jax.lax.Precision.HIGHEST)
            x = jax.nn.relu(x + b[None, :, None, None])
    x = jnp.max(x, axis=(2, 3))
    return jax.nn.relu(x)


if __name__ == "__main__":
    key = jax.random.PRNGKey(0)
    kx, kp = jax.random.split(key)
    params = init_params(kp)

    # (batch, block_b): small spec-consistent case, plus a multi-grid-step case with a
    # ragged tail (B=24, Bblk=16 -> grid of 2 with 8 zero-padded rows sliced off).
    for B, blk in ((2, 32), (24, 16)):
        x = jax.random.normal(jax.random.fold_in(kx, B),
                              (B, INPUT_DIM, 16, 16), jnp.float32)   # NCHW like PyTorch
        out = jax.block_until_ready(embedder_forward(x, params, block_b=blk))
        ref = embedder_reference(x, params)
        assert out.shape == (B, EMBEDDING_DIM), out.shape
        assert bool(jnp.all(jnp.isfinite(out)))
        max_err = float(jnp.max(jnp.abs(out - ref)))
        # bf16 MXU operands vs f32 HIGHEST-precision reference -> 2e-2 tolerance.
        assert jnp.allclose(out, ref, atol=2e-2, rtol=2e-2), (B, max_err)
    print("KERNEL_OK")
</pallas_src>

<mosaic_0001>
module attributes {stable_mosaic.version = 11 : i64} {
  func.func @_embedder_fused_kernel(%arg0: i32, %arg1: memref<8x256x64xbf16, #tpu.memory_space<vmem>>, %arg2: memref<64x32xbf16, #tpu.memory_space<vmem>>, %arg3: memref<1x32xf32, #tpu.memory_space<vmem>>, %arg4: memref<9x32x64xbf16, #tpu.memory_space<vmem>>, %arg5: memref<1x64xf32, #tpu.memory_space<vmem>>, %arg6: memref<8x64xf32, #tpu.memory_space<vmem>>) attributes {dimension_semantics = [#tpu.dimension_semantics<parallel>], iteration_bounds = array<i64: 1>, scalar_prefetch = 0 : i64, scratch_operands = 0 : i64, tpu.core_type = #tpu.core_type<tc>, window_params = [{transform_indices = @transform_0, window_bounds = array<i64: 8, 256, 64>}, {pipeline_mode = #tpu.pipeline_mode<synchronous>, transform_indices = @transform_1, window_bounds = array<i64: 64, 32>}, {pipeline_mode = #tpu.pipeline_mode<synchronous>, transform_indices = @transform_2, window_bounds = array<i64: 1, 32>}, {pipeline_mode = #tpu.pipeline_mode<synchronous>, transform_indices = @transform_3, window_bounds = array<i64: 9, 32, 64>}, {pipeline_mode = #tpu.pipeline_mode<synchronous>, transform_indices = @transform_4, window_bounds = array<i64: 1, 64>}, {transform_indices = @transform_5, window_bounds = array<i64: 8, 64>}]} {
    %c0 = arith.constant 0 : index
    %c0_0 = arith.constant 0 : index
    %c0_1 = arith.constant 0 : index
    %0 = vector.load %arg1[%c0, %c0_0, %c0_1] : memref<8x256x64xbf16, #tpu.memory_space<vmem>>, vector<8x256x64xbf16>
    %1 = vector.shape_cast %0 : vector<8x256x64xbf16> to vector<2048x64xbf16>
    %c0_2 = arith.constant 0 : index
    %c0_3 = arith.constant 0 : index
    %2 = vector.load %arg2[%c0_2, %c0_3] : memref<64x32xbf16, #tpu.memory_space<vmem>>, vector<64x32xbf16>
    %cst = arith.constant dense<0.000000e+00> : vector<2048x32xf32>
    %3 = tpu.matmul %1, %2, %cst {dimension_numbers = #tpu.dot_dimension_numbers<[1], [0], [0], [1], [0, 0, 1, 1], [], []>} : vector<2048x64xbf16>, vector<64x32xbf16>, vector<2048x32xf32> -> vector<2048x32xf32>
    %4 = vector.shape_cast %3 : vector<2048x32xf32> to vector<8x4x64x32xf32>
    %cst_4 = arith.constant dense<0xFF800000> : vector<8x64x32xf32>
    %5 = vector.multi_reduction <maximumf>, %4, %cst_4 [1] : vector<8x4x64x32xf32> to vector<8x64x32xf32>
    %c0_5 = arith.constant 0 : index
    %c0_6 = arith.constant 0 : index
    %6 = vector.load %arg3[%c0_5, %c0_6] : memref<1x32xf32, #tpu.memory_space<vmem>>, vector<1x32xf32>
    %7 = vector.shape_cast %6 : vector<1x32xf32> to vector<1x1x32xf32>
    %8 = vector.broadcast %7 : vector<1x1x32xf32> to vector<8x64x32xf32>
    %9 = arith.addf %5, %8 : vector<8x64x32xf32>
    %cst_7 = arith.constant 0.000000e+00 : f32
    %10 = vector.broadcast %cst_7 : f32 to vector<8x64x32xf32>
    %11 = arith.maximumf %9, %10 : vector<8x64x32xf32>
    %12 = arith.truncf %11 : vector<8x64x32xf32> to vector<8x64x32xbf16>
    %13 = vector.shape_cast %12 : vector<8x64x32xbf16> to vector<8x8x8x32xbf16>
    %cst_8 = arith.constant 0.000000e+00 : bf16
    %14 = vector.broadcast %cst_8 : bf16 to vector<8x1x8x32xbf16>
    %15 = vector.extract_strided_slice %13 {offsets = [0, 0, 0, 0], sizes = [8, 7, 8, 32], strides = [1, 1, 1, 1]} : vector<8x8x8x32xbf16> to vector<8x7x8x32xbf16>
    %16 = tpu.concatenate %14, %15 in 1 : vector<8x1x8x32xbf16>, vector<8x7x8x32xbf16> -> vector<8x8x8x32xbf16>
    %cst_9 = arith.constant 0.000000e+00 : bf16
    %17 = vector.broadcast %cst_9 : bf16 to vector<8x8x1x32xbf16>
    %18 = vector.extract_strided_slice %16 {offsets = [0, 0, 0, 0], sizes = [8, 8, 7, 32], strides = [1, 1, 1, 1]} : vector<8x8x8x32xbf16> to vector<8x8x7x32xbf16>
    %19 = tpu.concatenate %17, %18 in 2 : vector<8x8x1x32xbf16>, vector<8x8x7x32xbf16> -> vector<8x8x8x32xbf16>
    %20 = vector.shape_cast %19 : vector<8x8x8x32xbf16> to vector<512x32xbf16>
    %c0_10 = arith.constant 0 : index
    %c0_11 = arith.constant 0 : index
    %c0_12 = arith.constant 0 : index
    %21 = vector.load %arg4[%c0_10, %c0_11, %c0_12] : memref<9x32x64xbf16, #tpu.memory_space<vmem>>, vector<1x32x64xbf16>
    %22 = vector.shape_cast %21 : vector<1x32x64xbf16> to vector<32x64xbf16>
    %cst_13 = arith.constant dense<0.000000e+00> : vector<512x64xf32>
    %23 = tpu.matmul %20, %22, %cst_13 {dimension_numbers = #tpu.dot_dimension_numbers<[1], [0], [0], [1], [0, 0, 1, 1], [], []>} : vector<512x32xbf16>, vector<32x64xbf16>, vector<512x64xf32> -> vector<512x64xf32>
    %cst_14 = arith.constant 0.000000e+00 : bf16
    %24 = vector.broadcast %cst_14 : bf16 to vector<8x1x8x32xbf16>
    %25 = vector.extract_strided_slice %13 {offsets = [0, 0, 0, 0], sizes = [8, 7, 8, 32], strides = [1, 1, 1, 1]} : vector<8x8x8x32xbf16> to vector<8x7x8x32xbf16>
    %26 = tpu.concatenate %24, %25 in 1 : vector<8x1x8x32xbf16>, vector<8x7x8x32xbf16> -> vector<8x8x8x32xbf16>
    %27 = vector.shape_cast %26 : vector<8x8x8x32xbf16> to vector<512x32xbf16>
    %c1 = arith.constant 1 : index
    %c0_15 = arith.constant 0 : index
    %c0_16 = arith.constant 0 : index
    %28 = vector.load %arg4[%c1, %c0_15, %c0_16] : memref<9x32x64xbf16, #tpu.memory_space<vmem>>, vector<1x32x64xbf16>
    %29 = vector.shape_cast %28 : vector<1x32x64xbf16> to vector<32x64xbf16>
    %cst_17 = arith.constant dense<0.000000e+00> : vector<512x64xf32>
    %30 = tpu.matmul %27, %29, %cst_17 {dimension_numbers = #tpu.dot_dimension_numbers<[1], [0], [0], [1], [0, 0, 1, 1], [], []>} : vector<512x32xbf16>, vector<32x64xbf16>, vector<512x64xf32> -> vector<512x64xf32>
    %31 = arith.addf %23, %30 : vector<512x64xf32>
    %cst_18 = arith.constant 0.000000e+00 : bf16
    %32 = vector.broadcast %cst_18 : bf16 to vector<8x1x8x32xbf16>
    %33 = vector.extract_strided_slice %13 {offsets = [0, 0, 0, 0], sizes = [8, 7, 8, 32], strides = [1, 1, 1, 1]} : vector<8x8x8x32xbf16> to vector<8x7x8x32xbf16>
    %34 = tpu.concatenate %32, %33 in 1 : vector<8x1x8x32xbf16>, vector<8x7x8x32xbf16> -> vector<8x8x8x32xbf16>
    %35 = vector.extract_strided_slice %34 {offsets = [0, 0, 1, 0], sizes = [8, 8, 7, 32], strides = [1, 1, 1, 1]} : vector<8x8x8x32xbf16> to vector<8x8x7x32xbf16>
    %cst_19 = arith.constant 0.000000e+00 : bf16
    %36 = vector.broadcast %cst_19 : bf16 to vector<8x8x1x32xbf16>
    %37 = tpu.concatenate %35, %36 in 2 : vector<8x8x7x32xbf16>, vector<8x8x1x32xbf16> -> vector<8x8x8x32xbf16>
    %38 = vector.shape_cast %37 : vector<8x8x8x32xbf16> to vector<512x32xbf16>
    %c2 = arith.constant 2 : index
    %c0_20 = arith.constant 0 : index
    %c0_21 = arith.constant 0 : index
    %39 = vector.load %arg4[%c2, %c0_20, %c0_21] : memref<9x32x64xbf16, #tpu.memory_space<vmem>>, vector<1x32x64xbf16>
    %40 = vector.shape_cast %39 : vector<1x32x64xbf16> to vector<32x64xbf16>
    %cst_22 = arith.constant dense<0.000000e+00> : vector<512x64xf32>
    %41 = tpu.matmul %38, %40, %cst_22 {dimension_numbers = #tpu.dot_dimension_numbers<[1], [0], [0], [1], [0, 0, 1, 1], [], []>} : vector<512x32xbf16>, vector<32x64xbf16>, vector<512x64xf32> -> vector<512x64xf32>
    %42 = arith.addf %31, %41 : vector<512x64xf32>
    %cst_23 = arith.constant 0.000000e+00 : bf16
    %43 = vector.broadcast %cst_23 : bf16 to vector<8x8x1x32xbf16>
    %44 = vector.extract_strided_slice %13 {offsets = [0, 0, 0, 0], sizes = [8, 8, 7, 32], strides = [1, 1, 1, 1]} : vector<8x8x8x32xbf16> to vector<8x8x7x32xbf16>
    %45 = tpu.concatenate %43, %44 in 2 : vector<8x8x1x32xbf16>, vector<8x8x7x32xbf16> -> vector<8x8x8x32xbf16>
    %46 = vector.shape_cast %45 : vector<8x8x8x32xbf16> to vector<512x32xbf16>
    %c3 = arith.constant 3 : index
    %c0_24 = arith.constant 0 : index
    %c0_25 = arith.constant 0 : index
    %47 = vector.load %arg4[%c3, %c0_24, %c0_25] : memref<9x32x64xbf16, #tpu.memory_space<vmem>>, vector<1x32x64xbf16>
    %48 = vector.shape_cast %47 : vector<1x32x64xbf16> to vector<32x64xbf16>
    %cst_26 = arith.constant dense<0.000000e+00> : vector<512x64xf32>
    %49 = tpu.matmul %46, %48, %cst_26 {dimension_numbers = #tpu.dot_dimension_numbers<[1], [0], [0], [1], [0, 0, 1, 1], [], []>} : vector<512x32xbf16>, vector<32x64xbf16>, vector<512x64xf32> -> vector<512x64xf32>
    %50 = arith.addf %42, %49 : vector<512x64xf32>
    %51 = vector.shape_cast %13 : vector<8x8x8x32xbf16> to vector<512x32xbf16>
    %c4 = arith.constant 4 : index
    %c0_27 = arith.constant 0 : index
    %c0_28 = arith.constant 0 : index
    %52 = vector.load %arg4[%c4, %c0_27, %c0_28] : memref<9x32x64xbf16, #tpu.memory_space<vmem>>, vector<1x32x64xbf16>
    %53 = vector.shape_cast %52 : vector<1x32x64xbf16> to vector<32x64xbf16>
    %cst_29 = arith.constant dense<0.000000e+00> : vector<512x64xf32>
    %54 = tpu.matmul %51, %53, %cst_29 {dimension_numbers = #tpu.dot_dimension_numbers<[1], [0], [0], [1], [0, 0, 1, 1], [], []>} : vector<512x32xbf16>, vector<32x64xbf16>, vector<512x64xf32> -> vector<512x64xf32>
    %55 = arith.addf %50, %54 : vector<512x64xf32>
    %56 = vector.extract_strided_slice %13 {offsets = [0, 0, 1, 0], sizes = [8, 8, 7, 32], strides = [1, 1, 1, 1]} : vector<8x8x8x32xbf16> to vector<8x8x7x32xbf16>
    %cst_30 = arith.constant 0.000000e+00 : bf16
    %57 = vector.broadcast %cst_30 : bf16 to vector<8x8x1x32xbf16>
    %58 = tpu.concatenate %56, %57 in 2 : vector<8x8x7x32xbf16>, vector<8x8x1x32xbf16> -> vector<8x8x8x32xbf16>
    %59 = vector.shape_cast %58 : vector<8x8x8x32xbf16> to vector<512x32xbf16>
    %c5 = arith.constant 5 : index
    %c0_31 = arith.constant 0 : index
    %c0_32 = arith.constant 0 : index
    %60 = vector.load %arg4[%c5, %c0_31, %c0_32] : memref<9x32x64xbf16, #tpu.memory_space<vmem>>, vector<1x32x64xbf16>
    %61 = vector.shape_cast %60 : vector<1x32x64xbf16> to vector<32x64xbf16>
    %cst_33 = arith.constant dense<0.000000e+00> : vector<512x64xf32>
    %62 = tpu.matmul %59, %61, %cst_33 {dimension_numbers = #tpu.dot_dimension_numbers<[1], [0], [0], [1], [0, 0, 1, 1], [], []>} : vector<512x32xbf16>, vector<32x64xbf16>, vector<512x64xf32> -> vector<512x64xf32>
    %63 = arith.addf %55, %62 : vector<512x64xf32>
    %64 = vector.extract_strided_slice %13 {offsets = [0, 1, 0, 0], sizes = [8, 7, 8, 32], strides = [1, 1, 1, 1]} : vector<8x8x8x32xbf16> to vector<8x7x8x32xbf16>
    %cst_34 = arith.constant 0.000000e+00 : bf16
    %65 = vector.broadcast %cst_34 : bf16 to vector<8x1x8x32xbf16>
    %66 = tpu.concatenate %64, %65 in 1 : vector<8x7x8x32xbf16>, vector<8x1x8x32xbf16> -> vector<8x8x8x32xbf16>
    %cst_35 = arith.constant 0.000000e+00 : bf16
    %67 = vector.broadcast %cst_35 : bf16 to vector<8x8x1x32xbf16>
    %68 = vector.extract_strided_slice %66 {offsets = [0, 0, 0, 0], sizes = [8, 8, 7, 32], strides = [1, 1, 1, 1]} : vector<8x8x8x32xbf16> to vector<8x8x7x32xbf16>
    %69 = tpu.concatenate %67, %68 in 2 : vector<8x8x1x32xbf16>, vector<8x8x7x32xbf16> -> vector<8x8x8x32xbf16>
    %70 = vector.shape_cast %69 : vector<8x8x8x32xbf16> to vector<512x32xbf16>
    %c6 = arith.constant 6 : index
    %c0_36 = arith.constant 0 : index
    %c0_37 = arith.constant 0 : index
    %71 = vector.load %arg4[%c6, %c0_36, %c0_37] : memref<9x32x64xbf16, #tpu.memory_space<vmem>>, vector<1x32x64xbf16>
    %72 = vector.shape_cast %71 : vector<1x32x64xbf16> to vector<32x64xbf16>
    %cst_38 = arith.constant dense<0.000000e+00> : vector<512x64xf32>
    %73 = tpu.matmul %70, %72, %cst_38 {dimension_numbers = #tpu.dot_dimension_numbers<[1], [0], [0], [1], [0, 0, 1, 1], [], []>} : vector<512x32xbf16>, vector<32x64xbf16>, vector<512x64xf32> -> vector<512x64xf32>
    %74 = arith.addf %63, %73 : vector<512x64xf32>
    %75 = vector.extract_strided_slice %13 {offsets = [0, 1, 0, 0], sizes = [8, 7, 8, 32], strides = [1, 1, 1, 1]} : vector<8x8x8x32xbf16> to vector<8x7x8x32xbf16>
    %cst_39 = arith.constant 0.000000e+00 : bf16
    %76 = vector.broadcast %cst_39 : bf16 to vector<8x1x8x32xbf16>
    %77 = tpu.concatenate %75, %76 in 1 : vector<8x7x8x32xbf16>, vector<8x1x8x32xbf16> -> vector<8x8x8x32xbf16>
    %78 = vector.shape_cast %77 : vector<8x8x8x32xbf16> to vector<512x32xbf16>
    %c7 = arith.constant 7 : index
    %c0_40 = arith.constant 0 : index
    %c0_41 = arith.constant 0 : index
    %79 = vector.load %arg4[%c7, %c0_40, %c0_41] : memref<9x32x64xbf16, #tpu.memory_space<vmem>>, vector<1x32x64xbf16>
    %80 = vector.shape_cast %79 : vector<1x32x64xbf16> to vector<32x64xbf16>
    %cst_42 = arith.constant dense<0.000000e+00> : vector<512x64xf32>
    %81 = tpu.matmul %78, %80, %cst_42 {dimension_numbers = #tpu.dot_dimension_numbers<[1], [0], [0], [1], [0, 0, 1, 1], [], []>} : vector<512x32xbf16>, vector<32x64xbf16>, vector<512x64xf32> -> vector<512x64xf32>
    %82 = arith.addf %74, %81 : vector<512x64xf32>
    %83 = vector.extract_strided_slice %13 {offsets = [0, 1, 0, 0], sizes = [8, 7, 8, 32], strides = [1, 1, 1, 1]} : vector<8x8x8x32xbf16> to vector<8x7x8x32xbf16>
    %cst_43 = arith.constant 0.000000e+00 : bf16
    %84 = vector.broadcast %cst_43 : bf16 to vector<8x1x8x32xbf16>
    %85 = tpu.concatenate %83, %84 in 1 : vector<8x7x8x32xbf16>, vector<8x1x8x32xbf16> -> vector<8x8x8x32xbf16>
    %86 = vector.extract_strided_slice %85 {offsets = [0, 0, 1, 0], sizes = [8, 8, 7, 32], strides = [1, 1, 1, 1]} : vector<8x8x8x32xbf16> to vector<8x8x7x32xbf16>
    %cst_44 = arith.constant 0.000000e+00 : bf16
    %87 = vector.broadcast %cst_44 : bf16 to vector<8x8x1x32xbf16>
    %88 = tpu.concatenate %86, %87 in 2 : vector<8x8x7x32xbf16>, vector<8x8x1x32xbf16> -> vector<8x8x8x32xbf16>
    %89 = vector.shape_cast %88 : vector<8x8x8x32xbf16> to vector<512x32xbf16>
    %c8 = arith.constant 8 : index
    %c0_45 = arith.constant 0 : index
    %c0_46 = arith.constant 0 : index
    %90 = vector.load %arg4[%c8, %c0_45, %c0_46] : memref<9x32x64xbf16, #tpu.memory_space<vmem>>, vector<1x32x64xbf16>
    %91 = vector.shape_cast %90 : vector<1x32x64xbf16> to vector<32x64xbf16>
    %cst_47 = arith.constant dense<0.000000e+00> : vector<512x64xf32>
    %92 = tpu.matmul %89, %91, %cst_47 {dimension_numbers = #tpu.dot_dimension_numbers<[1], [0], [0], [1], [0, 0, 1, 1], [], []>} : vector<512x32xbf16>, vector<32x64xbf16>, vector<512x64xf32> -> vector<512x64xf32>
    %93 = arith.addf %82, %92 : vector<512x64xf32>
    %94 = vector.shape_cast %93 : vector<512x64xf32> to vector<8x64x64xf32>
    %cst_48 = arith.constant dense<0xFF800000> : vector<8x64xf32>
    %95 = vector.multi_reduction <maximumf>, %94, %cst_48 [1] : vector<8x64x64xf32> to vector<8x64xf32>
    %c0_49 = arith.constant 0 : index
    %c0_50 = arith.constant 0 : index
    %96 = vector.load %arg5[%c0_49, %c0_50] : memref<1x64xf32, #tpu.memory_space<vmem>>, vector<1x64xf32>
    %97 = vector.broadcast %96 : vector<1x64xf32> to vector<8x64xf32>
    %98 = arith.addf %95, %97 : vector<8x64xf32>
    %cst_51 = arith.constant 0.000000e+00 : f32
    %99 = vector.broadcast %cst_51 : f32 to vector<8x64xf32>
    %100 = arith.maximumf %98, %99 : vector<8x64xf32>
    %c0_52 = arith.constant 0 : index
    %c0_53 = arith.constant 0 : index
    %101 = vector.load %arg6[%c0_52, %c0_53] : memref<8x64xf32, #tpu.memory_space<vmem>>, vector<8x64xf32>
    tpu.vector_store %arg6[%c0_52, %c0_53], %100 {strides = array<i32>} : memref<8x64xf32, #tpu.memory_space<vmem>>, vector<8x64xf32>,
    return
  }
  func.func @transform_0(%arg0: i32) -> (i32, i32, i32) {
    %c0_i32 = arith.constant 0 : i32
    %c0_i32_0 = arith.constant 0 : i32
    %c0_i32_1 = arith.constant 0 : i32
    return %arg0, %c0_i32, %c0_i32_0 : i32, i32, i32
  }
  func.func @transform_1(%arg0: i32) -> (i32, i32) {
    %c0_i32 = arith.constant 0 : i32
    %c0_i32_0 = arith.constant 0 : i32
    %c0_i32_1 = arith.constant 0 : i32
    return %c0_i32, %c0_i32_0 : i32, i32
  }
  func.func @transform_2(%arg0: i32) -> (i32, i32) {
    %c0_i32 = arith.constant 0 : i32
    %c0_i32_0 = arith.constant 0 : i32
    %c0_i32_1 = arith.constant 0 : i32
    return %c0_i32, %c0_i32_0 : i32, i32
  }
  func.func @transform_3(%arg0: i32) -> (i32, i32, i32) {
    %c0_i32 = arith.constant 0 : i32
    %c0_i32_0 = arith.constant 0 : i32
    %c0_i32_1 = arith.constant 0 : i32
    %c0_i32_2 = arith.constant 0 : i32
    return %c0_i32, %c0_i32_0, %c0_i32_1 : i32, i32, i32
  }
  func.func @transform_4(%arg0: i32) -> (i32, i32) {
    %c0_i32 = arith.constant 0 : i32
    %c0_i32_0 = arith.constant 0 : i32
    %c0_i32_1 = arith.constant 0 : i32
    return %c0_i32, %c0_i32_0 : i32, i32
  }
  func.func @transform_5(%arg0: i32) -> (i32, i32) {
    %c0_i32 = arith.constant 0 : i32
    %c0_i32_0 = arith.constant 0 : i32
    return %arg0, %c0_i32 : i32, i32
  }
}

</mosaic_0001>

<llo_original>
// kernel: tpu_custom_call.1
$region0: #{tpu_custom_call.1}
  #allocation0 [shape = 'u32[]', space=smem, size = 0x4, offset = 0x4, fixed_abs, tag = 'smem constant byte address 0x4 - core index']
  #allocation1 [shape = 'u32[144,128]{1,0:T(1,128)}', space=vmem, size = 0x12000, scoped, tag = 'internal scratch']
  %s0 = inlined_call_operand.vmem [shape: bf16[8,256,64], index: 0, kind: input, shape index: {}]
  %s1 = inlined_call_operand.vmem [shape: bf16[64,32], index: 1, kind: input, shape index: {}]
  %s2 = inlined_call_operand.vmem [shape: f32[1,32], index: 2, kind: input, shape index: {}]
  %s3 = inlined_call_operand.vmem [shape: bf16[9,32,64], index: 3, kind: input, shape index: {}]
  %s4 = inlined_call_operand.vmem [shape: f32[1,64], index: 4, kind: input, shape index: {}]
  %s5 = inlined_call_operand.hbm [shape: f32[8,64], index: 5, kind: output, shape index: {}]
  %s6 = sld [smem:[#allocation0]]
  $region30: #{tpu_custom_call.1} parent=0
    _
  %s8 = ssub.s32 1, %s6
  %s9 = scalar_select 0, %s8, %s6
  $region1: #{tpu_custom_call.1} parent=0
    #allocation2 [shape = 'u8[4096]{0}', space=vmem, size = 0x1000, scoped, tag = 'output window, operand 0, single buffered']
    #allocation3 [shape = 's32[1]{0}', space=sflag, size = 0x4, scoped, tag = 'scoped memory for tpu_custom_call.1']
    %10 = vsyncpa [#allocation3], 0
    // Predicated region
    $region2: #{tpu_custom_call.1} parent=1 // pred_check
      _
    $region3: #{tpu_custom_call.1} parent=1 // pred_check_branch
      %12 = sbr.rel (0) target = $region5
    $region4: #{tpu_custom_call.1} parent=1 // pred_region
      _
    $region5: #{tpu_custom_call.1} parent=1 // pred_fallthru
      _
    // Predicated region
    $region6: #{tpu_custom_call.1} parent=1 // pred_check
      _
    $region7: #{tpu_custom_call.1} parent=1 // pred_check_branch
      %14 = sbr.rel (0) target = $region9
    $region8: #{tpu_custom_call.1} parent=1 // pred_region
      _
    $region9: #{tpu_custom_call.1} parent=1 // pred_fallthru
      _
    // Predicated region
    $region10: #{tpu_custom_call.1} parent=1 // pred_check
      _
    $region11: #{tpu_custom_call.1} parent=1 // pred_check_branch
      %16 = sbr.rel (0) target = $region13
    $region12: #{tpu_custom_call.1} parent=1 // pred_region
      _
    $region13: #{tpu_custom_call.1} parent=1 // pred_fallthru
      _
    // Predicated region
    $region14: #{tpu_custom_call.1} parent=1 // pred_check
      _
    $region15: #{tpu_custom_call.1} parent=1 // pred_check_branch
      %18 = sbr.rel (0) target = $region17
    $region16: #{tpu_custom_call.1} parent=1 // pred_region
      _
    $region17: #{tpu_custom_call.1} parent=1 // pred_fallthru
      _
    // Predicated region
    $region18: #{tpu_custom_call.1} parent=1 // pred_check
      _
    $region19: #{tpu_custom_call.1} parent=1 // pred_check_branch
      %20 = sbr.rel (0) target = $region21
    $region20: #{tpu_custom_call.1} parent=1 // pred_region
      _
    $region21: #{tpu_custom_call.1} parent=1 // pred_fallthru
      _
    %v22 = vld [vmem:[%s0] sm:$0xf]
    %v23 = vld [vmem:[%s0 + $0x4] sm:$0xf]
    %v24 = vld [vmem:[%s0 + $0x8] sm:$0xf]
    %v25 = vld [vmem:[%s0 + $0xc] sm:$0xf]
    %v26 = vld [vmem:[%s0 + $0x10] sm:$0xf]
    %v27 = vld [vmem:[%s0 + $0x14] sm:$0xf]
    %v28 = vld [vmem:[%s0 + $0x18] sm:$0xf]
    %v29 = vld [vmem:[%s0 + $0x1c] sm:$0xf]
    %v30 = vld [vmem:[%s0 + $0x20] sm:$0xf]
    %v31 = vld [vmem:[%s0 + $0x24] sm:$0xf]
    %v32 = vld [vmem:[%s0 + $0x28] sm:$0xf]
    %v33 = vld [vmem:[%s0 + $0x2c] sm:$0xf]
    %v34 = vld [vmem:[%s0 + $0x30] sm:$0xf]
    %v35 = vld [vmem:[%s0 + $0x34] sm:$0xf]
    %v36 = vld [vmem:[%s0 + $0x38] sm:$0xf]
    %v37 = vld [vmem:[%s0 + $0x3c] sm:$0xf]
    %v38 = vld [vmem:[%s0 + $0x40] sm:$0xf]
    %v39 = vld [vmem:[%s0 + $0x44] sm:$0xf]
    %v40 = vld [vmem:[%s0 + $0x48] sm:$0xf]
    %v41 = vld [vmem:[%s0 + $0x4c] sm:$0xf]
    %v42 = vld [vmem:[%s0 + $0x50] sm:$0xf]
    %v43 = vld [vmem:[%s0 + $0x54] sm:$0xf]
    %v44 = vld [vmem:[%s0 + $0x58] sm:$0xf]
    %v45 = vld [vmem:[%s0 + $0x5c] sm:$0xf]
    %v46 = vld [vmem:[%s0 + $0x60] sm:$0xf]
    %v47 = vld [vmem:[%s0 + $0x64] sm:$0xf]
    %v48 = vld [vmem:[%s0 + $0x68] sm:$0xf]
    %v49 = vld [vmem:[%s0 + $0x6c] sm:$0xf]
    %v50 = vld [vmem:[%s0 + $0x70] sm:$0xf]
    %v51 = vld [vmem:[%s0 + $0x74] sm:$0xf]
    %v52 = vld [vmem:[%s0 + $0x78] sm:$0xf]
    %v53 = vld [vmem:[%s0 + $0x7c] sm:$0xf]
    %v54 = vld [vmem:[%s0 + $0x80] sm:$0xf]
    %v55 = vld [vmem:[%s0 + $0x84] sm:$0xf]
    %v56 = vld [vmem:[%s0 + $0x88] sm:$0xf]
    %v57 = vld [vmem:[%s0 + $0x8c] sm:$0xf]
    %v58 = vld [vmem:[%s0 + $0x90] sm:$0xf]
    %v59 = vld [vmem:[%s0 + $0x94] sm:$0xf]
    %v60 = vld [vmem:[%s0 + $0x98] sm:$0xf]
    %v61 = vld [vmem:[%s0 + $0x9c] sm:$0xf]
    %v62 = vld [vmem:[%s0 + $0xa0] sm:$0xf]
    %v63 = vld [vmem:[%s0 + $0xa4] sm:$0xf]
    %v64 = vld [vmem:[%s0 + $0xa8] sm:$0xf]
    %v65 = vld [vmem:[%s0 + $0xac] sm:$0xf]
    %v66 = vld [vmem:[%s0 + $0xb0] sm:$0xf]
    %v67 = vld [vmem:[%s0 + $0xb4] sm:$0xf]
    %v68 = vld [vmem:[%s0 + $0xb8] sm:$0xf]
    %v69 = vld [vmem:[%s0 + $0xbc] sm:$0xf]
    %v70 = vld [vmem:[%s0 + $0xc0] sm:$0xf]
    %v71 = vld [vmem:[%s0 + $0xc4] sm:$0xf]
    %v72 = vld [vmem:[%s0 + $0xc8] sm:$0xf]
    %v73 = vld [vmem:[%s0 + $0xcc] sm:$0xf]
    %v74 = vld [vmem:[%s0 + $0xd0] sm:$0xf]
    %v75 = vld [vmem:[%s0 + $0xd4] sm:$0xf]
    %v76 = vld [vmem:[%s0 + $0xd8] sm:$0xf]
    %v77 = vld [vmem:[%s0 + $0xdc] sm:$0xf]
    %v78 = vld [vmem:[%s0 + $0xe0] sm:$0xf]
    %v79 = vld [vmem:[%s0 + $0xe4] sm:$0xf]
    %v80 = vld [vmem:[%s0 + $0xe8] sm:$0xf]
    %v81 = vld [vmem:[%s0 + $0xec] sm:$0xf]
    %v82 = vld [vmem:[%s0 + $0xf0] sm:$0xf]
    %v83 = vld [vmem:[%s0 + $0xf4] sm:$0xf]
    %v84 = vld [vmem:[%s0 + $0xf8] sm:$0xf]
    %v85 = vld [vmem:[%s0 + $0xfc] sm:$0xf]
    %v86 = vld [vmem:[%s0 + $0x100] sm:$0xf]
    %v87 = vld [vmem:[%s0 + $0x104] sm:$0xf]
    %v88 = vld [vmem:[%s0 + $0x108] sm:$0xf]
    %v89 = vld [vmem:[%s0 + $0x10c] sm:$0xf]
    %v90 = vld [vmem:[%s0 + $0x110] sm:$0xf]
    %v91 = vld [vmem:[%s0 + $0x114] sm:$0xf]
    %v92 = vld [vmem:[%s0 + $0x118] sm:$0xf]
    %v93 = vld [vmem:[%s0 + $0x11c] sm:$0xf]
    %v94 = vld [vmem:[%s0 + $0x120] sm:$0xf]
    %v95 = vld [vmem:[%s0 + $0x124] sm:$0xf]
    %v96 = vld [vmem:[%s0 + $0x128] sm:$0xf]
    %v97 = vld [vmem:[%s0 + $0x12c] sm:$0xf]
    %v98 = vld [vmem:[%s0 + $0x130] sm:$0xf]
    %v99 = vld [vmem:[%s0 + $0x134] sm:$0xf]
    %v100 = vld [vmem:[%s0 + $0x138] sm:$0xf]
    %v101 = vld [vmem:[%s0 + $0x13c] sm:$0xf]
    %v102 = vld [vmem:[%s0 + $0x140] sm:$0xf]
    %v103 = vld [vmem:[%s0 + $0x144] sm:$0xf]
    %v104 = vld [vmem:[%s0 + $0x148] sm:$0xf]
    %v105 = vld [vmem:[%s0 + $0x14c] sm:$0xf]
    %v106 = vld [vmem:[%s0 + $0x150] sm:$0xf]
    %v107 = vld [vmem:[%s0 + $0x154] sm:$0xf]
    %v108 = vld [vmem:[%s0 + $0x158] sm:$0xf]
    %v109 = vld [vmem:[%s0 + $0x15c] sm:$0xf]
    %v110 = vld [vmem:[%s0 + $0x160] sm:$0xf]
    %v111 = vld [vmem:[%s0 + $0x164] sm:$0xf]
    %v112 = vld [vmem:[%s0 + $0x168] sm:$0xf]
    %v113 = vld [vmem:[%s0 + $0x16c] sm:$0xf]
    %v114 = vld [vmem:[%s0 + $0x170] sm:$0xf]
    %v115 = vld [vmem:[%s0 + $0x174] sm:$0xf]
    %v116 = vld [vmem:[%s0 + $0x178] sm:$0xf]
    %v117 = vld [vmem:[%s0 + $0x17c] sm:$0xf]
    %v118 = vld [vmem:[%s0 + $0x180] sm:$0xf]
    %v119 = vld [vmem:[%s0 + $0x184] sm:$0xf]
    %v120 = vld [vmem:[%s0 + $0x188] sm:$0xf]
    %v121 = vld [vmem:[%s0 + $0x18c] sm:$0xf]
    %v122 = vld [vmem:[%s0 + $0x190] sm:$0xf]
    %v123 = vld [vmem:[%s0 + $0x194] sm:$0xf]
    %v124 = vld [vmem:[%s0 + $0x198] sm:$0xf]
    %v125 = vld [vmem:[%s0 + $0x19c] sm:$0xf]
    %v126 = vld [vmem:[%s0 + $0x1a0] sm:$0xf]
    %v127 = vld [vmem:[%s0 + $0x1a4] sm:$0xf]
    %v128 = vld [vmem:[%s0 + $0x1a8] sm:$0xf]
    %v129 = vld [vmem:[%s0 + $0x1ac] sm:$0xf]
    %v130 = vld [vmem:[%s0 + $0x1b0] sm:$0xf]
    %v131 = vld [vmem:[%s0 + $0x1b4] sm:$0xf]
    %v132 = vld [vmem:[%s0 + $0x1b8] sm:$0xf]
    %v133 = vld [vmem:[%s0 + $0x1bc] sm:$0xf]
    %v134 = vld [vmem:[%s0 + $0x1c0] sm:$0xf]
    %v135 = vld [vmem:[%s0 + $0x1c4] sm:$0xf]
    %v136 = vld [vmem:[%s0 + $0x1c8] sm:$0xf]
    %v137 = vld [vmem:[%s0 + $0x1cc] sm:$0xf]
    %v138 = vld [vmem:[%s0 + $0x1d0] sm:$0xf]
    %v139 = vld [vmem:[%s0 + $0x1d4] sm:$0xf]
    %v140 = vld [vmem:[%s0 + $0x1d8] sm:$0xf]
    %v141 = vld [vmem:[%s0 + $0x1dc] sm:$0xf]
    %v142 = vld [vmem:[%s0 + $0x1e0] sm:$0xf]
    %v143 = vld [vmem:[%s0 + $0x1e4] sm:$0xf]
    %v144 = vld [vmem:[%s0 + $0x1e8] sm:$0xf]
    %v145 = vld [vmem:[%s0 + $0x1ec] sm:$0xf]
    %v146 = vld [vmem:[%s0 + $0x1f0] sm:$0xf]
    %v147 = vld [vmem:[%s0 + $0x1f4] sm:$0xf]
    %v148 = vld [vmem:[%s0 + $0x1f8] sm:$0xf]
    %v149 = vld [vmem:[%s0 + $0x1fc] sm:$0xf]
    %v150 = vld [vmem:[%s0 + $0x200] sm:$0xf]
    %v151 = vld [vmem:[%s0 + $0x204] sm:$0xf]
    %v152 = vld [vmem:[%s0 + $0x208] sm:$0xf]
    %v153 = vld [vmem:[%s0 + $0x20c] sm:$0xf]
    %v154 = vld [vmem:[%s0 + $0x210] sm:$0xf]
    %v155 = vld [vmem:[%s0 + $0x214] sm:$0xf]
    %v156 = vld [vmem:[%s0 + $0x218] sm:$0xf]
    %v157 = vld [vmem:[%s0 + $0x21c] sm:$0xf]
    %v158 = vld [vmem:[%s0 + $0x220] sm:$0xf]
    %v159 = vld [vmem:[%s0 + $0x224] sm:$0xf]
    %v160 = vld [vmem:[%s0 + $0x228] sm:$0xf]
    %v161 = vld [vmem:[%s0 + $0x22c] sm:$0xf]
    %v162 = vld [vmem:[%s0 + $0x230] sm:$0xf]
    %v163 = vld [vmem:[%s0 + $0x234] sm:$0xf]
    %v164 = vld [vmem:[%s0 + $0x238] sm:$0xf]
    %v165 = vld [vmem:[%s0 + $0x23c] sm:$0xf]
    %v166 = vld [vmem:[%s0 + $0x240] sm:$0xf]
    %v167 = vld [vmem:[%s0 + $0x244] sm:$0xf]
    %v168 = vld [vmem:[%s0 + $0x248] sm:$0xf]
    %v169 = vld [vmem:[%s0 + $0x24c] sm:$0xf]
    %v170 = vld [vmem:[%s0 + $0x250] sm:$0xf]
    %v171 = vld [vmem:[%s0 + $0x254] sm:$0xf]
    %v172 = vld [vmem:[%s0 + $0x258] sm:$0xf]
    %v173 = vld [vmem:[%s0 + $0x25c] sm:$0xf]
    %v174 = vld [vmem:[%s0 + $0x260] sm:$0xf]
    %v175 = vld [vmem:[%s0 + $0x264] sm:$0xf]
    %v176 = vld [vmem:[%s0 + $0x268] sm:$0xf]
    %v177 = vld [vmem:[%s0 + $0x26c] sm:$0xf]
    %v178 = vld [vmem:[%s0 + $0x270] sm:$0xf]
    %v179 = vld [vmem:[%s0 + $0x274] sm:$0xf]
    %v180 = vld [vmem:[%s0 + $0x278] sm:$0xf]
    %v181 = vld [vmem:[%s0 + $0x27c] sm:$0xf]
    %v182 = vld [vmem:[%s0 + $0x280] sm:$0xf]
    %v183 = vld [vmem:[%s0 + $0x284] sm:$0xf]
    %v184 = vld [vmem:[%s0 + $0x288] sm:$0xf]
    %v185 = vld [vmem:[%s0 + $0x28c] sm:$0xf]
    %v186 = vld [vmem:[%s0 + $0x290] sm:$0xf]
    %v187 = vld [vmem:[%s0 + $0x294] sm:$0xf]
    %v188 = vld [vmem:[%s0 + $0x298] sm:$0xf]
    %v189 = vld [vmem:[%s0 + $0x29c] sm:$0xf]
    %v190 = vld [vmem:[%s0 + $0x2a0] sm:$0xf]
    %v191 = vld [vmem:[%s0 + $0x2a4] sm:$0xf]
    %v192 = vld [vmem:[%s0 + $0x2a8] sm:$0xf]
    %v193 = vld [vmem:[%s0 + $0x2ac] sm:$0xf]
    %v194 = vld [vmem:[%s0 + $0x2b0] sm:$0xf]
    %v195 = vld [vmem:[%s0 + $0x2b4] sm:$0xf]
    %v196 = vld [vmem:[%s0 + $0x2b8] sm:$0xf]
    %v197 = vld [vmem:[%s0 + $0x2bc] sm:$0xf]
    %v198 = vld [vmem:[%s0 + $0x2c0] sm:$0xf]
    %v199 = vld [vmem:[%s0 + $0x2c4] sm:$0xf]
    %v200 = vld [vmem:[%s0 + $0x2c8] sm:$0xf]
    %v201 = vld [vmem:[%s0 + $0x2cc] sm:$0xf]
    %v202 = vld [vmem:[%s0 + $0x2d0] sm:$0xf]
    %v203 = vld [vmem:[%s0 + $0x2d4] sm:$0xf]
    %v204 = vld [vmem:[%s0 + $0x2d8] sm:$0xf]
    %v205 = vld [vmem:[%s0 + $0x2dc] sm:$0xf]
    %v206 = vld [vmem:[%s0 + $0x2e0] sm:$0xf]
    %v207 = vld [vmem:[%s0 + $0x2e4] sm:$0xf]
    %v208 = vld [vmem:[%s0 + $0x2e8] sm:$0xf]
    %v209 = vld [vmem:[%s0 + $0x2ec] sm:$0xf]
    %v210 = vld [vmem:[%s0 + $0x2f0] sm:$0xf]
    %v211 = vld [vmem:[%s0 + $0x2f4] sm:$0xf]
    %v212 = vld [vmem:[%s0 + $0x2f8] sm:$0xf]
    %v213 = vld [vmem:[%s0 + $0x2fc] sm:$0xf]
    %v214 = vld [vmem:[%s0 + $0x300] sm:$0xf]
    %v215 = vld [vmem:[%s0 + $0x304] sm:$0xf]
    %v216 = vld [vmem:[%s0 + $0x308] sm:$0xf]
    %v217 = vld [vmem:[%s0 + $0x30c] sm:$0xf]
    %v218 = vld [vmem:[%s0 + $0x310] sm:$0xf]
    %v219 = vld [vmem:[%s0 + $0x314] sm:$0xf]
    %v220 = vld [vmem:[%s0 + $0x318] sm:$0xf]
    %v221 = vld [vmem:[%s0 + $0x31c] sm:$0xf]
    %v222 = vld [vmem:[%s0 + $0x320] sm:$0xf]
    %v223 = vld [vmem:[%s0 + $0x324] sm:$0xf]
    %v224 = vld [vmem:[%s0 + $0x328] sm:$0xf]
    %v225 = vld [vmem:[%s0 + $0x32c] sm:$0xf]
    %v226 = vld [vmem:[%s0 + $0x330] sm:$0xf]
    %v227 = vld [vmem:[%s0 + $0x334] sm:$0xf]
    %v228 = vld [vmem:[%s0 + $0x338] sm:$0xf]
    %v229 = vld [vmem:[%s0 + $0x33c] sm:$0xf]
    %v230 = vld [vmem:[%s0 + $0x340] sm:$0xf]
    %v231 = vld [vmem:[%s0 + $0x344] sm:$0xf]
    %v232 = vld [vmem:[%s0 + $0x348] sm:$0xf]
    %v233 = vld [vmem:[%s0 + $0x34c] sm:$0xf]
    %v234 = vld [vmem:[%s0 + $0x350] sm:$0xf]
    %v235 = vld [vmem:[%s0 + $0x354] sm:$0xf]
    %v236 = vld [vmem:[%s0 + $0x358] sm:$0xf]
    %v237 = vld [vmem:[%s0 + $0x35c] sm:$0xf]
    %v238 = vld [vmem:[%s0 + $0x360] sm:$0xf]
    %v239 = vld [vmem:[%s0 + $0x364] sm:$0xf]
    %v240 = vld [vmem:[%s0 + $0x368] sm:$0xf]
    %v241 = vld [vmem:[%s0 + $0x36c] sm:$0xf]
    %v242 = vld [vmem:[%s0 + $0x370] sm:$0xf]
    %v243 = vld [vmem:[%s0 + $0x374] sm:$0xf]
    %v244 = vld [vmem:[%s0 + $0x378] sm:$0xf]
    %v245 = vld [vmem:[%s0 + $0x37c] sm:$0xf]
    %v246 = vld [vmem:[%s0 + $0x380] sm:$0xf]
    %v247 = vld [vmem:[%s0 + $0x384] sm:$0xf]
    %v248 = vld [vmem:[%s0 + $0x388] sm:$0xf]
    %v249 = vld [vmem:[%s0 + $0x38c] sm:$0xf]
    %v250 = vld [vmem:[%s0 + $0x390] sm:$0xf]
    %v251 = vld [vmem:[%s0 + $0x394] sm:$0xf]
    %v252 = vld [vmem:[%s0 + $0x398] sm:$0xf]
    %v253 = vld [vmem:[%s0 + $0x39c] sm:$0xf]
    %v254 = vld [vmem:[%s0 + $0x3a0] sm:$0xf]
    %v255 = vld [vmem:[%s0 + $0x3a4] sm:$0xf]
    %v256 = vld [vmem:[%s0 + $0x3a8] sm:$0xf]
    %v257 = vld [vmem:[%s0 + $0x3ac] sm:$0xf]
    %v258 = vld [vmem:[%s0 + $0x3b0] sm:$0xf]
    %v259 = vld [vmem:[%s0 + $0x3b4] sm:$0xf]
    %v260 = vld [vmem:[%s0 + $0x3b8] sm:$0xf]
    %v261 = vld [vmem:[%s0 + $0x3bc] sm:$0xf]
    %v262 = vld [vmem:[%s0 + $0x3c0] sm:$0xf]
    %v263 = vld [vmem:[%s0 + $0x3c4] sm:$0xf]
    %v264 = vld [vmem:[%s0 + $0x3c8] sm:$0xf]
    %v265 = vld [vmem:[%s0 + $0x3cc] sm:$0xf]
    %v266 = vld [vmem:[%s0 + $0x3d0] sm:$0xf]
    %v267 = vld [vmem:[%s0 + $0x3d4] sm:$0xf]
    %v268 = vld [vmem:[%s0 + $0x3d8] sm:$0xf]
    %v269 = vld [vmem:[%s0 + $0x3dc] sm:$0xf]
    %v270 = vld [vmem:[%s0 + $0x3e0] sm:$0xf]
    %v271 = vld [vmem:[%s0 + $0x3e4] sm:$0xf]
    %v272 = vld [vmem:[%s0 + $0x3e8] sm:$0xf]
    %v273 = vld [vmem:[%s0 + $0x3ec] sm:$0xf]
    %v274 = vld [vmem:[%s0 + $0x3f0] sm:$0xf]
    %v275 = vld [vmem:[%s0 + $0x3f4] sm:$0xf]
    %v276 = vld [vmem:[%s0 + $0x3f8] sm:$0xf]
    %v277 = vld [vmem:[%s0 + $0x3fc] sm:$0xf]
    %v278 = vld [vmem:[%s1] sm:$0xf]
    %v279 = vld [vmem:[%s1 + $0x4] sm:$0xf]
    %v280 = vld [vmem:[%s1 + $0x8] sm:$0xf]
    %v281 = vld [vmem:[%s1 + $0xc] sm:$0xf]
    %v282 = vld [vmem:[%s1 + $0x10] sm:$0xf]
    %v283 = vld [vmem:[%s1 + $0x14] sm:$0xf]
    %v284 = vld [vmem:[%s1 + $0x18] sm:$0xf]
    %v285 = vld [vmem:[%s1 + $0x1c] sm:$0xf]
    %v542 = vunpack.c.l.b16 %v22
    %v543 = vunpack.c.l.b16 %v23
    %v544 = vunpack.c.l.b16 %v24
    %v545 = vunpack.c.l.b16 %v25
    %v546 = vunpack.c.l.b16 %v26
    %v547 = vunpack.c.l.b16 %v27
    %v548 = vunpack.c.l.b16 %v28
    %v549 = vunpack.c.l.b16 %v29
    %v550 = vunpack.c.l.b16 %v30
    %v551 = vunpack.c.l.b16 %v31
    %v552 = vunpack.c.l.b16 %v32
    %v553 = vunpack.c.l.b16 %v33
    %v554 = vunpack.c.l.b16 %v34
    %v555 = vunpack.c.l.b16 %v35
    %v556 = vunpack.c.l.b16 %v36
    %v557 = vunpack.c.l.b16 %v37
    %v558 = vunpack.c.l.b16 %v38
    %v559 = vunpack.c.l.b16 %v39
    %v560 = vunpack.c.l.b16 %v40
    %v561 = vunpack.c.l.b16 %v41
    %v562 = vunpack.c.l.b16 %v42
    %v563 = vunpack.c.l.b16 %v43
    %v564 = vunpack.c.l.b16 %v44
    %v565 = vunpack.c.l.b16 %v45
    %v566 = vunpack.c.l.b16 %v46
    %v567 = vunpack.c.l.b16 %v47
    %v568 = vunpack.c.l.b16 %v48
    %v569 = vunpack.c.l.b16 %v49
    %v570 = vunpack.c.l.b16 %v50
    %v571 = vunpack.c.l.b16 %v51
    %v572 = vunpack.c.l.b16 %v52
    %v573 = vunpack.c.l.b16 %v53
    %v574 = vunpack.c.l.b16 %v54
    %v575 = vunpack.c.l.b16 %v55
    %v576 = vunpack.c.l.b16 %v56
    %v577 = vunpack.c.l.b16 %v57
    %v578 = vunpack.c.l.b16 %v58
    %v579 = vunpack.c.l.b16 %v59
    %v580 = vunpack.c.l.b16 %v60
    %v581 = vunpack.c.l.b16 %v61
    %v582 = vunpack.c.l.b16 %v62
    %v583 = vunpack.c.l.b16 %v63
    %v584 = vunpack.c.l.b16 %v64
    %v585 = vunpack.c.l.b16 %v65
    %v586 = vunpack.c.l.b16 %v66
    %v587 = vunpack.c.l.b16 %v67
    %v588 = vunpack.c.l.b16 %v68
    %v589 = vunpack.c.l.b16 %v69
    %v590 = vunpack.c.l.b16 %v70
    %v591 = vunpack.c.l.b16 %v71
    %v592 = vunpack.c.l.b16 %v72
    %v593 = vunpack.c.l.b16 %v73
    %v594 = vunpack.c.l.b16 %v74
    %v595 = vunpack.c.l.b16 %v75
    %v596 = vunpack.c.l.b16 %v76
    %v597 = vunpack.c.l.b16 %v77
    %v598 = vunpack.c.l.b16 %v78
    %v599 = vunpack.c.l.b16 %v79
    %v600 = vunpack.c.l.b16 %v80
    %v601 = vunpack.c.l.b16 %v81
    %v602 = vunpack.c.l.b16 %v82
    %v603 = vunpack.c.l.b16 %v83
    %v604 = vunpack.c.l.b16 %v84
    %v605 = vunpack.c.l.b16 %v85
    %v606 = vunpack.c.l.b16 %v86
    %v607 = vunpack.c.l.b16 %v87
    %v608 = vunpack.c.l.b16 %v88
    %v609 = vunpack.c.l.b16 %v89
    %v610 = vunpack.c.l.b16 %v90
    %v611 = vunpack.c.l.b16 %v91
    %v612 = vunpack.c.l.b16 %v92
    %v613 = vunpack.c.l.b16 %v93
    %v614 = vunpack.c.l.b16 %v94
    %v615 = vunpack.c.l.b16 %v95
    %v616 = vunpack.c.l.b16 %v96
    %v617 = vunpack.c.l.b16 %v97
    %v618 = vunpack.c.l.b16 %v98
    %v619 = vunpack.c.l.b16 %v99
    %v620 = vunpack.c.l.b16 %v100
    %v621 = vunpack.c.l.b16 %v101
    %v622 = vunpack.c.l.b16 %v102
    %v623 = vunpack.c.l.b16 %v103
    %v624 = vunpack.c.l.b16 %v104
    %v625 = vunpack.c.l.b16 %v105
    %v626 = vunpack.c.l.b16 %v106
    %v627 = vunpack.c.l.b16 %v107
    %v628 = vunpack.c.l.b16 %v108
    %v629 = vunpack.c.l.b16 %v109
    %v630 = vunpack.c.l.b16 %v110
    %v631 = vunpack.c.l.b16 %v111
    %v632 = vunpack.c.l.b16 %v112
    %v633 = vunpack.c.l.b16 %v113
    %v634 = vunpack.c.l.b16 %v114
    %v635 = vunpack.c.l.b16 %v115
    %v636 = vunpack.c.l.b16 %v116
    %v637 = vunpack.c.l.b16 %v117
    %v638 = vunpack.c.l.b16 %v118
    %v639 = vunpack.c.l.b16 %v119
    %v640 = vunpack.c.l.b16 %v120
    %v641 = vunpack.c.l.b16 %v121
    %v642 = vunpack.c.l.b16 %v122
    %v643 = vunpack.c.l.b16 %v123
    %v644 = vunpack.c.l.b16 %v124
    %v645 = vunpack.c.l.b16 %v125
    %v646 = vunpack.c.l.b16 %v126
    %v647 = vunpack.c.l.b16 %v127
    %v648 = vunpack.c.l.b16 %v128
    %v649 = vunpack.c.l.b16 %v129
    %v650 = vunpack.c.l.b16 %v130
    %v651 = vunpack.c.l.b16 %v131
    %v652 = vunpack.c.l.b16 %v132
    %v653 = vunpack.c.l.b16 %v133
    %v654 = vunpack.c.l.b16 %v134
    %v655 = vunpack.c.l.b16 %v135
    %v656 = vunpack.c.l.b16 %v136
    %v657 = vunpack.c.l.b16 %v137
    %v658 = vunpack.c.l.b16 %v138
    %v659 = vunpack.c.l.b16 %v139
    %v660 = vunpack.c.l.b16 %v140
    %v661 = vunpack.c.l.b16 %v141
    %v662 = vunpack.c.l.b16 %v142
    %v663 = vunpack.c.l.b16 %v143
    %v664 = vunpack.c.l.b16 %v144
    %v665 = vunpack.c.l.b16 %v145
    %v666 = vunpack.c.l.b16 %v146
    %v667 = vunpack.c.l.b16 %v147
    %v668 = vunpack.c.l.b16 %v148
    %v669 = vunpack.c.l.b16 %v149
    %v670 = vunpack.c.l.b16 %v150
    %v671 = vunpack.c.l.b16 %v151
    %v672 = vunpack.c.l.b16 %v152
    %v673 = vunpack.c.l.b16 %v153
    %v674 = vunpack.c.l.b16 %v154
    %v675 = vunpack.c.l.b16 %v155
    %v676 = vunpack.c.l.b16 %v156
    %v677 = vunpack.c.l.b16 %v157
    %v678 = vunpack.c.l.b16 %v158
    %v679 = vunpack.c.l.b16 %v159
    %v680 = vunpack.c.l.b16 %v160
    %v681 = vunpack.c.l.b16 %v161
    %v682 = vunpack.c.l.b16 %v162
    %v683 = vunpack.c.l.b16 %v163
    %v684 = vunpack.c.l.b16 %v164
    %v685 = vunpack.c.l.b16 %v165
    %v686 = vunpack.c.l.b16 %v166
    %v687 = vunpack.c.l.b16 %v167
    %v688 = vunpack.c.l.b16 %v168
    %v689 = vunpack.c.l.b16 %v169
    %v690 = vunpack.c.l.b16 %v170
    %v691 = vunpack.c.l.b16 %v171
    %v692 = vunpack.c.l.b16 %v172
    %v693 = vunpack.c.l.b16 %v173
    %v694 = vunpack.c.l.b16 %v174
    %v695 = vunpack.c.l.b16 %v175
    %v696 = vunpack.c.l.b16 %v176
    %v697 = vunpack.c.l.b16 %v177
    %v698 = vunpack.c.l.b16 %v178
    %v699 = vunpack.c.l.b16 %v179
    %v700 = vunpack.c.l.b16 %v180
    %v701 = vunpack.c.l.b16 %v181
    %v702 = vunpack.c.l.b16 %v182
    %v703 = vunpack.c.l.b16 %v183
    %v704 = vunpack.c.l.b16 %v184
    %v705 = vunpack.c.l.b16 %v185
    %v706 = vunpack.c.l.b16 %v186
    %v707 = vunpack.c.l.b16 %v187
    %v708 = vunpack.c.l.b16 %v188
    %v709 = vunpack.c.l.b16 %v189
    %v710 = vunpack.c.l.b16 %v190
    %v711 = vunpack.c.l.b16 %v191
    %v712 = vunpack.c.l.b16 %v192
    %v713 = vunpack.c.l.b16 %v193
    %v714 = vunpack.c.l.b16 %v194
    %v715 = vunpack.c.l.b16 %v195
    %v716 = vunpack.c.l.b16 %v196
    %v717 = vunpack.c.l.b16 %v197
    %v718 = vunpack.c.l.b16 %v198
    %v719 = vunpack.c.l.b16 %v199
    %v720 = vunpack.c.l.b16 %v200
    %v721 = vunpack.c.l.b16 %v201
    %v722 = vunpack.c.l.b16 %v202
    %v723 = vunpack.c.l.b16 %v203
    %v724 = vunpack.c.l.b16 %v204
    %v725 = vunpack.c.l.b16 %v205
    %v726 = vunpack.c.l.b16 %v206
    %v727 = vunpack.c.l.b16 %v207
    %v728 = vunpack.c.l.b16 %v208
    %v729 = vunpack.c.l.b16 %v209
    %v730 = vunpack.c.l.b16 %v210
    %v731 = vunpack.c.l.b16 %v211
    %v732 = vunpack.c.l.b16 %v212
    %v733 = vunpack.c.l.b16 %v213
    %v734 = vunpack.c.l.b16 %v214
    %v735 = vunpack.c.l.b16 %v215
    %v736 = vunpack.c.l.b16 %v216
    %v737 = vunpack.c.l.b16 %v217
    %v738 = vunpack.c.l.b16 %v218
    %v739 = vunpack.c.l.b16 %v219
    %v740 = vunpack.c.l.b16 %v220
    %v741 = vunpack.c.l.b16 %v221
    %v742 = vunpack.c.l.b16 %v222
    %v743 = vunpack.c.l.b16 %v223
    %v744 = vunpack.c.l.b16 %v224
    %v745 = vunpack.c.l.b16 %v225
    %v746 = vunpack.c.l.b16 %v226
    %v747 = vunpack.c.l.b16 %v227
    %v748 = vunpack.c.l.b16 %v228
    %v749 = vunpack.c.l.b16 %v229
    %v750 = vunpack.c.l.b16 %v230
    %v751 = vunpack.c.l.b16 %v231
    %v752 = vunpack.c.l.b16 %v232
    %v753 = vunpack.c.l.b16 %v233
    %v754 = vunpack.c.l.b16 %v234
    %v755 = vunpack.c.l.b16 %v235
    %v756 = vunpack.c.l.b16 %v236
    %v757 = vunpack.c.l.b16 %v237
    %v758 = vunpack.c.l.b16 %v238
    %v759 = vunpack.c.l.b16 %v239
    %v760 = vunpack.c.l.b16 %v240
    %v761 = vunpack.c.l.b16 %v241
    %v762 = vunpack.c.l.b16 %v242
    %v763 = vunpack.c.l.b16 %v243
    %v764 = vunpack.c.l.b16 %v244
    %v765 = vunpack.c.l.b16 %v245
    %v766 = vunpack.c.l.b16 %v246
    %v767 = vunpack.c.l.b16 %v247
    %v768 = vunpack.c.l.b16 %v248
    %v769 = vunpack.c.l.b16 %v249
    %v770 = vunpack.c.l.b16 %v250
    %v771 = vunpack.c.l.b16 %v251
    %v772 = vunpack.c.l.b16 %v252
    %v773 = vunpack.c.l.b16 %v253
    %v774 = vunpack.c.l.b16 %v254
    %v775 = vunpack.c.l.b16 %v255
    %v776 = vunpack.c.l.b16 %v256
    %v777 = vunpack.c.l.b16 %v257
    %v778 = vunpack.c.l.b16 %v258
    %v779 = vunpack.c.l.b16 %v259
    %v780 = vunpack.c.l.b16 %v260
    %v781 = vunpack.c.l.b16 %v261
    %v782 = vunpack.c.l.b16 %v262
    %v783 = vunpack.c.l.b16 %v263
    %v784 = vunpack.c.l.b16 %v264
    %v785 = vunpack.c.l.b16 %v265
    %v786 = vunpack.c.l.b16 %v266
    %v787 = vunpack.c.l.b16 %v267
    %v788 = vunpack.c.l.b16 %v268
    %v789 = vunpack.c.l.b16 %v269
    %v790 = vunpack.c.l.b16 %v270
    %v791 = vunpack.c.l.b16 %v271
    %v792 = vunpack.c.l.b16 %v272
    %v793 = vunpack.c.l.b16 %v273
    %v794 = vunpack.c.l.b16 %v274
    %v795 = vunpack.c.l.b16 %v275
    %v796 = vunpack.c.l.b16 %v276
    %v797 = vunpack.c.l.b16 %v277
    %v798 = vpack.c.b16 %v543, %v542
    %v799 = vpack.c.b16 %v545, %v544
    %v800 = vpack.c.b16 %v547, %v546
    %v801 = vpack.c.b16 %v549, %v548
    %v802 = vpack.c.b16 %v551, %v550
    %v803 = vpack.c.b16 %v553, %v552
    %v804 = vpack.c.b16 %v555, %v554
    %v805 = vpack.c.b16 %v557, %v556
    %v806 = vpack.c.b16 %v559, %v558
    %v807 = vpack.c.b16 %v561, %v560
    %v808 = vpack.c.b16 %v563, %v562
    %v809 = vpack.c.b16 %v565, %v564
    %v810 = vpack.c.b16 %v567, %v566
    %v811 = vpack.c.b16 %v569, %v568
    %v812 = vpack.c.b16 %v571, %v570
    %v813 = vpack.c.b16 %v573, %v572
    %v814 = vpack.c.b16 %v575, %v574
    %v815 = vpack.c.b16 %v577, %v576
    %v816 = vpack.c.b16 %v579, %v578
    %v817 = vpack.c.b16 %v581, %v580
    %v818 = vpack.c.b16 %v583, %v582
    %v819 = vpack.c.b16 %v585, %v584
    %v820 = vpack.c.b16 %v587, %v586
    %v821 = vpack.c.b16 %v589, %v588
    %v822 = vpack.c.b16 %v591, %v590
    %v823 = vpack.c.b16 %v593, %v592
    %v824 = vpack.c.b16 %v595, %v594
    %v825 = vpack.c.b16 %v597, %v596
    %v826 = vpack.c.b16 %v599, %v598
    %v827 = vpack.c.b16 %v601, %v600
    %v828 = vpack.c.b16 %v603, %v602
    %v829 = vpack.c.b16 %v605, %v604
    %v830 = vpack.c.b16 %v607, %v606
    %v831 = vpack.c.b16 %v609, %v608
    %v832 = vpack.c.b16 %v611, %v610
    %v833 = vpack.c.b16 %v613, %v612
    %v834 = vpack.c.b16 %v615, %v614
    %v835 = vpack.c.b16 %v617, %v616
    %v836 = vpack.c.b16 %v619, %v618
    %v837 = vpack.c.b16 %v621, %v620
    %v838 = vpack.c.b16 %v623, %v622
    %v839 = vpack.c.b16 %v625, %v624
    %v840 = vpack.c.b16 %v627, %v626
    %v841 = vpack.c.b16 %v629, %v628
    %v842 = vpack.c.b16 %v631, %v630
    %v843 = vpack.c.b16 %v633, %v632
    %v844 = vpack.c.b16 %v635, %v634
    %v845 = vpack.c.b16 %v637, %v636
    %v846 = vpack.c.b16 %v639, %v638
    %v847 = vpack.c.b16 %v641, %v640
    %v848 = vpack.c.b16 %v643, %v642
    %v849 = vpack.c.b16 %v645, %v644
    %v850 = vpack.c.b16 %v647, %v646
    %v851 = vpack.c.b16 %v649, %v648
    %v852 = vpack.c.b16 %v651, %v650
    %v853 = vpack.c.b16 %v653, %v652
    %v854 = vpack.c.b16 %v655, %v654
    %v855 = vpack.c.b16 %v657, %v656
    %v856 = vpack.c.b16 %v659, %v658
    %v857 = vpack.c.b16 %v661, %v660
    %v858 = vpack.c.b16 %v663, %v662
    %v859 = vpack.c.b16 %v665, %v664
    %v860 = vpack.c.b16 %v667, %v666
    %v861 = vpack.c.b16 %v669, %v668
    %v862 = vpack.c.b16 %v671, %v670
    %v863 = vpack.c.b16 %v673, %v672
    %v864 = vpack.c.b16 %v675, %v674
    %v865 = vpack.c.b16 %v677, %v676
    %v866 = vpack.c.b16 %v679, %v678
    %v867 = vpack.c.b16 %v681, %v680
    %v868 = vpack.c.b16 %v683, %v682
    %v869 = vpack.c.b16 %v685, %v684
    %v870 = vpack.c.b16 %v687, %v686
    %v871 = vpack.c.b16 %v689, %v688
    %v872 = vpack.c.b16 %v691, %v690
    %v873 = vpack.c.b16 %v693, %v692
    %v874 = vpack.c.b16 %v695, %v694
    %v875 = vpack.c.b16 %v697, %v696
    %v876 = vpack.c.b16 %v699, %v698
    %v877 = vpack.c.b16 %v701, %v700
    %v878 = vpack.c.b16 %v703, %v702
    %v879 = vpack.c.b16 %v705, %v704
    %v880 = vpack.c.b16 %v707, %v706
    %v881 = vpack.c.b16 %v709, %v708
    %v882 = vpack.c.b16 %v711, %v710
    %v883 = vpack.c.b16 %v713, %v712
    %v884 = vpack.c.b16 %v715, %v714
    %v885 = vpack.c.b16 %v717, %v716
    %v886 = vpack.c.b16 %v719, %v718
    %v887 = vpack.c.b16 %v721, %v720
    %v888 = vpack.c.b16 %v723, %v722
    %v889 = vpack.c.b16 %v725, %v724
    %v890 = vpack.c.b16 %v727, %v726
    %v891 = vpack.c.b16 %v729, %v728
    %v892 = vpack.c.b16 %v731, %v730
    %v893 = vpack.c.b16 %v733, %v732
    %v894 = vpack.c.b16 %v735, %v734
    %v895 = vpack.c.b16 %v737, %v736
    %v896 = vpack.c.b16 %v739, %v738
    %v897 = vpack.c.b16 %v741, %v740
    %v898 = vpack.c.b16 %v743, %v742
    %v899 = vpack.c.b16 %v745, %v744
    %v900 = vpack.c.b16 %v747, %v746
    %v901 = vpack.c.b16 %v749, %v748
    %v902 = vpack.c.b16 %v751, %v750
    %v903 = vpack.c.b16 %v753, %v752
    %v904 = vpack.c.b16 %v755, %v754
    %v905 = vpack.c.b16 %v757, %v756
    %v906 = vpack.c.b16 %v759, %v758
    %v907 = vpack.c.b16 %v761, %v760
    %v908 = vpack.c.b16 %v763, %v762
    %v909 = vpack.c.b16 %v765, %v764
    %v910 = vpack.c.b16 %v767, %v766
    %v911 = vpack.c.b16 %v769, %v768
    %v912 = vpack.c.b16 %v771, %v770
    %v913 = vpack.c.b16 %v773, %v772
    %v914 = vpack.c.b16 %v775, %v774
    %v915 = vpack.c.b16 %v777, %v776
    %v916 = vpack.c.b16 %v779, %v778
    %v917 = vpack.c.b16 %v781, %v780
    %v918 = vpack.c.b16 %v783, %v782
    %v919 = vpack.c.b16 %v785, %v784
    %v920 = vpack.c.b16 %v787, %v786
    %v921 = vpack.c.b16 %v789, %v788
    %v922 = vpack.c.b16 %v791, %v790
    %v923 = vpack.c.b16 %v793, %v792
    %v924 = vpack.c.b16 %v795, %v794
    %v925 = vpack.c.b16 %v797, %v796
    %v934 = vunpack.c.l.b16 %v278
    %v935 = vunpack.c.l.b16 %v279
    %v936 = vunpack.c.l.b16 %v280
    %v937 = vunpack.c.l.b16 %v281
    %v938 = vunpack.c.l.b16 %v282
    %v939 = vunpack.c.l.b16 %v283
    %v940 = vunpack.c.l.b16 %v284
    %v941 = vunpack.c.l.b16 %v285
    %v942 = vpack.c.b16 %v935, %v934
    %v943 = vpack.c.b16 %v937, %v936
    %v944 = vpack.c.b16 %v939, %v938
    %v945 = vpack.c.b16 %v941, %v940
    %vm950 = vcmask 523264
    %v952 = vsel %vm950, %v798, 0
    %v955 = vsel %vm950, %v799, 0
    %v958 = vsel %vm950, %v800, 0
    %v961 = vsel %vm950, %v801, 0
    %v964 = vsel %vm950, %v802, 0
    %v967 = vsel %vm950, %v803, 0
    %v970 = vsel %vm950, %v804, 0
    %v973 = vsel %vm950, %v805, 0
    %v976 = vsel %vm950, %v806, 0
    %v979 = vsel %vm950, %v807, 0
    %v982 = vsel %vm950, %v808, 0
    %v985 = vsel %vm950, %v809, 0
    %v988 = vsel %vm950, %v810, 0
    %v991 = vsel %vm950, %v811, 0
    %v994 = vsel %vm950, %v812, 0
    %v997 = vsel %vm950, %v813, 0
    %v1000 = vsel %vm950, %v814, 0
    %v1003 = vsel %vm950, %v815, 0
    %v1006 = vsel %vm950, %v816, 0
    %v1009 = vsel %vm950, %v817, 0
    %v1012 = vsel %vm950, %v818, 0
    %v1015 = vsel %vm950, %v819, 0
    %v1018 = vsel %vm950, %v820, 0
    %v1021 = vsel %vm950, %v821, 0
    %v1024 = vsel %vm950, %v822, 0
    %v1027 = vsel %vm950, %v823, 0
    %v1030 = vsel %vm950, %v824, 0
    %v1033 = vsel %vm950, %v825, 0
    %v1036 = vsel %vm950, %v826, 0
    %v1039 = vsel %vm950, %v827, 0
    %v1042 = vsel %vm950, %v828, 0
    %v1045 = vsel %vm950, %v829, 0
    %v1048 = vsel %vm950, %v830, 0
    %v1051 = vsel %vm950, %v831, 0
    %v1054 = vsel %vm950, %v832, 0
    %v1057 = vsel %vm950, %v833, 0
    %v1060 = vsel %vm950, %v834, 0
    %v1063 = vsel %vm950, %v835, 0
    %v1066 = vsel %vm950, %v836, 0
    %v1069 = vsel %vm950, %v837, 0
    %v1072 = vsel %vm950, %v838, 0
    %v1075 = vsel %vm950, %v839, 0
    %v1078 = vsel %vm950, %v840, 0
    %v1081 = vsel %vm950, %v841, 0
    %v1084 = vsel %vm950, %v842, 0
    %v1087 = vsel %vm950, %v843, 0
    %v1090 = vsel %vm950, %v844, 0
    %v1093 = vsel %vm950, %v845, 0
    %v1096 = vsel %vm950, %v846, 0
    %v1099 = vsel %vm950, %v847, 0
    %v1102 = vsel %vm950, %v848, 0
    %v1105 = vsel %vm950, %v849, 0
    %v1108 = vsel %vm950, %v850, 0
    %v1111 = vsel %vm950, %v851, 0
    %v1114 = vsel %vm950, %v852, 0
    %v1117 = vsel %vm950, %v853, 0
    %v1120 = vsel %vm950, %v854, 0
    %v1123 = vsel %vm950, %v855, 0
    %v1126 = vsel %vm950, %v856, 0
    %v1129 = vsel %vm950, %v857, 0
    %v1132 = vsel %vm950, %v858, 0
    %v1135 = vsel %vm950, %v859, 0
    %v1138 = vsel %vm950, %v860, 0
    %v1141 = vsel %vm950, %v861, 0
    %v1144 = vsel %vm950, %v862, 0
    %v1147 = vsel %vm950, %v863, 0
    %v1150 = vsel %vm950, %v864, 0
    %v1153 = vsel %vm950, %v865, 0
    %v1156 = vsel %vm950, %v866, 0
    %v1159 = vsel %vm950, %v867, 0
    %v1162 = vsel %vm950, %v868, 0
    %v1165 = vsel %vm950, %v869, 0
    %v1168 = vsel %vm950, %v870, 0
    %v1171 = vsel %vm950, %v871, 0
    %v1174 = vsel %vm950, %v872, 0
    %v1177 = vsel %vm950, %v873, 0
    %v1180 = vsel %vm950, %v874, 0
    %v1183 = vsel %vm950, %v875, 0
    %v1186 = vsel %vm950, %v876, 0
    %v1189 = vsel %vm950, %v877, 0
    %v1192 = vsel %vm950, %v878, 0
    %v1195 = vsel %vm950, %v879, 0
    %v1198 = vsel %vm950, %v880, 0
    %v1201 = vsel %vm950, %v881, 0
    %v1204 = vsel %vm950, %v882, 0
    %v1207 = vsel %vm950, %v883, 0
    %v1210 = vsel %vm950, %v884, 0
    %v1213 = vsel %vm950, %v885, 0
    %v1216 = vsel %vm950, %v886, 0
    %v1219 = vsel %vm950, %v887, 0
    %v1222 = vsel %vm950, %v888, 0
    %v1225 = vsel %vm950, %v889, 0
    %v1228 = vsel %vm950, %v890, 0
    %v1231 = vsel %vm950, %v891, 0
    %v1234 = vsel %vm950, %v892, 0
    %v1237 = vsel %vm950, %v893, 0
    %v1240 = vsel %vm950, %v894, 0
    %v1243 = vsel %vm950, %v895, 0
    %v1246 = vsel %vm950, %v896, 0
    %v1249 = vsel %vm950, %v897, 0
    %v1252 = vsel %vm950, %v898, 0
    %v1255 = vsel %vm950, %v899, 0
    %v1258 = vsel %vm950, %v900, 0
    %v1261 = vsel %vm950, %v901, 0
    %v1264 = vsel %vm950, %v902, 0
    %v1267 = vsel %vm950, %v903, 0
    %v1270 = vsel %vm950, %v904, 0
    %v1273 = vsel %vm950, %v905, 0
    %v1276 = vsel %vm950, %v906, 0
    %v1279 = vsel %vm950, %v907, 0
    %v1282 = vsel %vm950, %v908, 0
    %v1285 = vsel %vm950, %v909, 0
    %v1288 = vsel %vm950, %v910, 0
    %v1291 = vsel %vm950, %v911, 0
    %v1294 = vsel %vm950, %v912, 0
    %v1297 = vsel %vm950, %v913, 0
    %v1300 = vsel %vm950, %v914, 0
    %v1303 = vsel %vm950, %v915, 0
    %v1306 = vsel %vm950, %v916, 0
    %v1309 = vsel %vm950, %v917, 0
    %v1312 = vsel %vm950, %v918, 0
    %v1315 = vsel %vm950, %v919, 0
    %v1318 = vsel %vm950, %v920, 0
    %v1321 = vsel %vm950, %v921, 0
    %v1324 = vsel %vm950, %v922, 0
    %v1327 = vsel %vm950, %v923, 0
    %v1330 = vsel %vm950, %v924, 0
    %v1333 = vsel %vm950, %v925, 0
    %1335 = vmatprep.subr.bf16.mxu0 0
    %1336 = vmatpush1.bf16.msra.mxu0 %v942
    %1337 = vmatprep.subr.bf16.mxu0 0
    %1338 = vmatpush1.bf16.msra.mxu0 %v943
    %1339 = vmatprep.subr.bf16.mxu0 0
    %1340 = vmatpush1.bf16.msra.mxu0 %v944
    %1341 = vmatprep.subr.bf16.mxu0 0
    %1342 = vmatpush1.bf16.msra.mxu0 %v945
    %1343 = vmatprep.subr.bf16.mxu0 0
    %1344 = vmatpush1.bf16.msra.mxu0 0
    %1345 = vmatprep.subr.bf16.mxu0 0
    %1346 = vmatpush1.bf16.msra.mxu0 0
    %1347 = vmatprep.subr.bf16.mxu0 0
    %1348 = vmatpush1.bf16.msra.mxu0 0
    %1349 = vmatprep.subr.bf16.mxu0 0
    %1350 = vmatpush1.bf16.msra.mxu0 0
    %1351 = vmatprep.subr.bf16.mxu0 0
    %1352 = vmatpush1.bf16.msra.mxu0 0
    %1353 = vmatprep.subr.bf16.mxu0 0
    %1354 = vmatpush1.bf16.msra.mxu0 0
    %1355 = vmatprep.subr.bf16.mxu0 0
    %1356 = vmatpush1.bf16.msra.mxu0 0
    %1357 = vmatprep.subr.bf16.mxu0 0
    %1358 = vmatpush1.bf16.msra.mxu0 0
    %1359 = vmatprep.subr.bf16.mxu0 0
    %1360 = vmatpush1.bf16.msra.mxu0 0
    %1361 = vmatprep.subr.bf16.mxu0 0
    %1362 = vmatpush1.bf16.msra.mxu0 0
    %1363 = vmatprep.subr.bf16.mxu0 0
    %1364 = vmatpush1.bf16.msra.mxu0 0
    %1365 = vmatprep.subr.bf16.mxu0 0
    %1366 = vmatpush1.bf16.msra.mxu0 0
    %1367 = vmatprep.mubr.bf16.mxu0 0
    %1368 = vmatmul.mubr.bf16.gmra.mrb[0].mxu0 %v952
    %v1369 = vpop.f32.mrb[0].mxu0
    %v1370 = vadd.f32 0.0, %v1369
    %v1371 = vpop.f32.mrb[0].mxu0
    %v1372 = vpop.f32.mrb[0].mxu0
    %v1373 = vadd.f32 0.0, %v1372
    %v1374 = vpop.f32.mrb[0].mxu0
    %1375 = vmatprep.mubr.bf16.mxu0 0
    %1376 = vmatmul.mubr.bf16.gmra.mrb[0].mxu0 %v955
    %v1377 = vpop.f32.mrb[0].mxu0
    %v1378 = vadd.f32 0.0, %v1377
    %v1379 = vpop.f32.mrb[0].mxu0
    %v1380 = vpop.f32.mrb[0].mxu0
    %v1381 = vadd.f32 0.0, %v1380
    %v1382 = vpop.f32.mrb[0].mxu0
    %1383 = vmatprep.mubr.bf16.mxu0 0
    %1384 = vmatmul.mubr.bf16.gmra.mrb[0].mxu0 %v958
    %v1385 = vpop.f32.mrb[0].mxu0
    %v1386 = vadd.f32 0.0, %v1385
    %v1387 = vpop.f32.mrb[0].mxu0
    %v1388 = vpop.f32.mrb[0].mxu0
    %v1389 = vadd.f32 0.0, %v1388
    %v1390 = vpop.f32.mrb[0].mxu0
    %1391 = vmatprep.mubr.bf16.mxu0 0
    %1392 = vmatmul.mubr.bf16.gmra.mrb[0].mxu0 %v961
    %v1393 = vpop.f32.mrb[0].mxu0
    %v1394 = vadd.f32 0.0, %v1393
    %v1395 = vpop.f32.mrb[0].mxu0
    %v1396 = vpop.f32.mrb[0].mxu0
    %v1397 = vadd.f32 0.0, %v1396
    %v1398 = vpop.f32.mrb[0].mxu0
    %1399 = vmatprep.mubr.bf16.mxu0 0
    %1400 = vmatmul.mubr.bf16.gmra.mrb[0].mxu0 %v964
    %v1401 = vpop.f32.mrb[0].mxu0
    %v1402 = vadd.f32 0.0, %v1401
    %v1403 = vpop.f32.mrb[0].mxu0
    %v1404 = vpop.f32.mrb[0].mxu0
    %v1405 = vadd.f32 0.0, %v1404
    %v1406 = vpop.f32.mrb[0].mxu0
    %1407 = vmatprep.mubr.bf16.mxu0 0
    %1408 = vmatmul.mubr.bf16.gmra.mrb[0].mxu0 %v967
    %v1409 = vpop.f32.mrb[0].mxu0
    %v1410 = vadd.f32 0.0, %v1409
    %v1411 = vpop.f32.mrb[0].mxu0
    %v1412 = vpop.f32.mrb[0].mxu0
    %v1413 = vadd.f32 0.0, %v1412
    %v1414 = vpop.f32.mrb[0].mxu0
    %1415 = vmatprep.mubr.bf16.mxu0 0
    %1416 = vmatmul.mubr.bf16.gmra.mrb[0].mxu0 %v970
    %v1417 = vpop.f32.mrb[0].mxu0
    %v1418 = vadd.f32 0.0, %v1417
    %v1419 = vpop.f32.mrb[0].mxu0
    %v1420 = vpop.f32.mrb[0].mxu0
    %v1421 = vadd.f32 0.0, %v1420
    %v1422 = vpop.f32.mrb[0].mxu0
    %1423 = vmatprep.mubr.bf16.mxu0 0
    %1424 = vmatmul.mubr.bf16.gmra.mrb[0].mxu0 %v973
    %v1425 = vpop.f32.mrb[0].mxu0
    %v1426 = vadd.f32 0.0, %v1425
    %v1427 = vpop.f32.mrb[0].mxu0
    %v1428 = vpop.f32.mrb[0].mxu0
    %v1429 = vadd.f32 0.0, %v1428
    %v1430 = vpop.f32.mrb[0].mxu0
    %1431 = vmatprep.mubr.bf16.mxu0 0
    %1432 = vmatmul.mubr.bf16.gmra.mrb[0].mxu0 %v976
    %v1433 = vpop.f32.mrb[0].mxu0
    %v1434 = vadd.f32 0.0, %v1433
    %v1435 = vpop.f32.mrb[0].mxu0
    %v1436 = vpop.f32.mrb[0].mxu0
    %v1437 = vadd.f32 0.0, %v1436
    %v1438 = vpop.f32.mrb[0].mxu0
    %1439 = vmatprep.mubr.bf16.mxu0 0
    %1440 = vmatmul.mubr.bf16.gmra.mrb[0].mxu0 %v979
    %v1441 = vpop.f32.mrb[0].mxu0
    %v1442 = vadd.f32 0.0, %v1441
    %v1443 = vpop.f32.mrb[0].mxu0
    %v1444 = vpop.f32.mrb[0].mxu0
    %v1445 = vadd.f32 0.0, %v1444
    %v1446 = vpop.f32.mrb[0].mxu0
    %1447 = vmatprep.mubr.bf16.mxu0 0
    %1448 = vmatmul.mubr.bf16.gmra.mrb[0].mxu0 %v982
    %v1449 = vpop.f32.mrb[0].mxu0
    %v1450 = vadd.f32 0.0, %v1449
    %v1451 = vpop.f32.mrb[0].mxu0
    %v1452 = vpop.f32.mrb[0].mxu0
    %v1453 = vadd.f32 0.0, %v1452
    %v1454 = vpop.f32.mrb[0].mxu0
    %1455 = vmatprep.mubr.bf16.mxu0 0
    %1456 = vmatmul.mubr.bf16.gmra.mrb[0].mxu0 %v985
    %v1457 = vpop.f32.mrb[0].mxu0
    %v1458 = vadd.f32 0.0, %v1457
    %v1459 = vpop.f32.mrb[0].mxu0
    %v1460 = vpop.f32.mrb[0].mxu0
    %v1461 = vadd.f32 0.0, %v1460
    %v1462 = vpop.f32.mrb[0].mxu0
    %1463 = vmatprep.mubr.bf16.mxu0 0
    %1464 = vmatmul.mubr.bf16.gmra.mrb[0].mxu0 %v988
    %v1465 = vpop.f32.mrb[0].mxu0
    %v1466 = vadd.f32 0.0, %v1465
    %v1467 = vpop.f32.mrb[0].mxu0
    %v1468 = vpop.f32.mrb[0].mxu0
    %v1469 = vadd.f32 0.0, %v1468
    %v1470 = vpop.f32.mrb[0].mxu0
    %1471 = vmatprep.mubr.bf16.mxu0 0
    %1472 = vmatmul.mubr.bf16.gmra.mrb[0].mxu0 %v991
    %v1473 = vpop.f32.mrb[0].mxu0
    %v1474 = vadd.f32 0.0, %v1473
    %v1475 = vpop.f32.mrb[0].mxu0
    %v1476 = vpop.f32.mrb[0].mxu0
    %v1477 = vadd.f32 0.0, %v1476
    %v1478 = vpop.f32.mrb[0].mxu0
    %1479 = vmatprep.mubr.bf16.mxu0 0
    %1480 = vmatmul.mubr.bf16.gmra.mrb[0].mxu0 %v994
    %v1481 = vpop.f32.mrb[0].mxu0
    %v1482 = vadd.f32 0.0, %v1481
    %v1483 = vpop.f32.mrb[0].mxu0
    %v1484 = vpop.f32.mrb[0].mxu0
    %v1485 = vadd.f32 0.0, %v1484
    %v1486 = vpop.f32.mrb[0].mxu0
    %1487 = vmatprep.mubr.bf16.mxu0 0
    %1488 = vmatmul.mubr.bf16.gmra.mrb[0].mxu0 %v997
    %v1489 = vpop.f32.mrb[0].mxu0
    %v1490 = vadd.f32 0.0, %v1489
    %v1491 = vpop.f32.mrb[0].mxu0
    %v1492 = vpop.f32.mrb[0].mxu0
    %v1493 = vadd.f32 0.0, %v1492
    %v1494 = vpop.f32.mrb[0].mxu0
    %1495 = vmatprep.mubr.bf16.mxu0 0
    %1496 = vmatmul.mubr.bf16.gmra.mrb[0].mxu0 %v1000
    %v1497 = vpop.f32.mrb[0].mxu0
    %v1498 = vadd.f32 0.0, %v1497
    %v1499 = vpop.f32.mrb[0].mxu0
    %v1500 = vpop.f32.mrb[0].mxu0
    %v1501 = vadd.f32 0.0, %v1500
    %v1502 = vpop.f32.mrb[0].mxu0
    %1503 = vmatprep.mubr.bf16.mxu0 0
    %1504 = vmatmul.mubr.bf16.gmra.mrb[0].mxu0 %v1003
    %v1505 = vpop.f32.mrb[0].mxu0
    %v1506 = vadd.f32 0.0, %v1505
    %v1507 = vpop.f32.mrb[0].mxu0
    %v1508 = vpop.f32.mrb[0].mxu0
    %v1509 = vadd.f32 0.0, %v1508
    %v1510 = vpop.f32.mrb[0].mxu0
    %1511 = vmatprep.mubr.bf16.mxu0 0
    %1512 = vmatmul.mubr.bf16.gmra.mrb[0].mxu0 %v1006
    %v1513 = vpop.f32.mrb[0].mxu0
    %v1514 = vadd.f32 0.0, %v1513
    %v1515 = vpop.f32.mrb[0].mxu0
    %v1516 = vpop.f32.mrb[0].mxu0
    %v1517 = vadd.f32 0.0, %v1516
    %v1518 = vpop.f32.mrb[0].mxu0
    %1519 = vmatprep.mubr.bf16.mxu0 0
    %1520 = vmatmul.mubr.bf16.gmra.mrb[0].mxu0 %v1009
    %v1521 = vpop.f32.mrb[0].mxu0
    %v1522 = vadd.f32 0.0, %v1521
    %v1523 = vpop.f32.mrb[0].mxu0
    %v1524 = vpop.f32.mrb[0].mxu0
    %v1525 = vadd.f32 0.0, %v1524
    %v1526 = vpop.f32.mrb[0].mxu0
    %1527 = vmatprep.mubr.bf16.mxu0 0
    %1528 = vmatmul.mubr.bf16.gmra.mrb[0].mxu0 %v1012
    %v1529 = vpop.f32.mrb[0].mxu0
    %v1530 = vadd.f32 0.0, %v1529
    %v1531 = vpop.f32.mrb[0].mxu0
    %v1532 = vpop.f32.mrb[0].mxu0
    %v1533 = vadd.f32 0.0, %v1532
    %v1534 = vpop.f32.mrb[0].mxu0
    %1535 = vmatprep.mubr.bf16.mxu0 0
    %1536 = vmatmul.mubr.bf16.gmra.mrb[0].mxu0 %v1015
    %v1537 = vpop.f32.mrb[0].mxu0
    %v1538 = vadd.f32 0.0, %v1537
    %v1539 = vpop.f32.mrb[0].mxu0
    %v1540 = vpop.f32.mrb[0].mxu0
    %v1541 = vadd.f32 0.0, %v1540
    %v1542 = vpop.f32.mrb[0].mxu0
    %1543 = vmatprep.mubr.bf16.mxu0 0
    %1544 = vmatmul.mubr.bf16.gmra.mrb[0].mxu0 %v1018
    %v1545 = vpop.f32.mrb[0].mxu0
    %v1546 = vadd.f32 0.0, %v1545
    %v1547 = vpop.f32.mrb[0].mxu0
    %v1548 = vpop.f32.mrb[0].mxu0
    %v1549 = vadd.f32 0.0, %v1548
    %v1550 = vpop.f32.mrb[0].mxu0
    %1551 = vmatprep.mubr.bf16.mxu0 0
    %1552 = vmatmul.mubr.bf16.gmra.mrb[0].mxu0 %v1021
    %v1553 = vpop.f32.mrb[0].mxu0
    %v1554 = vadd.f32 0.0, %v1553
    %v1555 = vpop.f32.mrb[0].mxu0
    %v1556 = vpop.f32.mrb[0].mxu0
    %v1557 = vadd.f32 0.0, %v1556
    %v1558 = vpop.f32.mrb[0].mxu0
    %1559 = vmatprep.mubr.bf16.mxu0 0
    %1560 = vmatmul.mubr.bf16.gmra.mrb[0].mxu0 %v1024
    %v1561 = vpop.f32.mrb[0].mxu0
    %v1562 = vadd.f32 0.0, %v1561
    %v1563 = vpop.f32.mrb[0].mxu0
    %v1564 = vpop.f32.mrb[0].mxu0
    %v1565 = vadd.f32 0.0, %v1564
    %v1566 = vpop.f32.mrb[0].mxu0
    %1567 = vmatprep.mubr.bf16.mxu0 0
    %1568 = vmatmul.mubr.bf16.gmra.mrb[0].mxu0 %v1027
    %v1569 = vpop.f32.mrb[0].mxu0
    %v1570 = vadd.f32 0.0, %v1569
    %v1571 = vpop.f32.mrb[0].mxu0
    %v1572 = vpop.f32.mrb[0].mxu0
    %v1573 = vadd.f32 0.0, %v1572
    %v1574 = vpop.f32.mrb[0].mxu0
    %1575 = vmatprep.mubr.bf16.mxu0 0
    %1576 = vmatmul.mubr.bf16.gmra.mrb[0].mxu0 %v1030
    %v1577 = vpop.f32.mrb[0].mxu0
    %v1578 = vadd.f32 0.0, %v1577
    %v1579 = vpop.f32.mrb[0].mxu0
    %v1580 = vpop.f32.mrb[0].mxu0
    %v1581 = vadd.f32 0.0, %v1580
    %v1582 = vpop.f32.mrb[0].mxu0
    %1583 = vmatprep.mubr.bf16.mxu0 0
    %1584 = vmatmul.mubr.bf16.gmra.mrb[0].mxu0 %v1033
    %v1585 = vpop.f32.mrb[0].mxu0
    %v1586 = vadd.f32 0.0, %v1585
    %v1587 = vpop.f32.mrb[0].mxu0
    %v1588 = vpop.f32.mrb[0].mxu0
    %v1589 = vadd.f32 0.0, %v1588
    %v1590 = vpop.f32.mrb[0].mxu0
    %1591 = vmatprep.mubr.bf16.mxu0 0
    %1592 = vmatmul.mubr.bf16.gmra.mrb[0].mxu0 %v1036
    %v1593 = vpop.f32.mrb[0].mxu0
    %v1594 = vadd.f32 0.0, %v1593
    %v1595 = vpop.f32.mrb[0].mxu0
    %v1596 = vpop.f32.mrb[0].mxu0
    %v1597 = vadd.f32 0.0, %v1596
    %v1598 = vpop.f32.mrb[0].mxu0
    %1599 = vmatprep.mubr.bf16.mxu0 0
    %1600 = vmatmul.mubr.bf16.gmra.mrb[0].mxu0 %v1039
    %v1601 = vpop.f32.mrb[0].mxu0
    %v1602 = vadd.f32 0.0, %v1601
    %v1603 = vpop.f32.mrb[0].mxu0
    %v1604 = vpop.f32.mrb[0].mxu0
    %v1605 = vadd.f32 0.0, %v1604
    %v1606 = vpop.f32.mrb[0].mxu0
    %1607 = vmatprep.mubr.bf16.mxu0 0
    %1608 = vmatmul.mubr.bf16.gmra.mrb[0].mxu0 %v1042
    %v1609 = vpop.f32.mrb[0].mxu0
    %v1610 = vadd.f32 0.0, %v1609
    %v1611 = vpop.f32.mrb[0].mxu0
    %v1612 = vpop.f32.mrb[0].mxu0
    %v1613 = vadd.f32 0.0, %v1612
    %v1614 = vpop.f32.mrb[0].mxu0
    %1615 = vmatprep.mubr.bf16.mxu0 0
    %1616 = vmatmul.mubr.bf16.gmra.mrb[0].mxu0 %v1045
    %v1617 = vpop.f32.mrb[0].mxu0
    %v1618 = vadd.f32 0.0, %v1617
    %v1619 = vpop.f32.mrb[0].mxu0
    %v1620 = vpop.f32.mrb[0].mxu0
    %v1621 = vadd.f32 0.0, %v1620
    %v1622 = vpop.f32.mrb[0].mxu0
    %1623 = vmatprep.mubr.bf16.mxu0 0
    %1624 = vmatmul.mubr.bf16.gmra.mrb[0].mxu0 %v1048
    %v1625 = vpop.f32.mrb[0].mxu0
    %v1626 = vadd.f32 0.0, %v1625
    %v1627 = vpop.f32.mrb[0].mxu0
    %v1628 = vpop.f32.mrb[0].mxu0
    %v1629 = vadd.f32 0.0, %v1628
    %v1630 = vpop.f32.mrb[0].mxu0
    %1631 = vmatprep.mubr.bf16.mxu0 0
    %1632 = vmatmul.mubr.bf16.gmra.mrb[0].mxu0 %v1051
    %v1633 = vpop.f32.mrb[0].mxu0
    %v1634 = vadd.f32 0.0, %v1633
    %v1635 = vpop.f32.mrb[0].mxu0
    %v1636 = vpop.f32.mrb[0].mxu0
    %v1637 = vadd.f32 0.0, %v1636
    %v1638 = vpop.f32.mrb[0].mxu0
    %1639 = vmatprep.mubr.bf16.mxu0 0
    %1640 = vmatmul.mubr.bf16.gmra.mrb[0].mxu0 %v1054
    %v1641 = vpop.f32.mrb[0].mxu0
    %v1642 = vadd.f32 0.0, %v1641
    %v1643 = vpop.f32.mrb[0].mxu0
    %v1644 = vpop.f32.mrb[0].mxu0
    %v1645 = vadd.f32 0.0, %v1644
    %v1646 = vpop.f32.mrb[0].mxu0
    %1647 = vmatprep.mubr.bf16.mxu0 0
    %1648 = vmatmul.mubr.bf16.gmra.mrb[0].mxu0 %v1057
    %v1649 = vpop.f32.mrb[0].mxu0
    %v1650 = vadd.f32 0.0, %v1649
    %v1651 = vpop.f32.mrb[0].mxu0
    %v1652 = vpop.f32.mrb[0].mxu0
    %v1653 = vadd.f32 0.0, %v1652
    %v1654 = vpop.f32.mrb[0].mxu0
    %1655 = vmatprep.mubr.bf16.mxu0 0
    %1656 = vmatmul.mubr.bf16.gmra.mrb[0].mxu0 %v1060
    %v1657 = vpop.f32.mrb[0].mxu0
    %v1658 = vadd.f32 0.0, %v1657
    %v1659 = vpop.f32.mrb[0].mxu0
    %v1660 = vpop.f32.mrb[0].mxu0
    %v1661 = vadd.f32 0.0, %v1660
    %v1662 = vpop.f32.mrb[0].mxu0
    %1663 = vmatprep.mubr.bf16.mxu0 0
    %1664 = vmatmul.mubr.bf16.gmra.mrb[0].mxu0 %v1063
    %v1665 = vpop.f32.mrb[0].mxu0
    %v1666 = vadd.f32 0.0, %v1665
    %v1667 = vpop.f32.mrb[0].mxu0
    %v1668 = vpop.f32.mrb[0].mxu0
    %v1669 = vadd.f32 0.0, %v1668
    %v1670 = vpop.f32.mrb[0].mxu0
    %1671 = vmatprep.mubr.bf16.mxu0 0
    %1672 = vmatmul.mubr.bf16.gmra.mrb[0].mxu0 %v1066
    %v1673 = vpop.f32.mrb[0].mxu0
    %v1674 = vadd.f32 0.0, %v1673
    %v1675 = vpop.f32.mrb[0].mxu0
    %v1676 = vpop.f32.mrb[0].mxu0
    %v1677 = vadd.f32 0.0, %v1676
    %v1678 = vpop.f32.mrb[0].mxu0
    %1679 = vmatprep.mubr.bf16.mxu0 0
    %1680 = vmatmul.mubr.bf16.gmra.mrb[0].mxu0 %v1069
    %v1681 = vpop.f32.mrb[0].mxu0
    %v1682 = vadd.f32 0.0, %v1681
    %v1683 = vpop.f32.mrb[0].mxu0
    %v1684 = vpop.f32.mrb[0].mxu0
    %v1685 = vadd.f32 0.0, %v1684
    %v1686 = vpop.f32.mrb[0].mxu0
    %1687 = vmatprep.mubr.bf16.mxu0 0
    %1688 = vmatmul.mubr.bf16.gmra.mrb[0].mxu0 %v1072
    %v1689 = vpop.f32.mrb[0].mxu0
    %v1690 = vadd.f32 0.0, %v1689
    %v1691 = vpop.f32.mrb[0].mxu0
    %v1692 = vpop.f32.mrb[0].mxu0
    %v1693 = vadd.f32 0.0, %v1692
    %v1694 = vpop.f32.mrb[0].mxu0
    %1695 = vmatprep.mubr.bf16.mxu0 0
    %1696 = vmatmul.mubr.bf16.gmra.mrb[0].mxu0 %v1075
    %v1697 = vpop.f32.mrb[0].mxu0
    %v1698 = vadd.f32 0.0, %v1697
    %v1699 = vpop.f32.mrb[0].mxu0
    %v1700 = vpop.f32.mrb[0].mxu0
    %v1701 = vadd.f32 0.0, %v1700
    %v1702 = vpop.f32.mrb[0].mxu0
    %1703 = vmatprep.mubr.bf16.mxu0 0
    %1704 = vmatmul.mubr.bf16.gmra.mrb[0].mxu0 %v1078
    %v1705 = vpop.f32.mrb[0].mxu0
    %v1706 = vadd.f32 0.0, %v1705
    %v1707 = vpop.f32.mrb[0].mxu0
    %v1708 = vpop.f32.mrb[0].mxu0
    %v1709 = vadd.f32 0.0, %v1708
    %v1710 = vpop.f32.mrb[0].mxu0
    %1711 = vmatprep.mubr.bf16.mxu0 0
    %1712 = vmatmul.mubr.bf16.gmra.mrb[0].mxu0 %v1081
    %v1713 = vpop.f32.mrb[0].mxu0
    %v1714 = vadd.f32 0.0, %v1713
    %v1715 = vpop.f32.mrb[0].mxu0
    %v1716 = vpop.f32.mrb[0].mxu0
    %v1717 = vadd.f32 0.0, %v1716
    %v1718 = vpop.f32.mrb[0].mxu0
    %1719 = vmatprep.mubr.bf16.mxu0 0
    %1720 = vmatmul.mubr.bf16.gmra.mrb[0].mxu0 %v1084
    %v1721 = vpop.f32.mrb[0].mxu0
    %v1722 = vadd.f32 0.0, %v1721
    %v1723 = vpop.f32.mrb[0].mxu0
    %v1724 = vpop.f32.mrb[0].mxu0
    %v1725 = vadd.f32 0.0, %v1724
    %v1726 = vpop.f32.mrb[0].mxu0
    %1727 = vmatprep.mubr.bf16.mxu0 0
    %1728 = vmatmul.mubr.bf16.gmra.mrb[0].mxu0 %v1087
    %v1729 = vpop.f32.mrb[0].mxu0
    %v1730 = vadd.f32 0.0, %v1729
    %v1731 = vpop.f32.mrb[0].mxu0
    %v1732 = vpop.f32.mrb[0].mxu0
    %v1733 = vadd.f32 0.0, %v1732
    %v1734 = vpop.f32.mrb[0].mxu0
    %1735 = vmatprep.mubr.bf16.mxu0 0
    %1736 = vmatmul.mubr.bf16.gmra.mrb[0].mxu0 %v1090
    %v1737 = vpop.f32.mrb[0].mxu0
    %v1738 = vadd.f32 0.0, %v1737
    %v1739 = vpop.f32.mrb[0].mxu0
    %v1740 = vpop.f32.mrb[0].mxu0
    %v1741 = vadd.f32 0.0, %v1740
    %v1742 = vpop.f32.mrb[0].mxu0
    %1743 = vmatprep.mubr.bf16.mxu0 0
    %1744 = vmatmul.mubr.bf16.gmra.mrb[0].mxu0 %v1093
    %v1745 = vpop.f32.mrb[0].mxu0
    %v1746 = vadd.f32 0.0, %v1745
    %v1747 = vpop.f32.mrb[0].mxu0
    %v1748 = vpop.f32.mrb[0].mxu0
    %v1749 = vadd.f32 0.0, %v1748
    %v1750 = vpop.f32.mrb[0].mxu0
    %1751 = vmatprep.mubr.bf16.mxu0 0
    %1752 = vmatmul.mubr.bf16.gmra.mrb[0].mxu0 %v1096
    %v1753 = vpop.f32.mrb[0].mxu0
    %v1754 = vadd.f32 0.0, %v1753
    %v1755 = vpop.f32.mrb[0].mxu0
    %v1756 = vpop.f32.mrb[0].mxu0
    %v1757 = vadd.f32 0.0, %v1756
    %v1758 = vpop.f32.mrb[0].mxu0
    %1759 = vmatprep.mubr.bf16.mxu0 0
    %1760 = vmatmul.mubr.bf16.gmra.mrb[0].mxu0 %v1099
    %v1761 = vpop.f32.mrb[0].mxu0
    %v1762 = vadd.f32 0.0, %v1761
    %v1763 = vpop.f32.mrb[0].mxu0
    %v1764 = vpop.f32.mrb[0].mxu0
    %v1765 = vadd.f32 0.0, %v1764
    %v1766 = vpop.f32.mrb[0].mxu0
    %1767 = vmatprep.mubr.bf16.mxu0 0
    %1768 = vmatmul.mubr.bf16.gmra.mrb[0].mxu0 %v1102
    %v1769 = vpop.f32.mrb[0].mxu0
    %v1770 = vadd.f32 0.0, %v1769
    %v1771 = vpop.f32.mrb[0].mxu0
    %v1772 = vpop.f32.mrb[0].mxu0
    %v1773 = vadd.f32 0.0, %v1772
    %v1774 = vpop.f32.mrb[0].mxu0
    %1775 = vmatprep.mubr.bf16.mxu0 0
    %1776 = vmatmul.mubr.bf16.gmra.mrb[0].mxu0 %v1105
    %v1777 = vpop.f32.mrb[0].mxu0
    %v1778 = vadd.f32 0.0, %v1777
    %v1779 = vpop.f32.mrb[0].mxu0
    %v1780 = vpop.f32.mrb[0].mxu0
    %v1781 = vadd.f32 0.0, %v1780
    %v1782 = vpop.f32.mrb[0].mxu0
    %1783 = vmatprep.mubr.bf16.mxu0 0
    %1784 = vmatmul.mubr.bf16.gmra.mrb[0].mxu0 %v1108
    %v1785 = vpop.f32.mrb[0].mxu0
    %v1786 = vadd.f32 0.0, %v1785
    %v1787 = vpop.f32.mrb[0].mxu0
    %v1788 = vpop.f32.mrb[0].mxu0
    %v1789 = vadd.f32 0.0, %v1788
    %v1790 = vpop.f32.mrb[0].mxu0
    %1791 = vmatprep.mubr.bf16.mxu0 0
    %1792 = vmatmul.mubr.bf16.gmra.mrb[0].mxu0 %v1111
    %v1793 = vpop.f32.mrb[0].mxu0
    %v1794 = vadd.f32 0.0, %v1793
    %v1795 = vpop.f32.mrb[0].mxu0
    %v1796 = vpop.f32.mrb[0].mxu0
    %v1797 = vadd.f32 0.0, %v1796
    %v1798 = vpop.f32.mrb[0].mxu0
    %1799 = vmatprep.mubr.bf16.mxu0 0
    %1800 = vmatmul.mubr.bf16.gmra.mrb[0].mxu0 %v1114
    %v1801 = vpop.f32.mrb[0].mxu0
    %v1802 = vadd.f32 0.0, %v1801
    %v1803 = vpop.f32.mrb[0].mxu0
    %v1804 = vpop.f32.mrb[0].mxu0
    %v1805 = vadd.f32 0.0, %v1804
    %v1806 = vpop.f32.mrb[0].mxu0
    %1807 = vmatprep.mubr.bf16.mxu0 0
    %1808 = vmatmul.mubr.bf16.gmra.mrb[0].mxu0 %v1117
    %v1809 = vpop.f32.mrb[0].mxu0
    %v1810 = vadd.f32 0.0, %v1809
    %v1811 = vpop.f32.mrb[0].mxu0
    %v1812 = vpop.f32.mrb[0].mxu0
    %v1813 = vadd.f32 0.0, %v1812
    %v1814 = vpop.f32.mrb[0].mxu0
    %1815 = vmatprep.mubr.bf16.mxu0 0
    %1816 = vmatmul.mubr.bf16.gmra.mrb[0].mxu0 %v1120
    %v1817 = vpop.f32.mrb[0].mxu0
    %v1818 = vadd.f32 0.0, %v1817
    %v1819 = vpop.f32.mrb[0].mxu0
    %v1820 = vpop.f32.mrb[0].mxu0
    %v1821 = vadd.f32 0.0, %v1820
    %v1822 = vpop.f32.mrb[0].mxu0
    %1823 = vmatprep.mubr.bf16.mxu0 0
    %1824 = vmatmul.mubr.bf16.gmra.mrb[0].mxu0 %v1123
    %v1825 = vpop.f32.mrb[0].mxu0
    %v1826 = vadd.f32 0.0, %v1825
    %v1827 = vpop.f32.mrb[0].mxu0
    %v1828 = vpop.f32.mrb[0].mxu0
    %v1829 = vadd.f32 0.0, %v1828
    %v1830 = vpop.f32.mrb[0].mxu0
    %1831 = vmatprep.mubr.bf16.mxu0 0
    %1832 = vmatmul.mubr.bf16.gmra.mrb[0].mxu0 %v1126
    %v1833 = vpop.f32.mrb[0].mxu0
    %v1834 = vadd.f32 0.0, %v1833
    %v1835 = vpop.f32.mrb[0].mxu0
    %v1836 = vpop.f32.mrb[0].mxu0
    %v1837 = vadd.f32 0.0, %v1836
    %v1838 = vpop.f32.mrb[0].mxu0
    %1839 = vmatprep.mubr.bf16.mxu0 0
    %1840 = vmatmul.mubr.bf16.gmra.mrb[0].mxu0 %v1129
    %v1841 = vpop.f32.mrb[0].mxu0
    %v1842 = vadd.f32 0.0, %v1841
    %v1843 = vpop.f32.mrb[0].mxu0
    %v1844 = vpop.f32.mrb[0].mxu0
    %v1845 = vadd.f32 0.0, %v1844
    %v1846 = vpop.f32.mrb[0].mxu0
    %1847 = vmatprep.mubr.bf16.mxu0 0
    %1848 = vmatmul.mubr.bf16.gmra.mrb[0].mxu0 %v1132
    %v1849 = vpop.f32.mrb[0].mxu0
    %v1850 = vadd.f32 0.0, %v1849
    %v1851 = vpop.f32.mrb[0].mxu0
    %v1852 = vpop.f32.mrb[0].mxu0
    %v1853 = vadd.f32 0.0, %v1852
    %v1854 = vpop.f32.mrb[0].mxu0
    %1855 = vmatprep.mubr.bf16.mxu0 0
    %1856 = vmatmul.mubr.bf16.gmra.mrb[0].mxu0 %v1135
    %v1857 = vpop.f32.mrb[0].mxu0
    %v1858 = vadd.f32 0.0, %v1857
    %v1859 = vpop.f32.mrb[0].mxu0
    %v1860 = vpop.f32.mrb[0].mxu0
    %v1861 = vadd.f32 0.0, %v1860
    %v1862 = vpop.f32.mrb[0].mxu0
    %1863 = vmatprep.mubr.bf16.mxu0 0
    %1864 = vmatmul.mubr.bf16.gmra.mrb[0].mxu0 %v1138
    %v1865 = vpop.f32.mrb[0].mxu0
    %v1866 = vadd.f32 0.0, %v1865
    %v1867 = vpop.f32.mrb[0].mxu0
    %v1868 = vpop.f32.mrb[0].mxu0
    %v1869 = vadd.f32 0.0, %v1868
    %v1870 = vpop.f32.mrb[0].mxu0
    %1871 = vmatprep.mubr.bf16.mxu0 0
    %1872 = vmatmul.mubr.bf16.gmra.mrb[0].mxu0 %v1141
    %v1873 = vpop.f32.mrb[0].mxu0
    %v1874 = vadd.f32 0.0, %v1873
    %v1875 = vpop.f32.mrb[0].mxu0
    %v1876 = vpop.f32.mrb[0].mxu0
    %v1877 = vadd.f32 0.0, %v1876
    %v1878 = vpop.f32.mrb[0].mxu0
    %1879 = vmatprep.mubr.bf16.mxu0 0
    %1880 = vmatmul.mubr.bf16.gmra.mrb[0].mxu0 %v1144
    %v1881 = vpop.f32.mrb[0].mxu0
    %v1882 = vadd.f32 0.0, %v1881
    %v1883 = vpop.f32.mrb[0].mxu0
    %v1884 = vpop.f32.mrb[0].mxu0
    %v1885 = vadd.f32 0.0, %v1884
    %v1886 = vpop.f32.mrb[0].mxu0
    %1887 = vmatprep.mubr.bf16.mxu0 0
    %1888 = vmatmul.mubr.bf16.gmra.mrb[0].mxu0 %v1147
    %v1889 = vpop.f32.mrb[0].mxu0
    %v1890 = vadd.f32 0.0, %v1889
    %v1891 = vpop.f32.mrb[0].mxu0
    %v1892 = vpop.f32.mrb[0].mxu0
    %v1893 = vadd.f32 0.0, %v1892
    %v1894 = vpop.f32.mrb[0].mxu0
    %1895 = vmatprep.mubr.bf16.mxu0 0
    %1896 = vmatmul.mubr.bf16.gmra.mrb[0].mxu0 %v1150
    %v1897 = vpop.f32.mrb[0].mxu0
    %v1898 = vadd.f32 0.0, %v1897
    %v1899 = vpop.f32.mrb[0].mxu0
    %v1900 = vpop.f32.mrb[0].mxu0
    %v1901 = vadd.f32 0.0, %v1900
    %v1902 = vpop.f32.mrb[0].mxu0
    %1903 = vmatprep.mubr.bf16.mxu0 0
    %1904 = vmatmul.mubr.bf16.gmra.mrb[0].mxu0 %v1153
    %v1905 = vpop.f32.mrb[0].mxu0
    %v1906 = vadd.f32 0.0, %v1905
    %v1907 = vpop.f32.mrb[0].mxu0
    %v1908 = vpop.f32.mrb[0].mxu0
    %v1909 = vadd.f32 0.0, %v1908
    %v1910 = vpop.f32.mrb[0].mxu0
    %1911 = vmatprep.mubr.bf16.mxu0 0
    %1912 = vmatmul.mubr.bf16.gmra.mrb[0].mxu0 %v1156
    %v1913 = vpop.f32.mrb[0].mxu0
    %v1914 = vadd.f32 0.0, %v1913
    %v1915 = vpop.f32.mrb[0].mxu0
    %v1916 = vpop.f32.mrb[0].mxu0
    %v1917 = vadd.f32 0.0, %v1916
    %v1918 = vpop.f32.mrb[0].mxu0
    %1919 = vmatprep.mubr.bf16.mxu0 0
    %1920 = vmatmul.mubr.bf16.gmra.mrb[0].mxu0 %v1159
    %v1921 = vpop.f32.mrb[0].mxu0
    %v1922 = vadd.f32 0.0, %v1921
    %v1923 = vpop.f32.mrb[0].mxu0
    %v1924 = vpop.f32.mrb[0].mxu0
    %v1925 = vadd.f32 0.0, %v1924
    %v1926 = vpop.f32.mrb[0].mxu0
    %1927 = vmatprep.mubr.bf16.mxu0 0
    %1928 = vmatmul.mubr.bf16.gmra.mrb[0].mxu0 %v1162
    %v1929 = vpop.f32.mrb[0].mxu0
    %v1930 = vadd.f32 0.0, %v1929
    %v1931 = vpop.f32.mrb[0].mxu0
    %v1932 = vpop.f32.mrb[0].mxu0
    %v1933 = vadd.f32 0.0, %v1932
    %v1934 = vpop.f32.mrb[0].mxu0
    %1935 = vmatprep.mubr.bf16.mxu0 0
    %1936 = vmatmul.mubr.bf16.gmra.mrb[0].mxu0 %v1165
    %v1937 = vpop.f32.mrb[0].mxu0
    %v1938 = vadd.f32 0.0, %v1937
    %v1939 = vpop.f32.mrb[0].mxu0
    %v1940 = vpop.f32.mrb[0].mxu0
    %v1941 = vadd.f32 0.0, %v1940
    %v1942 = vpop.f32.mrb[0].mxu0
    %1943 = vmatprep.mubr.bf16.mxu0 0
    %1944 = vmatmul.mubr.bf16.gmra.mrb[0].mxu0 %v1168
    %v1945 = vpop.f32.mrb[0].mxu0
    %v1946 = vadd.f32 0.0, %v1945
    %v1947 = vpop.f32.mrb[0].mxu0
    %v1948 = vpop.f32.mrb[0].mxu0
    %v1949 = vadd.f32 0.0, %v1948
    %v1950 = vpop.f32.mrb[0].mxu0
    %1951 = vmatprep.mubr.bf16.mxu0 0
    %1952 = vmatmul.mubr.bf16.gmra.mrb[0].mxu0 %v1171
    %v1953 = vpop.f32.mrb[0].mxu0
    %v1954 = vadd.f32 0.0, %v1953
    %v1955 = vpop.f32.mrb[0].mxu0
    %v1956 = vpop.f32.mrb[0].mxu0
    %v1957 = vadd.f32 0.0, %v1956
    %v1958 = vpop.f32.mrb[0].mxu0
    %1959 = vmatprep.mubr.bf16.mxu0 0
    %1960 = vmatmul.mubr.bf16.gmra.mrb[0].mxu0 %v1174
    %v1961 = vpop.f32.mrb[0].mxu0
    %v1962 = vadd.f32 0.0, %v1961
    %v1963 = vpop.f32.mrb[0].mxu0
    %v1964 = vpop.f32.mrb[0].mxu0
    %v1965 = vadd.f32 0.0, %v1964
    %v1966 = vpop.f32.mrb[0].mxu0
    %1967 = vmatprep.mubr.bf16.mxu0 0
    %1968 = vmatmul.mubr.bf16.gmra.mrb[0].mxu0 %v1177
    %v1969 = vpop.f32.mrb[0].mxu0
    %v1970 = vadd.f32 0.0, %v1969
    %v1971 = vpop.f32.mrb[0].mxu0
    %v1972 = vpop.f32.mrb[0].mxu0
    %v1973 = vadd.f32 0.0, %v1972
    %v1974 = vpop.f32.mrb[0].mxu0
    %1975 = vmatprep.mubr.bf16.mxu0 0
    %1976 = vmatmul.mubr.bf16.gmra.mrb[0].mxu0 %v1180
    %v1977 = vpop.f32.mrb[0].mxu0
    %v1978 = vadd.f32 0.0, %v1977
    %v1979 = vpop.f32.mrb[0].mxu0
    %v1980 = vpop.f32.mrb[0].mxu0
    %v1981 = vadd.f32 0.0, %v1980
    %v1982 = vpop.f32.mrb[0].mxu0
    %1983 = vmatprep.mubr.bf16.mxu0 0
    %1984 = vmatmul.mubr.bf16.gmra.mrb[0].mxu0 %v1183
    %v1985 = vpop.f32.mrb[0].mxu0
    %v1986 = vadd.f32 0.0, %v1985
    %v1987 = vpop.f32.mrb[0].mxu0
    %v1988 = vpop.f32.mrb[0].mxu0
    %v1989 = vadd.f32 0.0, %v1988
    %v1990 = vpop.f32.mrb[0].mxu0
    %1991 = vmatprep.mubr.bf16.mxu0 0
    %1992 = vmatmul.mubr.bf16.gmra.mrb[0].mxu0 %v1186
    %v1993 = vpop.f32.mrb[0].mxu0
    %v1994 = vadd.f32 0.0, %v1993
    %v1995 = vpop.f32.mrb[0].mxu0
    %v1996 = vpop.f32.mrb[0].mxu0
    %v1997 = vadd.f32 0.0, %v1996
    %v1998 = vpop.f32.mrb[0].mxu0
    %1999 = vmatprep.mubr.bf16.mxu0 0
    %2000 = vmatmul.mubr.bf16.gmra.mrb[0].mxu0 %v1189
    %v2001 = vpop.f32.mrb[0].mxu0
    %v2002 = vadd.f32 0.0, %v2001
    %v2003 = vpop.f32.mrb[0].mxu0
    %v2004 = vpop.f32.mrb[0].mxu0
    %v2005 = vadd.f32 0.0, %v2004
    %v2006 = vpop.f32.mrb[0].mxu0
    %2007 = vmatprep.mubr.bf16.mxu0 0
    %2008 = vmatmul.mubr.bf16.gmra.mrb[0].mxu0 %v1192
    %v2009 = vpop.f32.mrb[0].mxu0
    %v2010 = vadd.f32 0.0, %v2009
    %v2011 = vpop.f32.mrb[0].mxu0
    %v2012 = vpop.f32.mrb[0].mxu0
    %v2013 = vadd.f32 0.0, %v2012
    %v2014 = vpop.f32.mrb[0].mxu0
    %2015 = vmatprep.mubr.bf16.mxu0 0
    %2016 = vmatmul.mubr.bf16.gmra.mrb[0].mxu0 %v1195
    %v2017 = vpop.f32.mrb[0].mxu0
    %v2018 = vadd.f32 0.0, %v2017
    %v2019 = vpop.f32.mrb[0].mxu0
    %v2020 = vpop.f32.mrb[0].mxu0
    %v2021 = vadd.f32 0.0, %v2020
    %v2022 = vpop.f32.mrb[0].mxu0
    %2023 = vmatprep.mubr.bf16.mxu0 0
    %2024 = vmatmul.mubr.bf16.gmra.mrb[0].mxu0 %v1198
    %v2025 = vpop.f32.mrb[0].mxu0
    %v2026 = vadd.f32 0.0, %v2025
    %v2027 = vpop.f32.mrb[0].mxu0
    %v2028 = vpop.f32.mrb[0].mxu0
    %v2029 = vadd.f32 0.0, %v2028
    %v2030 = vpop.f32.mrb[0].mxu0
    %2031 = vmatprep.mubr.bf16.mxu0 0
    %2032 = vmatmul.mubr.bf16.gmra.mrb[0].mxu0 %v1201
    %v2033 = vpop.f32.mrb[0].mxu0
    %v2034 = vadd.f32 0.0, %v2033
    %v2035 = vpop.f32.mrb[0].mxu0
    %v2036 = vpop.f32.mrb[0].mxu0
    %v2037 = vadd.f32 0.0, %v2036
    %v2038 = vpop.f32.mrb[0].mxu0
    %2039 = vmatprep.mubr.bf16.mxu0 0
    %2040 = vmatmul.mubr.bf16.gmra.mrb[0].mxu0 %v1204
    %v2041 = vpop.f32.mrb[0].mxu0
    %v2042 = vadd.f32 0.0, %v2041
    %v2043 = vpop.f32.mrb[0].mxu0
    %v2044 = vpop.f32.mrb[0].mxu0
    %v2045 = vadd.f32 0.0, %v2044
    %v2046 = vpop.f32.mrb[0].mxu0
    %2047 = vmatprep.mubr.bf16.mxu0 0
    %2048 = vmatmul.mubr.bf16.gmra.mrb[0].mxu0 %v1207
    %v2049 = vpop.f32.mrb[0].mxu0
    %v2050 = vadd.f32 0.0, %v2049
    %v2051 = vpop.f32.mrb[0].mxu0
    %v2052 = vpop.f32.mrb[0].mxu0
    %v2053 = vadd.f32 0.0, %v2052
    %v2054 = vpop.f32.mrb[0].mxu0
    %2055 = vmatprep.mubr.bf16.mxu0 0
    %2056 = vmatmul.mubr.bf16.gmra.mrb[0].mxu0 %v1210
    %v2057 = vpop.f32.mrb[0].mxu0
    %v2058 = vadd.f32 0.0, %v2057
    %v2059 = vpop.f32.mrb[0].mxu0
    %v2060 = vpop.f32.mrb[0].mxu0
    %v2061 = vadd.f32 0.0, %v2060
    %v2062 = vpop.f32.mrb[0].mxu0
    %2063 = vmatprep.mubr.bf16.mxu0 0
    %2064 = vmatmul.mubr.bf16.gmra.mrb[0].mxu0 %v1213
    %v2065 = vpop.f32.mrb[0].mxu0
    %v2066 = vadd.f32 0.0, %v2065
    %v2067 = vpop.f32.mrb[0].mxu0
    %v2068 = vpop.f32.mrb[0].mxu0
    %v2069 = vadd.f32 0.0, %v2068
    %v2070 = vpop.f32.mrb[0].mxu0
    %2071 = vmatprep.mubr.bf16.mxu0 0
    %2072 = vmatmul.mubr.bf16.gmra.mrb[0].mxu0 %v1216
    %v2073 = vpop.f32.mrb[0].mxu0
    %v2074 = vadd.f32 0.0, %v2073
    %v2075 = vpop.f32.mrb[0].mxu0
    %v2076 = vpop.f32.mrb[0].mxu0
    %v2077 = vadd.f32 0.0, %v2076
    %v2078 = vpop.f32.mrb[0].mxu0
    %2079 = vmatprep.mubr.bf16.mxu0 0
    %2080 = vmatmul.mubr.bf16.gmra.mrb[0].mxu0 %v1219
    %v2081 = vpop.f32.mrb[0].mxu0
    %v2082 = vadd.f32 0.0, %v2081
    %v2083 = vpop.f32.mrb[0].mxu0
    %v2084 = vpop.f32.mrb[0].mxu0
    %v2085 = vadd.f32 0.0, %v2084
    %v2086 = vpop.f32.mrb[0].mxu0
    %2087 = vmatprep.mubr.bf16.mxu0 0
    %2088 = vmatmul.mubr.bf16.gmra.mrb[0].mxu0 %v1222
    %v2089 = vpop.f32.mrb[0].mxu0
    %v2090 = vadd.f32 0.0, %v2089
    %v2091 = vpop.f32.mrb[0].mxu0
    %v2092 = vpop.f32.mrb[0].mxu0
    %v2093 = vadd.f32 0.0, %v2092
    %v2094 = vpop.f32.mrb[0].mxu0
    %2095 = vmatprep.mubr.bf16.mxu0 0
    %2096 = vmatmul.mubr.bf16.gmra.mrb[0].mxu0 %v1225
    %v2097 = vpop.f32.mrb[0].mxu0
    %v2098 = vadd.f32 0.0, %v2097
    %v2099 = vpop.f32.mrb[0].mxu0
    %v2100 = vpop.f32.mrb[0].mxu0
    %v2101 = vadd.f32 0.0, %v2100
    %v2102 = vpop.f32.mrb[0].mxu0
    %2103 = vmatprep.mubr.bf16.mxu0 0
    %2104 = vmatmul.mubr.bf16.gmra.mrb[0].mxu0 %v1228
    %v2105 = vpop.f32.mrb[0].mxu0
    %v2106 = vadd.f32 0.0, %v2105
    %v2107 = vpop.f32.mrb[0].mxu0
    %v2108 = vpop.f32.mrb[0].mxu0
    %v2109 = vadd.f32 0.0, %v2108
    %v2110 = vpop.f32.mrb[0].mxu0
    %2111 = vmatprep.mubr.bf16.mxu0 0
    %2112 = vmatmul.mubr.bf16.gmra.mrb[0].mxu0 %v1231
    %v2113 = vpop.f32.mrb[0].mxu0
    %v2114 = vadd.f32 0.0, %v2113
    %v2115 = vpop.f32.mrb[0].mxu0
    %v2116 = vpop.f32.mrb[0].mxu0
    %v2117 = vadd.f32 0.0, %v2116
    %v2118 = vpop.f32.mrb[0].mxu0
    %2119 = vmatprep.mubr.bf16.mxu0 0
    %2120 = vmatmul.mubr.bf16.gmra.mrb[0].mxu0 %v1234
    %v2121 = vpop.f32.mrb[0].mxu0
    %v2122 = vadd.f32 0.0, %v2121
    %v2123 = vpop.f32.mrb[0].mxu0
    %v2124 = vpop.f32.mrb[0].mxu0
    %v2125 = vadd.f32 0.0, %v2124
    %v2126 = vpop.f32.mrb[0].mxu0
    %2127 = vmatprep.mubr.bf16.mxu0 0
    %2128 = vmatmul.mubr.bf16.gmra.mrb[0].mxu0 %v1237
    %v2129 = vpop.f32.mrb[0].mxu0
    %v2130 = vadd.f32 0.0, %v2129
    %v2131 = vpop.f32.mrb[0].mxu0
    %v2132 = vpop.f32.mrb[0].mxu0
    %v2133 = vadd.f32 0.0, %v2132
    %v2134 = vpop.f32.mrb[0].mxu0
    %2135 = vmatprep.mubr.bf16.mxu0 0
    %2136 = vmatmul.mubr.bf16.gmra.mrb[0].mxu0 %v1240
    %v2137 = vpop.f32.mrb[0].mxu0
    %v2138 = vadd.f32 0.0, %v2137
    %v2139 = vpop.f32.mrb[0].mxu0
    %v2140 = vpop.f32.mrb[0].mxu0
    %v2141 = vadd.f32 0.0, %v2140
    %v2142 = vpop.f32.mrb[0].mxu0
    %2143 = vmatprep.mubr.bf16.mxu0 0
    %2144 = vmatmul.mubr.bf16.gmra.mrb[0].mxu0 %v1243
    %v2145 = vpop.f32.mrb[0].mxu0
    %v2146 = vadd.f32 0.0, %v2145
    %v2147 = vpop.f32.mrb[0].mxu0
    %v2148 = vpop.f32.mrb[0].mxu0
    %v2149 = vadd.f32 0.0, %v2148
    %v2150 = vpop.f32.mrb[0].mxu0
    %2151 = vmatprep.mubr.bf16.mxu0 0
    %2152 = vmatmul.mubr.bf16.gmra.mrb[0].mxu0 %v1246
    %v2153 = vpop.f32.mrb[0].mxu0
    %v2154 = vadd.f32 0.0, %v2153
    %v2155 = vpop.f32.mrb[0].mxu0
    %v2156 = vpop.f32.mrb[0].mxu0
    %v2157 = vadd.f32 0.0, %v2156
    %v2158 = vpop.f32.mrb[0].mxu0
    %2159 = vmatprep.mubr.bf16.mxu0 0
    %2160 = vmatmul.mubr.bf16.gmra.mrb[0].mxu0 %v1249
    %v2161 = vpop.f32.mrb[0].mxu0
    %v2162 = vadd.f32 0.0, %v2161
    %v2163 = vpop.f32.mrb[0].mxu0
    %v2164 = vpop.f32.mrb[0].mxu0
    %v2165 = vadd.f32 0.0, %v2164
    %v2166 = vpop.f32.mrb[0].mxu0
    %2167 = vmatprep.mubr.bf16.mxu0 0
    %2168 = vmatmul.mubr.bf16.gmra.mrb[0].mxu0 %v1252
    %v2169 = vpop.f32.mrb[0].mxu0
    %v2170 = vadd.f32 0.0, %v2169
    %v2171 = vpop.f32.mrb[0].mxu0
    %v2172 = vpop.f32.mrb[0].mxu0
    %v2173 = vadd.f32 0.0, %v2172
    %v2174 = vpop.f32.mrb[0].mxu0
    %2175 = vmatprep.mubr.bf16.mxu0 0
    %2176 = vmatmul.mubr.bf16.gmra.mrb[0].mxu0 %v1255
    %v2177 = vpop.f32.mrb[0].mxu0
    %v2178 = vadd.f32 0.0, %v2177
    %v2179 = vpop.f32.mrb[0].mxu0
    %v2180 = vpop.f32.mrb[0].mxu0
    %v2181 = vadd.f32 0.0, %v2180
    %v2182 = vpop.f32.mrb[0].mxu0
    %2183 = vmatprep.mubr.bf16.mxu0 0
    %2184 = vmatmul.mubr.bf16.gmra.mrb[0].mxu0 %v1258
    %v2185 = vpop.f32.mrb[0].mxu0
    %v2186 = vadd.f32 0.0, %v2185
    %v2187 = vpop.f32.mrb[0].mxu0
    %v2188 = vpop.f32.mrb[0].mxu0
    %v2189 = vadd.f32 0.0, %v2188
    %v2190 = vpop.f32.mrb[0].mxu0
    %2191 = vmatprep.mubr.bf16.mxu0 0
    %2192 = vmatmul.mubr.bf16.gmra.mrb[0].mxu0 %v1261
    %v2193 = vpop.f32.mrb[0].mxu0
    %v2194 = vadd.f32 0.0, %v2193
    %v2195 = vpop.f32.mrb[0].mxu0
    %v2196 = vpop.f32.mrb[0].mxu0
    %v2197 = vadd.f32 0.0, %v2196
    %v2198 = vpop.f32.mrb[0].mxu0
    %2199 = vmatprep.mubr.bf16.mxu0 0
    %2200 = vmatmul.mubr.bf16.gmra.mrb[0].mxu0 %v1264
    %v2201 = vpop.f32.mrb[0].mxu0
    %v2202 = vadd.f32 0.0, %v2201
    %v2203 = vpop.f32.mrb[0].mxu0
    %v2204 = vpop.f32.mrb[0].mxu0
    %v2205 = vadd.f32 0.0, %v2204
    %v2206 = vpop.f32.mrb[0].mxu0
    %2207 = vmatprep.mubr.bf16.mxu0 0
    %2208 = vmatmul.mubr.bf16.gmra.mrb[0].mxu0 %v1267
    %v2209 = vpop.f32.mrb[0].mxu0
    %v2210 = vadd.f32 0.0, %v2209
    %v2211 = vpop.f32.mrb[0].mxu0
    %v2212 = vpop.f32.mrb[0].mxu0
    %v2213 = vadd.f32 0.0, %v2212
    %v2214 = vpop.f32.mrb[0].mxu0
    %2215 = vmatprep.mubr.bf16.mxu0 0
    %2216 = vmatmul.mubr.bf16.gmra.mrb[0].mxu0 %v1270
    %v2217 = vpop.f32.mrb[0].mxu0
    %v2218 = vadd.f32 0.0, %v2217
    %v2219 = vpop.f32.mrb[0].mxu0
    %v2220 = vpop.f32.mrb[0].mxu0
    %v2221 = vadd.f32 0.0, %v2220
    %v2222 = vpop.f32.mrb[0].mxu0
    %2223 = vmatprep.mubr.bf16.mxu0 0
    %2224 = vmatmul.mubr.bf16.gmra.mrb[0].mxu0 %v1273
    %v2225 = vpop.f32.mrb[0].mxu0
    %v2226 = vadd.f32 0.0, %v2225
    %v2227 = vpop.f32.mrb[0].mxu0
    %v2228 = vpop.f32.mrb[0].mxu0
    %v2229 = vadd.f32 0.0, %v2228
    %v2230 = vpop.f32.mrb[0].mxu0
    %2231 = vmatprep.mubr.bf16.mxu0 0
    %2232 = vmatmul.mubr.bf16.gmra.mrb[0].mxu0 %v1276
    %v2233 = vpop.f32.mrb[0].mxu0
    %v2234 = vadd.f32 0.0, %v2233
    %v2235 = vpop.f32.mrb[0].mxu0
    %v2236 = vpop.f32.mrb[0].mxu0
    %v2237 = vadd.f32 0.0, %v2236
    %v2238 = vpop.f32.mrb[0].mxu0
    %2239 = vmatprep.mubr.bf16.mxu0 0
    %2240 = vmatmul.mubr.bf16.gmra.mrb[0].mxu0 %v1279
    %v2241 = vpop.f32.mrb[0].mxu0
    %v2242 = vadd.f32 0.0, %v2241
    %v2243 = vpop.f32.mrb[0].mxu0
    %v2244 = vpop.f32.mrb[0].mxu0
    %v2245 = vadd.f32 0.0, %v2244
    %v2246 = vpop.f32.mrb[0].mxu0
    %2247 = vmatprep.mubr.bf16.mxu0 0
    %2248 = vmatmul.mubr.bf16.gmra.mrb[0].mxu0 %v1282
    %v2249 = vpop.f32.mrb[0].mxu0
    %v2250 = vadd.f32 0.0, %v2249
    %v2251 = vpop.f32.mrb[0].mxu0
    %v2252 = vpop.f32.mrb[0].mxu0
    %v2253 = vadd.f32 0.0, %v2252
    %v2254 = vpop.f32.mrb[0].mxu0
    %2255 = vmatprep.mubr.bf16.mxu0 0
    %2256 = vmatmul.mubr.bf16.gmra.mrb[0].mxu0 %v1285
    %v2257 = vpop.f32.mrb[0].mxu0
    %v2258 = vadd.f32 0.0, %v2257
    %v2259 = vpop.f32.mrb[0].mxu0
    %v2260 = vpop.f32.mrb[0].mxu0
    %v2261 = vadd.f32 0.0, %v2260
    %v2262 = vpop.f32.mrb[0].mxu0
    %2263 = vmatprep.mubr.bf16.mxu0 0
    %2264 = vmatmul.mubr.bf16.gmra.mrb[0].mxu0 %v1288
    %v2265 = vpop.f32.mrb[0].mxu0
    %v2266 = vadd.f32 0.0, %v2265
    %v2267 = vpop.f32.mrb[0].mxu0
    %v2268 = vpop.f32.mrb[0].mxu0
    %v2269 = vadd.f32 0.0, %v2268
    %v2270 = vpop.f32.mrb[0].mxu0
    %2271 = vmatprep.mubr.bf16.mxu0 0
    %2272 = vmatmul.mubr.bf16.gmra.mrb[0].mxu0 %v1291
    %v2273 = vpop.f32.mrb[0].mxu0
    %v2274 = vadd.f32 0.0, %v2273
    %v2275 = vpop.f32.mrb[0].mxu0
    %v2276 = vpop.f32.mrb[0].mxu0
    %v2277 = vadd.f32 0.0, %v2276
    %v2278 = vpop.f32.mrb[0].mxu0
    %2279 = vmatprep.mubr.bf16.mxu0 0
    %2280 = vmatmul.mubr.bf16.gmra.mrb[0].mxu0 %v1294
    %v2281 = vpop.f32.mrb[0].mxu0
    %v2282 = vadd.f32 0.0, %v2281
    %v2283 = vpop.f32.mrb[0].mxu0
    %v2284 = vpop.f32.mrb[0].mxu0
    %v2285 = vadd.f32 0.0, %v2284
    %v2286 = vpop.f32.mrb[0].mxu0
    %2287 = vmatprep.mubr.bf16.mxu0 0
    %2288 = vmatmul.mubr.bf16.gmra.mrb[0].mxu0 %v1297
    %v2289 = vpop.f32.mrb[0].mxu0
    %v2290 = vadd.f32 0.0, %v2289
    %v2291 = vpop.f32.mrb[0].mxu0
    %v2292 = vpop.f32.mrb[0].mxu0
    %v2293 = vadd.f32 0.0, %v2292
    %v2294 = vpop.f32.mrb[0].mxu0
    %2295 = vmatprep.mubr.bf16.mxu0 0
    %2296 = vmatmul.mubr.bf16.gmra.mrb[0].mxu0 %v1300
    %v2297 = vpop.f32.mrb[0].mxu0
    %v2298 = vadd.f32 0.0, %v2297
    %v2299 = vpop.f32.mrb[0].mxu0
    %v2300 = vpop.f32.mrb[0].mxu0
    %v2301 = vadd.f32 0.0, %v2300
    %v2302 = vpop.f32.mrb[0].mxu0
    %2303 = vmatprep.mubr.bf16.mxu0 0
    %2304 = vmatmul.mubr.bf16.gmra.mrb[0].mxu0 %v1303
    %v2305 = vpop.f32.mrb[0].mxu0
    %v2306 = vadd.f32 0.0, %v2305
    %v2307 = vpop.f32.mrb[0].mxu0
    %v2308 = vpop.f32.mrb[0].mxu0
    %v2309 = vadd.f32 0.0, %v2308
    %v2310 = vpop.f32.mrb[0].mxu0
    %2311 = vmatprep.mubr.bf16.mxu0 0
    %2312 = vmatmul.mubr.bf16.gmra.mrb[0].mxu0 %v1306
    %v2313 = vpop.f32.mrb[0].mxu0
    %v2314 = vadd.f32 0.0, %v2313
    %v2315 = vpop.f32.mrb[0].mxu0
    %v2316 = vpop.f32.mrb[0].mxu0
    %v2317 = vadd.f32 0.0, %v2316
    %v2318 = vpop.f32.mrb[0].mxu0
    %2319 = vmatprep.mubr.bf16.mxu0 0
    %2320 = vmatmul.mubr.bf16.gmra.mrb[0].mxu0 %v1309
    %v2321 = vpop.f32.mrb[0].mxu0
    %v2322 = vadd.f32 0.0, %v2321
    %v2323 = vpop.f32.mrb[0].mxu0
    %v2324 = vpop.f32.mrb[0].mxu0
    %v2325 = vadd.f32 0.0, %v2324
    %v2326 = vpop.f32.mrb[0].mxu0
    %2327 = vmatprep.mubr.bf16.mxu0 0
    %2328 = vmatmul.mubr.bf16.gmra.mrb[0].mxu0 %v1312
    %v2329 = vpop.f32.mrb[0].mxu0
    %v2330 = vadd.f32 0.0, %v2329
    %v2331 = vpop.f32.mrb[0].mxu0
    %v2332 = vpop.f32.mrb[0].mxu0
    %v2333 = vadd.f32 0.0, %v2332
    %v2334 = vpop.f32.mrb[0].mxu0
    %2335 = vmatprep.mubr.bf16.mxu0 0
    %2336 = vmatmul.mubr.bf16.gmra.mrb[0].mxu0 %v1315
    %v2337 = vpop.f32.mrb[0].mxu0
    %v2338 = vadd.f32 0.0, %v2337
    %v2339 = vpop.f32.mrb[0].mxu0
    %v2340 = vpop.f32.mrb[0].mxu0
    %v2341 = vadd.f32 0.0, %v2340
    %v2342 = vpop.f32.mrb[0].mxu0
    %2343 = vmatprep.mubr.bf16.mxu0 0
    %2344 = vmatmul.mubr.bf16.gmra.mrb[0].mxu0 %v1318
    %v2345 = vpop.f32.mrb[0].mxu0
    %v2346 = vadd.f32 0.0, %v2345
    %v2347 = vpop.f32.mrb[0].mxu0
    %v2348 = vpop.f32.mrb[0].mxu0
    %v2349 = vadd.f32 0.0, %v2348
    %v2350 = vpop.f32.mrb[0].mxu0
    %2351 = vmatprep.mubr.bf16.mxu0 0
    %2352 = vmatmul.mubr.bf16.gmra.mrb[0].mxu0 %v1321
    %v2353 = vpop.f32.mrb[0].mxu0
    %v2354 = vadd.f32 0.0, %v2353
    %v2355 = vpop.f32.mrb[0].mxu0
    %v2356 = vpop.f32.mrb[0].mxu0
    %v2357 = vadd.f32 0.0, %v2356
    %v2358 = vpop.f32.mrb[0].mxu0
    %2359 = vmatprep.mubr.bf16.mxu0 0
    %2360 = vmatmul.mubr.bf16.gmra.mrb[0].mxu0 %v1324
    %v2361 = vpop.f32.mrb[0].mxu0
    %v2362 = vadd.f32 0.0, %v2361
    %v2363 = vpop.f32.mrb[0].mxu0
    %v2364 = vpop.f32.mrb[0].mxu0
    %v2365 = vadd.f32 0.0, %v2364
    %v2366 = vpop.f32.mrb[0].mxu0
    %2367 = vmatprep.mubr.bf16.mxu0 0
    %2368 = vmatmul.mubr.bf16.gmra.mrb[0].mxu0 %v1327
    %v2369 = vpop.f32.mrb[0].mxu0
    %v2370 = vadd.f32 0.0, %v2369
    %v2371 = vpop.f32.mrb[0].mxu0
    %v2372 = vpop.f32.mrb[0].mxu0
    %v2373 = vadd.f32 0.0, %v2372
    %v2374 = vpop.f32.mrb[0].mxu0
    %2375 = vmatprep.mubr.bf16.mxu0 0
    %2376 = vmatmul.mubr.bf16.gmra.mrb[0].mxu0 %v1330
    %v2377 = vpop.f32.mrb[0].mxu0
    %v2378 = vadd.f32 0.0, %v2377
    %v2379 = vpop.f32.mrb[0].mxu0
    %v2380 = vpop.f32.mrb[0].mxu0
    %v2381 = vadd.f32 0.0, %v2380
    %v2382 = vpop.f32.mrb[0].mxu0
    %2383 = vmatprep.mubr.bf16.mxu0 0
    %2384 = vmatmul.mubr.bf16.gmra.mrb[0].mxu0 %v1333
    %v2385 = vpop.f32.mrb[0].mxu0
    %v2386 = vadd.f32 0.0, %v2385
    %v2387 = vpop.f32.mrb[0].mxu0
    %v2388 = vpop.f32.mrb[0].mxu0
    %v2389 = vadd.f32 0.0, %v2388
    %v2390 = vpop.f32.mrb[0].mxu0
    %2391 = vdwg.mxu0
    %vm2392 = vcmask 261120
    %v2393 = vsel %vm2392, %v1370, -inf
    %v2394 = vsel %vm2392, %v1402, -inf
    %v2395 = vmax.f32 %v2393, %v2394
    %v2396 = vsel %vm2392, %v1434, -inf
    %v2397 = vmax.f32 %v2395, %v2396
    %v2398 = vsel %vm2392, %v1466, -inf
    %v2399 = vmax.f32 %v2397, %v2398
    %v2400 = vsel %vm2392, %v1373, -inf
    %v2401 = vsel %vm2392, %v1405, -inf
    %v2402 = vmax.f32 %v2400, %v2401
    %v2403 = vsel %vm2392, %v1437, -inf
    %v2404 = vmax.f32 %v2402, %v2403
    %v2405 = vsel %vm2392, %v1469, -inf
    %v2406 = vmax.f32 %v2404, %v2405
    %v2407 = vsel %vm2392, %v1378, -inf
    %v2408 = vsel %vm2392, %v1410, -inf
    %v2409 = vmax.f32 %v2407, %v2408
    %v2410 = vsel %vm2392, %v1442, -inf
    %v2411 = vmax.f32 %v2409, %v2410
    %v2412 = vsel %vm2392, %v1474, -inf
    %v2413 = vmax.f32 %v2411, %v2412
    %v2414 = vsel %vm2392, %v1381, -inf
    %v2415 = vsel %vm2392, %v1413, -inf
    %v2416 = vmax.f32 %v2414, %v2415
    %v2417 = vsel %vm2392, %v1445, -inf
    %v2418 = vmax.f32 %v2416, %v2417
    %v2419 = vsel %vm2392, %v1477, -inf
    %v2420 = vmax.f32 %v2418, %v2419
    %v2421 = vsel %vm2392, %v1386, -inf
    %v2422 = vsel %vm2392, %v1418, -inf
    %v2423 = vmax.f32 %v2421, %v2422
    %v2424 = vsel %vm2392, %v1450, -inf
    %v2425 = vmax.f32 %v2423, %v2424
    %v2426 = vsel %vm2392, %v1482, -inf
    %v2427 = vmax.f32 %v2425, %v2426
    %v2428 = vsel %vm2392, %v1389, -inf
    %v2429 = vsel %vm2392, %v1421, -inf
    %v2430 = vmax.f32 %v2428, %v2429
    %v2431 = vsel %vm2392, %v1453, -inf
    %v2432 = vmax.f32 %v2430, %v2431
    %v2433 = vsel %vm2392, %v1485, -inf
    %v2434 = vmax.f32 %v2432, %v2433
    %v2435 = vsel %vm2392, %v1394, -inf
    %v2436 = vsel %vm2392, %v1426, -inf
    %v2437 = vmax.f32 %v2435, %v2436
    %v2438 = vsel %vm2392, %v1458, -inf
    %v2439 = vmax.f32 %v2437, %v2438
    %v2440 = vsel %vm2392, %v1490, -inf
    %v2441 = vmax.f32 %v2439, %v2440
    %v2442 = vsel %vm2392, %v1397, -inf
    %v2443 = vsel %vm2392, %v1429, -inf
    %v2444 = vmax.f32 %v2442, %v2443
    %v2445 = vsel %vm2392, %v1461, -inf
    %v2446 = vmax.f32 %v2444, %v2445
    %v2447 = vsel %vm2392, %v1493, -inf
    %v2448 = vmax.f32 %v2446, %v2447
    %v2449 = vsel %vm2392, %v1498, -inf
    %v2450 = vsel %vm2392, %v1530, -inf
    %v2451 = vmax.f32 %v2449, %v2450
    %v2452 = vsel %vm2392, %v1562, -inf
    %v2453 = vmax.f32 %v2451, %v2452
    %v2454 = vsel %vm2392, %v1594, -inf
    %v2455 = vmax.f32 %v2453, %v2454
    %v2456 = vsel %vm2392, %v1501, -inf
    %v2457 = vsel %vm2392, %v1533, -inf
    %v2458 = vmax.f32 %v2456, %v2457
    %v2459 = vsel %vm2392, %v1565, -inf
    %v2460 = vmax.f32 %v2458, %v2459
    %v2461 = vsel %vm2392, %v1597, -inf
    %v2462 = vmax.f32 %v2460, %v2461
    %v2463 = vsel %vm2392, %v1506, -inf
    %v2464 = vsel %vm2392, %v1538, -inf
    %v2465 = vmax.f32 %v2463, %v2464
    %v2466 = vsel %vm2392, %v1570, -inf
    %v2467 = vmax.f32 %v2465, %v2466
    %v2468 = vsel %vm2392, %v1602, -inf
    %v2469 = vmax.f32 %v2467, %v2468
    %v2470 = vsel %vm2392, %v1509, -inf
    %v2471 = vsel %vm2392, %v1541, -inf
    %v2472 = vmax.f32 %v2470, %v2471
    %v2473 = vsel %vm2392, %v1573, -inf
    %v2474 = vmax.f32 %v2472, %v2473
    %v2475 = vsel %vm2392, %v1605, -inf
    %v2476 = vmax.f32 %v2474, %v2475
    %v2477 = vsel %vm2392, %v1514, -inf
    %v2478 = vsel %vm2392, %v1546, -inf
    %v2479 = vmax.f32 %v2477, %v2478
    %v2480 = vsel %vm2392, %v1578, -inf
    %v2481 = vmax.f32 %v2479, %v2480
    %v2482 = vsel %vm2392, %v1610, -inf
    %v2483 = vmax.f32 %v2481, %v2482
    %v2484 = vsel %vm2392, %v1517, -inf
    %v2485 = vsel %vm2392, %v1549, -inf
    %v2486 = vmax.f32 %v2484, %v2485
    %v2487 = vsel %vm2392, %v1581, -inf
    %v2488 = vmax.f32 %v2486, %v2487
    %v2489 = vsel %vm2392, %v1613, -inf
    %v2490 = vmax.f32 %v2488, %v2489
    %v2491 = vsel %vm2392, %v1522, -inf
    %v2492 = vsel %vm2392, %v1554, -inf
    %v2493 = vmax.f32 %v2491, %v2492
    %v2494 = vsel %vm2392, %v1586, -inf
    %v2495 = vmax.f32 %v2493, %v2494
    %v2496 = vsel %vm2392, %v1618, -inf
    %v2497 = vmax.f32 %v2495, %v2496
    %v2498 = vsel %vm2392, %v1525, -inf
    %v2499 = vsel %vm2392, %v1557, -inf
    %v2500 = vmax.f32 %v2498, %v2499
    %v2501 = vsel %vm2392, %v1589, -inf
    %v2502 = vmax.f32 %v2500, %v2501
    %v2503 = vsel %vm2392, %v1621, -inf
    %v2504 = vmax.f32 %v2502, %v2503
    %v2505 = vsel %vm2392, %v1626, -inf
    %v2506 = vsel %vm2392, %v1658, -inf
    %v2507 = vmax.f32 %v2505, %v2506
    %v2508 = vsel %vm2392, %v1690, -inf
    %v2509 = vmax.f32 %v2507, %v2508
    %v2510 = vsel %vm2392, %v1722, -inf
    %v2511 = vmax.f32 %v2509, %v2510
    %v2512 = vsel %vm2392, %v1629, -inf
    %v2513 = vsel %vm2392, %v1661, -inf
    %v2514 = vmax.f32 %v2512, %v2513
    %v2515 = vsel %vm2392, %v1693, -inf
    %v2516 = vmax.f32 %v2514, %v2515
    %v2517 = vsel %vm2392, %v1725, -inf
    %v2518 = vmax.f32 %v2516, %v2517
    %v2519 = vsel %vm2392, %v1634, -inf
    %v2520 = vsel %vm2392, %v1666, -inf
    %v2521 = vmax.f32 %v2519, %v2520
    %v2522 = vsel %vm2392, %v1698, -inf
    %v2523 = vmax.f32 %v2521, %v2522
    %v2524 = vsel %vm2392, %v1730, -inf
    %v2525 = vmax.f32 %v2523, %v2524
    %v2526 = vsel %vm2392, %v1637, -inf
    %v2527 = vsel %vm2392, %v1669, -inf
    %v2528 = vmax.f32 %v2526, %v2527
    %v2529 = vsel %vm2392, %v1701, -inf
    %v2530 = vmax.f32 %v2528, %v2529
    %v2531 = vsel %vm2392, %v1733, -inf
    %v2532 = vmax.f32 %v2530, %v2531
    %v2533 = vsel %vm2392, %v1642, -inf
    %v2534 = vsel %vm2392, %v1674, -inf
    %v2535 = vmax.f32 %v2533, %v2534
    %v2536 = vsel %vm2392, %v1706, -inf
    %v2537 = vmax.f32 %v2535, %v2536
    %v2538 = vsel %vm2392, %v1738, -inf
    %v2539 = vmax.f32 %v2537, %v2538
    %v2540 = vsel %vm2392, %v1645, -inf
    %v2541 = vsel %vm2392, %v1677, -inf
    %v2542 = vmax.f32 %v2540, %v2541
    %v2543 = vsel %vm2392, %v1709, -inf
    %v2544 = vmax.f32 %v2542, %v2543
    %v2545 = vsel %vm2392, %v1741, -inf
    %v2546 = vmax.f32 %v2544, %v2545
    %v2547 = vsel %vm2392, %v1650, -inf
    %v2548 = vsel %vm2392, %v1682, -inf
    %v2549 = vmax.f32 %v2547, %v2548
    %v2550 = vsel %vm2392, %v1714, -inf
    %v2551 = vmax.f32 %v2549, %v2550
    %v2552 = vsel %vm2392, %v1746, -inf
    %v2553 = vmax.f32 %v2551, %v2552
    %v2554 = vsel %vm2392, %v1653, -inf
    %v2555 = vsel %vm2392, %v1685, -inf
    %v2556 = vmax.f32 %v2554, %v2555
    %v2557 = vsel %vm2392, %v1717, -inf
    %v2558 = vmax.f32 %v2556, %v2557
    %v2559 = vsel %vm2392, %v1749, -inf
    %v2560 = vmax.f32 %v2558, %v2559
    %v2561 = vsel %vm2392, %v1754, -inf
    %v2562 = vsel %vm2392, %v1786, -inf
    %v2563 = vmax.f32 %v2561, %v2562
    %v2564 = vsel %vm2392, %v1818, -inf
    %v2565 = vmax.f32 %v2563, %v2564
    %v2566 = vsel %vm2392, %v1850, -inf
    %v2567 = vmax.f32 %v2565, %v2566
    %v2568 = vsel %vm2392, %v1757, -inf
    %v2569 = vsel %vm2392, %v1789, -inf
    %v2570 = vmax.f32 %v2568, %v2569
    %v2571 = vsel %vm2392, %v1821, -inf
    %v2572 = vmax.f32 %v2570, %v2571
    %v2573 = vsel %vm2392, %v1853, -inf
    %v2574 = vmax.f32 %v2572, %v2573
    %v2575 = vsel %vm2392, %v1762, -inf
    %v2576 = vsel %vm2392, %v1794, -inf
    %v2577 = vmax.f32 %v2575, %v2576
    %v2578 = vsel %vm2392, %v1826, -inf
    %v2579 = vmax.f32 %v2577, %v2578
    %v2580 = vsel %vm2392, %v1858, -inf
    %v2581 = vmax.f32 %v2579, %v2580
    %v2582 = vsel %vm2392, %v1765, -inf
    %v2583 = vsel %vm2392, %v1797, -inf
    %v2584 = vmax.f32 %v2582, %v2583
    %v2585 = vsel %vm2392, %v1829, -inf
    %v2586 = vmax.f32 %v2584, %v2585
    %v2587 = vsel %vm2392, %v1861, -inf
    %v2588 = vmax.f32 %v2586, %v2587
    %v2589 = vsel %vm2392, %v1770, -inf
    %v2590 = vsel %vm2392, %v1802, -inf
    %v2591 = vmax.f32 %v2589, %v2590
    %v2592 = vsel %vm2392, %v1834, -inf
    %v2593 = vmax.f32 %v2591, %v2592
    %v2594 = vsel %vm2392, %v1866, -inf
    %v2595 = vmax.f32 %v2593, %v2594
    %v2596 = vsel %vm2392, %v1773, -inf
    %v2597 = vsel %vm2392, %v1805, -inf
    %v2598 = vmax.f32 %v2596, %v2597
    %v2599 = vsel %vm2392, %v1837, -inf
    %v2600 = vmax.f32 %v2598, %v2599
    %v2601 = vsel %vm2392, %v1869, -inf
    %v2602 = vmax.f32 %v2600, %v2601
    %v2603 = vsel %vm2392, %v1778, -inf
    %v2604 = vsel %vm2392, %v1810, -inf
    %v2605 = vmax.f32 %v2603, %v2604
    %v2606 = vsel %vm2392, %v1842, -inf
    %v2607 = vmax.f32 %v2605, %v2606
    %v2608 = vsel %vm2392, %v1874, -inf
    %v2609 = vmax.f32 %v2607, %v2608
    %v2610 = vsel %vm2392, %v1781, -inf
    %v2611 = vsel %vm2392, %v1813, -inf
    %v2612 = vmax.f32 %v2610, %v2611
    %v2613 = vsel %vm2392, %v1845, -inf
    %v2614 = vmax.f32 %v2612, %v2613
    %v2615 = vsel %vm2392, %v1877, -inf
    %v2616 = vmax.f32 %v2614, %v2615
    %v2617 = vsel %vm2392, %v1882, -inf
    %v2618 = vsel %vm2392, %v1914, -inf
    %v2619 = vmax.f32 %v2617, %v2618
    %v2620 = vsel %vm2392, %v1946, -inf
    %v2621 = vmax.f32 %v2619, %v2620
    %v2622 = vsel %vm2392, %v1978, -inf
    %v2623 = vmax.f32 %v2621, %v2622
    %v2624 = vsel %vm2392, %v1885, -inf
    %v2625 = vsel %vm2392, %v1917, -inf
    %v2626 = vmax.f32 %v2624, %v2625
    %v2627 = vsel %vm2392, %v1949, -inf
    %v2628 = vmax.f32 %v2626, %v2627
    %v2629 = vsel %vm2392, %v1981, -inf
    %v2630 = vmax.f32 %v2628, %v2629
    %v2631 = vsel %vm2392, %v1890, -inf
    %v2632 = vsel %vm2392, %v1922, -inf
    %v2633 = vmax.f32 %v2631, %v2632
    %v2634 = vsel %vm2392, %v1954, -inf
    %v2635 = vmax.f32 %v2633, %v2634
    %v2636 = vsel %vm2392, %v1986, -inf
    %v2637 = vmax.f32 %v2635, %v2636
    %v2638 = vsel %vm2392, %v1893, -inf
    %v2639 = vsel %vm2392, %v1925, -inf
    %v2640 = vmax.f32 %v2638, %v2639
    %v2641 = vsel %vm2392, %v1957, -inf
    %v2642 = vmax.f32 %v2640, %v2641
    %v2643 = vsel %vm2392, %v1989, -inf
    %v2644 = vmax.f32 %v2642, %v2643
    %v2645 = vsel %vm2392, %v1898, -inf
    %v2646 = vsel %vm2392, %v1930, -inf
    %v2647 = vmax.f32 %v2645, %v2646
    %v2648 = vsel %vm2392, %v1962, -inf
    %v2649 = vmax.f32 %v2647, %v2648
    %v2650 = vsel %vm2392, %v1994, -inf
    %v2651 = vmax.f32 %v2649, %v2650
    %v2652 = vsel %vm2392, %v1901, -inf
    %v2653 = vsel %vm2392, %v1933, -inf
    %v2654 = vmax.f32 %v2652, %v2653
    %v2655 = vsel %vm2392, %v1965, -inf
    %v2656 = vmax.f32 %v2654, %v2655
    %v2657 = vsel %vm2392, %v1997, -inf
    %v2658 = vmax.f32 %v2656, %v2657
    %v2659 = vsel %vm2392, %v1906, -inf
    %v2660 = vsel %vm2392, %v1938, -inf
    %v2661 = vmax.f32 %v2659, %v2660
    %v2662 = vsel %vm2392, %v1970, -inf
    %v2663 = vmax.f32 %v2661, %v2662
    %v2664 = vsel %vm2392, %v2002, -inf
    %v2665 = vmax.f32 %v2663, %v2664
    %v2666 = vsel %vm2392, %v1909, -inf
    %v2667 = vsel %vm2392, %v1941, -inf
    %v2668 = vmax.f32 %v2666, %v2667
    %v2669 = vsel %vm2392, %v1973, -inf
    %v2670 = vmax.f32 %v2668, %v2669
    %v2671 = vsel %vm2392, %v2005, -inf
    %v2672 = vmax.f32 %v2670, %v2671
    %v2673 = vsel %vm2392, %v2010, -inf
    %v2674 = vsel %vm2392, %v2042, -inf
    %v2675 = vmax.f32 %v2673, %v2674
    %v2676 = vsel %vm2392, %v2074, -inf
    %v2677 = vmax.f32 %v2675, %v2676
    %v2678 = vsel %vm2392, %v2106, -inf
    %v2679 = vmax.f32 %v2677, %v2678
    %v2680 = vsel %vm2392, %v2013, -inf
    %v2681 = vsel %vm2392, %v2045, -inf
    %v2682 = vmax.f32 %v2680, %v2681
    %v2683 = vsel %vm2392, %v2077, -inf
    %v2684 = vmax.f32 %v2682, %v2683
    %v2685 = vsel %vm2392, %v2109, -inf
    %v2686 = vmax.f32 %v2684, %v2685
    %v2687 = vsel %vm2392, %v2018, -inf
    %v2688 = vsel %vm2392, %v2050, -inf
    %v2689 = vmax.f32 %v2687, %v2688
    %v2690 = vsel %vm2392, %v2082, -inf
    %v2691 = vmax.f32 %v2689, %v2690
    %v2692 = vsel %vm2392, %v2114, -inf
    %v2693 = vmax.f32 %v2691, %v2692
    %v2694 = vsel %vm2392, %v2021, -inf
    %v2695 = vsel %vm2392, %v2053, -inf
    %v2696 = vmax.f32 %v2694, %v2695
    %v2697 = vsel %vm2392, %v2085, -inf
    %v2698 = vmax.f32 %v2696, %v2697
    %v2699 = vsel %vm2392, %v2117, -inf
    %v2700 = vmax.f32 %v2698, %v2699
    %v2701 = vsel %vm2392, %v2026, -inf
    %v2702 = vsel %vm2392, %v2058, -inf
    %v2703 = vmax.f32 %v2701, %v2702
    %v2704 = vsel %vm2392, %v2090, -inf
    %v2705 = vmax.f32 %v2703, %v2704
    %v2706 = vsel %vm2392, %v2122, -inf
    %v2707 = vmax.f32 %v2705, %v2706
    %v2708 = vsel %vm2392, %v2029, -inf
    %v2709 = vsel %vm2392, %v2061, -inf
    %v2710 = vmax.f32 %v2708, %v2709
    %v2711 = vsel %vm2392, %v2093, -inf
    %v2712 = vmax.f32 %v2710, %v2711
    %v2713 = vsel %vm2392, %v2125, -inf
    %v2714 = vmax.f32 %v2712, %v2713
    %v2715 = vsel %vm2392, %v2034, -inf
    %v2716 = vsel %vm2392, %v2066, -inf
    %v2717 = vmax.f32 %v2715, %v2716
    %v2718 = vsel %vm2392, %v2098, -inf
    %v2719 = vmax.f32 %v2717, %v2718
    %v2720 = vsel %vm2392, %v2130, -inf
    %v2721 = vmax.f32 %v2719, %v2720
    %v2722 = vsel %vm2392, %v2037, -inf
    %v2723 = vsel %vm2392, %v2069, -inf
    %v2724 = vmax.f32 %v2722, %v2723
    %v2725 = vsel %vm2392, %v2101, -inf
    %v2726 = vmax.f32 %v2724, %v2725
    %v2727 = vsel %vm2392, %v2133, -inf
    %v2728 = vmax.f32 %v2726, %v2727
    %v2729 = vsel %vm2392, %v2138, -inf
    %v2730 = vsel %vm2392, %v2170, -inf
    %v2731 = vmax.f32 %v2729, %v2730
    %v2732 = vsel %vm2392, %v2202, -inf
    %v2733 = vmax.f32 %v2731, %v2732
    %v2734 = vsel %vm2392, %v2234, -inf
    %v2735 = vmax.f32 %v2733, %v2734
    %v2736 = vsel %vm2392, %v2141, -inf
    %v2737 = vsel %vm2392, %v2173, -inf
    %v2738 = vmax.f32 %v2736, %v2737
    %v2739 = vsel %vm2392, %v2205, -inf
    %v2740 = vmax.f32 %v2738, %v2739
    %v2741 = vsel %vm2392, %v2237, -inf
    %v2742 = vmax.f32 %v2740, %v2741
    %v2743 = vsel %vm2392, %v2146, -inf
    %v2744 = vsel %vm2392, %v2178, -inf
    %v2745 = vmax.f32 %v2743, %v2744
    %v2746 = vsel %vm2392, %v2210, -inf
    %v2747 = vmax.f32 %v2745, %v2746
    %v2748 = vsel %vm2392, %v2242, -inf
    %v2749 = vmax.f32 %v2747, %v2748
    %v2750 = vsel %vm2392, %v2149, -inf
    %v2751 = vsel %vm2392, %v2181, -inf
    %v2752 = vmax.f32 %v2750, %v2751
    %v2753 = vsel %vm2392, %v2213, -inf
    %v2754 = vmax.f32 %v2752, %v2753
    %v2755 = vsel %vm2392, %v2245, -inf
    %v2756 = vmax.f32 %v2754, %v2755
    %v2757 = vsel %vm2392, %v2154, -inf
    %v2758 = vsel %vm2392, %v2186, -inf
    %v2759 = vmax.f32 %v2757, %v2758
    %v2760 = vsel %vm2392, %v2218, -inf
    %v2761 = vmax.f32 %v2759, %v2760
    %v2762 = vsel %vm2392, %v2250, -inf
    %v2763 = vmax.f32 %v2761, %v2762
    %v2764 = vsel %vm2392, %v2157, -inf
    %v2765 = vsel %vm2392, %v2189, -inf
    %v2766 = vmax.f32 %v2764, %v2765
    %v2767 = vsel %vm2392, %v2221, -inf
    %v2768 = vmax.f32 %v2766, %v2767
    %v2769 = vsel %vm2392, %v2253, -inf
    %v2770 = vmax.f32 %v2768, %v2769
    %v2771 = vsel %vm2392, %v2162, -inf
    %v2772 = vsel %vm2392, %v2194, -inf
    %v2773 = vmax.f32 %v2771, %v2772
    %v2774 = vsel %vm2392, %v2226, -inf
    %v2775 = vmax.f32 %v2773, %v2774
    %v2776 = vsel %vm2392, %v2258, -inf
    %v2777 = vmax.f32 %v2775, %v2776
    %v2778 = vsel %vm2392, %v2165, -inf
    %v2779 = vsel %vm2392, %v2197, -inf
    %v2780 = vmax.f32 %v2778, %v2779
    %v2781 = vsel %vm2392, %v2229, -inf
    %v2782 = vmax.f32 %v2780, %v2781
    %v2783 = vsel %vm2392, %v2261, -inf
    %v2784 = vmax.f32 %v2782, %v2783
    %v2785 = vsel %vm2392, %v2266, -inf
    %v2786 = vsel %vm2392, %v2298, -inf
    %v2787 = vmax.f32 %v2785, %v2786
    %v2788 = vsel %vm2392, %v2330, -inf
    %v2789 = vmax.f32 %v2787, %v2788
    %v2790 = vsel %vm2392, %v2362, -inf
    %v2791 = vmax.f32 %v2789, %v2790
    %v2792 = vsel %vm2392, %v2269, -inf
    %v2793 = vsel %vm2392, %v2301, -inf
    %v2794 = vmax.f32 %v2792, %v2793
    %v2795 = vsel %vm2392, %v2333, -inf
    %v2796 = vmax.f32 %v2794, %v2795
    %v2797 = vsel %vm2392, %v2365, -inf
    %v2798 = vmax.f32 %v2796, %v2797
    %v2799 = vsel %vm2392, %v2274, -inf
    %v2800 = vsel %vm2392, %v2306, -inf
    %v2801 = vmax.f32 %v2799, %v2800
    %v2802 = vsel %vm2392, %v2338, -inf
    %v2803 = vmax.f32 %v2801, %v2802
    %v2804 = vsel %vm2392, %v2370, -inf
    %v2805 = vmax.f32 %v2803, %v2804
    %v2806 = vsel %vm2392, %v2277, -inf
    %v2807 = vsel %vm2392, %v2309, -inf
    %v2808 = vmax.f32 %v2806, %v2807
    %v2809 = vsel %vm2392, %v2341, -inf
    %v2810 = vmax.f32 %v2808, %v2809
    %v2811 = vsel %vm2392, %v2373, -inf
    %v2812 = vmax.f32 %v2810, %v2811
    %v2813 = vsel %vm2392, %v2282, -inf
    %v2814 = vsel %vm2392, %v2314, -inf
    %v2815 = vmax.f32 %v2813, %v2814
    %v2816 = vsel %vm2392, %v2346, -inf
    %v2817 = vmax.f32 %v2815, %v2816
    %v2818 = vsel %vm2392, %v2378, -inf
    %v2819 = vmax.f32 %v2817, %v2818
    %v2820 = vsel %vm2392, %v2285, -inf
    %v2821 = vsel %vm2392, %v2317, -inf
    %v2822 = vmax.f32 %v2820, %v2821
    %v2823 = vsel %vm2392, %v2349, -inf
    %v2824 = vmax.f32 %v2822, %v2823
    %v2825 = vsel %vm2392, %v2381, -inf
    %v2826 = vmax.f32 %v2824, %v2825
    %v2827 = vsel %vm2392, %v2290, -inf
    %v2828 = vsel %vm2392, %v2322, -inf
    %v2829 = vmax.f32 %v2827, %v2828
    %v2830 = vsel %vm2392, %v2354, -inf
    %v2831 = vmax.f32 %v2829, %v2830
    %v2832 = vsel %vm2392, %v2386, -inf
    %v2833 = vmax.f32 %v2831, %v2832
    %v2834 = vsel %vm2392, %v2293, -inf
    %v2835 = vsel %vm2392, %v2325, -inf
    %v2836 = vmax.f32 %v2834, %v2835
    %v2837 = vsel %vm2392, %v2357, -inf
    %v2838 = vmax.f32 %v2836, %v2837
    %v2839 = vsel %vm2392, %v2389, -inf
    %v2840 = vmax.f32 %v2838, %v2839
    %v2841 = vld [vmem:[%s2] sm:$0x1]
    %v2843 = vlaneseq
    %v2844 = vshrl.u32 %v2843, 7
    %v2845 = vsub.s32 0, %v2844
    %v2846 = vrot.slane %v2841, %v2845
    %v2848 = vadd.f32 %v2399, %v2846
    %v2849 = vadd.f32 %v2406, %v2846
    %v2850 = vadd.f32 %v2413, %v2846
    %v2851 = vadd.f32 %v2420, %v2846
    %v2852 = vadd.f32 %v2427, %v2846
    %v2853 = vadd.f32 %v2434, %v2846
    %v2854 = vadd.f32 %v2441, %v2846
    %v2855 = vadd.f32 %v2448, %v2846
    %v2856 = vadd.f32 %v2455, %v2846
    %v2857 = vadd.f32 %v2462, %v2846
    %v2858 = vadd.f32 %v2469, %v2846
    %v2859 = vadd.f32 %v2476, %v2846
    %v2860 = vadd.f32 %v2483, %v2846
    %v2861 = vadd.f32 %v2490, %v2846
    %v2862 = vadd.f32 %v2497, %v2846
    %v2863 = vadd.f32 %v2504, %v2846
    %v2864 = vadd.f32 %v2511, %v2846
    %v2865 = vadd.f32 %v2518, %v2846
    %v2866 = vadd.f32 %v2525, %v2846
    %v2867 = vadd.f32 %v2532, %v2846
    %v2868 = vadd.f32 %v2539, %v2846
    %v2869 = vadd.f32 %v2546, %v2846
    %v2870 = vadd.f32 %v2553, %v2846
    %v2871 = vadd.f32 %v2560, %v2846
    %v2872 = vadd.f32 %v2567, %v2846
    %v2873 = vadd.f32 %v2574, %v2846
    %v2874 = vadd.f32 %v2581, %v2846
    %v2875 = vadd.f32 %v2588, %v2846
    %v2876 = vadd.f32 %v2595, %v2846
    %v2877 = vadd.f32 %v2602, %v2846
    %v2878 = vadd.f32 %v2609, %v2846
    %v2879 = vadd.f32 %v2616, %v2846
    %v2880 = vadd.f32 %v2623, %v2846
    %v2881 = vadd.f32 %v2630, %v2846
    %v2882 = vadd.f32 %v2637, %v2846
    %v2883 = vadd.f32 %v2644, %v2846
    %v2884 = vadd.f32 %v2651, %v2846
    %v2885 = vadd.f32 %v2658, %v2846
    %v2886 = vadd.f32 %v2665, %v2846
    %v2887 = vadd.f32 %v2672, %v2846
    %v2888 = vadd.f32 %v2679, %v2846
    %v2889 = vadd.f32 %v2686, %v2846
    %v2890 = vadd.f32 %v2693, %v2846
    %v2891 = vadd.f32 %v2700, %v2846
    %v2892 = vadd.f32 %v2707, %v2846
    %v2893 = vadd.f32 %v2714, %v2846
    %v2894 = vadd.f32 %v2721, %v2846
    %v2895 = vadd.f32 %v2728, %v2846
    %v2896 = vadd.f32 %v2735, %v2846
    %v2897 = vadd.f32 %v2742, %v2846
    %v2898 = vadd.f32 %v2749, %v2846
    %v2899 = vadd.f32 %v2756, %v2846
    %v2900 = vadd.f32 %v2763, %v2846
    %v2901 = vadd.f32 %v2770, %v2846
    %v2902 = vadd.f32 %v2777, %v2846
    %v2903 = vadd.f32 %v2784, %v2846
    %v2904 = vadd.f32 %v2791, %v2846
    %v2905 = vadd.f32 %v2798, %v2846
    %v2906 = vadd.f32 %v2805, %v2846
    %v2907 = vadd.f32 %v2812, %v2846
    %v2908 = vadd.f32 %v2819, %v2846
    %v2909 = vadd.f32 %v2826, %v2846
    %v2910 = vadd.f32 %v2833, %v2846
    %v2911 = vadd.f32 %v2840, %v2846
    %v2912 = vmax.f32 %v2848, 0.0
    %v2913 = vmax.f32 %v2849, 0.0
    %v2914 = vmax.f32 %v2850, 0.0
    %v2915 = vmax.f32 %v2851, 0.0
    %v2916 = vmax.f32 %v2852, 0.0
    %v2917 = vmax.f32 %v2853, 0.0
    %v2918 = vmax.f32 %v2854, 0.0
    %v2919 = vmax.f32 %v2855, 0.0
    %v2920 = vmax.f32 %v2856, 0.0
    %v2921 = vmax.f32 %v2857, 0.0
    %v2922 = vmax.f32 %v2858, 0.0
    %v2923 = vmax.f32 %v2859, 0.0
    %v2924 = vmax.f32 %v2860, 0.0
    %v2925 = vmax.f32 %v2861, 0.0
    %v2926 = vmax.f32 %v2862, 0.0
    %v2927 = vmax.f32 %v2863, 0.0
    %v2928 = vmax.f32 %v2864, 0.0
    %v2929 = vmax.f32 %v2865, 0.0
    %v2930 = vmax.f32 %v2866, 0.0
    %v2931 = vmax.f32 %v2867, 0.0
    %v2932 = vmax.f32 %v2868, 0.0
    %v2933 = vmax.f32 %v2869, 0.0
    %v2934 = vmax.f32 %v2870, 0.0
    %v2935 = vmax.f32 %v2871, 0.0
    %v2936 = vmax.f32 %v2872, 0.0
    %v2937 = vmax.f32 %v2873, 0.0
    %v2938 = vmax.f32 %v2874, 0.0
    %v2939 = vmax.f32 %v2875, 0.0
    %v2940 = vmax.f32 %v2876, 0.0
    %v2941 = vmax.f32 %v2877, 0.0
    %v2942 = vmax.f32 %v2878, 0.0
    %v2943 = vmax.f32 %v2879, 0.0
    %v2944 = vmax.f32 %v2880, 0.0
    %v2945 = vmax.f32 %v2881, 0.0
    %v2946 = vmax.f32 %v2882, 0.0
    %v2947 = vmax.f32 %v2883, 0.0
    %v2948 = vmax.f32 %v2884, 0.0
    %v2949 = vmax.f32 %v2885, 0.0
    %v2950 = vmax.f32 %v2886, 0.0
    %v2951 = vmax.f32 %v2887, 0.0
    %v2952 = vmax.f32 %v2888, 0.0
    %v2953 = vmax.f32 %v2889, 0.0
    %v2954 = vmax.f32 %v2890, 0.0
    %v2955 = vmax.f32 %v2891, 0.0
    %v2956 = vmax.f32 %v2892, 0.0
    %v2957 = vmax.f32 %v2893, 0.0
    %v2958 = vmax.f32 %v2894, 0.0
    %v2959 = vmax.f32 %v2895, 0.0
    %v2960 = vmax.f32 %v2896, 0.0
    %v2961 = vmax.f32 %v2897, 0.0
    %v2962 = vmax.f32 %v2898, 0.0
    %v2963 = vmax.f32 %v2899, 0.0
    %v2964 = vmax.f32 %v2900, 0.0
    %v2965 = vmax.f32 %v2901, 0.0
    %v2966 = vmax.f32 %v2902, 0.0
    %v2967 = vmax.f32 %v2903, 0.0
    %v2968 = vmax.f32 %v2904, 0.0
    %v2969 = vmax.f32 %v2905, 0.0
    %v2970 = vmax.f32 %v2906, 0.0
    %v2971 = vmax.f32 %v2907, 0.0
    %v2972 = vmax.f32 %v2908, 0.0
    %v2973 = vmax.f32 %v2909, 0.0
    %v2974 = vmax.f32 %v2910, 0.0
    %v2975 = vmax.f32 %v2911, 0.0
    %v2976 = vpack.c.bf16 %v2913, %v2912
    %v2977 = vpack.c.bf16 %v2915, %v2914
    %v2978 = vpack.c.bf16 %v2917, %v2916
    %v2979 = vpack.c.bf16 %v2919, %v2918
    %v2980 = vpack.c.bf16 %v2921, %v2920
    %v2981 = vpack.c.bf16 %v2923, %v2922
    %v2982 = vpack.c.bf16 %v2925, %v2924
    %v2983 = vpack.c.bf16 %v2927, %v2926
    %v2984 = vpack.c.bf16 %v2929, %v2928
    %v2985 = vpack.c.bf16 %v2931, %v2930
    %v2986 = vpack.c.bf16 %v2933, %v2932
    %v2987 = vpack.c.bf16 %v2935, %v2934
    %v2988 = vpack.c.bf16 %v2937, %v2936
    %v2989 = vpack.c.bf16 %v2939, %v2938
    %v2990 = vpack.c.bf16 %v2941, %v2940
    %v2991 = vpack.c.bf16 %v2943, %v2942
    %v2992 = vpack.c.bf16 %v2945, %v2944
    %v2993 = vpack.c.bf16 %v2947, %v2946
    %v2994 = vpack.c.bf16 %v2949, %v2948
    %v2995 = vpack.c.bf16 %v2951, %v2950
    %v2996 = vpack.c.bf16 %v2953, %v2952
    %v2997 = vpack.c.bf16 %v2955, %v2954
    %v2998 = vpack.c.bf16 %v2957, %v2956
    %v2999 = vpack.c.bf16 %v2959, %v2958
    %v3000 = vpack.c.bf16 %v2961, %v2960
    %v3001 = vpack.c.bf16 %v2963, %v2962
    %v3002 = vpack.c.bf16 %v2965, %v2964
    %v3003 = vpack.c.bf16 %v2967, %v2966
    %v3004 = vpack.c.bf16 %v2969, %v2968
    %v3005 = vpack.c.bf16 %v2971, %v2970
    %v3006 = vpack.c.bf16 %v2973, %v2972
    %v3007 = vpack.c.bf16 %v2975, %v2974
    %v3040 = vunpack.c.l.b16 %v2976
    %v3041 = vunpack.c.h.b16 %v2976
    %v3042 = vunpack.c.l.b16 %v2977
    %v3043 = vunpack.c.h.b16 %v2977
    %v3044 = vunpack.c.l.b16 %v2978
    %v3045 = vunpack.c.h.b16 %v2978
    %v3046 = vunpack.c.l.b16 %v2979
    %v3047 = vunpack.c.h.b16 %v2979
    %v3048 = vunpack.c.l.b16 %v2980
    %v3049 = vunpack.c.h.b16 %v2980
    %v3050 = vunpack.c.l.b16 %v2981
    %v3051 = vunpack.c.h.b16 %v2981
    %v3052 = vunpack.c.l.b16 %v2982
    %v3053 = vunpack.c.h.b16 %v2982
    %v3054 = vunpack.c.l.b16 %v2983
    %v3055 = vunpack.c.h.b16 %v2983
    %v3056 = vunpack.c.l.b16 %v2984
    %v3057 = vunpack.c.h.b16 %v2984
    %v3058 = vunpack.c.l.b16 %v2985
    %v3059 = vunpack.c.h.b16 %v2985
    %v3060 = vunpack.c.l.b16 %v2986
    %v3061 = vunpack.c.h.b16 %v2986
    %v3062 = vunpack.c.l.b16 %v2987
    %v3063 = vunpack.c.h.b16 %v2987
    %v3064 = vunpack.c.l.b16 %v2988
    %v3065 = vunpack.c.h.b16 %v2988
    %v3066 = vunpack.c.l.b16 %v2989
    %v3067 = vunpack.c.h.b16 %v2989
    %v3068 = vunpack.c.l.b16 %v2990
    %v3069 = vunpack.c.h.b16 %v2990
    %v3070 = vunpack.c.l.b16 %v2991
    %v3071 = vunpack.c.h.b16 %v2991
    %v3072 = vunpack.c.l.b16 %v2992
    %v3073 = vunpack.c.h.b16 %v2992
    %v3074 = vunpack.c.l.b16 %v2993
    %v3075 = vunpack.c.h.b16 %v2993
    %v3076 = vunpack.c.l.b16 %v2994
    %v3077 = vunpack.c.h.b16 %v2994
    %v3078 = vunpack.c.l.b16 %v2995
    %v3079 = vunpack.c.h.b16 %v2995
    %v3080 = vunpack.c.l.b16 %v2996
    %v3081 = vunpack.c.h.b16 %v2996
    %v3082 = vunpack.c.l.b16 %v2997
    %v3083 = vunpack.c.h.b16 %v2997
    %v3084 = vunpack.c.l.b16 %v2998
    %v3085 = vunpack.c.h.b16 %v2998
    %v3086 = vunpack.c.l.b16 %v2999
    %v3087 = vunpack.c.h.b16 %v2999
    %v3088 = vunpack.c.l.b16 %v3000
    %v3089 = vunpack.c.h.b16 %v3000
    %v3090 = vunpack.c.l.b16 %v3001
    %v3091 = vunpack.c.h.b16 %v3001
    %v3092 = vunpack.c.l.b16 %v3002
    %v3093 = vunpack.c.h.b16 %v3002
    %v3094 = vunpack.c.l.b16 %v3003
    %v3095 = vunpack.c.h.b16 %v3003
    %v3096 = vunpack.c.l.b16 %v3004
    %v3097 = vunpack.c.h.b16 %v3004
    %v3098 = vunpack.c.l.b16 %v3005
    %v3099 = vunpack.c.h.b16 %v3005
    %v3100 = vunpack.c.l.b16 %v3006
    %v3101 = vunpack.c.h.b16 %v3006
    %v3102 = vunpack.c.l.b16 %v3007
    %v3103 = vunpack.c.h.b16 %v3007
    %v3104 = vpack.c.b16 %v3040, %v3040
    %v3105 = vpack.c.b16 %v3041, %v3041
    %v3106 = vpack.c.b16 %v3042, %v3042
    %v3107 = vpack.c.b16 %v3043, %v3043
    %v3108 = vpack.c.b16 %v3044, %v3044
    %v3109 = vpack.c.b16 %v3045, %v3045
    %v3110 = vpack.c.b16 %v3046, %v3046
    %v3111 = vpack.c.b16 %v3048, %v3048
    %v3112 = vpack.c.b16 %v3049, %v3049
    %v3113 = vpack.c.b16 %v3050, %v3050
    %v3114 = vpack.c.b16 %v3051, %v3051
    %v3115 = vpack.c.b16 %v3052, %v3052
    %v3116 = vpack.c.b16 %v3053, %v3053
    %v3117 = vpack.c.b16 %v3054, %v3054
    %v3118 = vpack.c.b16 %v3056, %v3056
    %v3119 = vpack.c.b16 %v3057, %v3057
    %v3120 = vpack.c.b16 %v3058, %v3058
    %v3121 = vpack.c.b16 %v3059, %v3059
    %v3122 = vpack.c.b16 %v3060, %v3060
    %v3123 = vpack.c.b16 %v3061, %v3061
    %v3124 = vpack.c.b16 %v3062, %v3062
    %v3125 = vpack.c.b16 %v3064, %v3064
    %v3126 = vpack.c.b16 %v3065, %v3065
    %v3127 = vpack.c.b16 %v3066, %v3066
    %v3128 = vpack.c.b16 %v3067, %v3067
    %v3129 = vpack.c.b16 %v3068, %v3068
    %v3130 = vpack.c.b16 %v3069, %v3069
    %v3131 = vpack.c.b16 %v3070, %v3070
    %v3132 = vpack.c.b16 %v3072, %v3072
    %v3133 = vpack.c.b16 %v3073, %v3073
    %v3134 = vpack.c.b16 %v3074, %v3074
    %v3135 = vpack.c.b16 %v3075, %v3075
    %v3136 = vpack.c.b16 %v3076, %v3076
    %v3137 = vpack.c.b16 %v3077, %v3077
    %v3138 = vpack.c.b16 %v3078, %v3078
    %v3139 = vpack.c.b16 %v3080, %v3080
    %v3140 = vpack.c.b16 %v3081, %v3081
    %v3141 = vpack.c.b16 %v3082, %v3082
    %v3142 = vpack.c.b16 %v3083, %v3083
    %v3143 = vpack.c.b16 %v3084, %v3084
    %v3144 = vpack.c.b16 %v3085, %v3085
    %v3145 = vpack.c.b16 %v3086, %v3086
    %v3146 = vpack.c.b16 %v3088, %v3088
    %v3147 = vpack.c.b16 %v3089, %v3089
    %v3148 = vpack.c.b16 %v3090, %v3090
    %v3149 = vpack.c.b16 %v3091, %v3091
    %v3150 = vpack.c.b16 %v3092, %v3092
    %v3151 = vpack.c.b16 %v3093, %v3093
    %v3152 = vpack.c.b16 %v3094, %v3094
    %v3153 = vpack.c.b16 %v3096, %v3096
    %v3154 = vpack.c.b16 %v3097, %v3097
    %v3155 = vpack.c.b16 %v3098, %v3098
    %v3156 = vpack.c.b16 %v3099, %v3099
    %v3157 = vpack.c.b16 %v3100, %v3100
    %v3158 = vpack.c.b16 %v3101, %v3101
    %v3159 = vpack.c.b16 %v3102, %v3102
    %v3161 = vshrl.u32 0, 16
    %v3163 = vrot.slane %v3161, 7
    %v3164 = vshll.u32 0, 16
    %v3166 = vor.u32 %v3163, %v3164
    %v3168 = vshrl.u32 %v3104, 16
    %v3170 = vrot.slane %v3168, 7
    %v3171 = vshll.u32 %v3104, 16
    %v3173 = vor.u32 %v3170, %v3171
    %v3175 = vshrl.u32 %v3105, 16
    %v3177 = vrot.slane %v3175, 7
    %v3178 = vshll.u32 %v3105, 16
    %v3180 = vor.u32 %v3177, %v3178
    %v3182 = vshrl.u32 %v3106, 16
    %v3184 = vrot.slane %v3182, 7
    %v3185 = vshll.u32 %v3106, 16
    %v3187 = vor.u32 %v3184, %v3185
    %v3189 = vshrl.u32 %v3107, 16
    %v3191 = vrot.slane %v3189, 7
    %v3192 = vshll.u32 %v3107, 16
    %v3194 = vor.u32 %v3191, %v3192
    %v3196 = vshrl.u32 %v3108, 16
    %v3198 = vrot.slane %v3196, 7
    %v3199 = vshll.u32 %v3108, 16
    %v3201 = vor.u32 %v3198, %v3199
    %v3203 = vshrl.u32 %v3109, 16
    %v3205 = vrot.slane %v3203, 7
    %v3206 = vshll.u32 %v3109, 16
    %v3208 = vor.u32 %v3205, %v3206
    %v3210 = vshrl.u32 %v3110, 16
    %v3212 = vrot.slane %v3210, 7
    %v3213 = vshll.u32 %v3110, 16
    %v3215 = vor.u32 %v3212, %v3213
    %v3217 = vshrl.u32 %v3111, 16
    %v3219 = vrot.slane %v3217, 7
    %v3220 = vshll.u32 %v3111, 16
    %v3222 = vor.u32 %v3219, %v3220
    %v3224 = vshrl.u32 %v3112, 16
    %v3226 = vrot.slane %v3224, 7
    %v3227 = vshll.u32 %v3112, 16
    %v3229 = vor.u32 %v3226, %v3227
    %v3231 = vshrl.u32 %v3113, 16
    %v3233 = vrot.slane %v3231, 7
    %v3234 = vshll.u32 %v3113, 16
    %v3236 = vor.u32 %v3233, %v3234
    %v3238 = vshrl.u32 %v3114, 16
    %v3240 = vrot.slane %v3238, 7
    %v3241 = vshll.u32 %v3114, 16
    %v3243 = vor.u32 %v3240, %v3241
    %v3245 = vshrl.u32 %v3115, 16
    %v3247 = vrot.slane %v3245, 7
    %v3248 = vshll.u32 %v3115, 16
    %v3250 = vor.u32 %v3247, %v3248
    %v3252 = vshrl.u32 %v3116, 16
    %v3254 = vrot.slane %v3252, 7
    %v3255 = vshll.u32 %v3116, 16
    %v3257 = vor.u32 %v3254, %v3255
    %v3259 = vshrl.u32 %v3117, 16
    %v3261 = vrot.slane %v3259, 7
    %v3262 = vshll.u32 %v3117, 16
    %v3264 = vor.u32 %v3261, %v3262
    %v3266 = vshrl.u32 %v3118, 16
    %v3268 = vrot.slane %v3266, 7
    %v3269 = vshll.u32 %v3118, 16
    %v3271 = vor.u32 %v3268, %v3269
    %v3273 = vshrl.u32 %v3119, 16
    %v3275 = vrot.slane %v3273, 7
    %v3276 = vshll.u32 %v3119, 16
    %v3278 = vor.u32 %v3275, %v3276
    %v3280 = vshrl.u32 %v3120, 16
    %v3282 = vrot.slane %v3280, 7
    %v3283 = vshll.u32 %v3120, 16
    %v3285 = vor.u32 %v3282, %v3283
    %v3287 = vshrl.u32 %v3121, 16
    %v3289 = vrot.slane %v3287, 7
    %v3290 = vshll.u32 %v3121, 16
    %v3292 = vor.u32 %v3289, %v3290
    %v3294 = vshrl.u32 %v3122, 16
    %v3296 = vrot.slane %v3294, 7
    %v3297 = vshll.u32 %v3122, 16
    %v3299 = vor.u32 %v3296, %v3297
    %v3301 = vshrl.u32 %v3123, 16
    %v3303 = vrot.slane %v3301, 7
    %v3304 = vshll.u32 %v3123, 16
    %v3306 = vor.u32 %v3303, %v3304
    %v3308 = vshrl.u32 %v3124, 16
    %v3310 = vrot.slane %v3308, 7
    %v3311 = vshll.u32 %v3124, 16
    %v3313 = vor.u32 %v3310, %v3311
    %v3315 = vshrl.u32 %v3125, 16
    %v3317 = vrot.slane %v3315, 7
    %v3318 = vshll.u32 %v3125, 16
    %v3320 = vor.u32 %v3317, %v3318
    %v3322 = vshrl.u32 %v3126, 16
    %v3324 = vrot.slane %v3322, 7
    %v3325 = vshll.u32 %v3126, 16
    %v3327 = vor.u32 %v3324, %v3325
    %v3329 = vshrl.u32 %v3127, 16
    %v3331 = vrot.slane %v3329, 7
    %v3332 = vshll.u32 %v3127, 16
    %v3334 = vor.u32 %v3331, %v3332
    %v3336 = vshrl.u32 %v3128, 16
    %v3338 = vrot.slane %v3336, 7
    %v3339 = vshll.u32 %v3128, 16
    %v3341 = vor.u32 %v3338, %v3339
    %v3343 = vshrl.u32 %v3129, 16
    %v3345 = vrot.slane %v3343, 7
    %v3346 = vshll.u32 %v3129, 16
    %v3348 = vor.u32 %v3345, %v3346
    %v3350 = vshrl.u32 %v3130, 16
    %v3352 = vrot.slane %v3350, 7
    %v3353 = vshll.u32 %v3130, 16
    %v3355 = vor.u32 %v3352, %v3353
    %v3357 = vshrl.u32 %v3131, 16
    %v3359 = vrot.slane %v3357, 7
    %v3360 = vshll.u32 %v3131, 16
    %v3362 = vor.u32 %v3359, %v3360
    %v3364 = vshrl.u32 %v3132, 16
    %v3366 = vrot.slane %v3364, 7
    %v3367 = vshll.u32 %v3132, 16
    %v3369 = vor.u32 %v3366, %v3367
    %v3371 = vshrl.u32 %v3133, 16
    %v3373 = vrot.slane %v3371, 7
    %v3374 = vshll.u32 %v3133, 16
    %v3376 = vor.u32 %v3373, %v3374
    %v3378 = vshrl.u32 %v3134, 16
    %v3380 = vrot.slane %v3378, 7
    %v3381 = vshll.u32 %v3134, 16
    %v3383 = vor.u32 %v3380, %v3381
    %v3385 = vshrl.u32 %v3135, 16
    %v3387 = vrot.slane %v3385, 7
    %v3388 = vshll.u32 %v3135, 16
    %v3390 = vor.u32 %v3387, %v3388
    %v3392 = vshrl.u32 %v3136, 16
    %v3394 = vrot.slane %v3392, 7
    %v3395 = vshll.u32 %v3136, 16
    %v3397 = vor.u32 %v3394, %v3395
    %v3399 = vshrl.u32 %v3137, 16
    %v3401 = vrot.slane %v3399, 7
    %v3402 = vshll.u32 %v3137, 16
    %v3404 = vor.u32 %v3401, %v3402
    %v3406 = vshrl.u32 %v3138, 16
    %v3408 = vrot.slane %v3406, 7
    %v3409 = vshll.u32 %v3138, 16
    %v3411 = vor.u32 %v3408, %v3409
    %v3413 = vshrl.u32 %v3139, 16
    %v3415 = vrot.slane %v3413, 7
    %v3416 = vshll.u32 %v3139, 16
    %v3418 = vor.u32 %v3415, %v3416
    %v3420 = vshrl.u32 %v3140, 16
    %v3422 = vrot.slane %v3420, 7
    %v3423 = vshll.u32 %v3140, 16
    %v3425 = vor.u32 %v3422, %v3423
    %v3427 = vshrl.u32 %v3141, 16
    %v3429 = vrot.slane %v3427, 7
    %v3430 = vshll.u32 %v3141, 16
    %v3432 = vor.u32 %v3429, %v3430
    %v3434 = vshrl.u32 %v3142, 16
    %v3436 = vrot.slane %v3434, 7
    %v3437 = vshll.u32 %v3142, 16
    %v3439 = vor.u32 %v3436, %v3437
    %v3441 = vshrl.u32 %v3143, 16
    %v3443 = vrot.slane %v3441, 7
    %v3444 = vshll.u32 %v3143, 16
    %v3446 = vor.u32 %v3443, %v3444
    %v3448 = vshrl.u32 %v3144, 16
    %v3450 = vrot.slane %v3448, 7
    %v3451 = vshll.u32 %v3144, 16
    %v3453 = vor.u32 %v3450, %v3451
    %v3455 = vshrl.u32 %v3145, 16
    %v3457 = vrot.slane %v3455, 7
    %v3458 = vshll.u32 %v3145, 16
    %v3460 = vor.u32 %v3457, %v3458
    %v3462 = vshrl.u32 %v3146, 16
    %v3464 = vrot.slane %v3462, 7
    %v3465 = vshll.u32 %v3146, 16
    %v3467 = vor.u32 %v3464, %v3465
    %v3469 = vshrl.u32 %v3147, 16
    %v3471 = vrot.slane %v3469, 7
    %v3472 = vshll.u32 %v3147, 16
    %v3474 = vor.u32 %v3471, %v3472
    %v3476 = vshrl.u32 %v3148, 16
    %v3478 = vrot.slane %v3476, 7
    %v3479 = vshll.u32 %v3148, 16
    %v3481 = vor.u32 %v3478, %v3479
    %v3483 = vshrl.u32 %v3149, 16
    %v3485 = vrot.slane %v3483, 7
    %v3486 = vshll.u32 %v3149, 16
    %v3488 = vor.u32 %v3485, %v3486
    %v3490 = vshrl.u32 %v3150, 16
    %v3492 = vrot.slane %v3490, 7
    %v3493 = vshll.u32 %v3150, 16
    %v3495 = vor.u32 %v3492, %v3493
    %v3497 = vshrl.u32 %v3151, 16
    %v3499 = vrot.slane %v3497, 7
    %v3500 = vshll.u32 %v3151, 16
    %v3502 = vor.u32 %v3499, %v3500
    %v3504 = vshrl.u32 %v3152, 16
    %v3506 = vrot.slane %v3504, 7
    %v3507 = vshll.u32 %v3152, 16
    %v3509 = vor.u32 %v3506, %v3507
    %v3511 = vshrl.u32 %v3153, 16
    %v3513 = vrot.slane %v3511, 7
    %v3514 = vshll.u32 %v3153, 16
    %v3516 = vor.u32 %v3513, %v3514
    %v3518 = vshrl.u32 %v3154, 16
    %v3520 = vrot.slane %v3518, 7
    %v3521 = vshll.u32 %v3154, 16
    %v3523 = vor.u32 %v3520, %v3521
    %v3525 = vshrl.u32 %v3155, 16
    %v3527 = vrot.slane %v3525, 7
    %v3528 = vshll.u32 %v3155, 16
    %v3530 = vor.u32 %v3527, %v3528
    %v3532 = vshrl.u32 %v3156, 16
    %v3534 = vrot.slane %v3532, 7
    %v3535 = vshll.u32 %v3156, 16
    %v3537 = vor.u32 %v3534, %v3535
    %v3539 = vshrl.u32 %v3157, 16
    %v3541 = vrot.slane %v3539, 7
    %v3542 = vshll.u32 %v3157, 16
    %v3544 = vor.u32 %v3541, %v3542
    %v3546 = vshrl.u32 %v3158, 16
    %v3548 = vrot.slane %v3546, 7
    %v3549 = vshll.u32 %v3158, 16
    %v3551 = vor.u32 %v3548, %v3549
    %v3553 = vshrl.u32 %v3159, 16
    %v3555 = vrot.slane %v3553, 7
    %v3556 = vshll.u32 %v3159, 16
    %v3558 = vor.u32 %v3555, %v3556
    %vm3616 = vcmask 1040384
    %vm3617 = vsmask.f32 256
    %vm3618 = vmand %vm3616, %vm3617
    %v3619 = vsel %vm3618, 0, %v3166
    %v3620 = vsel %vm3618, 0, %v3173
    %v3621 = vsel %vm3618, 0, %v3180
    %v3622 = vsel %vm3618, 0, %v3187
    %v3623 = vsel %vm3618, 0, %v3194
    %v3624 = vsel %vm3618, 0, %v3201
    %v3625 = vsel %vm3618, 0, %v3208
    %v3626 = vsel %vm3618, 0, %v3215
    %v3627 = vsel %vm3618, 0, %v3222
    %v3628 = vsel %vm3618, 0, %v3229
    %v3629 = vsel %vm3618, 0, %v3236
    %v3630 = vsel %vm3618, 0, %v3243
    %v3631 = vsel %vm3618, 0, %v3250
    %v3632 = vsel %vm3618, 0, %v3257
    %v3633 = vsel %vm3618, 0, %v3264
    %v3634 = vsel %vm3618, 0, %v3271
    %v3635 = vsel %vm3618, 0, %v3278
    %v3636 = vsel %vm3618, 0, %v3285
    %v3637 = vsel %vm3618, 0, %v3292
    %v3638 = vsel %vm3618, 0, %v3299
    %v3639 = vsel %vm3618, 0, %v3306
    %v3640 = vsel %vm3618, 0, %v3313
    %v3641 = vsel %vm3618, 0, %v3320
    %v3642 = vsel %vm3618, 0, %v3327
    %v3643 = vsel %vm3618, 0, %v3334
    %v3644 = vsel %vm3618, 0, %v3341
    %v3645 = vsel %vm3618, 0, %v3348
    %v3646 = vsel %vm3618, 0, %v3355
    %v3647 = vsel %vm3618, 0, %v3362
    %v3648 = vsel %vm3618, 0, %v3369
    %v3649 = vsel %vm3618, 0, %v3376
    %v3650 = vsel %vm3618, 0, %v3383
    %v3651 = vsel %vm3618, 0, %v3390
    %v3652 = vsel %vm3618, 0, %v3397
    %v3653 = vsel %vm3618, 0, %v3404
    %v3654 = vsel %vm3618, 0, %v3411
    %v3655 = vsel %vm3618, 0, %v3418
    %v3656 = vsel %vm3618, 0, %v3425
    %v3657 = vsel %vm3618, 0, %v3432
    %v3658 = vsel %vm3618, 0, %v3439
    %v3659 = vsel %vm3618, 0, %v3446
    %v3660 = vsel %vm3618, 0, %v3453
    %v3661 = vsel %vm3618, 0, %v3460
    %v3662 = vsel %vm3618, 0, %v3467
    %v3663 = vsel %vm3618, 0, %v3474
    %v3664 = vsel %vm3618, 0, %v3481
    %v3665 = vsel %vm3618, 0, %v3488
    %v3666 = vsel %vm3618, 0, %v3495
    %v3667 = vsel %vm3618, 0, %v3502
    %v3668 = vsel %vm3618, 0, %v3509
    %v3669 = vsel %vm3618, 0, %v3516
    %v3670 = vsel %vm3618, 0, %v3523
    %v3671 = vsel %vm3618, 0, %v3530
    %v3672 = vsel %vm3618, 0, %v3537
    %v3673 = vsel %vm3618, 0, %v3544
    %v3674 = vsel %vm3618, 0, %v3551
    %v3675 = vsel %vm3618, 0, %v3558
    %v3676 = vld [vmem:[%s3] sm:$0xf]
    %v3677 = vld [vmem:[%s3 + $0x4] sm:$0xf]
    %v3678 = vld [vmem:[%s3 + $0x8] sm:$0xf]
    %v3679 = vld [vmem:[%s3 + $0xc] sm:$0xf]
    %s3680 = scalar_lea.vmem %s3, 16
    %v3681 = vld [vmem:[%s3680] sm:$0xf]
    %v3682 = vld [vmem:[%s3680 + $0x4] sm:$0xf]
    %v3683 = vld [vmem:[%s3680 + $0x8] sm:$0xf]
    %v3684 = vld [vmem:[%s3680 + $0xc] sm:$0xf]
    %v3686 = vunpack.c.l.b16 0
    %v3687 = vpack.c.b16 %v3040, %v3686
    %v3688 = vpack.c.b16 %v3042, %v3041
    %v3689 = vpack.c.b16 %v3044, %v3043
    %v3690 = vpack.c.b16 %v3046, %v3045
    %v3691 = vpack.c.b16 %v3048, %v3686
    %v3692 = vpack.c.b16 %v3050, %v3049
    %v3693 = vpack.c.b16 %v3052, %v3051
    %v3694 = vpack.c.b16 %v3054, %v3053
    %v3695 = vpack.c.b16 %v3056, %v3686
    %v3696 = vpack.c.b16 %v3058, %v3057
    %v3697 = vpack.c.b16 %v3060, %v3059
    %v3698 = vpack.c.b16 %v3062, %v3061
    %v3699 = vpack.c.b16 %v3064, %v3686
    %v3700 = vpack.c.b16 %v3066, %v3065
    %v3701 = vpack.c.b16 %v3068, %v3067
    %v3702 = vpack.c.b16 %v3070, %v3069
    %v3703 = vpack.c.b16 %v3072, %v3686
    %v3704 = vpack.c.b16 %v3074, %v3073
    %v3705 = vpack.c.b16 %v3076, %v3075
    %v3706 = vpack.c.b16 %v3078, %v3077
    %v3707 = vpack.c.b16 %v3080, %v3686
    %v3708 = vpack.c.b16 %v3082, %v3081
    %v3709 = vpack.c.b16 %v3084, %v3083
    %v3710 = vpack.c.b16 %v3086, %v3085
    %v3711 = vpack.c.b16 %v3088, %v3686
    %v3712 = vpack.c.b16 %v3090, %v3089
    %v3713 = vpack.c.b16 %v3092, %v3091
    %v3714 = vpack.c.b16 %v3094, %v3093
    %v3715 = vpack.c.b16 %v3096, %v3686
    %v3716 = vpack.c.b16 %v3098, %v3097
    %v3717 = vpack.c.b16 %v3100, %v3099
    %v3718 = vpack.c.b16 %v3102, %v3101
    %v3723 = vunpack.c.l.b16 %v3681
    %v3724 = vunpack.c.l.b16 %v3682
    %v3725 = vunpack.c.l.b16 %v3683
    %v3726 = vunpack.c.l.b16 %v3684
    %v3727 = vpack.c.b16 %v3724, %v3723
    %v3728 = vpack.c.b16 %v3726, %v3725
    %v3732 = vsel %vm2392, %v3687, 0
    %v3735 = vsel %vm2392, %v3688, 0
    %v3738 = vsel %vm2392, %v3689, 0
    %v3741 = vsel %vm2392, %v3690, 0
    %v3744 = vsel %vm2392, %v3691, 0
    %v3747 = vsel %vm2392, %v3692, 0
    %v3750 = vsel %vm2392, %v3693, 0
    %v3753 = vsel %vm2392, %v3694, 0
    %v3756 = vsel %vm2392, %v3695, 0
    %v3759 = vsel %vm2392, %v3696, 0
    %v3762 = vsel %vm2392, %v3697, 0
    %v3765 = vsel %vm2392, %v3698, 0
    %v3768 = vsel %vm2392, %v3699, 0
    %v3771 = vsel %vm2392, %v3700, 0
    %v3774 = vsel %vm2392, %v3701, 0
    %v3777 = vsel %vm2392, %v3702, 0
    %v3780 = vsel %vm2392, %v3703, 0
    %v3783 = vsel %vm2392, %v3704, 0
    %v3786 = vsel %vm2392, %v3705, 0
    %v3789 = vsel %vm2392, %v3706, 0
    %v3792 = vsel %vm2392, %v3707, 0
    %v3795 = vsel %vm2392, %v3708, 0
    %v3798 = vsel %vm2392, %v3709, 0
    %v3801 = vsel %vm2392, %v3710, 0
    %v3804 = vsel %vm2392, %v3711, 0
    %v3807 = vsel %vm2392, %v3712, 0
    %v3810 = vsel %vm2392, %v3713, 0
    %v3813 = vsel %vm2392, %v3714, 0
    %v3816 = vsel %vm2392, %v3715, 0
    %v3819 = vsel %vm2392, %v3716, 0
    %v3822 = vsel %vm2392, %v3717, 0
    %v3825 = vsel %vm2392, %v3718, 0
    %3827 = vmatprep.subr.bf16.mxu0 0
    %3828 = vmatpush1.bf16.msra.mxu0 %v3727
    %3829 = vmatprep.subr.bf16.mxu0 0
    %3830 = vmatpush1.bf16.msra.mxu0 %v3728
    %3831 = vmatprep.subr.bf16.mxu0 0
    %3832 = vmatpush1.bf16.msra.mxu0 0
    %3833 = vmatprep.subr.bf16.mxu0 0
    %3834 = vmatpush1.bf16.msra.mxu0 0
    %3835 = vmatprep.subr.bf16.mxu0 0
    %3836 = vmatpush1.bf16.msra.mxu0 0
    %3837 = vmatprep.subr.bf16.mxu0 0
    %3838 = vmatpush1.bf16.msra.mxu0 0
    %3839 = vmatprep.subr.bf16.mxu0 0
    %3840 = vmatpush1.bf16.msra.mxu0 0
    %3841 = vmatprep.subr.bf16.mxu0 0
    %3842 = vmatpush1.bf16.msra.mxu0 0
    %3843 = vmatprep.subr.bf16.mxu0 0
    %3844 = vmatpush1.bf16.msra.mxu0 0
    %3845 = vmatprep.subr.bf16.mxu0 0
    %3846 = vmatpush1.bf16.msra.mxu0 0
    %3847 = vmatprep.subr.bf16.mxu0 0
    %3848 = vmatpush1.bf16.msra.mxu0 0
    %3849 = vmatprep.subr.bf16.mxu0 0
    %3850 = vmatpush1.bf16.msra.mxu0 0
    %3851 = vmatprep.subr.bf16.mxu0 0
    %3852 = vmatpush1.bf16.msra.mxu0 0
    %3853 = vmatprep.subr.bf16.mxu0 0
    %3854 = vmatpush1.bf16.msra.mxu0 0
    %3855 = vmatprep.subr.bf16.mxu0 0
    %3856 = vmatpush1.bf16.msra.mxu0 0
    %3857 = vmatprep.subr.bf16.mxu0 0
    %3858 = vmatpush1.bf16.msra.mxu0 0
    %3859 = vmatprep.mubr.bf16.mxu0 0
    %3860 = vmatmul.mubr.bf16.gmra.mrb[0].mxu0 %v3732
    %v3861 = vpop.f32.mrb[0].mxu0
    %v3862 = vadd.f32 0.0, %v3861
    %v3863 = vpop.f32.mrb[0].mxu0
    %v3864 = vpop.f32.mrb[0].mxu0
    %v3865 = vadd.f32 0.0, %v3864
    %v3866 = vpop.f32.mrb[0].mxu0
    %3867 = vmatprep.mubr.bf16.mxu0 0
    %3868 = vmatmul.mubr.bf16.gmra.mrb[0].mxu0 %v3735
    %v3869 = vpop.f32.mrb[0].mxu0
    %v3870 = vadd.f32 0.0, %v3869
    %v3871 = vpop.f32.mrb[0].mxu0
    %v3872 = vpop.f32.mrb[0].mxu0
    %v3873 = vadd.f32 0.0, %v3872
    %v3874 = vpop.f32.mrb[0].mxu0
    %3875 = vmatprep.mubr.bf16.mxu0 0
    %3876 = vmatmul.mubr.bf16.gmra.mrb[0].mxu0 %v3738
    %v3877 = vpop.f32.mrb[0].mxu0
    %v3878 = vadd.f32 0.0, %v3877
    %v3879 = vpop.f32.mrb[0].mxu0
    %v3880 = vpop.f32.mrb[0].mxu0
    %v3881 = vadd.f32 0.0, %v3880
    %v3882 = vpop.f32.mrb[0].mxu0
    %3883 = vmatprep.mubr.bf16.mxu0 0
    %3884 = vmatmul.mubr.bf16.gmra.mrb[0].mxu0 %v3741
    %v3885 = vpop.f32.mrb[0].mxu0
    %v3886 = vadd.f32 0.0, %v3885
    %v3887 = vpop.f32.mrb[0].mxu0
    %v3888 = vpop.f32.mrb[0].mxu0
    %v3889 = vadd.f32 0.0, %v3888
    %v3890 = vpop.f32.mrb[0].mxu0
    %3891 = vmatprep.mubr.bf16.mxu0 0
    %3892 = vmatmul.mubr.bf16.gmra.mrb[0].mxu0 %v3744
    %v3893 = vpop.f32.mrb[0].mxu0
    %v3894 = vadd.f32 0.0, %v3893
    %v3895 = vpop.f32.mrb[0].mxu0
    %v3896 = vpop.f32.mrb[0].mxu0
    %v3897 = vadd.f32 0.0, %v3896
    %v3898 = vpop.f32.mrb[0].mxu0
    %3899 = vmatprep.mubr.bf16.mxu0 0
    %3900 = vmatmul.mubr.bf16.gmra.mrb[0].mxu0 %v3747
    %v3901 = vpop.f32.mrb[0].mxu0
    %v3902 = vadd.f32 0.0, %v3901
    %v3903 = vpop.f32.mrb[0].mxu0
    %v3904 = vpop.f32.mrb[0].mxu0
    %v3905 = vadd.f32 0.0, %v3904
    %v3906 = vpop.f32.mrb[0].mxu0
    %3907 = vmatprep.mubr.bf16.mxu0 0
    %3908 = vmatmul.mubr.bf16.gmra.mrb[0].mxu0 %v3750
    %v3909 = vpop.f32.mrb[0].mxu0
    %v3910 = vadd.f32 0.0, %v3909
    %v3911 = vpop.f32.mrb[0].mxu0
    %v3912 = vpop.f32.mrb[0].mxu0
    %v3913 = vadd.f32 0.0, %v3912
    %v3914 = vpop.f32.mrb[0].mxu0
    %3915 = vmatprep.mubr.bf16.mxu0 0
    %3916 = vmatmul.mubr.bf16.gmra.mrb[0].mxu0 %v3753
    %v3917 = vpop.f32.mrb[0].mxu0
    %v3918 = vadd.f32 0.0, %v3917
    %v3919 = vpop.f32.mrb[0].mxu0
    %v3920 = vpop.f32.mrb[0].mxu0
    %v3921 = vadd.f32 0.0, %v3920
    %v3922 = vpop.f32.mrb[0].mxu0
    %3923 = vmatprep.mubr.bf16.mxu0 0
    %3924 = vmatmul.mubr.bf16.gmra.mrb[0].mxu0 %v3756
    %v3925 = vpop.f32.mrb[0].mxu0
    %v3926 = vadd.f32 0.0, %v3925
    %v3927 = vpop.f32.mrb[0].mxu0
    %v3928 = vpop.f32.mrb[0].mxu0
    %v3929 = vadd.f32 0.0, %v3928
    %v3930 = vpop.f32.mrb[0].mxu0
    %3931 = vmatprep.mubr.bf16.mxu0 0
    %3932 = vmatmul.mubr.bf16.gmra.mrb[0].mxu0 %v3759
    %v3933 = vpop.f32.mrb[0].mxu0
    %v3934 = vadd.f32 0.0, %v3933
    %v3935 = vpop.f32.mrb[0].mxu0
    %v3936 = vpop.f32.mrb[0].mxu0
    %v3937 = vadd.f32 0.0, %v3936
    %v3938 = vpop.f32.mrb[0].mxu0
    %3939 = vmatprep.mubr.bf16.mxu0 0
    %3940 = vmatmul.mubr.bf16.gmra.mrb[0].mxu0 %v3762
    %v3941 = vpop.f32.mrb[0].mxu0
    %v3942 = vadd.f32 0.0, %v3941
    %v3943 = vpop.f32.mrb[0].mxu0
    %v3944 = vpop.f32.mrb[0].mxu0
    %v3945 = vadd.f32 0.0, %v3944
    %v3946 = vpop.f32.mrb[0].mxu0
    %3947 = vmatprep.mubr.bf16.mxu0 0
    %3948 = vmatmul.mubr.bf16.gmra.mrb[0].mxu0 %v3765
    %v3949 = vpop.f32.mrb[0].mxu0
    %v3950 = vadd.f32 0.0, %v3949
    %v3951 = vpop.f32.mrb[0].mxu0
    %v3952 = vpop.f32.mrb[0].mxu0
    %v3953 = vadd.f32 0.0, %v3952
    %v3954 = vpop.f32.mrb[0].mxu0
    %3955 = vmatprep.mubr.bf16.mxu0 0
    %3956 = vmatmul.mubr.bf16.gmra.mrb[0].mxu0 %v3768
    %v3957 = vpop.f32.mrb[0].mxu0
    %v3958 = vadd.f32 0.0, %v3957
    %v3959 = vpop.f32.mrb[0].mxu0
    %v3960 = vpop.f32.mrb[0].mxu0
    %v3961 = vadd.f32 0.0, %v3960
    %v3962 = vpop.f32.mrb[0].mxu0
    %3963 = vmatprep.mubr.bf16.mxu0 0
    %3964 = vmatmul.mubr.bf16.gmra.mrb[0].mxu0 %v3771
    %v3965 = vpop.f32.mrb[0].mxu0
    %v3966 = vadd.f32 0.0, %v3965
    %v3967 = vpop.f32.mrb[0].mxu0
    %v3968 = vpop.f32.mrb[0].mxu0
    %v3969 = vadd.f32 0.0, %v3968
    %v3970 = vpop.f32.mrb[0].mxu0
    %3971 = vmatprep.mubr.bf16.mxu0 0
    %3972 = vmatmul.mubr.bf16.gmra.mrb[0].mxu0 %v3774
    %v3973 = vpop.f32.mrb[0].mxu0
    %v3974 = vadd.f32 0.0, %v3973
    %v3975 = vpop.f32.mrb[0].mxu0
    %v3976 = vpop.f32.mrb[0].mxu0
    %v3977 = vadd.f32 0.0, %v3976
    %v3978 = vpop.f32.mrb[0].mxu0
    %3979 = vmatprep.mubr.bf16.mxu0 0
    %3980 = vmatmul.mubr.bf16.gmra.mrb[0].mxu0 %v3777
    %v3981 = vpop.f32.mrb[0].mxu0
    %v3982 = vadd.f32 0.0, %v3981
    %v3983 = vpop.f32.mrb[0].mxu0
    %v3984 = vpop.f32.mrb[0].mxu0
    %v3985 = vadd.f32 0.0, %v3984
    %v3986 = vpop.f32.mrb[0].mxu0
    %3987 = vmatprep.mubr.bf16.mxu0 0
    %3988 = vmatmul.mubr.bf16.gmra.mrb[0].mxu0 %v3780
    %v3989 = vpop.f32.mrb[0].mxu0
    %v3990 = vadd.f32 0.0, %v3989
    %v3991 = vpop.f32.mrb[0].mxu0
    %v3992 = vpop.f32.mrb[0].mxu0
    %v3993 = vadd.f32 0.0, %v3992
    %v3994 = vpop.f32.mrb[0].mxu0
    %3995 = vmatprep.mubr.bf16.mxu0 0
    %3996 = vmatmul.mubr.bf16.gmra.mrb[0].mxu0 %v3783
    %v3997 = vpop.f32.mrb[0].mxu0
    %v3998 = vadd.f32 0.0, %v3997
    %v3999 = vpop.f32.mrb[0].mxu0
    %v4000 = vpop.f32.mrb[0].mxu0
    %v4001 = vadd.f32 0.0, %v4000
    %v4002 = vpop.f32.mrb[0].mxu0
    %4003 = vmatprep.mubr.bf16.mxu0 0
    %4004 = vmatmul.mubr.bf16.gmra.mrb[0].mxu0 %v3786
    %v4005 = vpop.f32.mrb[0].mxu0
    %v4006 = vadd.f32 0.0, %v4005
    %v4007 = vpop.f32.mrb[0].mxu0
    %v4008 = vpop.f32.mrb[0].mxu0
    %v4009 = vadd.f32 0.0, %v4008
    %v4010 = vpop.f32.mrb[0].mxu0
    %4011 = vmatprep.mubr.bf16.mxu0 0
    %4012 = vmatmul.mubr.bf16.gmra.mrb[0].mxu0 %v3789
    %v4013 = vpop.f32.mrb[0].mxu0
    %v4014 = vadd.f32 0.0, %v4013
    %v4015 = vpop.f32.mrb[0].mxu0
    %v4016 = vpop.f32.mrb[0].mxu0
    %v4017 = vadd.f32 0.0, %v4016
    %v4018 = vpop.f32.mrb[0].mxu0
    %4019 = vmatprep.mubr.bf16.mxu0 0
    %4020 = vmatmul.mubr.bf16.gmra.mrb[0].mxu0 %v3792
    %v4021 = vpop.f32.mrb[0].mxu0
    %v4022 = vadd.f32 0.0, %v4021
    %v4023 = vpop.f32.mrb[0].mxu0
    %v4024 = vpop.f32.mrb[0].mxu0
    %v4025 = vadd.f32 0.0, %v4024
    %v4026 = vpop.f32.mrb[0].mxu0
    %4027 = vmatprep.mubr.bf16.mxu0 0
    %4028 = vmatmul.mubr.bf16.gmra.mrb[0].mxu0 %v3795
    %v4029 = vpop.f32.mrb[0].mxu0
    %v4030 = vadd.f32 0.0, %v4029
    %v4031 = vpop.f32.mrb[0].mxu0
    %v4032 = vpop.f32.mrb[0].mxu0
    %v4033 = vadd.f32 0.0, %v4032
    %v4034 = vpop.f32.mrb[0].mxu0
    %4035 = vmatprep.mubr.bf16.mxu0 0
    %4036 = vmatmul.mubr.bf16.gmra.mrb[0].mxu0 %v3798
    %v4037 = vpop.f32.mrb[0].mxu0
    %v4038 = vadd.f32 0.0, %v4037
    %v4039 = vpop.f32.mrb[0].mxu0
    %v4040 = vpop.f32.mrb[0].mxu0
    %v4041 = vadd.f32 0.0, %v4040
    %v4042 = vpop.f32.mrb[0].mxu0
    %4043 = vmatprep.mubr.bf16.mxu0 0
    %4044 = vmatmul.mubr.bf16.gmra.mrb[0].mxu0 %v3801
    %v4045 = vpop.f32.mrb[0].mxu0
    %v4046 = vadd.f32 0.0, %v4045
    %v4047 = vpop.f32.mrb[0].mxu0
    %v4048 = vpop.f32.mrb[0].mxu0
    %v4049 = vadd.f32 0.0, %v4048
    %v4050 = vpop.f32.mrb[0].mxu0
    %4051 = vmatprep.mubr.bf16.mxu0 0
    %4052 = vmatmul.mubr.bf16.gmra.mrb[0].mxu0 %v3804
    %v4053 = vpop.f32.mrb[0].mxu0
    %v4054 = vadd.f32 0.0, %v4053
    %v4055 = vpop.f32.mrb[0].mxu0
    %v4056 = vpop.f32.mrb[0].mxu0
    %v4057 = vadd.f32 0.0, %v4056
    %v4058 = vpop.f32.mrb[0].mxu0
    %4059 = vmatprep.mubr.bf16.mxu0 0
    %4060 = vmatmul.mubr.bf16.gmra.mrb[0].mxu0 %v3807
    %v4061 = vpop.f32.mrb[0].mxu0
    %v4062 = vadd.f32 0.0, %v4061
    %v4063 = vpop.f32.mrb[0].mxu0
    %v4064 = vpop.f32.mrb[0].mxu0
    %v4065 = vadd.f32 0.0, %v4064
    %v4066 = vpop.f32.mrb[0].mxu0
    %4067 = vmatprep.mubr.bf16.mxu0 0
    %4068 = vmatmul.mubr.bf16.gmra.mrb[0].mxu0 %v3810
    %v4069 = vpop.f32.mrb[0].mxu0
    %v4070 = vadd.f32 0.0, %v4069
    %v4071 = vpop.f32.mrb[0].mxu0
    %v4072 = vpop.f32.mrb[0].mxu0
    %v4073 = vadd.f32 0.0, %v4072
    %v4074 = vpop.f32.mrb[0].mxu0
    %4075 = vmatprep.mubr.bf16.mxu0 0
    %4076 = vmatmul.mubr.bf16.gmra.mrb[0].mxu0 %v3813
    %v4077 = vpop.f32.mrb[0].mxu0
    %v4078 = vadd.f32 0.0, %v4077
    %v4079 = vpop.f32.mrb[0].mxu0
    %v4080 = vpop.f32.mrb[0].mxu0
    %v4081 = vadd.f32 0.0, %v4080
    %v4082 = vpop.f32.mrb[0].mxu0
    %4083 = vmatprep.mubr.bf16.mxu0 0
    %4084 = vmatmul.mubr.bf16.gmra.mrb[0].mxu0 %v3816
    %v4085 = vpop.f32.mrb[0].mxu0
    %v4086 = vadd.f32 0.0, %v4085
    %v4087 = vpop.f32.mrb[0].mxu0
    %v4088 = vpop.f32.mrb[0].mxu0
    %v4089 = vadd.f32 0.0, %v4088
    %v4090 = vpop.f32.mrb[0].mxu0
    %4091 = vmatprep.mubr.bf16.mxu0 0
    %4092 = vmatmul.mubr.bf16.gmra.mrb[0].mxu0 %v3819
    %v4093 = vpop.f32.mrb[0].mxu0
    %v4094 = vadd.f32 0.0, %v4093
    %v4095 = vpop.f32.mrb[0].mxu0
    %v4096 = vpop.f32.mrb[0].mxu0
    %v4097 = vadd.f32 0.0, %v4096
    %v4098 = vpop.f32.mrb[0].mxu0
    %4099 = vmatprep.mubr.bf16.mxu0 0
    %4100 = vmatmul.mubr.bf16.gmra.mrb[0].mxu0 %v3822
    %v4101 = vpop.f32.mrb[0].mxu0
    %v4102 = vadd.f32 0.0, %v4101
    %v4103 = vpop.f32.mrb[0].mxu0
    %v4104 = vpop.f32.mrb[0].mxu0
    %v4105 = vadd.f32 0.0, %v4104
    %v4106 = vpop.f32.mrb[0].mxu0
    %4107 = vmatprep.mubr.bf16.mxu0 0
    %4108 = vmatmul.mubr.bf16.gmra.mrb[0].mxu0 %v3825
    %v4109 = vpop.f32.mrb[0].mxu0
    %v4110 = vadd.f32 0.0, %v4109
    %v4111 = vpop.f32.mrb[0].mxu0
    %v4112 = vpop.f32.mrb[0].mxu0
    %v4113 = vadd.f32 0.0, %v4112
    %v4114 = vpop.f32.mrb[0].mxu0
    %4115 = vdwg.mxu0
    %v4173 = vunpack.c.l.b16 %v3619
    %v4174 = vunpack.c.l.b16 %v3620
    %v4175 = vunpack.c.l.b16 %v3621
    %v4176 = vunpack.c.l.b16 %v3622
    %v4177 = vunpack.c.l.b16 %v3623
    %v4178 = vunpack.c.l.b16 %v3624
    %v4179 = vunpack.c.l.b16 %v3625
    %v4180 = vunpack.c.l.b16 %v3626
    %v4181 = vunpack.c.l.b16 %v3627
    %v4182 = vunpack.c.l.b16 %v3628
    %v4183 = vunpack.c.l.b16 %v3629
    %v4184 = vunpack.c.l.b16 %v3630
    %v4185 = vunpack.c.l.b16 %v3631
    %v4186 = vunpack.c.l.b16 %v3632
    %v4187 = vunpack.c.l.b16 %v3633
    %v4188 = vunpack.c.l.b16 %v3634
    %v4189 = vunpack.c.l.b16 %v3635
    %v4190 = vunpack.c.l.b16 %v3636
    %v4191 = vunpack.c.l.b16 %v3637
    %v4192 = vunpack.c.l.b16 %v3638
    %v4193 = vunpack.c.l.b16 %v3639
    %v4194 = vunpack.c.l.b16 %v3640
    %v4195 = vunpack.c.l.b16 %v3641
    %v4196 = vunpack.c.l.b16 %v3642
    %v4197 = vunpack.c.l.b16 %v3643
    %v4198 = vunpack.c.l.b16 %v3644
    %v4199 = vunpack.c.l.b16 %v3645
    %v4200 = vunpack.c.l.b16 %v3646
    %v4201 = vunpack.c.l.b16 %v3647
    %v4202 = vunpack.c.l.b16 %v3648
    %v4203 = vunpack.c.l.b16 %v3649
    %v4204 = vunpack.c.l.b16 %v3650
    %v4205 = vunpack.c.l.b16 %v3651
    %v4206 = vunpack.c.l.b16 %v3652
    %v4207 = vunpack.c.l.b16 %v3653
    %v4208 = vunpack.c.l.b16 %v3654
    %v4209 = vunpack.c.l.b16 %v3655
    %v4210 = vunpack.c.l.b16 %v3656
    %v4211 = vunpack.c.l.b16 %v3657
    %v4212 = vunpack.c.l.b16 %v3658
    %v4213 = vunpack.c.l.b16 %v3659
    %v4214 = vunpack.c.l.b16 %v3660
    %v4215 = vunpack.c.l.b16 %v3661
    %v4216 = vunpack.c.l.b16 %v3662
    %v4217 = vunpack.c.l.b16 %v3663
    %v4218 = vunpack.c.l.b16 %v3664
    %v4219 = vunpack.c.l.b16 %v3665
    %v4220 = vunpack.c.l.b16 %v3666
    %v4221 = vunpack.c.l.b16 %v3667
    %v4222 = vunpack.c.l.b16 %v3668
    %v4223 = vunpack.c.l.b16 %v3669
    %v4224 = vunpack.c.l.b16 %v3670
    %v4225 = vunpack.c.l.b16 %v3671
    %v4226 = vunpack.c.l.b16 %v3672
    %v4227 = vunpack.c.l.b16 %v3673
    %v4228 = vunpack.c.l.b16 %v3674
    %v4229 = vunpack.c.l.b16 %v3675
    %v4230 = vpack.c.b16 %v4174, %v4173
    %v4231 = vpack.c.b16 %v4176, %v4175
    %v4232 = vpack.c.b16 %v4178, %v4177
    %v4233 = vpack.c.b16 %v4180, %v4179
    %v4234 = vpack.c.b16 %v4181, %v4173
    %v4235 = vpack.c.b16 %v4183, %v4182
    %v4236 = vpack.c.b16 %v4185, %v4184
    %v4237 = vpack.c.b16 %v4187, %v4186
    %v4238 = vpack.c.b16 %v4188, %v4173
    %v4239 = vpack.c.b16 %v4190, %v4189
    %v4240 = vpack.c.b16 %v4192, %v4191
    %v4241 = vpack.c.b16 %v4194, %v4193
    %v4242 = vpack.c.b16 %v4195, %v4173
    %v4243 = vpack.c.b16 %v4197, %v4196
    %v4244 = vpack.c.b16 %v4199, %v4198
    %v4245 = vpack.c.b16 %v4201, %v4200
    %v4246 = vpack.c.b16 %v4202, %v4173
    %v4247 = vpack.c.b16 %v4204, %v4203
    %v4248 = vpack.c.b16 %v4206, %v4205
    %v4249 = vpack.c.b16 %v4208, %v4207
    %v4250 = vpack.c.b16 %v4209, %v4173
    %v4251 = vpack.c.b16 %v4211, %v4210
    %v4252 = vpack.c.b16 %v4213, %v4212
    %v4253 = vpack.c.b16 %v4215, %v4214
    %v4254 = vpack.c.b16 %v4216, %v4173
    %v4255 = vpack.c.b16 %v4218, %v4217
    %v4256 = vpack.c.b16 %v4220, %v4219
    %v4257 = vpack.c.b16 %v4222, %v4221
    %v4258 = vpack.c.b16 %v4223, %v4173
    %v4259 = vpack.c.b16 %v4225, %v4224
    %v4260 = vpack.c.b16 %v4227, %v4226
    %v4261 = vpack.c.b16 %v4229, %v4228
    %v4266 = vunpack.c.l.b16 %v3676
    %v4267 = vunpack.c.l.b16 %v3677
    %v4268 = vunpack.c.l.b16 %v3678
    %v4269 = vunpack.c.l.b16 %v3679
    %v4270 = vpack.c.b16 %v4267, %v4266
    %v4271 = vpack.c.b16 %v4269, %v4268
    %v4275 = vsel %vm2392, %v4230, 0
    %v4278 = vsel %vm2392, %v4231, 0
    %v4281 = vsel %vm2392, %v4232, 0
    %v4284 = vsel %vm2392, %v4233, 0
    %v4287 = vsel %vm2392, %v4234, 0
    %v4290 = vsel %vm2392, %v4235, 0
    %v4293 = vsel %vm2392, %v4236, 0
    %v4296 = vsel %vm2392, %v4237, 0
    %v4299 = vsel %vm2392, %v4238, 0
    %v4302 = vsel %vm2392, %v4239, 0
    %v4305 = vsel %vm2392, %v4240, 0
    %v4308 = vsel %vm2392, %v4241, 0
    %v4311 = vsel %vm2392, %v4242, 0
    %v4314 = vsel %vm2392, %v4243, 0
    %v4317 = vsel %vm2392, %v4244, 0
    %v4320 = vsel %vm2392, %v4245, 0
    %v4323 = vsel %vm2392, %v4246, 0
    %v4326 = vsel %vm2392, %v4247, 0
    %v4329 = vsel %vm2392, %v4248, 0
    %v4332 = vsel %vm2392, %v4249, 0
    %v4335 = vsel %vm2392, %v4250, 0
    %v4338 = vsel %vm2392, %v4251, 0
    %v4341 = vsel %vm2392, %v4252, 0
    %v4344 = vsel %vm2392, %v4253, 0
    %v4347 = vsel %vm2392, %v4254, 0
    %v4350 = vsel %vm2392, %v4255, 0
    %v4353 = vsel %vm2392, %v4256, 0
    %v4356 = vsel %vm2392, %v4257, 0
    %v4359 = vsel %vm2392, %v4258, 0
    %v4362 = vsel %vm2392, %v4259, 0
    %v4365 = vsel %vm2392, %v4260, 0
    %v4368 = vsel %vm2392, %v4261, 0
    %4370 = vmatprep.subr.bf16.mxu0 0
    %4371 = vmatpush1.bf16.msra.mxu0 %v4270
    %4372 = vmatprep.subr.bf16.mxu0 0
    %4373 = vmatpush1.bf16.msra.mxu0 %v4271
    %4374 = vmatprep.subr.bf16.mxu0 0
    %4375 = vmatpush1.bf16.msra.mxu0 0
    %4376 = vmatprep.subr.bf16.mxu0 0
    %4377 = vmatpush1.bf16.msra.mxu0 0
    %4378 = vmatprep.subr.bf16.mxu0 0
    %4379 = vmatpush1.bf16.msra.mxu0 0
    %4380 = vmatprep.subr.bf16.mxu0 0
    %4381 = vmatpush1.bf16.msra.mxu0 0
    %4382 = vmatprep.subr.bf16.mxu0 0
    %4383 = vmatpush1.bf16.msra.mxu0 0
    %4384 = vmatprep.subr.bf16.mxu0 0
    %4385 = vmatpush1.bf16.msra.mxu0 0
    %4386 = vmatprep.subr.bf16.mxu0 0
    %4387 = vmatpush1.bf16.msra.mxu0 0
    %4388 = vmatprep.subr.bf16.mxu0 0
    %4389 = vmatpush1.bf16.msra.mxu0 0
    %4390 = vmatprep.subr.bf16.mxu0 0
    %4391 = vmatpush1.bf16.msra.mxu0 0
    %4392 = vmatprep.subr.bf16.mxu0 0
    %4393 = vmatpush1.bf16.msra.mxu0 0
    %4394 = vmatprep.subr.bf16.mxu0 0
    %4395 = vmatpush1.bf16.msra.mxu0 0
    %4396 = vmatprep.subr.bf16.mxu0 0
    %4397 = vmatpush1.bf16.msra.mxu0 0
    %4398 = vmatprep.subr.bf16.mxu0 0
    %4399 = vmatpush1.bf16.msra.mxu0 0
    %4400 = vmatprep.subr.bf16.mxu0 0
    %4401 = vmatpush1.bf16.msra.mxu0 0
    %4402 = vmatprep.mubr.bf16.mxu0 0
    %4403 = vmatmul.mubr.bf16.gmra.mrb[0].mxu0 %v4275
    %v4404 = vpop.f32.mrb[0].mxu0
    %v4405 = vadd.f32 %v3862, %v4404
    %v4406 = vpop.f32.mrb[0].mxu0
    %v4407 = vpop.f32.mrb[0].mxu0
    %v4408 = vadd.f32 %v3865, %v4407
    %v4409 = vpop.f32.mrb[0].mxu0
    %4410 = vmatprep.mubr.bf16.mxu0 0
    %4411 = vmatmul.mubr.bf16.gmra.mrb[0].mxu0 %v4278
    %v4412 = vpop.f32.mrb[0].mxu0
    %v4413 = vadd.f32 %v3870, %v4412
    %v4414 = vpop.f32.mrb[0].mxu0
    %v4415 = vpop.f32.mrb[0].mxu0
    %v4416 = vadd.f32 %v3873, %v4415
    %v4417 = vpop.f32.mrb[0].mxu0
    %4418 = vmatprep.mubr.bf16.mxu0 0
    %4419 = vmatmul.mubr.bf16.gmra.mrb[0].mxu0 %v4281
    %v4420 = vpop.f32.mrb[0].mxu0
    %v4421 = vadd.f32 %v3878, %v4420
    %v4422 = vpop.f32.mrb[0].mxu0
    %v4423 = vpop.f32.mrb[0].mxu0
    %v4424 = vadd.f32 %v3881, %v4423
    %v4425 = vpop.f32.mrb[0].mxu0
    %4426 = vmatprep.mubr.bf16.mxu0 0
    %4427 = vmatmul.mubr.bf16.gmra.mrb[0].mxu0 %v4284
    %v4428 = vpop.f32.mrb[0].mxu0
    %v4429 = vadd.f32 %v3886, %v4428
    %v4430 = vpop.f32.mrb[0].mxu0
    %v4431 = vpop.f32.mrb[0].mxu0
    %v4432 = vadd.f32 %v3889, %v4431
    %v4433 = vpop.f32.mrb[0].mxu0
    %4434 = vmatprep.mubr.bf16.mxu0 0
    %4435 = vmatmul.mubr.bf16.gmra.mrb[0].mxu0 %v4287
    %v4436 = vpop.f32.mrb[0].mxu0
    %v4437 = vadd.f32 %v3894, %v4436
    %v4438 = vpop.f32.mrb[0].mxu0
    %v4439 = vpop.f32.mrb[0].mxu0
    %v4440 = vadd.f32 %v3897, %v4439
    %v4441 = vpop.f32.mrb[0].mxu0
    %4442 = vmatprep.mubr.bf16.mxu0 0
    %4443 = vmatmul.mubr.bf16.gmra.mrb[0].mxu0 %v4290
    %v4444 = vpop.f32.mrb[0].mxu0
    %v4445 = vadd.f32 %v3902, %v4444
    %v4446 = vpop.f32.mrb[0].mxu0
    %v4447 = vpop.f32.mrb[0].mxu0
    %v4448 = vadd.f32 %v3905, %v4447
    %v4449 = vpop.f32.mrb[0].mxu0
    %4450 = vmatprep.mubr.bf16.mxu0 0
    %4451 = vmatmul.mubr.bf16.gmra.mrb[0].mxu0 %v4293
    %v4452 = vpop.f32.mrb[0].mxu0
    %v4453 = vadd.f32 %v3910, %v4452
    %v4454 = vpop.f32.mrb[0].mxu0
    %v4455 = vpop.f32.mrb[0].mxu0
    %v4456 = vadd.f32 %v3913, %v4455
    %v4457 = vpop.f32.mrb[0].mxu0
    %4458 = vmatprep.mubr.bf16.mxu0 0
    %4459 = vmatmul.mubr.bf16.gmra.mrb[0].mxu0 %v4296
    %v4460 = vpop.f32.mrb[0].mxu0
    %v4461 = vadd.f32 %v3918, %v4460
    %v4462 = vpop.f32.mrb[0].mxu0
    %v4463 = vpop.f32.mrb[0].mxu0
    %v4464 = vadd.f32 %v3921, %v4463
    %v4465 = vpop.f32.mrb[0].mxu0
    %4466 = vmatprep.mubr.bf16.mxu0 0
    %4467 = vmatmul.mubr.bf16.gmra.mrb[0].mxu0 %v4299
    %v4468 = vpop.f32.mrb[0].mxu0
    %v4469 = vadd.f32 %v3926, %v4468
    %v4470 = vpop.f32.mrb[0].mxu0
    %v4471 = vpop.f32.mrb[0].mxu0
    %v4472 = vadd.f32 %v3929, %v4471
    %v4473 = vpop.f32.mrb[0].mxu0
    %4474 = vmatprep.mubr.bf16.mxu0 0
    %4475 = vmatmul.mubr.bf16.gmra.mrb[0].mxu0 %v4302
    %v4476 = vpop.f32.mrb[0].mxu0
    %v4477 = vadd.f32 %v3934, %v4476
    %v4478 = vpop.f32.mrb[0].mxu0
    %v4479 = vpop.f32.mrb[0].mxu0
    %v4480 = vadd.f32 %v3937, %v4479
    %v4481 = vpop.f32.mrb[0].mxu0
    %4482 = vmatprep.mubr.bf16.mxu0 0
    %4483 = vmatmul.mubr.bf16.gmra.mrb[0].mxu0 %v4305
    %v4484 = vpop.f32.mrb[0].mxu0
    %v4485 = vadd.f32 %v3942, %v4484
    %v4486 = vpop.f32.mrb[0].mxu0
    %v4487 = vpop.f32.mrb[0].mxu0
    %v4488 = vadd.f32 %v3945, %v4487
    %v4489 = vpop.f32.mrb[0].mxu0
    %4490 = vmatprep.mubr.bf16.mxu0 0
    %4491 = vmatmul.mubr.bf16.gmra.mrb[0].mxu0 %v4308
    %v4492 = vpop.f32.mrb[0].mxu0
    %v4493 = vadd.f32 %v3950, %v4492
    %v4494 = vpop.f32.mrb[0].mxu0
    %v4495 = vpop.f32.mrb[0].mxu0
    %v4496 = vadd.f32 %v3953, %v4495
    %v4497 = vpop.f32.mrb[0].mxu0
    %4498 = vmatprep.mubr.bf16.mxu0 0
    %4499 = vmatmul.mubr.bf16.gmra.mrb[0].mxu0 %v4311
    %v4500 = vpop.f32.mrb[0].mxu0
    %v4501 = vadd.f32 %v3958, %v4500
    %v4502 = vpop.f32.mrb[0].mxu0
    %v4503 = vpop.f32.mrb[0].mxu0
    %v4504 = vadd.f32 %v3961, %v4503
    %v4505 = vpop.f32.mrb[0].mxu0
    %4506 = vmatprep.mubr.bf16.mxu0 0
    %4507 = vmatmul.mubr.bf16.gmra.mrb[0].mxu0 %v4314
    %v4508 = vpop.f32.mrb[0].mxu0
    %v4509 = vadd.f32 %v3966, %v4508
    %v4510 = vpop.f32.mrb[0].mxu0
    %v4511 = vpop.f32.mrb[0].mxu0
    %v4512 = vadd.f32 %v3969, %v4511
    %v4513 = vpop.f32.mrb[0].mxu0
    %4514 = vmatprep.mubr.bf16.mxu0 0
    %4515 = vmatmul.mubr.bf16.gmra.mrb[0].mxu0 %v4317
    %v4516 = vpop.f32.mrb[0].mxu0
    %v4517 = vadd.f32 %v3974, %v4516
    %v4518 = vpop.f32.mrb[0].mxu0
    %v4519 = vpop.f32.mrb[0].mxu0
    %v4520 = vadd.f32 %v3977, %v4519
    %v4521 = vpop.f32.mrb[0].mxu0
    %4522 = vmatprep.mubr.bf16.mxu0 0
    %4523 = vmatmul.mubr.bf16.gmra.mrb[0].mxu0 %v4320
    %v4524 = vpop.f32.mrb[0].mxu0
    %v4525 = vadd.f32 %v3982, %v4524
    %v4526 = vpop.f32.mrb[0].mxu0
    %v4527 = vpop.f32.mrb[0].mxu0
    %v4528 = vadd.f32 %v3985, %v4527
    %v4529 = vpop.f32.mrb[0].mxu0
    %4530 = vmatprep.mubr.bf16.mxu0 0
    %4531 = vmatmul.mubr.bf16.gmra.mrb[0].mxu0 %v4323
    %v4532 = vpop.f32.mrb[0].mxu0
    %v4533 = vadd.f32 %v3990, %v4532
    %v4534 = vpop.f32.mrb[0].mxu0
    %v4535 = vpop.f32.mrb[0].mxu0
    %v4536 = vadd.f32 %v3993, %v4535
    %v4537 = vpop.f32.mrb[0].mxu0
    %4538 = vmatprep.mubr.bf16.mxu0 0
    %4539 = vmatmul.mubr.bf16.gmra.mrb[0].mxu0 %v4326
    %v4540 = vpop.f32.mrb[0].mxu0
    %v4541 = vadd.f32 %v3998, %v4540
    %v4542 = vpop.f32.mrb[0].mxu0
    %v4543 = vpop.f32.mrb[0].mxu0
    %v4544 = vadd.f32 %v4001, %v4543
    %v4545 = vpop.f32.mrb[0].mxu0
    %4546 = vmatprep.mubr.bf16.mxu0 0
    %4547 = vmatmul.mubr.bf16.gmra.mrb[0].mxu0 %v4329
    %v4548 = vpop.f32.mrb[0].mxu0
    %v4549 = vadd.f32 %v4006, %v4548
    %v4550 = vpop.f32.mrb[0].mxu0
    %v4551 = vpop.f32.mrb[0].mxu0
    %v4552 = vadd.f32 %v4009, %v4551
    %v4553 = vpop.f32.mrb[0].mxu0
    %4554 = vmatprep.mubr.bf16.mxu0 0
    %4555 = vmatmul.mubr.bf16.gmra.mrb[0].mxu0 %v4332
    %v4556 = vpop.f32.mrb[0].mxu0
    %v4557 = vadd.f32 %v4014, %v4556
    %v4558 = vpop.f32.mrb[0].mxu0
    %v4559 = vpop.f32.mrb[0].mxu0
    %v4560 = vadd.f32 %v4017, %v4559
    %v4561 = vpop.f32.mrb[0].mxu0
    %4562 = vmatprep.mubr.bf16.mxu0 0
    %4563 = vmatmul.mubr.bf16.gmra.mrb[0].mxu0 %v4335
    %v4564 = vpop.f32.mrb[0].mxu0
    %v4565 = vadd.f32 %v4022, %v4564
    %v4566 = vpop.f32.mrb[0].mxu0
    %v4567 = vpop.f32.mrb[0].mxu0
    %v4568 = vadd.f32 %v4025, %v4567
    %v4569 = vpop.f32.mrb[0].mxu0
    %4570 = vmatprep.mubr.bf16.mxu0 0
    %4571 = vmatmul.mubr.bf16.gmra.mrb[0].mxu0 %v4338
    %v4572 = vpop.f32.mrb[0].mxu0
    %v4573 = vadd.f32 %v4030, %v4572
    %v4574 = vpop.f32.mrb[0].mxu0
    %v4575 = vpop.f32.mrb[0].mxu0
    %v4576 = vadd.f32 %v4033, %v4575
    %v4577 = vpop.f32.mrb[0].mxu0
    %4578 = vmatprep.mubr.bf16.mxu0 0
    %4579 = vmatmul.mubr.bf16.gmra.mrb[0].mxu0 %v4341
    %v4580 = vpop.f32.mrb[0].mxu0
    %v4581 = vadd.f32 %v4038, %v4580
    %v4582 = vpop.f32.mrb[0].mxu0
    %v4583 = vpop.f32.mrb[0].mxu0
    %v4584 = vadd.f32 %v4041, %v4583
    %v4585 = vpop.f32.mrb[0].mxu0
    %4586 = vmatprep.mubr.bf16.mxu0 0
    %4587 = vmatmul.mubr.bf16.gmra.mrb[0].mxu0 %v4344
    %v4588 = vpop.f32.mrb[0].mxu0
    %v4589 = vadd.f32 %v4046, %v4588
    %v4590 = vpop.f32.mrb[0].mxu0
    %v4591 = vpop.f32.mrb[0].mxu0
    %v4592 = vadd.f32 %v4049, %v4591
    %v4593 = vpop.f32.mrb[0].mxu0
    %4594 = vmatprep.mubr.bf16.mxu0 0
    %4595 = vmatmul.mubr.bf16.gmra.mrb[0].mxu0 %v4347
    %v4596 = vpop.f32.mrb[0].mxu0
    %v4597 = vadd.f32 %v4054, %v4596
    %v4598 = vpop.f32.mrb[0].mxu0
    %v4599 = vpop.f32.mrb[0].mxu0
    %v4600 = vadd.f32 %v4057, %v4599
    %v4601 = vpop.f32.mrb[0].mxu0
    %4602 = vmatprep.mubr.bf16.mxu0 0
    %4603 = vmatmul.mubr.bf16.gmra.mrb[0].mxu0 %v4350
    %v4604 = vpop.f32.mrb[0].mxu0
    %v4605 = vadd.f32 %v4062, %v4604
    %v4606 = vpop.f32.mrb[0].mxu0
    %v4607 = vpop.f32.mrb[0].mxu0
    %v4608 = vadd.f32 %v4065, %v4607
    %v4609 = vpop.f32.mrb[0].mxu0
    %4610 = vmatprep.mubr.bf16.mxu0 0
    %4611 = vmatmul.mubr.bf16.gmra.mrb[0].mxu0 %v4353
    %v4612 = vpop.f32.mrb[0].mxu0
    %v4613 = vadd.f32 %v4070, %v4612
    %v4614 = vpop.f32.mrb[0].mxu0
    %v4615 = vpop.f32.mrb[0].mxu0
    %v4616 = vadd.f32 %v4073, %v4615
    %v4617 = vpop.f32.mrb[0].mxu0
    %4618 = vmatprep.mubr.bf16.mxu0 0
    %4619 = vmatmul.mubr.bf16.gmra.mrb[0].mxu0 %v4356
    %v4620 = vpop.f32.mrb[0].mxu0
    %v4621 = vadd.f32 %v4078, %v4620
    %v4622 = vpop.f32.mrb[0].mxu0
    %v4623 = vpop.f32.mrb[0].mxu0
    %v4624 = vadd.f32 %v4081, %v4623
    %v4625 = vpop.f32.mrb[0].mxu0
    %4626 = vmatprep.mubr.bf16.mxu0 0
    %4627 = vmatmul.mubr.bf16.gmra.mrb[0].mxu0 %v4359
    %v4628 = vpop.f32.mrb[0].mxu0
    %v4629 = vadd.f32 %v4086, %v4628
    %v4630 = vpop.f32.mrb[0].mxu0
    %v4631 = vpop.f32.mrb[0].mxu0
    %v4632 = vadd.f32 %v4089, %v4631
    %v4633 = vpop.f32.mrb[0].mxu0
    %4634 = vmatprep.mubr.bf16.mxu0 0
    %4635 = vmatmul.mubr.bf16.gmra.mrb[0].mxu0 %v4362
    %v4636 = vpop.f32.mrb[0].mxu0
    %v4637 = vadd.f32 %v4094, %v4636
    %v4638 = vpop.f32.mrb[0].mxu0
    %v4639 = vpop.f32.mrb[0].mxu0
    %v4640 = vadd.f32 %v4097, %v4639
    %v4641 = vpop.f32.mrb[0].mxu0
    %4642 = vmatprep.mubr.bf16.mxu0 0
    %4643 = vmatmul.mubr.bf16.gmra.mrb[0].mxu0 %v4365
    %v4644 = vpop.f32.mrb[0].mxu0
    %v4645 = vadd.f32 %v4102, %v4644
    %v4646 = vpop.f32.mrb[0].mxu0
    %v4647 = vpop.f32.mrb[0].mxu0
    %v4648 = vadd.f32 %v4105, %v4647
    %v4649 = vpop.f32.mrb[0].mxu0
    %4650 = vmatprep.mubr.bf16.mxu0 0
    %4651 = vmatmul.mubr.bf16.gmra.mrb[0].mxu0 %v4368
    %v4652 = vpop.f32.mrb[0].mxu0
    %v4653 = vadd.f32 %v4110, %v4652
    %v4654 = vpop.f32.mrb[0].mxu0
    %v4655 = vpop.f32.mrb[0].mxu0
    %v4656 = vadd.f32 %v4113, %v4655
    %v4657 = vpop.f32.mrb[0].mxu0
    %4658 = vdwg.mxu0
    %v4659 = vrot.slane %v3164, 1
    %v4660 = vor.u32 %v3161, %v4659
    %v4661 = vrot.slane %v3171, 1
    %v4662 = vor.u32 %v3168, %v4661
    %v4663 = vrot.slane %v3178, 1
    %v4664 = vor.u32 %v3175, %v4663
    %v4665 = vrot.slane %v3185, 1
    %v4666 = vor.u32 %v3182, %v4665
    %v4667 = vrot.slane %v3192, 1
    %v4668 = vor.u32 %v3189, %v4667
    %v4669 = vrot.slane %v3199, 1
    %v4670 = vor.u32 %v3196, %v4669
    %v4671 = vrot.slane %v3206, 1
    %v4672 = vor.u32 %v3203, %v4671
    %v4673 = vrot.slane %v3213, 1
    %v4674 = vor.u32 %v3210, %v4673
    %v4675 = vrot.slane %v3220, 1
    %v4676 = vor.u32 %v3217, %v4675
    %v4677 = vrot.slane %v3227, 1
    %v4678 = vor.u32 %v3224, %v4677
    %v4679 = vrot.slane %v3234, 1
    %v4680 = vor.u32 %v3231, %v4679
    %v4681 = vrot.slane %v3241, 1
    %v4682 = vor.u32 %v3238, %v4681
    %v4683 = vrot.slane %v3248, 1
    %v4684 = vor.u32 %v3245, %v4683
    %v4685 = vrot.slane %v3255, 1
    %v4686 = vor.u32 %v3252, %v4685
    %v4687 = vrot.slane %v3262, 1
    %v4688 = vor.u32 %v3259, %v4687
    %v4689 = vrot.slane %v3269, 1
    %v4690 = vor.u32 %v3266, %v4689
    %v4691 = vrot.slane %v3276, 1
    %v4692 = vor.u32 %v3273, %v4691
    %v4693 = vrot.slane %v3283, 1
    %v4694 = vor.u32 %v3280, %v4693
    %v4695 = vrot.slane %v3290, 1
    %v4696 = vor.u32 %v3287, %v4695
    %v4697 = vrot.slane %v3297, 1
    %v4698 = vor.u32 %v3294, %v4697
    %v4699 = vrot.slane %v3304, 1
    %v4700 = vor.u32 %v3301, %v4699
    %v4701 = vrot.slane %v3311, 1
    %v4702 = vor.u32 %v3308, %v4701
    %v4703 = vrot.slane %v3318, 1
    %v4704 = vor.u32 %v3315, %v4703
    %v4705 = vrot.slane %v3325, 1
    %v4706 = vor.u32 %v3322, %v4705
    %v4707 = vrot.slane %v3332, 1
    %v4708 = vor.u32 %v3329, %v4707
    %v4709 = vrot.slane %v3339, 1
    %v4710 = vor.u32 %v3336, %v4709
    %v4711 = vrot.slane %v3346, 1
    %v4712 = vor.u32 %v3343, %v4711
    %v4713 = vrot.slane %v3353, 1
    %v4714 = vor.u32 %v3350, %v4713
    %v4715 = vrot.slane %v3360, 1
    %v4716 = vor.u32 %v3357, %v4715
    %v4717 = vrot.slane %v3367, 1
    %v4718 = vor.u32 %v3364, %v4717
    %v4719 = vrot.slane %v3374, 1
    %v4720 = vor.u32 %v3371, %v4719
    %v4721 = vrot.slane %v3381, 1
    %v4722 = vor.u32 %v3378, %v4721
    %v4723 = vrot.slane %v3388, 1
    %v4724 = vor.u32 %v3385, %v4723
    %v4725 = vrot.slane %v3395, 1
    %v4726 = vor.u32 %v3392, %v4725
    %v4727 = vrot.slane %v3402, 1
    %v4728 = vor.u32 %v3399, %v4727
    %v4729 = vrot.slane %v3409, 1
    %v4730 = vor.u32 %v3406, %v4729
    %v4731 = vrot.slane %v3416, 1
    %v4732 = vor.u32 %v3413, %v4731
    %v4733 = vrot.slane %v3423, 1
    %v4734 = vor.u32 %v3420, %v4733
    %v4735 = vrot.slane %v3430, 1
    %v4736 = vor.u32 %v3427, %v4735
    %v4737 = vrot.slane %v3437, 1
    %v4738 = vor.u32 %v3434, %v4737
    %v4739 = vrot.slane %v3444, 1
    %v4740 = vor.u32 %v3441, %v4739
    %v4741 = vrot.slane %v3451, 1
    %v4742 = vor.u32 %v3448, %v4741
    %v4743 = vrot.slane %v3458, 1
    %v4744 = vor.u32 %v3455, %v4743
    %v4745 = vrot.slane %v3465, 1
    %v4746 = vor.u32 %v3462, %v4745
    %v4747 = vrot.slane %v3472, 1
    %v4748 = vor.u32 %v3469, %v4747
    %v4749 = vrot.slane %v3479, 1
    %v4750 = vor.u32 %v3476, %v4749
    %v4751 = vrot.slane %v3486, 1
    %v4752 = vor.u32 %v3483, %v4751
    %v4753 = vrot.slane %v3493, 1
    %v4754 = vor.u32 %v3490, %v4753
    %v4755 = vrot.slane %v3500, 1
    %v4756 = vor.u32 %v3497, %v4755
    %v4757 = vrot.slane %v3507, 1
    %v4758 = vor.u32 %v3504, %v4757
    %v4759 = vrot.slane %v3514, 1
    %v4760 = vor.u32 %v3511, %v4759
    %v4761 = vrot.slane %v3521, 1
    %v4762 = vor.u32 %v3518, %v4761
    %v4763 = vrot.slane %v3528, 1
    %v4764 = vor.u32 %v3525, %v4763
    %v4765 = vrot.slane %v3535, 1
    %v4766 = vor.u32 %v3532, %v4765
    %v4767 = vrot.slane %v3542, 1
    %v4768 = vor.u32 %v3539, %v4767
    %v4769 = vrot.slane %v3549, 1
    %v4770 = vor.u32 %v3546, %v4769
    %v4771 = vrot.slane %v3556, 1
    %v4772 = vor.u32 %v3553, %v4771
    %vm4830 = vcmask 1043456
    %vm4831 = vsmask.f32 3328
    %vm4832 = vmand %vm4830, %vm4831
    %v4833 = vsel %vm4832, %v4660, 0
    %v4834 = vsel %vm4832, %v4662, 0
    %v4835 = vsel %vm4832, %v4664, 0
    %v4836 = vsel %vm4832, %v4666, 0
    %v4837 = vsel %vm4832, %v4668, 0
    %v4838 = vsel %vm4832, %v4670, 0
    %v4839 = vsel %vm4832, %v4672, 0
    %v4840 = vsel %vm4832, %v4674, 0
    %v4841 = vsel %vm4832, %v4676, 0
    %v4842 = vsel %vm4832, %v4678, 0
    %v4843 = vsel %vm4832, %v4680, 0
    %v4844 = vsel %vm4832, %v4682, 0
    %v4845 = vsel %vm4832, %v4684, 0
    %v4846 = vsel %vm4832, %v4686, 0
    %v4847 = vsel %vm4832, %v4688, 0
    %v4848 = vsel %vm4832, %v4690, 0
    %v4849 = vsel %vm4832, %v4692, 0
    %v4850 = vsel %vm4832, %v4694, 0
    %v4851 = vsel %vm4832, %v4696, 0
    %v4852 = vsel %vm4832, %v4698, 0
    %v4853 = vsel %vm4832, %v4700, 0
    %v4854 = vsel %vm4832, %v4702, 0
    %v4855 = vsel %vm4832, %v4704, 0
    %v4856 = vsel %vm4832, %v4706, 0
    %v4857 = vsel %vm4832, %v4708, 0
    %v4858 = vsel %vm4832, %v4710, 0
    %v4859 = vsel %vm4832, %v4712, 0
    %v4860 = vsel %vm4832, %v4714, 0
    %v4861 = vsel %vm4832, %v4716, 0
    %v4862 = vsel %vm4832, %v4718, 0
    %v4863 = vsel %vm4832, %v4720, 0
    %v4864 = vsel %vm4832, %v4722, 0
    %v4865 = vsel %vm4832, %v4724, 0
    %v4866 = vsel %vm4832, %v4726, 0
    %v4867 = vsel %vm4832, %v4728, 0
    %v4868 = vsel %vm4832, %v4730, 0
    %v4869 = vsel %vm4832, %v4732, 0
    %v4870 = vsel %vm4832, %v4734, 0
    %v4871 = vsel %vm4832, %v4736, 0
    %v4872 = vsel %vm4832, %v4738, 0
    %v4873 = vsel %vm4832, %v4740, 0
    %v4874 = vsel %vm4832, %v4742, 0
    %v4875 = vsel %vm4832, %v4744, 0
    %v4876 = vsel %vm4832, %v4746, 0
    %v4877 = vsel %vm4832, %v4748, 0
    %v4878 = vsel %vm4832, %v4750, 0
    %v4879 = vsel %vm4832, %v4752, 0
    %v4880 = vsel %vm4832, %v4754, 0
    %v4881 = vsel %vm4832, %v4756, 0
    %v4882 = vsel %vm4832, %v4758, 0
    %v4883 = vsel %vm4832, %v4760, 0
    %v4884 = vsel %vm4832, %v4762, 0
    %v4885 = vsel %vm4832, %v4764, 0
    %v4886 = vsel %vm4832, %v4766, 0
    %v4887 = vsel %vm4832, %v4768, 0
    %v4888 = vsel %vm4832, %v4770, 0
    %v4889 = vsel %vm4832, %v4772, 0
    %s4890 = scalar_lea.vmem %s3, 32
    %v4891 = vld [vmem:[%s4890] sm:$0xf]
    %v4892 = vld [vmem:[%s4890 + $0x4] sm:$0xf]
    %v4893 = vld [vmem:[%s4890 + $0x8] sm:$0xf]
    %v4894 = vld [vmem:[%s4890 + $0xc] sm:$0xf]
    %v4952 = vunpack.c.l.b16 %v4833
    %v4953 = vunpack.c.l.b16 %v4834
    %v4954 = vunpack.c.l.b16 %v4835
    %v4955 = vunpack.c.l.b16 %v4836
    %v4956 = vunpack.c.l.b16 %v4837
    %v4957 = vunpack.c.l.b16 %v4838
    %v4958 = vunpack.c.l.b16 %v4839
    %v4959 = vunpack.c.l.b16 %v4840
    %v4960 = vunpack.c.l.b16 %v4841
    %v4961 = vunpack.c.l.b16 %v4842
    %v4962 = vunpack.c.l.b16 %v4843
    %v4963 = vunpack.c.l.b16 %v4844
    %v4964 = vunpack.c.l.b16 %v4845
    %v4965 = vunpack.c.l.b16 %v4846
    %v4966 = vunpack.c.l.b16 %v4847
    %v4967 = vunpack.c.l.b16 %v4848
    %v4968 = vunpack.c.l.b16 %v4849
    %v4969 = vunpack.c.l.b16 %v4850
    %v4970 = vunpack.c.l.b16 %v4851
    %v4971 = vunpack.c.l.b16 %v4852
    %v4972 = vunpack.c.l.b16 %v4853
    %v4973 = vunpack.c.l.b16 %v4854
    %v4974 = vunpack.c.l.b16 %v4855
    %v4975 = vunpack.c.l.b16 %v4856
    %v4976 = vunpack.c.l.b16 %v4857
    %v4977 = vunpack.c.l.b16 %v4858
    %v4978 = vunpack.c.l.b16 %v4859
    %v4979 = vunpack.c.l.b16 %v4860
    %v4980 = vunpack.c.l.b16 %v4861
    %v4981 = vunpack.c.l.b16 %v4862
    %v4982 = vunpack.c.l.b16 %v4863
    %v4983 = vunpack.c.l.b16 %v4864
    %v4984 = vunpack.c.l.b16 %v4865
    %v4985 = vunpack.c.l.b16 %v4866
    %v4986 = vunpack.c.l.b16 %v4867
    %v4987 = vunpack.c.l.b16 %v4868
    %v4988 = vunpack.c.l.b16 %v4869
    %v4989 = vunpack.c.l.b16 %v4870
    %v4990 = vunpack.c.l.b16 %v4871
    %v4991 = vunpack.c.l.b16 %v4872
    %v4992 = vunpack.c.l.b16 %v4873
    %v4993 = vunpack.c.l.b16 %v4874
    %v4994 = vunpack.c.l.b16 %v4875
    %v4995 = vunpack.c.l.b16 %v4876
    %v4996 = vunpack.c.l.b16 %v4877
    %v4997 = vunpack.c.l.b16 %v4878
    %v4998 = vunpack.c.l.b16 %v4879
    %v4999 = vunpack.c.l.b16 %v4880
    %v5000 = vunpack.c.l.b16 %v4881
    %v5001 = vunpack.c.l.b16 %v4882
    %v5002 = vunpack.c.l.b16 %v4883
    %v5003 = vunpack.c.l.b16 %v4884
    %v5004 = vunpack.c.l.b16 %v4885
    %v5005 = vunpack.c.l.b16 %v4886
    %v5006 = vunpack.c.l.b16 %v4887
    %v5007 = vunpack.c.l.b16 %v4888
    %v5008 = vunpack.c.l.b16 %v4889
    %v5009 = vpack.c.b16 %v4953, %v4952
    %v5010 = vpack.c.b16 %v4955, %v4954
    %v5011 = vpack.c.b16 %v4957, %v4956
    %v5012 = vpack.c.b16 %v4959, %v4958
    %v5013 = vpack.c.b16 %v4960, %v4952
    %v5014 = vpack.c.b16 %v4962, %v4961
    %v5015 = vpack.c.b16 %v4964, %v4963
    %v5016 = vpack.c.b16 %v4966, %v4965
    %v5017 = vpack.c.b16 %v4967, %v4952
    %v5018 = vpack.c.b16 %v4969, %v4968
    %v5019 = vpack.c.b16 %v4971, %v4970
    %v5020 = vpack.c.b16 %v4973, %v4972
    %v5021 = vpack.c.b16 %v4974, %v4952
    %v5022 = vpack.c.b16 %v4976, %v4975
    %v5023 = vpack.c.b16 %v4978, %v4977
    %v5024 = vpack.c.b16 %v4980, %v4979
    %v5025 = vpack.c.b16 %v4981, %v4952
    %v5026 = vpack.c.b16 %v4983, %v4982
    %v5027 = vpack.c.b16 %v4985, %v4984
    %v5028 = vpack.c.b16 %v4987, %v4986
    %v5029 = vpack.c.b16 %v4988, %v4952
    %v5030 = vpack.c.b16 %v4990, %v4989
    %v5031 = vpack.c.b16 %v4992, %v4991
    %v5032 = vpack.c.b16 %v4994, %v4993
    %v5033 = vpack.c.b16 %v4995, %v4952
    %v5034 = vpack.c.b16 %v4997, %v4996
    %v5035 = vpack.c.b16 %v4999, %v4998
    %v5036 = vpack.c.b16 %v5001, %v5000
    %v5037 = vpack.c.b16 %v5002, %v4952
    %v5038 = vpack.c.b16 %v5004, %v5003
    %v5039 = vpack.c.b16 %v5006, %v5005
    %v5040 = vpack.c.b16 %v5008, %v5007
    %v5045 = vunpack.c.l.b16 %v4891
    %v5046 = vunpack.c.l.b16 %v4892
    %v5047 = vunpack.c.l.b16 %v4893
    %v5048 = vunpack.c.l.b16 %v4894
    %v5049 = vpack.c.b16 %v5046, %v5045
    %v5050 = vpack.c.b16 %v5048, %v5047
    %v5054 = vsel %vm2392, %v5009, 0
    %v5057 = vsel %vm2392, %v5010, 0
    %v5060 = vsel %vm2392, %v5011, 0
    %v5063 = vsel %vm2392, %v5012, 0
    %v5066 = vsel %vm2392, %v5013, 0
    %v5069 = vsel %vm2392, %v5014, 0
    %v5072 = vsel %vm2392, %v5015, 0
    %v5075 = vsel %vm2392, %v5016, 0
    %v5078 = vsel %vm2392, %v5017, 0
    %v5081 = vsel %vm2392, %v5018, 0
    %v5084 = vsel %vm2392, %v5019, 0
    %v5087 = vsel %vm2392, %v5020, 0
    %v5090 = vsel %vm2392, %v5021, 0
    %v5093 = vsel %vm2392, %v5022, 0
    %v5096 = vsel %vm2392, %v5023, 0
    %v5099 = vsel %vm2392, %v5024, 0
    %v5102 = vsel %vm2392, %v5025, 0
    %v5105 = vsel %vm2392, %v5026, 0
    %v5108 = vsel %vm2392, %v5027, 0
    %v5111 = vsel %vm2392, %v5028, 0
    %v5114 = vsel %vm2392, %v5029, 0
    %v5117 = vsel %vm2392, %v5030, 0
    %v5120 = vsel %vm2392, %v5031, 0
    %v5123 = vsel %vm2392, %v5032, 0
    %v5126 = vsel %vm2392, %v5033, 0
    %v5129 = vsel %vm2392, %v5034, 0
    %v5132 = vsel %vm2392, %v5035, 0
    %v5135 = vsel %vm2392, %v5036, 0
    %v5138 = vsel %vm2392, %v5037, 0
    %v5141 = vsel %vm2392, %v5038, 0
    %v5144 = vsel %vm2392, %v5039, 0
    %v5147 = vsel %vm2392, %v5040, 0
    %5149 = vmatprep.subr.bf16.mxu0 0
    %5150 = vmatpush1.bf16.msra.mxu0 %v5049
    %5151 = vmatprep.subr.bf16.mxu0 0
    %5152 = vmatpush1.bf16.msra.mxu0 %v5050
    %5153 = vmatprep.subr.bf16.mxu0 0
    %5154 = vmatpush1.bf16.msra.mxu0 0
    %5155 = vmatprep.subr.bf16.mxu0 0
    %5156 = vmatpush1.bf16.msra.mxu0 0
    %5157 = vmatprep.subr.bf16.mxu0 0
    %5158 = vmatpush1.bf16.msra.mxu0 0
    %5159 = vmatprep.subr.bf16.mxu0 0
    %5160 = vmatpush1.bf16.msra.mxu0 0
    %5161 = vmatprep.subr.bf16.mxu0 0
    %5162 = vmatpush1.bf16.msra.mxu0 0
    %5163 = vmatprep.subr.bf16.mxu0 0
    %5164 = vmatpush1.bf16.msra.mxu0 0
    %5165 = vmatprep.subr.bf16.mxu0 0
    %5166 = vmatpush1.bf16.msra.mxu0 0
    %5167 = vmatprep.subr.bf16.mxu0 0
    %5168 = vmatpush1.bf16.msra.mxu0 0
    %5169 = vmatprep.subr.bf16.mxu0 0
    %5170 = vmatpush1.bf16.msra.mxu0 0
    %5171 = vmatprep.subr.bf16.mxu0 0
    %5172 = vmatpush1.bf16.msra.mxu0 0
    %5173 = vmatprep.subr.bf16.mxu0 0
    %5174 = vmatpush1.bf16.msra.mxu0 0
    %5175 = vmatprep.subr.bf16.mxu0 0
    %5176 = vmatpush1.bf16.msra.mxu0 0
    %5177 = vmatprep.subr.bf16.mxu0 0
    %5178 = vmatpush1.bf16.msra.mxu0 0
    %5179 = vmatprep.subr.bf16.mxu0 0
    %5180 = vmatpush1.bf16.msra.mxu0 0
    %5181 = vmatprep.mubr.bf16.mxu0 0
    %5182 = vmatmul.mubr.bf16.gmra.mrb[0].mxu0 %v5054
    %v5183 = vpop.f32.mrb[0].mxu0
    %v5184 = vadd.f32 0.0, %v5183
    %v5185 = vpop.f32.mrb[0].mxu0
    %v5186 = vpop.f32.mrb[0].mxu0
    %v5187 = vadd.f32 0.0, %v5186
    %v5188 = vpop.f32.mrb[0].mxu0
    %5189 = vmatprep.mubr.bf16.mxu0 0
    %5190 = vmatmul.mubr.bf16.gmra.mrb[0].mxu0 %v5057
    %v5191 = vpop.f32.mrb[0].mxu0
    %v5192 = vadd.f32 0.0, %v5191
    %v5193 = vpop.f32.mrb[0].mxu0
    %v5194 = vpop.f32.mrb[0].mxu0
    %v5195 = vadd.f32 0.0, %v5194
    %v5196 = vpop.f32.mrb[0].mxu0
    %5197 = vmatprep.mubr.bf16.mxu0 0
    %5198 = vmatmul.mubr.bf16.gmra.mrb[0].mxu0 %v5060
    %v5199 = vpop.f32.mrb[0].mxu0
    %v5200 = vadd.f32 0.0, %v5199
    %v5201 = vpop.f32.mrb[0].mxu0
    %v5202 = vpop.f32.mrb[0].mxu0
    %v5203 = vadd.f32 0.0, %v5202
    %v5204 = vpop.f32.mrb[0].mxu0
    %5205 = vmatprep.mubr.bf16.mxu0 0
    %5206 = vmatmul.mubr.bf16.gmra.mrb[0].mxu0 %v5063
    %v5207 = vpop.f32.mrb[0].mxu0
    %v5208 = vadd.f32 0.0, %v5207
    %v5209 = vpop.f32.mrb[0].mxu0
    %v5210 = vpop.f32.mrb[0].mxu0
    %v5211 = vadd.f32 0.0, %v5210
    %v5212 = vpop.f32.mrb[0].mxu0
    %5213 = vmatprep.mubr.bf16.mxu0 0
    %5214 = vmatmul.mubr.bf16.gmra.mrb[0].mxu0 %v5066
    %v5215 = vpop.f32.mrb[0].mxu0
    %v5216 = vadd.f32 0.0, %v5215
    %v5217 = vpop.f32.mrb[0].mxu0
    %v5218 = vpop.f32.mrb[0].mxu0
    %v5219 = vadd.f32 0.0, %v5218
    %v5220 = vpop.f32.mrb[0].mxu0
    %5221 = vmatprep.mubr.bf16.mxu0 0
    %5222 = vmatmul.mubr.bf16.gmra.mrb[0].mxu0 %v5069
    %v5223 = vpop.f32.mrb[0].mxu0
    %v5224 = vadd.f32 0.0, %v5223
    %v5225 = vpop.f32.mrb[0].mxu0
    %v5226 = vpop.f32.mrb[0].mxu0
    %v5227 = vadd.f32 0.0, %v5226
    %v5228 = vpop.f32.mrb[0].mxu0
    %5229 = vmatprep.mubr.bf16.mxu0 0
    %5230 = vmatmul.mubr.bf16.gmra.mrb[0].mxu0 %v5072
    %v5231 = vpop.f32.mrb[0].mxu0
    %v5232 = vadd.f32 0.0, %v5231
    %v5233 = vpop.f32.mrb[0].mxu0
    %v5234 = vpop.f32.mrb[0].mxu0
    %v5235 = vadd.f32 0.0, %v5234
    %v5236 = vpop.f32.mrb[0].mxu0
    %5237 = vmatprep.mubr.bf16.mxu0 0
    %5238 = vmatmul.mubr.bf16.gmra.mrb[0].mxu0 %v5075
    %v5239 = vpop.f32.mrb[0].mxu0
    %v5240 = vadd.f32 0.0, %v5239
    %v5241 = vpop.f32.mrb[0].mxu0
    %v5242 = vpop.f32.mrb[0].mxu0
    %v5243 = vadd.f32 0.0, %v5242
    %v5244 = vpop.f32.mrb[0].mxu0
    %5245 = vmatprep.mubr.bf16.mxu0 0
    %5246 = vmatmul.mubr.bf16.gmra.mrb[0].mxu0 %v5078
    %v5247 = vpop.f32.mrb[0].mxu0
    %v5248 = vadd.f32 0.0, %v5247
    %v5249 = vpop.f32.mrb[0].mxu0
    %v5250 = vpop.f32.mrb[0].mxu0
    %v5251 = vadd.f32 0.0, %v5250
    %v5252 = vpop.f32.mrb[0].mxu0
    %5253 = vmatprep.mubr.bf16.mxu0 0
    %5254 = vmatmul.mubr.bf16.gmra.mrb[0].mxu0 %v5081
    %v5255 = vpop.f32.mrb[0].mxu0
    %v5256 = vadd.f32 0.0, %v5255
    %v5257 = vpop.f32.mrb[0].mxu0
    %v5258 = vpop.f32.mrb[0].mxu0
    %v5259 = vadd.f32 0.0, %v5258
    %v5260 = vpop.f32.mrb[0].mxu0
    %5261 = vmatprep.mubr.bf16.mxu0 0
    %5262 = vmatmul.mubr.bf16.gmra.mrb[0].mxu0 %v5084
    %v5263 = vpop.f32.mrb[0].mxu0
    %v5264 = vadd.f32 0.0, %v5263
    %v5265 = vpop.f32.mrb[0].mxu0
    %v5266 = vpop.f32.mrb[0].mxu0
    %v5267 = vadd.f32 0.0, %v5266
    %v5268 = vpop.f32.mrb[0].mxu0
    %5269 = vmatprep.mubr.bf16.mxu0 0
    %5270 = vmatmul.mubr.bf16.gmra.mrb[0].mxu0 %v5087
    %v5271 = vpop.f32.mrb[0].mxu0
    %v5272 = vadd.f32 0.0, %v5271
    %v5273 = vpop.f32.mrb[0].mxu0
    %v5274 = vpop.f32.mrb[0].mxu0
    %v5275 = vadd.f32 0.0, %v5274
    %v5276 = vpop.f32.mrb[0].mxu0
    %5277 = vmatprep.mubr.bf16.mxu0 0
    %5278 = vmatmul.mubr.bf16.gmra.mrb[0].mxu0 %v5090
    %v5279 = vpop.f32.mrb[0].mxu0
    %v5280 = vadd.f32 0.0, %v5279
    %v5281 = vpop.f32.mrb[0].mxu0
    %v5282 = vpop.f32.mrb[0].mxu0
    %v5283 = vadd.f32 0.0, %v5282
    %v5284 = vpop.f32.mrb[0].mxu0
    %5285 = vmatprep.mubr.bf16.mxu0 0
    %5286 = vmatmul.mubr.bf16.gmra.mrb[0].mxu0 %v5093
    %v5287 = vpop.f32.mrb[0].mxu0
    %v5288 = vadd.f32 0.0, %v5287
    %v5289 = vpop.f32.mrb[0].mxu0
    %v5290 = vpop.f32.mrb[0].mxu0
    %v5291 = vadd.f32 0.0, %v5290
    %v5292 = vpop.f32.mrb[0].mxu0
    %5293 = vmatprep.mubr.bf16.mxu0 0
    %5294 = vmatmul.mubr.bf16.gmra.mrb[0].mxu0 %v5096
    %v5295 = vpop.f32.mrb[0].mxu0
    %v5296 = vadd.f32 0.0, %v5295
    %v5297 = vpop.f32.mrb[0].mxu0
    %v5298 = vpop.f32.mrb[0].mxu0
    %v5299 = vadd.f32 0.0, %v5298
    %v5300 = vpop.f32.mrb[0].mxu0
    %5301 = vmatprep.mubr.bf16.mxu0 0
    %5302 = vmatmul.mubr.bf16.gmra.mrb[0].mxu0 %v5099
    %v5303 = vpop.f32.mrb[0].mxu0
    %v5304 = vadd.f32 0.0, %v5303
    %v5305 = vpop.f32.mrb[0].mxu0
    %v5306 = vpop.f32.mrb[0].mxu0
    %v5307 = vadd.f32 0.0, %v5306
    %v5308 = vpop.f32.mrb[0].mxu0
    %5309 = vmatprep.mubr.bf16.mxu0 0
    %5310 = vmatmul.mubr.bf16.gmra.mrb[0].mxu0 %v5102
    %v5311 = vpop.f32.mrb[0].mxu0
    %v5312 = vadd.f32 0.0, %v5311
    %v5313 = vpop.f32.mrb[0].mxu0
    %v5314 = vpop.f32.mrb[0].mxu0
    %v5315 = vadd.f32 0.0, %v5314
    %v5316 = vpop.f32.mrb[0].mxu0
    %5317 = vmatprep.mubr.bf16.mxu0 0
    %5318 = vmatmul.mubr.bf16.gmra.mrb[0].mxu0 %v5105
    %v5319 = vpop.f32.mrb[0].mxu0
    %v5320 = vadd.f32 0.0, %v5319
    %v5321 = vpop.f32.mrb[0].mxu0
    %v5322 = vpop.f32.mrb[0].mxu0
    %v5323 = vadd.f32 0.0, %v5322
    %v5324 = vpop.f32.mrb[0].mxu0
    %5325 = vmatprep.mubr.bf16.mxu0 0
    %5326 = vmatmul.mubr.bf16.gmra.mrb[0].mxu0 %v5108
    %v5327 = vpop.f32.mrb[0].mxu0
    %v5328 = vadd.f32 0.0, %v5327
    %v5329 = vpop.f32.mrb[0].mxu0
    %v5330 = vpop.f32.mrb[0].mxu0
    %v5331 = vadd.f32 0.0, %v5330
    %v5332 = vpop.f32.mrb[0].mxu0
    %5333 = vmatprep.mubr.bf16.mxu0 0
    %5334 = vmatmul.mubr.bf16.gmra.mrb[0].mxu0 %v5111
    %v5335 = vpop.f32.mrb[0].mxu0
    %v5336 = vadd.f32 0.0, %v5335
    %v5337 = vpop.f32.mrb[0].mxu0
    %v5338 = vpop.f32.mrb[0].mxu0
    %v5339 = vadd.f32 0.0, %v5338
    %v5340 = vpop.f32.mrb[0].mxu0
    %5341 = vmatprep.mubr.bf16.mxu0 0
    %5342 = vmatmul.mubr.bf16.gmra.mrb[0].mxu0 %v5114
    %v5343 = vpop.f32.mrb[0].mxu0
    %v5344 = vadd.f32 0.0, %v5343
    %v5345 = vpop.f32.mrb[0].mxu0
    %v5346 = vpop.f32.mrb[0].mxu0
    %v5347 = vadd.f32 0.0, %v5346
    %v5348 = vpop.f32.mrb[0].mxu0
    %5349 = vmatprep.mubr.bf16.mxu0 0
    %5350 = vmatmul.mubr.bf16.gmra.mrb[0].mxu0 %v5117
    %v5351 = vpop.f32.mrb[0].mxu0
    %v5352 = vadd.f32 0.0, %v5351
    %v5353 = vpop.f32.mrb[0].mxu0
    %v5354 = vpop.f32.mrb[0].mxu0
    %v5355 = vadd.f32 0.0, %v5354
    %v5356 = vpop.f32.mrb[0].mxu0
    %5357 = vmatprep.mubr.bf16.mxu0 0
    %5358 = vmatmul.mubr.bf16.gmra.mrb[0].mxu0 %v5120
    %v5359 = vpop.f32.mrb[0].mxu0
    %v5360 = vadd.f32 0.0, %v5359
    %v5361 = vpop.f32.mrb[0].mxu0
    %v5362 = vpop.f32.mrb[0].mxu0
    %v5363 = vadd.f32 0.0, %v5362
    %v5364 = vpop.f32.mrb[0].mxu0
    %5365 = vmatprep.mubr.bf16.mxu0 0
    %5366 = vmatmul.mubr.bf16.gmra.mrb[0].mxu0 %v5123
    %v5367 = vpop.f32.mrb[0].mxu0
    %v5368 = vadd.f32 0.0, %v5367
    %v5369 = vpop.f32.mrb[0].mxu0
    %v5370 = vpop.f32.mrb[0].mxu0
    %v5371 = vadd.f32 0.0, %v5370
    %v5372 = vpop.f32.mrb[0].mxu0
    %5373 = vmatprep.mubr.bf16.mxu0 0
    %5374 = vmatmul.mubr.bf16.gmra.mrb[0].mxu0 %v5126
    %v5375 = vpop.f32.mrb[0].mxu0
    %v5376 = vadd.f32 0.0, %v5375
    %v5377 = vpop.f32.mrb[0].mxu0
    %v5378 = vpop.f32.mrb[0].mxu0
    %v5379 = vadd.f32 0.0, %v5378
    %v5380 = vpop.f32.mrb[0].mxu0
    %5381 = vmatprep.mubr.bf16.mxu0 0
    %5382 = vmatmul.mubr.bf16.gmra.mrb[0].mxu0 %v5129
    %v5383 = vpop.f32.mrb[0].mxu0
    %v5384 = vadd.f32 0.0, %v5383
    %v5385 = vpop.f32.mrb[0].mxu0
    %v5386 = vpop.f32.mrb[0].mxu0
    %v5387 = vadd.f32 0.0, %v5386
    %v5388 = vpop.f32.mrb[0].mxu0
    %5389 = vmatprep.mubr.bf16.mxu0 0
    %5390 = vmatmul.mubr.bf16.gmra.mrb[0].mxu0 %v5132
    %v5391 = vpop.f32.mrb[0].mxu0
    %v5392 = vadd.f32 0.0, %v5391
    %v5393 = vpop.f32.mrb[0].mxu0
    %v5394 = vpop.f32.mrb[0].mxu0
    %v5395 = vadd.f32 0.0, %v5394
    %v5396 = vpop.f32.mrb[0].mxu0
    %5397 = vmatprep.mubr.bf16.mxu0 0
    %5398 = vmatmul.mubr.bf16.gmra.mrb[0].mxu0 %v5135
    %v5399 = vpop.f32.mrb[0].mxu0
    %v5400 = vadd.f32 0.0, %v5399
    %v5401 = vpop.f32.mrb[0].mxu0
    %v5402 = vpop.f32.mrb[0].mxu0
    %v5403 = vadd.f32 0.0, %v5402
    %v5404 = vpop.f32.mrb[0].mxu0
    %5405 = vmatprep.mubr.bf16.mxu0 0
    %5406 = vmatmul.mubr.bf16.gmra.mrb[0].mxu0 %v5138
    %v5407 = vpop.f32.mrb[0].mxu0
    %v5408 = vadd.f32 0.0, %v5407
    %v5409 = vpop.f32.mrb[0].mxu0
    %v5410 = vpop.f32.mrb[0].mxu0
    %v5411 = vadd.f32 0.0, %v5410
    %v5412 = vpop.f32.mrb[0].mxu0
    %5413 = vmatprep.mubr.bf16.mxu0 0
    %5414 = vmatmul.mubr.bf16.gmra.mrb[0].mxu0 %v5141
    %v5415 = vpop.f32.mrb[0].mxu0
    %v5416 = vadd.f32 0.0, %v5415
    %v5417 = vpop.f32.mrb[0].mxu0
    %v5418 = vpop.f32.mrb[0].mxu0
    %v5419 = vadd.f32 0.0, %v5418
    %v5420 = vpop.f32.mrb[0].mxu0
    %5421 = vmatprep.mubr.bf16.mxu0 0
    %5422 = vmatmul.mubr.bf16.gmra.mrb[0].mxu0 %v5144
    %v5423 = vpop.f32.mrb[0].mxu0
    %v5424 = vadd.f32 0.0, %v5423
    %v5425 = vpop.f32.mrb[0].mxu0
    %v5426 = vpop.f32.mrb[0].mxu0
    %v5427 = vadd.f32 0.0, %v5426
    %v5428 = vpop.f32.mrb[0].mxu0
    %5429 = vmatprep.mubr.bf16.mxu0 0
    %5430 = vmatmul.mubr.bf16.gmra.mrb[0].mxu0 %v5147
    %v5431 = vpop.f32.mrb[0].mxu0
    %v5432 = vadd.f32 0.0, %v5431
    %v5433 = vpop.f32.mrb[0].mxu0
    %v5434 = vpop.f32.mrb[0].mxu0
    %v5435 = vadd.f32 0.0, %v5434
    %v5436 = vpop.f32.mrb[0].mxu0
    %5437 = vdwg.mxu0
    %v5438 = vadd.f32 %v4405, %v5184
    %v5439 = vadd.f32 %v4408, %v5187
    %v5440 = vadd.f32 %v4413, %v5192
    %v5441 = vadd.f32 %v4416, %v5195
    %v5442 = vadd.f32 %v4421, %v5200
    %v5443 = vadd.f32 %v4424, %v5203
    %v5444 = vadd.f32 %v4429, %v5208
    %v5445 = vadd.f32 %v4432, %v5211
    %v5446 = vadd.f32 %v4437, %v5216
    %v5447 = vadd.f32 %v4440, %v5219
    %v5448 = vadd.f32 %v4445, %v5224
    %v5449 = vadd.f32 %v4448, %v5227
    %v5450 = vadd.f32 %v4453, %v5232
    %v5451 = vadd.f32 %v4456, %v5235
    %v5452 = vadd.f32 %v4461, %v5240
    %v5453 = vadd.f32 %v4464, %v5243
    %v5454 = vadd.f32 %v4469, %v5248
    %v5455 = vadd.f32 %v4472, %v5251
    %v5456 = vadd.f32 %v4477, %v5256
    %v5457 = vadd.f32 %v4480, %v5259
    %v5458 = vadd.f32 %v4485, %v5264
    %v5459 = vadd.f32 %v4488, %v5267
    %v5460 = vadd.f32 %v4493, %v5272
    %v5461 = vadd.f32 %v4496, %v5275
    %v5462 = vadd.f32 %v4501, %v5280
    %v5463 = vadd.f32 %v4504, %v5283
    %v5464 = vadd.f32 %v4509, %v5288
    %v5465 = vadd.f32 %v4512, %v5291
    %v5466 = vadd.f32 %v4517, %v5296
    %v5467 = vadd.f32 %v4520, %v5299
    %v5468 = vadd.f32 %v4525, %v5304
    %v5469 = vadd.f32 %v4528, %v5307
    %v5470 = vadd.f32 %v4533, %v5312
    %v5471 = vadd.f32 %v4536, %v5315
    %v5472 = vadd.f32 %v4541, %v5320
    %v5473 = vadd.f32 %v4544, %v5323
    %v5474 = vadd.f32 %v4549, %v5328
    %v5475 = vadd.f32 %v4552, %v5331
    %v5476 = vadd.f32 %v4557, %v5336
    %v5477 = vadd.f32 %v4560, %v5339
    %v5478 = vadd.f32 %v4565, %v5344
    %v5479 = vadd.f32 %v4568, %v5347
    %v5480 = vadd.f32 %v4573, %v5352
    %v5481 = vadd.f32 %v4576, %v5355
    %v5482 = vadd.f32 %v4581, %v5360
    %v5483 = vadd.f32 %v4584, %v5363
    %v5484 = vadd.f32 %v4589, %v5368
    %v5485 = vadd.f32 %v4592, %v5371
    %v5486 = vadd.f32 %v4597, %v5376
    %v5487 = vadd.f32 %v4600, %v5379
    %v5488 = vadd.f32 %v4605, %v5384
    %v5489 = vadd.f32 %v4608, %v5387
    %v5490 = vadd.f32 %v4613, %v5392
    %v5491 = vadd.f32 %v4616, %v5395
    %v5492 = vadd.f32 %v4621, %v5400
    %v5493 = vadd.f32 %v4624, %v5403
    %v5494 = vadd.f32 %v4629, %v5408
    %v5495 = vadd.f32 %v4632, %v5411
    %v5496 = vadd.f32 %v4637, %v5416
    %v5497 = vadd.f32 %v4640, %v5419
    %v5498 = vadd.f32 %v4645, %v5424
    %v5499 = vadd.f32 %v4648, %v5427
    %v5500 = vadd.f32 %v4653, %v5432
    %v5501 = vadd.f32 %v4656, %v5435
    %v5502 = vpack.c.b16 %v3047, %v3047
    %v5503 = vpack.c.b16 %v3055, %v3055
    %v5504 = vpack.c.b16 %v3063, %v3063
    %v5505 = vpack.c.b16 %v3071, %v3071
    %v5506 = vpack.c.b16 %v3079, %v3079
    %v5507 = vpack.c.b16 %v3087, %v3087
    %v5508 = vpack.c.b16 %v3095, %v3095
    %v5509 = vpack.c.b16 %v3103, %v3103
    %v5511 = vshrl.u32 %v5502, 16
    %v5513 = vrot.slane %v5511, 7
    %v5514 = vshll.u32 %v5502, 16
    %v5516 = vor.u32 %v5513, %v5514
    %v5518 = vshrl.u32 %v5503, 16
    %v5520 = vrot.slane %v5518, 7
    %v5521 = vshll.u32 %v5503, 16
    %v5523 = vor.u32 %v5520, %v5521
    %v5525 = vshrl.u32 %v5504, 16
    %v5527 = vrot.slane %v5525, 7
    %v5528 = vshll.u32 %v5504, 16
    %v5530 = vor.u32 %v5527, %v5528
    %v5532 = vshrl.u32 %v5505, 16
    %v5534 = vrot.slane %v5532, 7
    %v5535 = vshll.u32 %v5505, 16
    %v5537 = vor.u32 %v5534, %v5535
    %v5539 = vshrl.u32 %v5506, 16
    %v5541 = vrot.slane %v5539, 7
    %v5542 = vshll.u32 %v5506, 16
    %v5544 = vor.u32 %v5541, %v5542
    %v5546 = vshrl.u32 %v5507, 16
    %v5548 = vrot.slane %v5546, 7
    %v5549 = vshll.u32 %v5507, 16
    %v5551 = vor.u32 %v5548, %v5549
    %v5553 = vshrl.u32 %v5508, 16
    %v5555 = vrot.slane %v5553, 7
    %v5556 = vshll.u32 %v5508, 16
    %v5558 = vor.u32 %v5555, %v5556
    %v5560 = vshrl.u32 %v5509, 16
    %v5562 = vrot.slane %v5560, 7
    %v5563 = vshll.u32 %v5509, 16
    %v5565 = vor.u32 %v5562, %v5563
    %v5574 = vsel %vm3618, 0, %v5516
    %v5575 = vsel %vm3618, 0, %v5523
    %v5576 = vsel %vm3618, 0, %v5530
    %v5577 = vsel %vm3618, 0, %v5537
    %v5578 = vsel %vm3618, 0, %v5544
    %v5579 = vsel %vm3618, 0, %v5551
    %v5580 = vsel %vm3618, 0, %v5558
    %v5581 = vsel %vm3618, 0, %v5565
    %s5582 = scalar_lea.vmem %s3, 48
    %v5583 = vld [vmem:[%s5582] sm:$0xf]
    %v5584 = vld [vmem:[%s5582 + $0x4] sm:$0xf]
    %v5585 = vld [vmem:[%s5582 + $0x8] sm:$0xf]
    %v5586 = vld [vmem:[%s5582 + $0xc] sm:$0xf]
    %v5595 = vunpack.c.l.b16 %v5574
    %v5596 = vunpack.c.l.b16 %v5575
    %v5597 = vunpack.c.l.b16 %v5576
    %v5598 = vunpack.c.l.b16 %v5577
    %v5599 = vunpack.c.l.b16 %v5578
    %v5600 = vunpack.c.l.b16 %v5579
    %v5601 = vunpack.c.l.b16 %v5580
    %v5602 = vunpack.c.l.b16 %v5581
    %v5603 = vpack.c.b16 %v4175, %v4174
    %v5604 = vpack.c.b16 %v4177, %v4176
    %v5605 = vpack.c.b16 %v4179, %v4178
    %v5606 = vpack.c.b16 %v5595, %v4180
    %v5607 = vpack.c.b16 %v4182, %v4181
    %v5608 = vpack.c.b16 %v4184, %v4183
    %v5609 = vpack.c.b16 %v4186, %v4185
    %v5610 = vpack.c.b16 %v5596, %v4187
    %v5611 = vpack.c.b16 %v4189, %v4188
    %v5612 = vpack.c.b16 %v4191, %v4190
    %v5613 = vpack.c.b16 %v4193, %v4192
    %v5614 = vpack.c.b16 %v5597, %v4194
    %v5615 = vpack.c.b16 %v4196, %v4195
    %v5616 = vpack.c.b16 %v4198, %v4197
    %v5617 = vpack.c.b16 %v4200, %v4199
    %v5618 = vpack.c.b16 %v5598, %v4201
    %v5619 = vpack.c.b16 %v4203, %v4202
    %v5620 = vpack.c.b16 %v4205, %v4204
    %v5621 = vpack.c.b16 %v4207, %v4206
    %v5622 = vpack.c.b16 %v5599, %v4208
    %v5623 = vpack.c.b16 %v4210, %v4209
    %v5624 = vpack.c.b16 %v4212, %v4211
    %v5625 = vpack.c.b16 %v4214, %v4213
    %v5626 = vpack.c.b16 %v5600, %v4215
    %v5627 = vpack.c.b16 %v4217, %v4216
    %v5628 = vpack.c.b16 %v4219, %v4218
    %v5629 = vpack.c.b16 %v4221, %v4220
    %v5630 = vpack.c.b16 %v5601, %v4222
    %v5631 = vpack.c.b16 %v4224, %v4223
    %v5632 = vpack.c.b16 %v4226, %v4225
    %v5633 = vpack.c.b16 %v4228, %v4227
    %v5634 = vpack.c.b16 %v5602, %v4229
    %v5639 = vunpack.c.l.b16 %v5583
    %v5640 = vunpack.c.l.b16 %v5584
    %v5641 = vunpack.c.l.b16 %v5585
    %v5642 = vunpack.c.l.b16 %v5586
    %v5643 = vpack.c.b16 %v5640, %v5639
    %v5644 = vpack.c.b16 %v5642, %v5641
    %v5648 = vsel %vm2392, %v5603, 0
    %v5651 = vsel %vm2392, %v5604, 0
    %v5654 = vsel %vm2392, %v5605, 0
    %v5657 = vsel %vm2392, %v5606, 0
    %v5660 = vsel %vm2392, %v5607, 0
    %v5663 = vsel %vm2392, %v5608, 0
    %v5666 = vsel %vm2392, %v5609, 0
    %v5669 = vsel %vm2392, %v5610, 0
    %v5672 = vsel %vm2392, %v5611, 0
    %v5675 = vsel %vm2392, %v5612, 0
    %v5678 = vsel %vm2392, %v5613, 0
    %v5681 = vsel %vm2392, %v5614, 0
    %v5684 = vsel %vm2392, %v5615, 0
    %v5687 = vsel %vm2392, %v5616, 0
    %v5690 = vsel %vm2392, %v5617, 0
    %v5693 = vsel %vm2392, %v5618, 0
    %v5696 = vsel %vm2392, %v5619, 0
    %v5699 = vsel %vm2392, %v5620, 0
    %v5702 = vsel %vm2392, %v5621, 0
    %v5705 = vsel %vm2392, %v5622, 0
    %v5708 = vsel %vm2392, %v5623, 0
    %v5711 = vsel %vm2392, %v5624, 0
    %v5714 = vsel %vm2392, %v5625, 0
    %v5717 = vsel %vm2392, %v5626, 0
    %v5720 = vsel %vm2392, %v5627, 0
    %v5723 = vsel %vm2392, %v5628, 0
    %v5726 = vsel %vm2392, %v5629, 0
    %v5729 = vsel %vm2392, %v5630, 0
    %v5732 = vsel %vm2392, %v5631, 0
    %v5735 = vsel %vm2392, %v5632, 0
    %v5738 = vsel %vm2392, %v5633, 0
    %v5741 = vsel %vm2392, %v5634, 0
    %5743 = vmatprep.subr.bf16.mxu0 0
    %5744 = vmatpush1.bf16.msra.mxu0 %v5643
    %5745 = vmatprep.subr.bf16.mxu0 0
    %5746 = vmatpush1.bf16.msra.mxu0 %v5644
    %5747 = vmatprep.subr.bf16.mxu0 0
    %5748 = vmatpush1.bf16.msra.mxu0 0
    %5749 = vmatprep.subr.bf16.mxu0 0
    %5750 = vmatpush1.bf16.msra.mxu0 0
    %5751 = vmatprep.subr.bf16.mxu0 0
    %5752 = vmatpush1.bf16.msra.mxu0 0
    %5753 = vmatprep.subr.bf16.mxu0 0
    %5754 = vmatpush1.bf16.msra.mxu0 0
    %5755 = vmatprep.subr.bf16.mxu0 0
    %5756 = vmatpush1.bf16.msra.mxu0 0
    %5757 = vmatprep.subr.bf16.mxu0 0
    %5758 = vmatpush1.bf16.msra.mxu0 0
    %5759 = vmatprep.subr.bf16.mxu0 0
    %5760 = vmatpush1.bf16.msra.mxu0 0
    %5761 = vmatprep.subr.bf16.mxu0 0
    %5762 = vmatpush1.bf16.msra.mxu0 0
    %5763 = vmatprep.subr.bf16.mxu0 0
    %5764 = vmatpush1.bf16.msra.mxu0 0
    %5765 = vmatprep.subr.bf16.mxu0 0
    %5766 = vmatpush1.bf16.msra.mxu0 0
    %5767 = vmatprep.subr.bf16.mxu0 0
    %5768 = vmatpush1.bf16.msra.mxu0 0
    %5769 = vmatprep.subr.bf16.mxu0 0
    %5770 = vmatpush1.bf16.msra.mxu0 0
    %5771 = vmatprep.subr.bf16.mxu0 0
    %5772 = vmatpush1.bf16.msra.mxu0 0
    %5773 = vmatprep.subr.bf16.mxu0 0
    %5774 = vmatpush1.bf16.msra.mxu0 0
    %5775 = vmatprep.mubr.bf16.mxu0 0
    %5776 = vmatmul.mubr.bf16.gmra.mrb[0].mxu0 %v5648
    %v5777 = vpop.f32.mrb[0].mxu0
    %v5778 = vadd.f32 0.0, %v5777
    %v5779 = vpop.f32.mrb[0].mxu0
    %v5780 = vpop.f32.mrb[0].mxu0
    %v5781 = vadd.f32 0.0, %v5780
    %v5782 = vpop.f32.mrb[0].mxu0
    %5783 = vmatprep.mubr.bf16.mxu0 0
    %5784 = vmatmul.mubr.bf16.gmra.mrb[0].mxu0 %v5651
    %v5785 = vpop.f32.mrb[0].mxu0
    %v5786 = vadd.f32 0.0, %v5785
    %v5787 = vpop.f32.mrb[0].mxu0
    %v5788 = vpop.f32.mrb[0].mxu0
    %v5789 = vadd.f32 0.0, %v5788
    %v5790 = vpop.f32.mrb[0].mxu0
    %5791 = vmatprep.mubr.bf16.mxu0 0
    %5792 = vmatmul.mubr.bf16.gmra.mrb[0].mxu0 %v5654
    %v5793 = vpop.f32.mrb[0].mxu0
    %v5794 = vadd.f32 0.0, %v5793
    %v5795 = vpop.f32.mrb[0].mxu0
    %v5796 = vpop.f32.mrb[0].mxu0
    %v5797 = vadd.f32 0.0, %v5796
    %v5798 = vpop.f32.mrb[0].mxu0
    %5799 = vmatprep.mubr.bf16.mxu0 0
    %5800 = vmatmul.mubr.bf16.gmra.mrb[0].mxu0 %v5657
    %v5801 = vpop.f32.mrb[0].mxu0
    %v5802 = vadd.f32 0.0, %v5801
    %v5803 = vpop.f32.mrb[0].mxu0
    %v5804 = vpop.f32.mrb[0].mxu0
    %v5805 = vadd.f32 0.0, %v5804
    %v5806 = vpop.f32.mrb[0].mxu0
    %5807 = vmatprep.mubr.bf16.mxu0 0
    %5808 = vmatmul.mubr.bf16.gmra.mrb[0].mxu0 %v5660
    %v5809 = vpop.f32.mrb[0].mxu0
    %v5810 = vadd.f32 0.0, %v5809
    %v5811 = vpop.f32.mrb[0].mxu0
    %v5812 = vpop.f32.mrb[0].mxu0
    %v5813 = vadd.f32 0.0, %v5812
    %v5814 = vpop.f32.mrb[0].mxu0
    %5815 = vmatprep.mubr.bf16.mxu0 0
    %5816 = vmatmul.mubr.bf16.gmra.mrb[0].mxu0 %v5663
    %v5817 = vpop.f32.mrb[0].mxu0
    %v5818 = vadd.f32 0.0, %v5817
    %v5819 = vpop.f32.mrb[0].mxu0
    %v5820 = vpop.f32.mrb[0].mxu0
    %v5821 = vadd.f32 0.0, %v5820
    %v5822 = vpop.f32.mrb[0].mxu0
    %5823 = vmatprep.mubr.bf16.mxu0 0
    %5824 = vmatmul.mubr.bf16.gmra.mrb[0].mxu0 %v5666
    %v5825 = vpop.f32.mrb[0].mxu0
    %v5826 = vadd.f32 0.0, %v5825
    %v5827 = vpop.f32.mrb[0].mxu0
    %v5828 = vpop.f32.mrb[0].mxu0
    %v5829 = vadd.f32 0.0, %v5828
    %v5830 = vpop.f32.mrb[0].mxu0
    %5831 = vmatprep.mubr.bf16.mxu0 0
    %5832 = vmatmul.mubr.bf16.gmra.mrb[0].mxu0 %v5669
    %v5833 = vpop.f32.mrb[0].mxu0
    %v5834 = vadd.f32 0.0, %v5833
    %v5835 = vpop.f32.mrb[0].mxu0
    %v5836 = vpop.f32.mrb[0].mxu0
    %v5837 = vadd.f32 0.0, %v5836
    %v5838 = vpop.f32.mrb[0].mxu0
    %5839 = vmatprep.mubr.bf16.mxu0 0
    %5840 = vmatmul.mubr.bf16.gmra.mrb[0].mxu0 %v5672
    %v5841 = vpop.f32.mrb[0].mxu0
    %v5842 = vadd.f32 0.0, %v5841
    %v5843 = vpop.f32.mrb[0].mxu0
    %v5844 = vpop.f32.mrb[0].mxu0
    %v5845 = vadd.f32 0.0, %v5844
    %v5846 = vpop.f32.mrb[0].mxu0
    %5847 = vmatprep.mubr.bf16.mxu0 0
    %5848 = vmatmul.mubr.bf16.gmra.mrb[0].mxu0 %v5675
    %v5849 = vpop.f32.mrb[0].mxu0
    %v5850 = vadd.f32 0.0, %v5849
    %v5851 = vpop.f32.mrb[0].mxu0
    %v5852 = vpop.f32.mrb[0].mxu0
    %v5853 = vadd.f32 0.0, %v5852
    %v5854 = vpop.f32.mrb[0].mxu0
    %5855 = vmatprep.mubr.bf16.mxu0 0
    %5856 = vmatmul.mubr.bf16.gmra.mrb[0].mxu0 %v5678
    %v5857 = vpop.f32.mrb[0].mxu0
    %v5858 = vadd.f32 0.0, %v5857
    %v5859 = vpop.f32.mrb[0].mxu0
    %v5860 = vpop.f32.mrb[0].mxu0
    %v5861 = vadd.f32 0.0, %v5860
    %v5862 = vpop.f32.mrb[0].mxu0
    %5863 = vmatprep.mubr.bf16.mxu0 0
    %5864 = vmatmul.mubr.bf16.gmra.mrb[0].mxu0 %v5681
    %v5865 = vpop.f32.mrb[0].mxu0
    %v5866 = vadd.f32 0.0, %v5865
    %v5867 = vpop.f32.mrb[0].mxu0
    %v5868 = vpop.f32.mrb[0].mxu0
    %v5869 = vadd.f32 0.0, %v5868
    %v5870 = vpop.f32.mrb[0].mxu0
    %5871 = vmatprep.mubr.bf16.mxu0 0
    %5872 = vmatmul.mubr.bf16.gmra.mrb[0].mxu0 %v5684
    %v5873 = vpop.f32.mrb[0].mxu0
    %v5874 = vadd.f32 0.0, %v5873
    %v5875 = vpop.f32.mrb[0].mxu0
    %v5876 = vpop.f32.mrb[0].mxu0
    %v5877 = vadd.f32 0.0, %v5876
    %v5878 = vpop.f32.mrb[0].mxu0
    %5879 = vmatprep.mubr.bf16.mxu0 0
    %5880 = vmatmul.mubr.bf16.gmra.mrb[0].mxu0 %v5687
    %v5881 = vpop.f32.mrb[0].mxu0
    %v5882 = vadd.f32 0.0, %v5881
    %v5883 = vpop.f32.mrb[0].mxu0
    %v5884 = vpop.f32.mrb[0].mxu0
    %v5885 = vadd.f32 0.0, %v5884
    %v5886 = vpop.f32.mrb[0].mxu0
    %5887 = vmatprep.mubr.bf16.mxu0 0
    %5888 = vmatmul.mubr.bf16.gmra.mrb[0].mxu0 %v5690
    %v5889 = vpop.f32.mrb[0].mxu0
    %v5890 = vadd.f32 0.0, %v5889
    %v5891 = vpop.f32.mrb[0].mxu0
    %v5892 = vpop.f32.mrb[0].mxu0
    %v5893 = vadd.f32 0.0, %v5892
    %v5894 = vpop.f32.mrb[0].mxu0
    %5895 = vmatprep.mubr.bf16.mxu0 0
    %5896 = vmatmul.mubr.bf16.gmra.mrb[0].mxu0 %v5693
    %v5897 = vpop.f32.mrb[0].mxu0
    %v5898 = vadd.f32 0.0, %v5897
    %v5899 = vpop.f32.mrb[0].mxu0
    %v5900 = vpop.f32.mrb[0].mxu0
    %v5901 = vadd.f32 0.0, %v5900
    %v5902 = vpop.f32.mrb[0].mxu0
    %5903 = vmatprep.mubr.bf16.mxu0 0
    %5904 = vmatmul.mubr.bf16.gmra.mrb[0].mxu0 %v5696
    %v5905 = vpop.f32.mrb[0].mxu0
    %v5906 = vadd.f32 0.0, %v5905
    %v5907 = vpop.f32.mrb[0].mxu0
    %v5908 = vpop.f32.mrb[0].mxu0
    %v5909 = vadd.f32 0.0, %v5908
    %v5910 = vpop.f32.mrb[0].mxu0
    %5911 = vmatprep.mubr.bf16.mxu0 0
    %5912 = vmatmul.mubr.bf16.gmra.mrb[0].mxu0 %v5699
    %v5913 = vpop.f32.mrb[0].mxu0
    %v5914 = vadd.f32 0.0, %v5913
    %v5915 = vpop.f32.mrb[0].mxu0
    %v5916 = vpop.f32.mrb[0].mxu0
    %v5917 = vadd.f32 0.0, %v5916
    %v5918 = vpop.f32.mrb[0].mxu0
    %5919 = vmatprep.mubr.bf16.mxu0 0
    %5920 = vmatmul.mubr.bf16.gmra.mrb[0].mxu0 %v5702
    %v5921 = vpop.f32.mrb[0].mxu0
    %v5922 = vadd.f32 0.0, %v5921
    %v5923 = vpop.f32.mrb[0].mxu0
    %v5924 = vpop.f32.mrb[0].mxu0
    %v5925 = vadd.f32 0.0, %v5924
    %v5926 = vpop.f32.mrb[0].mxu0
    %5927 = vmatprep.mubr.bf16.mxu0 0
    %5928 = vmatmul.mubr.bf16.gmra.mrb[0].mxu0 %v5705
    %v5929 = vpop.f32.mrb[0].mxu0
    %v5930 = vadd.f32 0.0, %v5929
    %v5931 = vpop.f32.mrb[0].mxu0
    %v5932 = vpop.f32.mrb[0].mxu0
    %v5933 = vadd.f32 0.0, %v5932
    %v5934 = vpop.f32.mrb[0].mxu0
    %5935 = vmatprep.mubr.bf16.mxu0 0
    %5936 = vmatmul.mubr.bf16.gmra.mrb[0].mxu0 %v5708
    %v5937 = vpop.f32.mrb[0].mxu0
    %v5938 = vadd.f32 0.0, %v5937
    %v5939 = vpop.f32.mrb[0].mxu0
    %v5940 = vpop.f32.mrb[0].mxu0
    %v5941 = vadd.f32 0.0, %v5940
    %v5942 = vpop.f32.mrb[0].mxu0
    %5943 = vmatprep.mubr.bf16.mxu0 0
    %5944 = vmatmul.mubr.bf16.gmra.mrb[0].mxu0 %v5711
    %v5945 = vpop.f32.mrb[0].mxu0
    %v5946 = vadd.f32 0.0, %v5945
    %v5947 = vpop.f32.mrb[0].mxu0
    %v5948 = vpop.f32.mrb[0].mxu0
    %v5949 = vadd.f32 0.0, %v5948
    %v5950 = vpop.f32.mrb[0].mxu0
    %5951 = vmatprep.mubr.bf16.mxu0 0
    %5952 = vmatmul.mubr.bf16.gmra.mrb[0].mxu0 %v5714
    %v5953 = vpop.f32.mrb[0].mxu0
    %v5954 = vadd.f32 0.0, %v5953
    %v5955 = vpop.f32.mrb[0].mxu0
    %v5956 = vpop.f32.mrb[0].mxu0
    %v5957 = vadd.f32 0.0, %v5956
    %v5958 = vpop.f32.mrb[0].mxu0
    %5959 = vmatprep.mubr.bf16.mxu0 0
    %5960 = vmatmul.mubr.bf16.gmra.mrb[0].mxu0 %v5717
    %v5961 = vpop.f32.mrb[0].mxu0
    %v5962 = vadd.f32 0.0, %v5961
    %v5963 = vpop.f32.mrb[0].mxu0
    %v5964 = vpop.f32.mrb[0].mxu0
    %v5965 = vadd.f32 0.0, %v5964
    %v5966 = vpop.f32.mrb[0].mxu0
    %5967 = vmatprep.mubr.bf16.mxu0 0
    %5968 = vmatmul.mubr.bf16.gmra.mrb[0].mxu0 %v5720
    %v5969 = vpop.f32.mrb[0].mxu0
    %v5970 = vadd.f32 0.0, %v5969
    %v5971 = vpop.f32.mrb[0].mxu0
    %v5972 = vpop.f32.mrb[0].mxu0
    %v5973 = vadd.f32 0.0, %v5972
    %v5974 = vpop.f32.mrb[0].mxu0
    %5975 = vmatprep.mubr.bf16.mxu0 0
    %5976 = vmatmul.mubr.bf16.gmra.mrb[0].mxu0 %v5723
    %v5977 = vpop.f32.mrb[0].mxu0
    %v5978 = vadd.f32 0.0, %v5977
    %v5979 = vpop.f32.mrb[0].mxu0
    %v5980 = vpop.f32.mrb[0].mxu0
    %v5981 = vadd.f32 0.0, %v5980
    %v5982 = vpop.f32.mrb[0].mxu0
    %5983 = vmatprep.mubr.bf16.mxu0 0
    %5984 = vmatmul.mubr.bf16.gmra.mrb[0].mxu0 %v5726
    %v5985 = vpop.f32.mrb[0].mxu0
    %v5986 = vadd.f32 0.0, %v5985
    %v5987 = vpop.f32.mrb[0].mxu0
    %v5988 = vpop.f32.mrb[0].mxu0
    %v5989 = vadd.f32 0.0, %v5988
    %v5990 = vpop.f32.mrb[0].mxu0
    %5991 = vmatprep.mubr.bf16.mxu0 0
    %5992 = vmatmul.mubr.bf16.gmra.mrb[0].mxu0 %v5729
    %v5993 = vpop.f32.mrb[0].mxu0
    %v5994 = vadd.f32 0.0, %v5993
    %v5995 = vpop.f32.mrb[0].mxu0
    %v5996 = vpop.f32.mrb[0].mxu0
    %v5997 = vadd.f32 0.0, %v5996
    %v5998 = vpop.f32.mrb[0].mxu0
    %5999 = vmatprep.mubr.bf16.mxu0 0
    %6000 = vmatmul.mubr.bf16.gmra.mrb[0].mxu0 %v5732
    %v6001 = vpop.f32.mrb[0].mxu0
    %v6002 = vadd.f32 0.0, %v6001
    %v6003 = vpop.f32.mrb[0].mxu0
    %v6004 = vpop.f32.mrb[0].mxu0
    %v6005 = vadd.f32 0.0, %v6004
    %v6006 = vpop.f32.mrb[0].mxu0
    %6007 = vmatprep.mubr.bf16.mxu0 0
    %6008 = vmatmul.mubr.bf16.gmra.mrb[0].mxu0 %v5735
    %v6009 = vpop.f32.mrb[0].mxu0
    %v6010 = vadd.f32 0.0, %v6009
    %v6011 = vpop.f32.mrb[0].mxu0
    %v6012 = vpop.f32.mrb[0].mxu0
    %v6013 = vadd.f32 0.0, %v6012
    %v6014 = vpop.f32.mrb[0].mxu0
    %6015 = vmatprep.mubr.bf16.mxu0 0
    %6016 = vmatmul.mubr.bf16.gmra.mrb[0].mxu0 %v5738
    %v6017 = vpop.f32.mrb[0].mxu0
    %v6018 = vadd.f32 0.0, %v6017
    %v6019 = vpop.f32.mrb[0].mxu0
    %v6020 = vpop.f32.mrb[0].mxu0
    %v6021 = vadd.f32 0.0, %v6020
    %v6022 = vpop.f32.mrb[0].mxu0
    %6023 = vmatprep.mubr.bf16.mxu0 0
    %6024 = vmatmul.mubr.bf16.gmra.mrb[0].mxu0 %v5741
    %v6025 = vpop.f32.mrb[0].mxu0
    %v6026 = vadd.f32 0.0, %v6025
    %v6027 = vpop.f32.mrb[0].mxu0
    %v6028 = vpop.f32.mrb[0].mxu0
    %v6029 = vadd.f32 0.0, %v6028
    %v6030 = vpop.f32.mrb[0].mxu0
    %6031 = vdwg.mxu0
    %v6032 = vadd.f32 %v5438, %v5778
    %v6033 = vadd.f32 %v5439, %v5781
    %v6034 = vadd.f32 %v5440, %v5786
    %v6035 = vadd.f32 %v5441, %v5789
    %v6036 = vadd.f32 %v5442, %v5794
    %v6037 = vadd.f32 %v5443, %v5797
    %v6038 = vadd.f32 %v5444, %v5802
    %v6039 = vadd.f32 %v5445, %v5805
    %v6040 = vadd.f32 %v5446, %v5810
    %v6041 = vadd.f32 %v5447, %v5813
    %v6042 = vadd.f32 %v5448, %v5818
    %v6043 = vadd.f32 %v5449, %v5821
    %v6044 = vadd.f32 %v5450, %v5826
    %v6045 = vadd.f32 %v5451, %v5829
    %v6046 = vadd.f32 %v5452, %v5834
    %v6047 = vadd.f32 %v5453, %v5837
    %v6048 = vadd.f32 %v5454, %v5842
    %v6049 = vadd.f32 %v5455, %v5845
    %v6050 = vadd.f32 %v5456, %v5850
    %v6051 = vadd.f32 %v5457, %v5853
    %v6052 = vadd.f32 %v5458, %v5858
    %v6053 = vadd.f32 %v5459, %v5861
    %v6054 = vadd.f32 %v5460, %v5866
    %v6055 = vadd.f32 %v5461, %v5869
    %v6056 = vadd.f32 %v5462, %v5874
    %v6057 = vadd.f32 %v5463, %v5877
    %v6058 = vadd.f32 %v5464, %v5882
    %v6059 = vadd.f32 %v5465, %v5885
    %v6060 = vadd.f32 %v5466, %v5890
    %v6061 = vadd.f32 %v5467, %v5893
    %v6062 = vadd.f32 %v5468, %v5898
    %v6063 = vadd.f32 %v5469, %v5901
    %v6064 = vadd.f32 %v5470, %v5906
    %v6065 = vadd.f32 %v5471, %v5909
    %v6066 = vadd.f32 %v5472, %v5914
    %v6067 = vadd.f32 %v5473, %v5917
    %v6068 = vadd.f32 %v5474, %v5922
    %v6069 = vadd.f32 %v5475, %v5925
    %v6070 = vadd.f32 %v5476, %v5930
    %v6071 = vadd.f32 %v5477, %v5933
    %v6072 = vadd.f32 %v5478, %v5938
    %v6073 = vadd.f32 %v5479, %v5941
    %v6074 = vadd.f32 %v5480, %v5946
    %v6075 = vadd.f32 %v5481, %v5949
    %v6076 = vadd.f32 %v5482, %v5954
    %v6077 = vadd.f32 %v5483, %v5957
    %v6078 = vadd.f32 %v5484, %v5962
    %v6079 = vadd.f32 %v5485, %v5965
    %v6080 = vadd.f32 %v5486, %v5970
    %v6081 = vadd.f32 %v5487, %v5973
    %v6082 = vadd.f32 %v5488, %v5978
    %v6083 = vadd.f32 %v5489, %v5981
    %v6084 = vadd.f32 %v5490, %v5986
    %v6085 = vadd.f32 %v5491, %v5989
    %v6086 = vadd.f32 %v5492, %v5994
    %v6087 = vadd.f32 %v5493, %v5997
    %v6088 = vadd.f32 %v5494, %v6002
    %v6089 = vadd.f32 %v5495, %v6005
    %v6090 = vadd.f32 %v5496, %v6010
    %v6091 = vadd.f32 %v5497, %v6013
    %v6092 = vadd.f32 %v5498, %v6018
    %v6093 = vadd.f32 %v5499, %v6021
    %v6094 = vadd.f32 %v5500, %v6026
    %v6095 = vadd.f32 %v5501, %v6029
    %s6096 = scalar_lea.vmem %s3, 64
    %v6097 = vld [vmem:[%s6096] sm:$0xf]
    %v6098 = vld [vmem:[%s6096 + $0x4] sm:$0xf]
    %v6099 = vld [vmem:[%s6096 + $0x8] sm:$0xf]
    %v6100 = vld [vmem:[%s6096 + $0xc] sm:$0xf]
    %v6105 = vunpack.c.l.b16 %v6097
    %v6106 = vunpack.c.l.b16 %v6098
    %v6107 = vunpack.c.l.b16 %v6099
    %v6108 = vunpack.c.l.b16 %v6100
    %v6109 = vpack.c.b16 %v6106, %v6105
    %v6110 = vpack.c.b16 %v6108, %v6107
    %v6114 = vsel %vm2392, %v2976, 0
    %v6117 = vsel %vm2392, %v2977, 0
    %v6120 = vsel %vm2392, %v2978, 0
    %v6123 = vsel %vm2392, %v2979, 0
    %v6126 = vsel %vm2392, %v2980, 0
    %v6129 = vsel %vm2392, %v2981, 0
    %v6132 = vsel %vm2392, %v2982, 0
    %v6135 = vsel %vm2392, %v2983, 0
    %v6138 = vsel %vm2392, %v2984, 0
    %v6141 = vsel %vm2392, %v2985, 0
    %v6144 = vsel %vm2392, %v2986, 0
    %v6147 = vsel %vm2392, %v2987, 0
    %v6150 = vsel %vm2392, %v2988, 0
    %v6153 = vsel %vm2392, %v2989, 0
    %v6156 = vsel %vm2392, %v2990, 0
    %v6159 = vsel %vm2392, %v2991, 0
    %v6162 = vsel %vm2392, %v2992, 0
    %v6165 = vsel %vm2392, %v2993, 0
    %v6168 = vsel %vm2392, %v2994, 0
    %v6171 = vsel %vm2392, %v2995, 0
    %v6174 = vsel %vm2392, %v2996, 0
    %v6177 = vsel %vm2392, %v2997, 0
    %v6180 = vsel %vm2392, %v2998, 0
    %v6183 = vsel %vm2392, %v2999, 0
    %v6186 = vsel %vm2392, %v3000, 0
    %v6189 = vsel %vm2392, %v3001, 0
    %v6192 = vsel %vm2392, %v3002, 0
    %v6195 = vsel %vm2392, %v3003, 0
    %v6198 = vsel %vm2392, %v3004, 0
    %v6201 = vsel %vm2392, %v3005, 0
    %v6204 = vsel %vm2392, %v3006, 0
    %v6207 = vsel %vm2392, %v3007, 0
    %6209 = vmatprep.subr.bf16.mxu0 0
    %6210 = vmatpush1.bf16.msra.mxu0 %v6109
    %6211 = vmatprep.subr.bf16.mxu0 0
    %6212 = vmatpush1.bf16.msra.mxu0 %v6110
    %6213 = vmatprep.subr.bf16.mxu0 0
    %6214 = vmatpush1.bf16.msra.mxu0 0
    %6215 = vmatprep.subr.bf16.mxu0 0
    %6216 = vmatpush1.bf16.msra.mxu0 0
    %6217 = vmatprep.subr.bf16.mxu0 0
    %6218 = vmatpush1.bf16.msra.mxu0 0
    %6219 = vmatprep.subr.bf16.mxu0 0
    %6220 = vmatpush1.bf16.msra.mxu0 0
    %6221 = vmatprep.subr.bf16.mxu0 0
    %6222 = vmatpush1.bf16.msra.mxu0 0
    %6223 = vmatprep.subr.bf16.mxu0 0
    %6224 = vmatpush1.bf16.msra.mxu0 0
    %6225 = vmatprep.subr.bf16.mxu0 0
    %6226 = vmatpush1.bf16.msra.mxu0 0
    %6227 = vmatprep.subr.bf16.mxu0 0
    %6228 = vmatpush1.bf16.msra.mxu0 0
    %6229 = vmatprep.subr.bf16.mxu0 0
    %6230 = vmatpush1.bf16.msra.mxu0 0
    %6231 = vmatprep.subr.bf16.mxu0 0
    %6232 = vmatpush1.bf16.msra.mxu0 0
    %6233 = vmatprep.subr.bf16.mxu0 0
    %6234 = vmatpush1.bf16.msra.mxu0 0
    %6235 = vmatprep.subr.bf16.mxu0 0
    %6236 = vmatpush1.bf16.msra.mxu0 0
    %6237 = vmatprep.subr.bf16.mxu0 0
    %6238 = vmatpush1.bf16.msra.mxu0 0
    %6239 = vmatprep.subr.bf16.mxu0 0
    %6240 = vmatpush1.bf16.msra.mxu0 0
    %6241 = vmatprep.mubr.bf16.mxu0 0
    %6242 = vmatmul.mubr.bf16.gmra.mrb[0].mxu0 %v6114
    %v6243 = vpop.f32.mrb[0].mxu0
    %v6244 = vadd.f32 0.0, %v6243
    %v6245 = vpop.f32.mrb[0].mxu0
    %v6246 = vpop.f32.mrb[0].mxu0
    %v6247 = vadd.f32 0.0, %v6246
    %v6248 = vpop.f32.mrb[0].mxu0
    %6249 = vmatprep.mubr.bf16.mxu0 0
    %6250 = vmatmul.mubr.bf16.gmra.mrb[0].mxu0 %v6117
    %v6251 = vpop.f32.mrb[0].mxu0
    %v6252 = vadd.f32 0.0, %v6251
    %v6253 = vpop.f32.mrb[0].mxu0
    %v6254 = vpop.f32.mrb[0].mxu0
    %v6255 = vadd.f32 0.0, %v6254
    %v6256 = vpop.f32.mrb[0].mxu0
    %6257 = vmatprep.mubr.bf16.mxu0 0
    %6258 = vmatmul.mubr.bf16.gmra.mrb[0].mxu0 %v6120
    %v6259 = vpop.f32.mrb[0].mxu0
    %v6260 = vadd.f32 0.0, %v6259
    %v6261 = vpop.f32.mrb[0].mxu0
    %v6262 = vpop.f32.mrb[0].mxu0
    %v6263 = vadd.f32 0.0, %v6262
    %v6264 = vpop.f32.mrb[0].mxu0
    %6265 = vmatprep.mubr.bf16.mxu0 0
    %6266 = vmatmul.mubr.bf16.gmra.mrb[0].mxu0 %v6123
    %v6267 = vpop.f32.mrb[0].mxu0
    %v6268 = vadd.f32 0.0, %v6267
    %v6269 = vpop.f32.mrb[0].mxu0
    %v6270 = vpop.f32.mrb[0].mxu0
    %v6271 = vadd.f32 0.0, %v6270
    %v6272 = vpop.f32.mrb[0].mxu0
    %6273 = vmatprep.mubr.bf16.mxu0 0
    %6274 = vmatmul.mubr.bf16.gmra.mrb[0].mxu0 %v6126
    %v6275 = vpop.f32.mrb[0].mxu0
    %v6276 = vadd.f32 0.0, %v6275
    %v6277 = vpop.f32.mrb[0].mxu0
    %v6278 = vpop.f32.mrb[0].mxu0
    %v6279 = vadd.f32 0.0, %v6278
    %v6280 = vpop.f32.mrb[0].mxu0
    %6281 = vmatprep.mubr.bf16.mxu0 0
    %6282 = vmatmul.mubr.bf16.gmra.mrb[0].mxu0 %v6129
    %v6283 = vpop.f32.mrb[0].mxu0
    %v6284 = vadd.f32 0.0, %v6283
    %v6285 = vpop.f32.mrb[0].mxu0
    %v6286 = vpop.f32.mrb[0].mxu0
    %v6287 = vadd.f32 0.0, %v6286
    %v6288 = vpop.f32.mrb[0].mxu0
    %6289 = vmatprep.mubr.bf16.mxu0 0
    %6290 = vmatmul.mubr.bf16.gmra.mrb[0].mxu0 %v6132
    %v6291 = vpop.f32.mrb[0].mxu0
    %v6292 = vadd.f32 0.0, %v6291
    %v6293 = vpop.f32.mrb[0].mxu0
    %v6294 = vpop.f32.mrb[0].mxu0
    %v6295 = vadd.f32 0.0, %v6294
    %v6296 = vpop.f32.mrb[0].mxu0
    %6297 = vmatprep.mubr.bf16.mxu0 0
    %6298 = vmatmul.mubr.bf16.gmra.mrb[0].mxu0 %v6135
    %v6299 = vpop.f32.mrb[0].mxu0
    %v6300 = vadd.f32 0.0, %v6299
    %v6301 = vpop.f32.mrb[0].mxu0
    %v6302 = vpop.f32.mrb[0].mxu0
    %v6303 = vadd.f32 0.0, %v6302
    %v6304 = vpop.f32.mrb[0].mxu0
    %6305 = vmatprep.mubr.bf16.mxu0 0
    %6306 = vmatmul.mubr.bf16.gmra.mrb[0].mxu0 %v6138
    %v6307 = vpop.f32.mrb[0].mxu0
    %v6308 = vadd.f32 0.0, %v6307
    %v6309 = vpop.f32.mrb[0].mxu0
    %v6310 = vpop.f32.mrb[0].mxu0
    %v6311 = vadd.f32 0.0, %v6310
    %v6312 = vpop.f32.mrb[0].mxu0
    %6313 = vmatprep.mubr.bf16.mxu0 0
    %6314 = vmatmul.mubr.bf16.gmra.mrb[0].mxu0 %v6141
    %v6315 = vpop.f32.mrb[0].mxu0
    %v6316 = vadd.f32 0.0, %v6315
    %v6317 = vpop.f32.mrb[0].mxu0
    %v6318 = vpop.f32.mrb[0].mxu0
    %v6319 = vadd.f32 0.0, %v6318
    %v6320 = vpop.f32.mrb[0].mxu0
    %6321 = vmatprep.mubr.bf16.mxu0 0
    %6322 = vmatmul.mubr.bf16.gmra.mrb[0].mxu0 %v6144
    %v6323 = vpop.f32.mrb[0].mxu0
    %v6324 = vadd.f32 0.0, %v6323
    %v6325 = vpop.f32.mrb[0].mxu0
    %v6326 = vpop.f32.mrb[0].mxu0
    %v6327 = vadd.f32 0.0, %v6326
    %v6328 = vpop.f32.mrb[0].mxu0
    %6329 = vmatprep.mubr.bf16.mxu0 0
    %6330 = vmatmul.mubr.bf16.gmra.mrb[0].mxu0 %v6147
    %v6331 = vpop.f32.mrb[0].mxu0
    %v6332 = vadd.f32 0.0, %v6331
    %v6333 = vpop.f32.mrb[0].mxu0
    %v6334 = vpop.f32.mrb[0].mxu0
    %v6335 = vadd.f32 0.0, %v6334
    %v6336 = vpop.f32.mrb[0].mxu0
    %6337 = vmatprep.mubr.bf16.mxu0 0
    %6338 = vmatmul.mubr.bf16.gmra.mrb[0].mxu0 %v6150
    %v6339 = vpop.f32.mrb[0].mxu0
    %v6340 = vadd.f32 0.0, %v6339
    %v6341 = vpop.f32.mrb[0].mxu0
    %v6342 = vpop.f32.mrb[0].mxu0
    %v6343 = vadd.f32 0.0, %v6342
    %v6344 = vpop.f32.mrb[0].mxu0
    %6345 = vmatprep.mubr.bf16.mxu0 0
    %6346 = vmatmul.mubr.bf16.gmra.mrb[0].mxu0 %v6153
    %v6347 = vpop.f32.mrb[0].mxu0
    %v6348 = vadd.f32 0.0, %v6347
    %v6349 = vpop.f32.mrb[0].mxu0
    %v6350 = vpop.f32.mrb[0].mxu0
    %v6351 = vadd.f32 0.0, %v6350
    %v6352 = vpop.f32.mrb[0].mxu0
    %6353 = vmatprep.mubr.bf16.mxu0 0
    %6354 = vmatmul.mubr.bf16.gmra.mrb[0].mxu0 %v6156
    %v6355 = vpop.f32.mrb[0].mxu0
    %v6356 = vadd.f32 0.0, %v6355
    %v6357 = vpop.f32.mrb[0].mxu0
    %v6358 = vpop.f32.mrb[0].mxu0
    %v6359 = vadd.f32 0.0, %v6358
    %v6360 = vpop.f32.mrb[0].mxu0
    %6361 = vmatprep.mubr.bf16.mxu0 0
    %6362 = vmatmul.mubr.bf16.gmra.mrb[0].mxu0 %v6159
    %v6363 = vpop.f32.mrb[0].mxu0
    %v6364 = vadd.f32 0.0, %v6363
    %v6365 = vpop.f32.mrb[0].mxu0
    %v6366 = vpop.f32.mrb[0].mxu0
    %v6367 = vadd.f32 0.0, %v6366
    %v6368 = vpop.f32.mrb[0].mxu0
    %6369 = vmatprep.mubr.bf16.mxu0 0
    %6370 = vmatmul.mubr.bf16.gmra.mrb[0].mxu0 %v6162
    %v6371 = vpop.f32.mrb[0].mxu0
    %v6372 = vadd.f32 0.0, %v6371
    %v6373 = vpop.f32.mrb[0].mxu0
    %v6374 = vpop.f32.mrb[0].mxu0
    %v6375 = vadd.f32 0.0, %v6374
    %v6376 = vpop.f32.mrb[0].mxu0
    %6377 = vmatprep.mubr.bf16.mxu0 0
    %6378 = vmatmul.mubr.bf16.gmra.mrb[0].mxu0 %v6165
    %v6379 = vpop.f32.mrb[0].mxu0
    %v6380 = vadd.f32 0.0, %v6379
    %v6381 = vpop.f32.mrb[0].mxu0
    %v6382 = vpop.f32.mrb[0].mxu0
    %v6383 = vadd.f32 0.0, %v6382
    %v6384 = vpop.f32.mrb[0].mxu0
    %6385 = vmatprep.mubr.bf16.mxu0 0
    %6386 = vmatmul.mubr.bf16.gmra.mrb[0].mxu0 %v6168
    %v6387 = vpop.f32.mrb[0].mxu0
    %v6388 = vadd.f32 0.0, %v6387
    %v6389 = vpop.f32.mrb[0].mxu0
    %v6390 = vpop.f32.mrb[0].mxu0
    %v6391 = vadd.f32 0.0, %v6390
    %v6392 = vpop.f32.mrb[0].mxu0
    %6393 = vmatprep.mubr.bf16.mxu0 0
    %6394 = vmatmul.mubr.bf16.gmra.mrb[0].mxu0 %v6171
    %v6395 = vpop.f32.mrb[0].mxu0
    %v6396 = vadd.f32 0.0, %v6395
    %v6397 = vpop.f32.mrb[0].mxu0
    %v6398 = vpop.f32.mrb[0].mxu0
    %v6399 = vadd.f32 0.0, %v6398
    %v6400 = vpop.f32.mrb[0].mxu0
    %6401 = vmatprep.mubr.bf16.mxu0 0
    %6402 = vmatmul.mubr.bf16.gmra.mrb[0].mxu0 %v6174
    %v6403 = vpop.f32.mrb[0].mxu0
    %v6404 = vadd.f32 0.0, %v6403
    %v6405 = vpop.f32.mrb[0].mxu0
    %v6406 = vpop.f32.mrb[0].mxu0
    %v6407 = vadd.f32 0.0, %v6406
    %v6408 = vpop.f32.mrb[0].mxu0
    %6409 = vmatprep.mubr.bf16.mxu0 0
    %6410 = vmatmul.mubr.bf16.gmra.mrb[0].mxu0 %v6177
    %v6411 = vpop.f32.mrb[0].mxu0
    %v6412 = vadd.f32 0.0, %v6411
    %v6413 = vpop.f32.mrb[0].mxu0
    %v6414 = vpop.f32.mrb[0].mxu0
    %v6415 = vadd.f32 0.0, %v6414
    %v6416 = vpop.f32.mrb[0].mxu0
    %6417 = vmatprep.mubr.bf16.mxu0 0
    %6418 = vmatmul.mubr.bf16.gmra.mrb[0].mxu0 %v6180
    %v6419 = vpop.f32.mrb[0].mxu0
    %v6420 = vadd.f32 0.0, %v6419
    %v6421 = vpop.f32.mrb[0].mxu0
    %v6422 = vpop.f32.mrb[0].mxu0
    %v6423 = vadd.f32 0.0, %v6422
    %v6424 = vpop.f32.mrb[0].mxu0
    %6425 = vmatprep.mubr.bf16.mxu0 0
    %6426 = vmatmul.mubr.bf16.gmra.mrb[0].mxu0 %v6183
    %v6427 = vpop.f32.mrb[0].mxu0
    %v6428 = vadd.f32 0.0, %v6427
    %v6429 = vpop.f32.mrb[0].mxu0
    %v6430 = vpop.f32.mrb[0].mxu0
    %v6431 = vadd.f32 0.0, %v6430
    %v6432 = vpop.f32.mrb[0].mxu0
    %6433 = vmatprep.mubr.bf16.mxu0 0
    %6434 = vmatmul.mubr.bf16.gmra.mrb[0].mxu0 %v6186
    %v6435 = vpop.f32.mrb[0].mxu0
    %v6436 = vadd.f32 0.0, %v6435
    %v6437 = vpop.f32.mrb[0].mxu0
    %v6438 = vpop.f32.mrb[0].mxu0
    %v6439 = vadd.f32 0.0, %v6438
    %v6440 = vpop.f32.mrb[0].mxu0
    %6441 = vmatprep.mubr.bf16.mxu0 0
    %6442 = vmatmul.mubr.bf16.gmra.mrb[0].mxu0 %v6189
    %v6443 = vpop.f32.mrb[0].mxu0
    %v6444 = vadd.f32 0.0, %v6443
    %v6445 = vpop.f32.mrb[0].mxu0
    %v6446 = vpop.f32.mrb[0].mxu0
    %v6447 = vadd.f32 0.0, %v6446
    %v6448 = vpop.f32.mrb[0].mxu0
    %6449 = vmatprep.mubr.bf16.mxu0 0
    %6450 = vmatmul.mubr.bf16.gmra.mrb[0].mxu0 %v6192
    %v6451 = vpop.f32.mrb[0].mxu0
    %v6452 = vadd.f32 0.0, %v6451
    %v6453 = vpop.f32.mrb[0].mxu0
    %v6454 = vpop.f32.mrb[0].mxu0
    %v6455 = vadd.f32 0.0, %v6454
    %v6456 = vpop.f32.mrb[0].mxu0
    %6457 = vmatprep.mubr.bf16.mxu0 0
    %6458 = vmatmul.mubr.bf16.gmra.mrb[0].mxu0 %v6195
    %v6459 = vpop.f32.mrb[0].mxu0
    %v6460 = vadd.f32 0.0, %v6459
    %v6461 = vpop.f32.mrb[0].mxu0
    %v6462 = vpop.f32.mrb[0].mxu0
    %v6463 = vadd.f32 0.0, %v6462
    %v6464 = vpop.f32.mrb[0].mxu0
    %6465 = vmatprep.mubr.bf16.mxu0 0
    %6466 = vmatmul.mubr.bf16.gmra.mrb[0].mxu0 %v6198
    %v6467 = vpop.f32.mrb[0].mxu0
    %v6468 = vadd.f32 0.0, %v6467
    %v6469 = vpop.f32.mrb[0].mxu0
    %v6470 = vpop.f32.mrb[0].mxu0
    %v6471 = vadd.f32 0.0, %v6470
    %v6472 = vpop.f32.mrb[0].mxu0
    %6473 = vmatprep.mubr.bf16.mxu0 0
    %6474 = vmatmul.mubr.bf16.gmra.mrb[0].mxu0 %v6201
    %v6475 = vpop.f32.mrb[0].mxu0
    %v6476 = vadd.f32 0.0, %v6475
    %v6477 = vpop.f32.mrb[0].mxu0
    %v6478 = vpop.f32.mrb[0].mxu0
    %v6479 = vadd.f32 0.0, %v6478
    %v6480 = vpop.f32.mrb[0].mxu0
    %6481 = vmatprep.mubr.bf16.mxu0 0
    %6482 = vmatmul.mubr.bf16.gmra.mrb[0].mxu0 %v6204
    %v6483 = vpop.f32.mrb[0].mxu0
    %v6484 = vadd.f32 0.0, %v6483
    %v6485 = vpop.f32.mrb[0].mxu0
    %v6486 = vpop.f32.mrb[0].mxu0
    %v6487 = vadd.f32 0.0, %v6486
    %v6488 = vpop.f32.mrb[0].mxu0
    %6489 = vmatprep.mubr.bf16.mxu0 0
    %6490 = vmatmul.mubr.bf16.gmra.mrb[0].mxu0 %v6207
    %v6491 = vpop.f32.mrb[0].mxu0
    %v6492 = vadd.f32 0.0, %v6491
    %v6493 = vpop.f32.mrb[0].mxu0
    %v6494 = vpop.f32.mrb[0].mxu0
    %v6495 = vadd.f32 0.0, %v6494
    %v6496 = vpop.f32.mrb[0].mxu0
    %6497 = vdwg.mxu0
    %v6498 = vadd.f32 %v6032, %v6244
    %v6499 = vadd.f32 %v6033, %v6247
    %v6500 = vadd.f32 %v6034, %v6252
    %v6501 = vadd.f32 %v6035, %v6255
    %v6502 = vadd.f32 %v6036, %v6260
    %v6503 = vadd.f32 %v6037, %v6263
    %v6504 = vadd.f32 %v6038, %v6268
    %v6505 = vadd.f32 %v6039, %v6271
    %v6506 = vadd.f32 %v6040, %v6276
    %v6507 = vadd.f32 %v6041, %v6279
    %v6508 = vadd.f32 %v6042, %v6284
    %v6509 = vadd.f32 %v6043, %v6287
    %v6510 = vadd.f32 %v6044, %v6292
    %v6511 = vadd.f32 %v6045, %v6295
    %v6512 = vadd.f32 %v6046, %v6300
    %v6513 = vadd.f32 %v6047, %v6303
    %v6514 = vadd.f32 %v6048, %v6308
    %v6515 = vadd.f32 %v6049, %v6311
    %v6516 = vadd.f32 %v6050, %v6316
    %v6517 = vadd.f32 %v6051, %v6319
    %v6518 = vadd.f32 %v6052, %v6324
    %v6519 = vadd.f32 %v6053, %v6327
    %v6520 = vadd.f32 %v6054, %v6332
    %v6521 = vadd.f32 %v6055, %v6335
    %v6522 = vadd.f32 %v6056, %v6340
    %v6523 = vadd.f32 %v6057, %v6343
    %v6524 = vadd.f32 %v6058, %v6348
    %v6525 = vadd.f32 %v6059, %v6351
    %v6526 = vadd.f32 %v6060, %v6356
    %v6527 = vadd.f32 %v6061, %v6359
    %v6528 = vadd.f32 %v6062, %v6364
    %v6529 = vadd.f32 %v6063, %v6367
    %v6530 = vadd.f32 %v6064, %v6372
    %v6531 = vadd.f32 %v6065, %v6375
    %v6532 = vadd.f32 %v6066, %v6380
    %v6533 = vadd.f32 %v6067, %v6383
    %v6534 = vadd.f32 %v6068, %v6388
    %v6535 = vadd.f32 %v6069, %v6391
    %v6536 = vadd.f32 %v6070, %v6396
    %v6537 = vadd.f32 %v6071, %v6399
    %v6538 = vadd.f32 %v6072, %v6404
    %v6539 = vadd.f32 %v6073, %v6407
    %v6540 = vadd.f32 %v6074, %v6412
    %v6541 = vadd.f32 %v6075, %v6415
    %v6542 = vadd.f32 %v6076, %v6420
    %v6543 = vadd.f32 %v6077, %v6423
    %v6544 = vadd.f32 %v6078, %v6428
    %v6545 = vadd.f32 %v6079, %v6431
    %v6546 = vadd.f32 %v6080, %v6436
    %v6547 = vadd.f32 %v6081, %v6439
    %v6548 = vadd.f32 %v6082, %v6444
    %v6549 = vadd.f32 %v6083, %v6447
    %v6550 = vadd.f32 %v6084, %v6452
    %v6551 = vadd.f32 %v6085, %v6455
    %v6552 = vadd.f32 %v6086, %v6460
    %v6553 = vadd.f32 %v6087, %v6463
    %v6554 = vadd.f32 %v6088, %v6468
    %v6555 = vadd.f32 %v6089, %v6471
    %v6556 = vadd.f32 %v6090, %v6476
    %v6557 = vadd.f32 %v6091, %v6479
    %v6558 = vadd.f32 %v6092, %v6484
    %v6559 = vadd.f32 %v6093, %v6487
    %v6560 = vadd.f32 %v6094, %v6492
    %v6561 = vadd.f32 %v6095, %v6495
    %v6562 = vrot.slane %v5514, 1
    %v6563 = vor.u32 %v5511, %v6562
    %v6564 = vrot.slane %v5521, 1
    %v6565 = vor.u32 %v5518, %v6564
    %v6566 = vrot.slane %v5528, 1
    %v6567 = vor.u32 %v5525, %v6566
    %v6568 = vrot.slane %v5535, 1
    %v6569 = vor.u32 %v5532, %v6568
    %v6570 = vrot.slane %v5542, 1
    %v6571 = vor.u32 %v5539, %v6570
    %v6572 = vrot.slane %v5549, 1
    %v6573 = vor.u32 %v5546, %v6572
    %v6574 = vrot.slane %v5556, 1
    %v6575 = vor.u32 %v5553, %v6574
    %v6576 = vrot.slane %v5563, 1
    %v6577 = vor.u32 %v5560, %v6576
    %v6586 = vsel %vm4832, %v6563, 0
    %v6587 = vsel %vm4832, %v6565, 0
    %v6588 = vsel %vm4832, %v6567, 0
    %v6589 = vsel %vm4832, %v6569, 0
    %v6590 = vsel %vm4832, %v6571, 0
    %v6591 = vsel %vm4832, %v6573, 0
    %v6592 = vsel %vm4832, %v6575, 0
    %v6593 = vsel %vm4832, %v6577, 0
    %s6594 = scalar_lea.vmem %s3, 80
    %v6595 = vld [vmem:[%s6594] sm:$0xf]
    %v6596 = vld [vmem:[%s6594 + $0x4] sm:$0xf]
    %v6597 = vld [vmem:[%s6594 + $0x8] sm:$0xf]
    %v6598 = vld [vmem:[%s6594 + $0xc] sm:$0xf]
    %v6607 = vunpack.c.l.b16 %v6586
    %v6608 = vunpack.c.l.b16 %v6587
    %v6609 = vunpack.c.l.b16 %v6588
    %v6610 = vunpack.c.l.b16 %v6589
    %v6611 = vunpack.c.l.b16 %v6590
    %v6612 = vunpack.c.l.b16 %v6591
    %v6613 = vunpack.c.l.b16 %v6592
    %v6614 = vunpack.c.l.b16 %v6593
    %v6615 = vpack.c.b16 %v4954, %v4953
    %v6616 = vpack.c.b16 %v4956, %v4955
    %v6617 = vpack.c.b16 %v4958, %v4957
    %v6618 = vpack.c.b16 %v6607, %v4959
    %v6619 = vpack.c.b16 %v4961, %v4960
    %v6620 = vpack.c.b16 %v4963, %v4962
    %v6621 = vpack.c.b16 %v4965, %v4964
    %v6622 = vpack.c.b16 %v6608, %v4966
    %v6623 = vpack.c.b16 %v4968, %v4967
    %v6624 = vpack.c.b16 %v4970, %v4969
    %v6625 = vpack.c.b16 %v4972, %v4971
    %v6626 = vpack.c.b16 %v6609, %v4973
    %v6627 = vpack.c.b16 %v4975, %v4974
    %v6628 = vpack.c.b16 %v4977, %v4976
    %v6629 = vpack.c.b16 %v4979, %v4978
    %v6630 = vpack.c.b16 %v6610, %v4980
    %v6631 = vpack.c.b16 %v4982, %v4981
    %v6632 = vpack.c.b16 %v4984, %v4983
    %v6633 = vpack.c.b16 %v4986, %v4985
    %v6634 = vpack.c.b16 %v6611, %v4987
    %v6635 = vpack.c.b16 %v4989, %v4988
    %v6636 = vpack.c.b16 %v4991, %v4990
    %v6637 = vpack.c.b16 %v4993, %v4992
    %v6638 = vpack.c.b16 %v6612, %v4994
    %v6639 = vpack.c.b16 %v4996, %v4995
    %v6640 = vpack.c.b16 %v4998, %v4997
    %v6641 = vpack.c.b16 %v5000, %v4999
    %v6642 = vpack.c.b16 %v6613, %v5001
    %v6643 = vpack.c.b16 %v5003, %v5002
    %v6644 = vpack.c.b16 %v5005, %v5004
    %v6645 = vpack.c.b16 %v5007, %v5006
    %v6646 = vpack.c.b16 %v6614, %v5008
    %v6651 = vunpack.c.l.b16 %v6595
    %v6652 = vunpack.c.l.b16 %v6596
    %v6653 = vunpack.c.l.b16 %v6597
    %v6654 = vunpack.c.l.b16 %v6598
    %v6655 = vpack.c.b16 %v6652, %v6651
    %v6656 = vpack.c.b16 %v6654, %v6653
    %v6660 = vsel %vm2392, %v6615, 0
    %v6663 = vsel %vm2392, %v6616, 0
    %v6666 = vsel %vm2392, %v6617, 0
    %v6669 = vsel %vm2392, %v6618, 0
    %v6672 = vsel %vm2392, %v6619, 0
    %v6675 = vsel %vm2392, %v6620, 0
    %v6678 = vsel %vm2392, %v6621, 0
    %v6681 = vsel %vm2392, %v6622, 0
    %v6684 = vsel %vm2392, %v6623, 0
    %v6687 = vsel %vm2392, %v6624, 0
    %v6690 = vsel %vm2392, %v6625, 0
    %v6693 = vsel %vm2392, %v6626, 0
    %v6696 = vsel %vm2392, %v6627, 0
    %v6699 = vsel %vm2392, %v6628, 0
    %v6702 = vsel %vm2392, %v6629, 0
    %v6705 = vsel %vm2392, %v6630, 0
    %v6708 = vsel %vm2392, %v6631, 0
    %v6711 = vsel %vm2392, %v6632, 0
    %v6714 = vsel %vm2392, %v6633, 0
    %v6717 = vsel %vm2392, %v6634, 0
    %v6720 = vsel %vm2392, %v6635, 0
    %v6723 = vsel %vm2392, %v6636, 0
    %v6726 = vsel %vm2392, %v6637, 0
    %v6729 = vsel %vm2392, %v6638, 0
    %v6732 = vsel %vm2392, %v6639, 0
    %v6735 = vsel %vm2392, %v6640, 0
    %v6738 = vsel %vm2392, %v6641, 0
    %v6741 = vsel %vm2392, %v6642, 0
    %v6744 = vsel %vm2392, %v6643, 0
    %v6747 = vsel %vm2392, %v6644, 0
    %v6750 = vsel %vm2392, %v6645, 0
    %v6753 = vsel %vm2392, %v6646, 0
    %6755 = vmatprep.subr.bf16.mxu0 0
    %6756 = vmatpush1.bf16.msra.mxu0 %v6655
    %6757 = vmatprep.subr.bf16.mxu0 0
    %6758 = vmatpush1.bf16.msra.mxu0 %v6656
    %6759 = vmatprep.subr.bf16.mxu0 0
    %6760 = vmatpush1.bf16.msra.mxu0 0
    %6761 = vmatprep.subr.bf16.mxu0 0
    %6762 = vmatpush1.bf16.msra.mxu0 0
    %6763 = vmatprep.subr.bf16.mxu0 0
    %6764 = vmatpush1.bf16.msra.mxu0 0
    %6765 = vmatprep.subr.bf16.mxu0 0
    %6766 = vmatpush1.bf16.msra.mxu0 0
    %6767 = vmatprep.subr.bf16.mxu0 0
    %6768 = vmatpush1.bf16.msra.mxu0 0
    %6769 = vmatprep.subr.bf16.mxu0 0
    %6770 = vmatpush1.bf16.msra.mxu0 0
    %6771 = vmatprep.subr.bf16.mxu0 0
    %6772 = vmatpush1.bf16.msra.mxu0 0
    %6773 = vmatprep.subr.bf16.mxu0 0
    %6774 = vmatpush1.bf16.msra.mxu0 0
    %6775 = vmatprep.subr.bf16.mxu0 0
    %6776 = vmatpush1.bf16.msra.mxu0 0
    %6777 = vmatprep.subr.bf16.mxu0 0
    %6778 = vmatpush1.bf16.msra.mxu0 0
    %6779 = vmatprep.subr.bf16.mxu0 0
    %6780 = vmatpush1.bf16.msra.mxu0 0
    %6781 = vmatprep.subr.bf16.mxu0 0
    %6782 = vmatpush1.bf16.msra.mxu0 0
    %6783 = vmatprep.subr.bf16.mxu0 0
    %6784 = vmatpush1.bf16.msra.mxu0 0
    %6785 = vmatprep.subr.bf16.mxu0 0
    %6786 = vmatpush1.bf16.msra.mxu0 0
    %6787 = vmatprep.mubr.bf16.mxu0 0
    %6788 = vmatmul.mubr.bf16.gmra.mrb[0].mxu0 %v6660
    %v6789 = vpop.f32.mrb[0].mxu0
    %v6790 = vadd.f32 0.0, %v6789
    %v6791 = vpop.f32.mrb[0].mxu0
    %v6792 = vpop.f32.mrb[0].mxu0
    %v6793 = vadd.f32 0.0, %v6792
    %v6794 = vpop.f32.mrb[0].mxu0
    %6795 = vmatprep.mubr.bf16.mxu0 0
    %6796 = vmatmul.mubr.bf16.gmra.mrb[0].mxu0 %v6663
    %v6797 = vpop.f32.mrb[0].mxu0
    %v6798 = vadd.f32 0.0, %v6797
    %v6799 = vpop.f32.mrb[0].mxu0
    %v6800 = vpop.f32.mrb[0].mxu0
    %v6801 = vadd.f32 0.0, %v6800
    %v6802 = vpop.f32.mrb[0].mxu0
    %6803 = vmatprep.mubr.bf16.mxu0 0
    %6804 = vmatmul.mubr.bf16.gmra.mrb[0].mxu0 %v6666
    %v6805 = vpop.f32.mrb[0].mxu0
    %v6806 = vadd.f32 0.0, %v6805
    %v6807 = vpop.f32.mrb[0].mxu0
    %v6808 = vpop.f32.mrb[0].mxu0
    %v6809 = vadd.f32 0.0, %v6808
    %v6810 = vpop.f32.mrb[0].mxu0
    %6811 = vmatprep.mubr.bf16.mxu0 0
    %6812 = vmatmul.mubr.bf16.gmra.mrb[0].mxu0 %v6669
    %v6813 = vpop.f32.mrb[0].mxu0
    %v6814 = vadd.f32 0.0, %v6813
    %v6815 = vpop.f32.mrb[0].mxu0
    %v6816 = vpop.f32.mrb[0].mxu0
    %v6817 = vadd.f32 0.0, %v6816
    %v6818 = vpop.f32.mrb[0].mxu0
    %6819 = vmatprep.mubr.bf16.mxu0 0
    %6820 = vmatmul.mubr.bf16.gmra.mrb[0].mxu0 %v6672
    %v6821 = vpop.f32.mrb[0].mxu0
    %v6822 = vadd.f32 0.0, %v6821
    %v6823 = vpop.f32.mrb[0].mxu0
    %v6824 = vpop.f32.mrb[0].mxu0
    %v6825 = vadd.f32 0.0, %v6824
    %v6826 = vpop.f32.mrb[0].mxu0
    %6827 = vmatprep.mubr.bf16.mxu0 0
    %6828 = vmatmul.mubr.bf16.gmra.mrb[0].mxu0 %v6675
    %v6829 = vpop.f32.mrb[0].mxu0
    %v6830 = vadd.f32 0.0, %v6829
    %v6831 = vpop.f32.mrb[0].mxu0
    %v6832 = vpop.f32.mrb[0].mxu0
    %v6833 = vadd.f32 0.0, %v6832
    %v6834 = vpop.f32.mrb[0].mxu0
    %6835 = vmatprep.mubr.bf16.mxu0 0
    %6836 = vmatmul.mubr.bf16.gmra.mrb[0].mxu0 %v6678
    %v6837 = vpop.f32.mrb[0].mxu0
    %v6838 = vadd.f32 0.0, %v6837
    %v6839 = vpop.f32.mrb[0].mxu0
    %v6840 = vpop.f32.mrb[0].mxu0
    %v6841 = vadd.f32 0.0, %v6840
    %v6842 = vpop.f32.mrb[0].mxu0
    %6843 = vmatprep.mubr.bf16.mxu0 0
    %6844 = vmatmul.mubr.bf16.gmra.mrb[0].mxu0 %v6681
    %v6845 = vpop.f32.mrb[0].mxu0
    %v6846 = vadd.f32 0.0, %v6845
    %v6847 = vpop.f32.mrb[0].mxu0
    %v6848 = vpop.f32.mrb[0].mxu0
    %v6849 = vadd.f32 0.0, %v6848
    %v6850 = vpop.f32.mrb[0].mxu0
    %6851 = vmatprep.mubr.bf16.mxu0 0
    %6852 = vmatmul.mubr.bf16.gmra.mrb[0].mxu0 %v6684
    %v6853 = vpop.f32.mrb[0].mxu0
    %v6854 = vadd.f32 0.0, %v6853
    %v6855 = vpop.f32.mrb[0].mxu0
    %v6856 = vpop.f32.mrb[0].mxu0
    %v6857 = vadd.f32 0.0, %v6856
    %v6858 = vpop.f32.mrb[0].mxu0
    %6859 = vmatprep.mubr.bf16.mxu0 0
    %6860 = vmatmul.mubr.bf16.gmra.mrb[0].mxu0 %v6687
    %v6861 = vpop.f32.mrb[0].mxu0
    %v6862 = vadd.f32 0.0, %v6861
    %v6863 = vpop.f32.mrb[0].mxu0
    %v6864 = vpop.f32.mrb[0].mxu0
    %v6865 = vadd.f32 0.0, %v6864
    %v6866 = vpop.f32.mrb[0].mxu0
    %6867 = vmatprep.mubr.bf16.mxu0 0
    %6868 = vmatmul.mubr.bf16.gmra.mrb[0].mxu0 %v6690
    %v6869 = vpop.f32.mrb[0].mxu0
    %v6870 = vadd.f32 0.0, %v6869
    %v6871 = vpop.f32.mrb[0].mxu0
    %v6872 = vpop.f32.mrb[0].mxu0
    %v6873 = vadd.f32 0.0, %v6872
    %v6874 = vpop.f32.mrb[0].mxu0
    %6875 = vmatprep.mubr.bf16.mxu0 0
    %6876 = vmatmul.mubr.bf16.gmra.mrb[0].mxu0 %v6693
    %v6877 = vpop.f32.mrb[0].mxu0
    %v6878 = vadd.f32 0.0, %v6877
    %v6879 = vpop.f32.mrb[0].mxu0
    %v6880 = vpop.f32.mrb[0].mxu0
    %v6881 = vadd.f32 0.0, %v6880
    %v6882 = vpop.f32.mrb[0].mxu0
    %6883 = vmatprep.mubr.bf16.mxu0 0
    %6884 = vmatmul.mubr.bf16.gmra.mrb[0].mxu0 %v6696
    %v6885 = vpop.f32.mrb[0].mxu0
    %v6886 = vadd.f32 0.0, %v6885
    %v6887 = vpop.f32.mrb[0].mxu0
    %v6888 = vpop.f32.mrb[0].mxu0
    %v6889 = vadd.f32 0.0, %v6888
    %v6890 = vpop.f32.mrb[0].mxu0
    %6891 = vmatprep.mubr.bf16.mxu0 0
    %6892 = vmatmul.mubr.bf16.gmra.mrb[0].mxu0 %v6699
    %v6893 = vpop.f32.mrb[0].mxu0
    %v6894 = vadd.f32 0.0, %v6893
    %v6895 = vpop.f32.mrb[0].mxu0
    %v6896 = vpop.f32.mrb[0].mxu0
    %v6897 = vadd.f32 0.0, %v6896
    %v6898 = vpop.f32.mrb[0].mxu0
    %6899 = vmatprep.mubr.bf16.mxu0 0
    %6900 = vmatmul.mubr.bf16.gmra.mrb[0].mxu0 %v6702
    %v6901 = vpop.f32.mrb[0].mxu0
    %v6902 = vadd.f32 0.0, %v6901
    %v6903 = vpop.f32.mrb[0].mxu0
    %v6904 = vpop.f32.mrb[0].mxu0
    %v6905 = vadd.f32 0.0, %v6904
    %v6906 = vpop.f32.mrb[0].mxu0
    %6907 = vmatprep.mubr.bf16.mxu0 0
    %6908 = vmatmul.mubr.bf16.gmra.mrb[0].mxu0 %v6705
    %v6909 = vpop.f32.mrb[0].mxu0
    %v6910 = vadd.f32 0.0, %v6909
    %v6911 = vpop.f32.mrb[0].mxu0
    %v6912 = vpop.f32.mrb[0].mxu0
    %v6913 = vadd.f32 0.0, %v6912
    %v6914 = vpop.f32.mrb[0].mxu0
    %6915 = vmatprep.mubr.bf16.mxu0 0
    %6916 = vmatmul.mubr.bf16.gmra.mrb[0].mxu0 %v6708
    %v6917 = vpop.f32.mrb[0].mxu0
    %v6918 = vadd.f32 0.0, %v6917
    %v6919 = vpop.f32.mrb[0].mxu0
    %v6920 = vpop.f32.mrb[0].mxu0
    %v6921 = vadd.f32 0.0, %v6920
    %v6922 = vpop.f32.mrb[0].mxu0
    %6923 = vmatprep.mubr.bf16.mxu0 0
    %6924 = vmatmul.mubr.bf16.gmra.mrb[0].mxu0 %v6711
    %v6925 = vpop.f32.mrb[0].mxu0
    %v6926 = vadd.f32 0.0, %v6925
    %v6927 = vpop.f32.mrb[0].mxu0
    %v6928 = vpop.f32.mrb[0].mxu0
    %v6929 = vadd.f32 0.0, %v6928
    %v6930 = vpop.f32.mrb[0].mxu0
    %6931 = vmatprep.mubr.bf16.mxu0 0
    %6932 = vmatmul.mubr.bf16.gmra.mrb[0].mxu0 %v6714
    %v6933 = vpop.f32.mrb[0].mxu0
    %v6934 = vadd.f32 0.0, %v6933
    %v6935 = vpop.f32.mrb[0].mxu0
    %v6936 = vpop.f32.mrb[0].mxu0
    %v6937 = vadd.f32 0.0, %v6936
    %v6938 = vpop.f32.mrb[0].mxu0
    %6939 = vmatprep.mubr.bf16.mxu0 0
    %6940 = vmatmul.mubr.bf16.gmra.mrb[0].mxu0 %v6717
    %v6941 = vpop.f32.mrb[0].mxu0
    %v6942 = vadd.f32 0.0, %v6941
    %v6943 = vpop.f32.mrb[0].mxu0
    %v6944 = vpop.f32.mrb[0].mxu0
    %v6945 = vadd.f32 0.0, %v6944
    %v6946 = vpop.f32.mrb[0].mxu0
    %6947 = vmatprep.mubr.bf16.mxu0 0
    %6948 = vmatmul.mubr.bf16.gmra.mrb[0].mxu0 %v6720
    %v6949 = vpop.f32.mrb[0].mxu0
    %v6950 = vadd.f32 0.0, %v6949
    %v6951 = vpop.f32.mrb[0].mxu0
    %v6952 = vpop.f32.mrb[0].mxu0
    %v6953 = vadd.f32 0.0, %v6952
    %v6954 = vpop.f32.mrb[0].mxu0
    %6955 = vmatprep.mubr.bf16.mxu0 0
    %6956 = vmatmul.mubr.bf16.gmra.mrb[0].mxu0 %v6723
    %v6957 = vpop.f32.mrb[0].mxu0
    %v6958 = vadd.f32 0.0, %v6957
    %v6959 = vpop.f32.mrb[0].mxu0
    %v6960 = vpop.f32.mrb[0].mxu0
    %v6961 = vadd.f32 0.0, %v6960
    %v6962 = vpop.f32.mrb[0].mxu0
    %6963 = vmatprep.mubr.bf16.mxu0 0
    %6964 = vmatmul.mubr.bf16.gmra.mrb[0].mxu0 %v6726
    %v6965 = vpop.f32.mrb[0].mxu0
    %v6966 = vadd.f32 0.0, %v6965
    %v6967 = vpop.f32.mrb[0].mxu0
    %v6968 = vpop.f32.mrb[0].mxu0
    %v6969 = vadd.f32 0.0, %v6968
    %v6970 = vpop.f32.mrb[0].mxu0
    %6971 = vmatprep.mubr.bf16.mxu0 0
    %6972 = vmatmul.mubr.bf16.gmra.mrb[0].mxu0 %v6729
    %v6973 = vpop.f32.mrb[0].mxu0
    %v6974 = vadd.f32 0.0, %v6973
    %v6975 = vpop.f32.mrb[0].mxu0
    %v6976 = vpop.f32.mrb[0].mxu0
    %v6977 = vadd.f32 0.0, %v6976
    %v6978 = vpop.f32.mrb[0].mxu0
    %6979 = vmatprep.mubr.bf16.mxu0 0
    %6980 = vmatmul.mubr.bf16.gmra.mrb[0].mxu0 %v6732
    %v6981 = vpop.f32.mrb[0].mxu0
    %v6982 = vadd.f32 0.0, %v6981
    %v6983 = vpop.f32.mrb[0].mxu0
    %v6984 = vpop.f32.mrb[0].mxu0
    %v6985 = vadd.f32 0.0, %v6984
    %v6986 = vpop.f32.mrb[0].mxu0
    %6987 = vmatprep.mubr.bf16.mxu0 0
    %6988 = vmatmul.mubr.bf16.gmra.mrb[0].mxu0 %v6735
    %v6989 = vpop.f32.mrb[0].mxu0
    %v6990 = vadd.f32 0.0, %v6989
    %v6991 = vpop.f32.mrb[0].mxu0
    %v6992 = vpop.f32.mrb[0].mxu0
    %v6993 = vadd.f32 0.0, %v6992
    %v6994 = vpop.f32.mrb[0].mxu0
    %6995 = vmatprep.mubr.bf16.mxu0 0
    %6996 = vmatmul.mubr.bf16.gmra.mrb[0].mxu0 %v6738
    %v6997 = vpop.f32.mrb[0].mxu0
    %v6998 = vadd.f32 0.0, %v6997
    %v6999 = vpop.f32.mrb[0].mxu0
    %v7000 = vpop.f32.mrb[0].mxu0
    %v7001 = vadd.f32 0.0, %v7000
    %v7002 = vpop.f32.mrb[0].mxu0
    %7003 = vmatprep.mubr.bf16.mxu0 0
    %7004 = vmatmul.mubr.bf16.gmra.mrb[0].mxu0 %v6741
    %v7005 = vpop.f32.mrb[0].mxu0
    %v7006 = vadd.f32 0.0, %v7005
    %v7007 = vpop.f32.mrb[0].mxu0
    %v7008 = vpop.f32.mrb[0].mxu0
    %v7009 = vadd.f32 0.0, %v7008
    %v7010 = vpop.f32.mrb[0].mxu0
    %7011 = vmatprep.mubr.bf16.mxu0 0
    %7012 = vmatmul.mubr.bf16.gmra.mrb[0].mxu0 %v6744
    %v7013 = vpop.f32.mrb[0].mxu0
    %v7014 = vadd.f32 0.0, %v7013
    %v7015 = vpop.f32.mrb[0].mxu0
    %v7016 = vpop.f32.mrb[0].mxu0
    %v7017 = vadd.f32 0.0, %v7016
    %v7018 = vpop.f32.mrb[0].mxu0
    %7019 = vmatprep.mubr.bf16.mxu0 0
    %7020 = vmatmul.mubr.bf16.gmra.mrb[0].mxu0 %v6747
    %v7021 = vpop.f32.mrb[0].mxu0
    %v7022 = vadd.f32 0.0, %v7021
    %v7023 = vpop.f32.mrb[0].mxu0
    %v7024 = vpop.f32.mrb[0].mxu0
    %v7025 = vadd.f32 0.0, %v7024
    %v7026 = vpop.f32.mrb[0].mxu0
    %7027 = vmatprep.mubr.bf16.mxu0 0
    %7028 = vmatmul.mubr.bf16.gmra.mrb[0].mxu0 %v6750
    %v7029 = vpop.f32.mrb[0].mxu0
    %v7030 = vadd.f32 0.0, %v7029
    %v7031 = vpop.f32.mrb[0].mxu0
    %v7032 = vpop.f32.mrb[0].mxu0
    %v7033 = vadd.f32 0.0, %v7032
    %v7034 = vpop.f32.mrb[0].mxu0
    %7035 = vmatprep.mubr.bf16.mxu0 0
    %7036 = vmatmul.mubr.bf16.gmra.mrb[0].mxu0 %v6753
    %v7037 = vpop.f32.mrb[0].mxu0
    %v7038 = vadd.f32 0.0, %v7037
    %v7039 = vpop.f32.mrb[0].mxu0
    %v7040 = vpop.f32.mrb[0].mxu0
    %v7041 = vadd.f32 0.0, %v7040
    %v7042 = vpop.f32.mrb[0].mxu0
    %7043 = vdwg.mxu0
    %v7044 = vadd.f32 %v6498, %v6790
    %v7045 = vadd.f32 %v6499, %v6793
    %v7046 = vadd.f32 %v6500, %v6798
    %v7047 = vadd.f32 %v6501, %v6801
    %v7048 = vadd.f32 %v6502, %v6806
    %v7049 = vadd.f32 %v6503, %v6809
    %v7050 = vadd.f32 %v6504, %v6814
    %v7051 = vadd.f32 %v6505, %v6817
    %v7052 = vadd.f32 %v6506, %v6822
    %v7053 = vadd.f32 %v6507, %v6825
    %v7054 = vadd.f32 %v6508, %v6830
    %v7055 = vadd.f32 %v6509, %v6833
    %v7056 = vadd.f32 %v6510, %v6838
    %v7057 = vadd.f32 %v6511, %v6841
    %v7058 = vadd.f32 %v6512, %v6846
    %v7059 = vadd.f32 %v6513, %v6849
    %v7060 = vadd.f32 %v6514, %v6854
    %v7061 = vadd.f32 %v6515, %v6857
    %v7062 = vadd.f32 %v6516, %v6862
    %v7063 = vadd.f32 %v6517, %v6865
    %v7064 = vadd.f32 %v6518, %v6870
    %v7065 = vadd.f32 %v6519, %v6873
    %v7066 = vadd.f32 %v6520, %v6878
    %v7067 = vadd.f32 %v6521, %v6881
    %v7068 = vadd.f32 %v6522, %v6886
    %v7069 = vadd.f32 %v6523, %v6889
    %v7070 = vadd.f32 %v6524, %v6894
    %v7071 = vadd.f32 %v6525, %v6897
    %v7072 = vadd.f32 %v6526, %v6902
    %v7073 = vadd.f32 %v6527, %v6905
    %v7074 = vadd.f32 %v6528, %v6910
    %v7075 = vadd.f32 %v6529, %v6913
    %v7076 = vadd.f32 %v6530, %v6918
    %v7077 = vadd.f32 %v6531, %v6921
    %v7078 = vadd.f32 %v6532, %v6926
    %v7079 = vadd.f32 %v6533, %v6929
    %v7080 = vadd.f32 %v6534, %v6934
    %v7081 = vadd.f32 %v6535, %v6937
    %v7082 = vadd.f32 %v6536, %v6942
    %v7083 = vadd.f32 %v6537, %v6945
    %v7084 = vadd.f32 %v6538, %v6950
    %v7085 = vadd.f32 %v6539, %v6953
    %v7086 = vadd.f32 %v6540, %v6958
    %v7087 = vadd.f32 %v6541, %v6961
    %v7088 = vadd.f32 %v6542, %v6966
    %v7089 = vadd.f32 %v6543, %v6969
    %v7090 = vadd.f32 %v6544, %v6974
    %v7091 = vadd.f32 %v6545, %v6977
    %v7092 = vadd.f32 %v6546, %v6982
    %v7093 = vadd.f32 %v6547, %v6985
    %v7094 = vadd.f32 %v6548, %v6990
    %v7095 = vadd.f32 %v6549, %v6993
    %v7096 = vadd.f32 %v6550, %v6998
    %v7097 = vadd.f32 %v6551, %v7001
    %v7098 = vadd.f32 %v6552, %v7006
    %v7099 = vadd.f32 %v6553, %v7009
    %v7100 = vadd.f32 %v6554, %v7014
    %v7101 = vadd.f32 %v6555, %v7017
    %v7102 = vadd.f32 %v6556, %v7022
    %v7103 = vadd.f32 %v6557, %v7025
    %v7104 = vadd.f32 %v6558, %v7030
    %v7105 = vadd.f32 %v6559, %v7033
    %v7106 = vadd.f32 %v6560, %v7038
    %v7107 = vadd.f32 %v6561, %v7041
    %v7108 = vpack.c.b16 %v3686, %v3686
    %v7110 = vshrl.u32 %v7108, 16
    %v7112 = vrot.slane %v7110, 7
    %v7113 = vshll.u32 %v7108, 16
    %v7115 = vor.u32 %v7112, %v7113
    %v7117 = vsel %vm3618, 0, %v7115
    %s7118 = scalar_lea.vmem %s3, 96
    %v7119 = vld [vmem:[%s7118] sm:$0xf]
    %v7120 = vld [vmem:[%s7118 + $0x4] sm:$0xf]
    %v7121 = vld [vmem:[%s7118 + $0x8] sm:$0xf]
    %v7122 = vld [vmem:[%s7118 + $0xc] sm:$0xf]
    %v7124 = vunpack.c.l.b16 %v7117
    %v7125 = vpack.c.b16 %v7124, %v5595
    %v7126 = vpack.c.b16 %v7124, %v5596
    %v7127 = vpack.c.b16 %v7124, %v5597
    %v7128 = vpack.c.b16 %v7124, %v5598
    %v7129 = vpack.c.b16 %v7124, %v5599
    %v7130 = vpack.c.b16 %v7124, %v5600
    %v7131 = vpack.c.b16 %v7124, %v5601
    %v7132 = vpack.c.b16 %v7124, %v5602
    %v7137 = vunpack.c.l.b16 %v7119
    %v7138 = vunpack.c.l.b16 %v7120
    %v7139 = vunpack.c.l.b16 %v7121
    %v7140 = vunpack.c.l.b16 %v7122
    %v7141 = vpack.c.b16 %v7138, %v7137
    %v7142 = vpack.c.b16 %v7140, %v7139
    %v7146 = vsel %vm2392, %v7125, 0
    %v7149 = vsel %vm2392, %v7126, 0
    %v7152 = vsel %vm2392, %v7127, 0
    %v7155 = vsel %vm2392, %v7128, 0
    %v7158 = vsel %vm2392, %v7129, 0
    %v7161 = vsel %vm2392, %v7130, 0
    %v7164 = vsel %vm2392, %v7131, 0
    %v7167 = vsel %vm2392, %v7132, 0
    %7169 = vmatprep.subr.bf16.mxu0 0
    %7170 = vmatpush1.bf16.msra.mxu0 %v7141
    %7171 = vmatprep.subr.bf16.mxu0 0
    %7172 = vmatpush1.bf16.msra.mxu0 %v7142
    %7173 = vmatprep.subr.bf16.mxu0 0
    %7174 = vmatpush1.bf16.msra.mxu0 0
    %7175 = vmatprep.subr.bf16.mxu0 0
    %7176 = vmatpush1.bf16.msra.mxu0 0
    %7177 = vmatprep.subr.bf16.mxu0 0
    %7178 = vmatpush1.bf16.msra.mxu0 0
    %7179 = vmatprep.subr.bf16.mxu0 0
    %7180 = vmatpush1.bf16.msra.mxu0 0
    %7181 = vmatprep.subr.bf16.mxu0 0
    %7182 = vmatpush1.bf16.msra.mxu0 0
    %7183 = vmatprep.subr.bf16.mxu0 0
    %7184 = vmatpush1.bf16.msra.mxu0 0
    %7185 = vmatprep.subr.bf16.mxu0 0
    %7186 = vmatpush1.bf16.msra.mxu0 0
    %7187 = vmatprep.subr.bf16.mxu0 0
    %7188 = vmatpush1.bf16.msra.mxu0 0
    %7189 = vmatprep.subr.bf16.mxu0 0
    %7190 = vmatpush1.bf16.msra.mxu0 0
    %7191 = vmatprep.subr.bf16.mxu0 0
    %7192 = vmatpush1.bf16.msra.mxu0 0
    %7193 = vmatprep.subr.bf16.mxu0 0
    %7194 = vmatpush1.bf16.msra.mxu0 0
    %7195 = vmatprep.subr.bf16.mxu0 0
    %7196 = vmatpush1.bf16.msra.mxu0 0
    %7197 = vmatprep.subr.bf16.mxu0 0
    %7198 = vmatpush1.bf16.msra.mxu0 0
    %7199 = vmatprep.subr.bf16.mxu0 0
    %7200 = vmatpush1.bf16.msra.mxu0 0
    %7201 = vmatprep.mubr.bf16.mxu0 0
    %7202 = vmatmul.mubr.bf16.gmra.mrb[0].mxu0 %v4278
    %v7203 = vpop.f32.mrb[0].mxu0
    %v7204 = vadd.f32 0.0, %v7203
    %v7205 = vpop.f32.mrb[0].mxu0
    %v7206 = vpop.f32.mrb[0].mxu0
    %v7207 = vadd.f32 0.0, %v7206
    %v7208 = vpop.f32.mrb[0].mxu0
    %7209 = vmatprep.mubr.bf16.mxu0 0
    %7210 = vmatmul.mubr.bf16.gmra.mrb[0].mxu0 %v4281
    %v7211 = vpop.f32.mrb[0].mxu0
    %v7212 = vadd.f32 0.0, %v7211
    %v7213 = vpop.f32.mrb[0].mxu0
    %v7214 = vpop.f32.mrb[0].mxu0
    %v7215 = vadd.f32 0.0, %v7214
    %v7216 = vpop.f32.mrb[0].mxu0
    %7217 = vmatprep.mubr.bf16.mxu0 0
    %7218 = vmatmul.mubr.bf16.gmra.mrb[0].mxu0 %v4284
    %v7219 = vpop.f32.mrb[0].mxu0
    %v7220 = vadd.f32 0.0, %v7219
    %v7221 = vpop.f32.mrb[0].mxu0
    %v7222 = vpop.f32.mrb[0].mxu0
    %v7223 = vadd.f32 0.0, %v7222
    %v7224 = vpop.f32.mrb[0].mxu0
    %7225 = vmatprep.mubr.bf16.mxu0 0
    %7226 = vmatmul.mubr.bf16.gmra.mrb[0].mxu0 %v7146
    %v7227 = vpop.f32.mrb[0].mxu0
    %v7228 = vadd.f32 0.0, %v7227
    %v7229 = vpop.f32.mrb[0].mxu0
    %v7230 = vpop.f32.mrb[0].mxu0
    %v7231 = vadd.f32 0.0, %v7230
    %v7232 = vpop.f32.mrb[0].mxu0
    %7233 = vmatprep.mubr.bf16.mxu0 0
    %7234 = vmatmul.mubr.bf16.gmra.mrb[0].mxu0 %v4290
    %v7235 = vpop.f32.mrb[0].mxu0
    %v7236 = vadd.f32 0.0, %v7235
    %v7237 = vpop.f32.mrb[0].mxu0
    %v7238 = vpop.f32.mrb[0].mxu0
    %v7239 = vadd.f32 0.0, %v7238
    %v7240 = vpop.f32.mrb[0].mxu0
    %7241 = vmatprep.mubr.bf16.mxu0 0
    %7242 = vmatmul.mubr.bf16.gmra.mrb[0].mxu0 %v4293
    %v7243 = vpop.f32.mrb[0].mxu0
    %v7244 = vadd.f32 0.0, %v7243
    %v7245 = vpop.f32.mrb[0].mxu0
    %v7246 = vpop.f32.mrb[0].mxu0
    %v7247 = vadd.f32 0.0, %v7246
    %v7248 = vpop.f32.mrb[0].mxu0
    %7249 = vmatprep.mubr.bf16.mxu0 0
    %7250 = vmatmul.mubr.bf16.gmra.mrb[0].mxu0 %v4296
    %v7251 = vpop.f32.mrb[0].mxu0
    %v7252 = vadd.f32 0.0, %v7251
    %v7253 = vpop.f32.mrb[0].mxu0
    %v7254 = vpop.f32.mrb[0].mxu0
    %v7255 = vadd.f32 0.0, %v7254
    %v7256 = vpop.f32.mrb[0].mxu0
    %7257 = vmatprep.mubr.bf16.mxu0 0
    %7258 = vmatmul.mubr.bf16.gmra.mrb[0].mxu0 %v7149
    %v7259 = vpop.f32.mrb[0].mxu0
    %v7260 = vadd.f32 0.0, %v7259
    %v7261 = vpop.f32.mrb[0].mxu0
    %v7262 = vpop.f32.mrb[0].mxu0
    %v7263 = vadd.f32 0.0, %v7262
    %v7264 = vpop.f32.mrb[0].mxu0
    %7265 = vmatprep.mubr.bf16.mxu0 0
    %7266 = vmatmul.mubr.bf16.gmra.mrb[0].mxu0 %v4302
    %v7267 = vpop.f32.mrb[0].mxu0
    %v7268 = vadd.f32 0.0, %v7267
    %v7269 = vpop.f32.mrb[0].mxu0
    %v7270 = vpop.f32.mrb[0].mxu0
    %v7271 = vadd.f32 0.0, %v7270
    %v7272 = vpop.f32.mrb[0].mxu0
    %7273 = vmatprep.mubr.bf16.mxu0 0
    %7274 = vmatmul.mubr.bf16.gmra.mrb[0].mxu0 %v4305
    %v7275 = vpop.f32.mrb[0].mxu0
    %v7276 = vadd.f32 0.0, %v7275
    %v7277 = vpop.f32.mrb[0].mxu0
    %v7278 = vpop.f32.mrb[0].mxu0
    %v7279 = vadd.f32 0.0, %v7278
    %v7280 = vpop.f32.mrb[0].mxu0
    %7281 = vmatprep.mubr.bf16.mxu0 0
    %7282 = vmatmul.mubr.bf16.gmra.mrb[0].mxu0 %v4308
    %v7283 = vpop.f32.mrb[0].mxu0
    %v7284 = vadd.f32 0.0, %v7283
    %v7285 = vpop.f32.mrb[0].mxu0
    %v7286 = vpop.f32.mrb[0].mxu0
    %v7287 = vadd.f32 0.0, %v7286
    %v7288 = vpop.f32.mrb[0].mxu0
    %7289 = vmatprep.mubr.bf16.mxu0 0
    %7290 = vmatmul.mubr.bf16.gmra.mrb[0].mxu0 %v7152
    %v7291 = vpop.f32.mrb[0].mxu0
    %v7292 = vadd.f32 0.0, %v7291
    %v7293 = vpop.f32.mrb[0].mxu0
    %v7294 = vpop.f32.mrb[0].mxu0
    %v7295 = vadd.f32 0.0, %v7294
    %v7296 = vpop.f32.mrb[0].mxu0
    %7297 = vmatprep.mubr.bf16.mxu0 0
    %7298 = vmatmul.mubr.bf16.gmra.mrb[0].mxu0 %v4314
    %v7299 = vpop.f32.mrb[0].mxu0
    %v7300 = vadd.f32 0.0, %v7299
    %v7301 = vpop.f32.mrb[0].mxu0
    %v7302 = vpop.f32.mrb[0].mxu0
    %v7303 = vadd.f32 0.0, %v7302
    %v7304 = vpop.f32.mrb[0].mxu0
    %7305 = vmatprep.mubr.bf16.mxu0 0
    %7306 = vmatmul.mubr.bf16.gmra.mrb[0].mxu0 %v4317
    %v7307 = vpop.f32.mrb[0].mxu0
    %v7308 = vadd.f32 0.0, %v7307
    %v7309 = vpop.f32.mrb[0].mxu0
    %v7310 = vpop.f32.mrb[0].mxu0
    %v7311 = vadd.f32 0.0, %v7310
    %v7312 = vpop.f32.mrb[0].mxu0
    %7313 = vmatprep.mubr.bf16.mxu0 0
    %7314 = vmatmul.mubr.bf16.gmra.mrb[0].mxu0 %v4320
    %v7315 = vpop.f32.mrb[0].mxu0
    %v7316 = vadd.f32 0.0, %v7315
    %v7317 = vpop.f32.mrb[0].mxu0
    %v7318 = vpop.f32.mrb[0].mxu0
    %v7319 = vadd.f32 0.0, %v7318
    %v7320 = vpop.f32.mrb[0].mxu0
    %7321 = vmatprep.mubr.bf16.mxu0 0
    %7322 = vmatmul.mubr.bf16.gmra.mrb[0].mxu0 %v7155
    %v7323 = vpop.f32.mrb[0].mxu0
    %v7324 = vadd.f32 0.0, %v7323
    %v7325 = vpop.f32.mrb[0].mxu0
    %v7326 = vpop.f32.mrb[0].mxu0
    %v7327 = vadd.f32 0.0, %v7326
    %v7328 = vpop.f32.mrb[0].mxu0
    %7329 = vmatprep.mubr.bf16.mxu0 0
    %7330 = vmatmul.mubr.bf16.gmra.mrb[0].mxu0 %v4326
    %v7331 = vpop.f32.mrb[0].mxu0
    %v7332 = vadd.f32 0.0, %v7331
    %v7333 = vpop.f32.mrb[0].mxu0
    %v7334 = vpop.f32.mrb[0].mxu0
    %v7335 = vadd.f32 0.0, %v7334
    %v7336 = vpop.f32.mrb[0].mxu0
    %7337 = vmatprep.mubr.bf16.mxu0 0
    %7338 = vmatmul.mubr.bf16.gmra.mrb[0].mxu0 %v4329
    %v7339 = vpop.f32.mrb[0].mxu0
    %v7340 = vadd.f32 0.0, %v7339
    %v7341 = vpop.f32.mrb[0].mxu0
    %v7342 = vpop.f32.mrb[0].mxu0
    %v7343 = vadd.f32 0.0, %v7342
    %v7344 = vpop.f32.mrb[0].mxu0
    %7345 = vmatprep.mubr.bf16.mxu0 0
    %7346 = vmatmul.mubr.bf16.gmra.mrb[0].mxu0 %v4332
    %v7347 = vpop.f32.mrb[0].mxu0
    %v7348 = vadd.f32 0.0, %v7347
    %v7349 = vpop.f32.mrb[0].mxu0
    %v7350 = vpop.f32.mrb[0].mxu0
    %v7351 = vadd.f32 0.0, %v7350
    %v7352 = vpop.f32.mrb[0].mxu0
    %7353 = vmatprep.mubr.bf16.mxu0 0
    %7354 = vmatmul.mubr.bf16.gmra.mrb[0].mxu0 %v7158
    %v7355 = vpop.f32.mrb[0].mxu0
    %v7356 = vadd.f32 0.0, %v7355
    %v7357 = vpop.f32.mrb[0].mxu0
    %v7358 = vpop.f32.mrb[0].mxu0
    %v7359 = vadd.f32 0.0, %v7358
    %v7360 = vpop.f32.mrb[0].mxu0
    %7361 = vmatprep.mubr.bf16.mxu0 0
    %7362 = vmatmul.mubr.bf16.gmra.mrb[0].mxu0 %v4338
    %v7363 = vpop.f32.mrb[0].mxu0
    %v7364 = vadd.f32 0.0, %v7363
    %v7365 = vpop.f32.mrb[0].mxu0
    %v7366 = vpop.f32.mrb[0].mxu0
    %v7367 = vadd.f32 0.0, %v7366
    %v7368 = vpop.f32.mrb[0].mxu0
    %7369 = vmatprep.mubr.bf16.mxu0 0
    %7370 = vmatmul.mubr.bf16.gmra.mrb[0].mxu0 %v4341
    %v7371 = vpop.f32.mrb[0].mxu0
    %v7372 = vadd.f32 0.0, %v7371
    %v7373 = vpop.f32.mrb[0].mxu0
    %v7374 = vpop.f32.mrb[0].mxu0
    %v7375 = vadd.f32 0.0, %v7374
    %v7376 = vpop.f32.mrb[0].mxu0
    %7377 = vmatprep.mubr.bf16.mxu0 0
    %7378 = vmatmul.mubr.bf16.gmra.mrb[0].mxu0 %v4344
    %v7379 = vpop.f32.mrb[0].mxu0
    %v7380 = vadd.f32 0.0, %v7379
    %v7381 = vpop.f32.mrb[0].mxu0
    %v7382 = vpop.f32.mrb[0].mxu0
    %v7383 = vadd.f32 0.0, %v7382
    %v7384 = vpop.f32.mrb[0].mxu0
    %7385 = vmatprep.mubr.bf16.mxu0 0
    %7386 = vmatmul.mubr.bf16.gmra.mrb[0].mxu0 %v7161
    %v7387 = vpop.f32.mrb[0].mxu0
    %v7388 = vadd.f32 0.0, %v7387
    %v7389 = vpop.f32.mrb[0].mxu0
    %v7390 = vpop.f32.mrb[0].mxu0
    %v7391 = vadd.f32 0.0, %v7390
    %v7392 = vpop.f32.mrb[0].mxu0
    %7393 = vmatprep.mubr.bf16.mxu0 0
    %7394 = vmatmul.mubr.bf16.gmra.mrb[0].mxu0 %v4350
    %v7395 = vpop.f32.mrb[0].mxu0
    %v7396 = vadd.f32 0.0, %v7395
    %v7397 = vpop.f32.mrb[0].mxu0
    %v7398 = vpop.f32.mrb[0].mxu0
    %v7399 = vadd.f32 0.0, %v7398
    %v7400 = vpop.f32.mrb[0].mxu0
    %7401 = vmatprep.mubr.bf16.mxu0 0
    %7402 = vmatmul.mubr.bf16.gmra.mrb[0].mxu0 %v4353
    %v7403 = vpop.f32.mrb[0].mxu0
    %v7404 = vadd.f32 0.0, %v7403
    %v7405 = vpop.f32.mrb[0].mxu0
    %v7406 = vpop.f32.mrb[0].mxu0
    %v7407 = vadd.f32 0.0, %v7406
    %v7408 = vpop.f32.mrb[0].mxu0
    %7409 = vmatprep.mubr.bf16.mxu0 0
    %7410 = vmatmul.mubr.bf16.gmra.mrb[0].mxu0 %v4356
    %v7411 = vpop.f32.mrb[0].mxu0
    %v7412 = vadd.f32 0.0, %v7411
    %v7413 = vpop.f32.mrb[0].mxu0
    %v7414 = vpop.f32.mrb[0].mxu0
    %v7415 = vadd.f32 0.0, %v7414
    %v7416 = vpop.f32.mrb[0].mxu0
    %7417 = vmatprep.mubr.bf16.mxu0 0
    %7418 = vmatmul.mubr.bf16.gmra.mrb[0].mxu0 %v7164
    %v7419 = vpop.f32.mrb[0].mxu0
    %v7420 = vadd.f32 0.0, %v7419
    %v7421 = vpop.f32.mrb[0].mxu0
    %v7422 = vpop.f32.mrb[0].mxu0
    %v7423 = vadd.f32 0.0, %v7422
    %v7424 = vpop.f32.mrb[0].mxu0
    %7425 = vmatprep.mubr.bf16.mxu0 0
    %7426 = vmatmul.mubr.bf16.gmra.mrb[0].mxu0 %v4362
    %v7427 = vpop.f32.mrb[0].mxu0
    %v7428 = vadd.f32 0.0, %v7427
    %v7429 = vpop.f32.mrb[0].mxu0
    %v7430 = vpop.f32.mrb[0].mxu0
    %v7431 = vadd.f32 0.0, %v7430
    %v7432 = vpop.f32.mrb[0].mxu0
    %7433 = vmatprep.mubr.bf16.mxu0 0
    %7434 = vmatmul.mubr.bf16.gmra.mrb[0].mxu0 %v4365
    %v7435 = vpop.f32.mrb[0].mxu0
    %v7436 = vadd.f32 0.0, %v7435
    %v7437 = vpop.f32.mrb[0].mxu0
    %v7438 = vpop.f32.mrb[0].mxu0
    %v7439 = vadd.f32 0.0, %v7438
    %v7440 = vpop.f32.mrb[0].mxu0
    %7441 = vmatprep.mubr.bf16.mxu0 0
    %7442 = vmatmul.mubr.bf16.gmra.mrb[0].mxu0 %v4368
    %v7443 = vpop.f32.mrb[0].mxu0
    %v7444 = vadd.f32 0.0, %v7443
    %v7445 = vpop.f32.mrb[0].mxu0
    %v7446 = vpop.f32.mrb[0].mxu0
    %v7447 = vadd.f32 0.0, %v7446
    %v7448 = vpop.f32.mrb[0].mxu0
    %7449 = vmatprep.mubr.bf16.mxu0 0
    %7450 = vmatmul.mubr.bf16.gmra.mrb[0].mxu0 %v7167
    %v7451 = vpop.f32.mrb[0].mxu0
    %v7452 = vadd.f32 0.0, %v7451
    %v7453 = vpop.f32.mrb[0].mxu0
    %v7454 = vpop.f32.mrb[0].mxu0
    %v7455 = vadd.f32 0.0, %v7454
    %v7456 = vpop.f32.mrb[0].mxu0
    %7457 = vdwg.mxu0
    %v7458 = vadd.f32 %v7044, %v7204
    %v7459 = vadd.f32 %v7045, %v7207
    %v7460 = vadd.f32 %v7046, %v7212
    %v7461 = vadd.f32 %v7047, %v7215
    %v7462 = vadd.f32 %v7048, %v7220
    %v7463 = vadd.f32 %v7049, %v7223
    %v7464 = vadd.f32 %v7050, %v7228
    %v7465 = vadd.f32 %v7051, %v7231
    %v7466 = vadd.f32 %v7052, %v7236
    %v7467 = vadd.f32 %v7053, %v7239
    %v7468 = vadd.f32 %v7054, %v7244
    %v7469 = vadd.f32 %v7055, %v7247
    %v7470 = vadd.f32 %v7056, %v7252
    %v7471 = vadd.f32 %v7057, %v7255
    %v7472 = vadd.f32 %v7058, %v7260
    %v7473 = vadd.f32 %v7059, %v7263
    %v7474 = vadd.f32 %v7060, %v7268
    %v7475 = vadd.f32 %v7061, %v7271
    %v7476 = vadd.f32 %v7062, %v7276
    %v7477 = vadd.f32 %v7063, %v7279
    %v7478 = vadd.f32 %v7064, %v7284
    %v7479 = vadd.f32 %v7065, %v7287
    %v7480 = vadd.f32 %v7066, %v7292
    %v7481 = vadd.f32 %v7067, %v7295
    %v7482 = vadd.f32 %v7068, %v7300
    %v7483 = vadd.f32 %v7069, %v7303
    %v7484 = vadd.f32 %v7070, %v7308
    %v7485 = vadd.f32 %v7071, %v7311
    %v7486 = vadd.f32 %v7072, %v7316
    %v7487 = vadd.f32 %v7073, %v7319
    %v7488 = vadd.f32 %v7074, %v7324
    %v7489 = vadd.f32 %v7075, %v7327
    %v7490 = vadd.f32 %v7076, %v7332
    %v7491 = vadd.f32 %v7077, %v7335
    %v7492 = vadd.f32 %v7078, %v7340
    %v7493 = vadd.f32 %v7079, %v7343
    %v7494 = vadd.f32 %v7080, %v7348
    %v7495 = vadd.f32 %v7081, %v7351
    %v7496 = vadd.f32 %v7082, %v7356
    %v7497 = vadd.f32 %v7083, %v7359
    %v7498 = vadd.f32 %v7084, %v7364
    %v7499 = vadd.f32 %v7085, %v7367
    %v7500 = vadd.f32 %v7086, %v7372
    %v7501 = vadd.f32 %v7087, %v7375
    %v7502 = vadd.f32 %v7088, %v7380
    %v7503 = vadd.f32 %v7089, %v7383
    %v7504 = vadd.f32 %v7090, %v7388
    %v7505 = vadd.f32 %v7091, %v7391
    %v7506 = vadd.f32 %v7092, %v7396
    %v7507 = vadd.f32 %v7093, %v7399
    %v7508 = vadd.f32 %v7094, %v7404
    %v7509 = vadd.f32 %v7095, %v7407
    %v7510 = vadd.f32 %v7096, %v7412
    %v7511 = vadd.f32 %v7097, %v7415
    %v7512 = vadd.f32 %v7098, %v7420
    %v7513 = vadd.f32 %v7099, %v7423
    %v7514 = vadd.f32 %v7100, %v7428
    %v7515 = vadd.f32 %v7101, %v7431
    %v7516 = vadd.f32 %v7102, %v7436
    %v7517 = vadd.f32 %v7103, %v7439
    %v7518 = vadd.f32 %v7104, %v7444
    %v7519 = vadd.f32 %v7105, %v7447
    %v7520 = vadd.f32 %v7106, %v7452
    %v7521 = vadd.f32 %v7107, %v7455
    %s7522 = scalar_lea.vmem %s3, 112
    %v7523 = vld [vmem:[%s7522] sm:$0xf]
    %v7524 = vld [vmem:[%s7522 + $0x4] sm:$0xf]
    %v7525 = vld [vmem:[%s7522 + $0x8] sm:$0xf]
    %v7526 = vld [vmem:[%s7522 + $0xc] sm:$0xf]
    %v7527 = vpack.c.b16 %v3686, %v3047
    %v7528 = vpack.c.b16 %v3686, %v3055
    %v7529 = vpack.c.b16 %v3686, %v3063
    %v7530 = vpack.c.b16 %v3686, %v3071
    %v7531 = vpack.c.b16 %v3686, %v3079
    %v7532 = vpack.c.b16 %v3686, %v3087
    %v7533 = vpack.c.b16 %v3686, %v3095
    %v7534 = vpack.c.b16 %v3686, %v3103
    %v7539 = vunpack.c.l.b16 %v7523
    %v7540 = vunpack.c.l.b16 %v7524
    %v7541 = vunpack.c.l.b16 %v7525
    %v7542 = vunpack.c.l.b16 %v7526
    %v7543 = vpack.c.b16 %v7540, %v7539
    %v7544 = vpack.c.b16 %v7542, %v7541
    %v7548 = vsel %vm2392, %v7527, 0
    %v7551 = vsel %vm2392, %v7528, 0
    %v7554 = vsel %vm2392, %v7529, 0
    %v7557 = vsel %vm2392, %v7530, 0
    %v7560 = vsel %vm2392, %v7531, 0
    %v7563 = vsel %vm2392, %v7532, 0
    %v7566 = vsel %vm2392, %v7533, 0
    %v7569 = vsel %vm2392, %v7534, 0
    %7571 = vmatprep.subr.bf16.mxu0 0
    %7572 = vmatpush1.bf16.msra.mxu0 %v7543
    %7573 = vmatprep.subr.bf16.mxu0 0
    %7574 = vmatpush1.bf16.msra.mxu0 %v7544
    %7575 = vmatprep.subr.bf16.mxu0 0
    %7576 = vmatpush1.bf16.msra.mxu0 0
    %7577 = vmatprep.subr.bf16.mxu0 0
    %7578 = vmatpush1.bf16.msra.mxu0 0
    %7579 = vmatprep.subr.bf16.mxu0 0
    %7580 = vmatpush1.bf16.msra.mxu0 0
    %7581 = vmatprep.subr.bf16.mxu0 0
    %7582 = vmatpush1.bf16.msra.mxu0 0
    %7583 = vmatprep.subr.bf16.mxu0 0
    %7584 = vmatpush1.bf16.msra.mxu0 0
    %7585 = vmatprep.subr.bf16.mxu0 0
    %7586 = vmatpush1.bf16.msra.mxu0 0
    %7587 = vmatprep.subr.bf16.mxu0 0
    %7588 = vmatpush1.bf16.msra.mxu0 0
    %7589 = vmatprep.subr.bf16.mxu0 0
    %7590 = vmatpush1.bf16.msra.mxu0 0
    %7591 = vmatprep.subr.bf16.mxu0 0
    %7592 = vmatpush1.bf16.msra.mxu0 0
    %7593 = vmatprep.subr.bf16.mxu0 0
    %7594 = vmatpush1.bf16.msra.mxu0 0
    %7595 = vmatprep.subr.bf16.mxu0 0
    %7596 = vmatpush1.bf16.msra.mxu0 0
    %7597 = vmatprep.subr.bf16.mxu0 0
    %7598 = vmatpush1.bf16.msra.mxu0 0
    %7599 = vmatprep.subr.bf16.mxu0 0
    %7600 = vmatpush1.bf16.msra.mxu0 0
    %7601 = vmatprep.subr.bf16.mxu0 0
    %7602 = vmatpush1.bf16.msra.mxu0 0
    %7603 = vmatprep.mubr.bf16.mxu0 0
    %7604 = vmatmul.mubr.bf16.gmra.mrb[0].mxu0 %v3735
    %v7605 = vpop.f32.mrb[0].mxu0
    %v7606 = vadd.f32 0.0, %v7605
    %v7607 = vpop.f32.mrb[0].mxu0
    %v7608 = vpop.f32.mrb[0].mxu0
    %v7609 = vadd.f32 0.0, %v7608
    %v7610 = vpop.f32.mrb[0].mxu0
    %7611 = vmatprep.mubr.bf16.mxu0 0
    %7612 = vmatmul.mubr.bf16.gmra.mrb[0].mxu0 %v3738
    %v7613 = vpop.f32.mrb[0].mxu0
    %v7614 = vadd.f32 0.0, %v7613
    %v7615 = vpop.f32.mrb[0].mxu0
    %v7616 = vpop.f32.mrb[0].mxu0
    %v7617 = vadd.f32 0.0, %v7616
    %v7618 = vpop.f32.mrb[0].mxu0
    %7619 = vmatprep.mubr.bf16.mxu0 0
    %7620 = vmatmul.mubr.bf16.gmra.mrb[0].mxu0 %v3741
    %v7621 = vpop.f32.mrb[0].mxu0
    %v7622 = vadd.f32 0.0, %v7621
    %v7623 = vpop.f32.mrb[0].mxu0
    %v7624 = vpop.f32.mrb[0].mxu0
    %v7625 = vadd.f32 0.0, %v7624
    %v7626 = vpop.f32.mrb[0].mxu0
    %7627 = vmatprep.mubr.bf16.mxu0 0
    %7628 = vmatmul.mubr.bf16.gmra.mrb[0].mxu0 %v7548
    %v7629 = vpop.f32.mrb[0].mxu0
    %v7630 = vadd.f32 0.0, %v7629
    %v7631 = vpop.f32.mrb[0].mxu0
    %v7632 = vpop.f32.mrb[0].mxu0
    %v7633 = vadd.f32 0.0, %v7632
    %v7634 = vpop.f32.mrb[0].mxu0
    %7635 = vmatprep.mubr.bf16.mxu0 0
    %7636 = vmatmul.mubr.bf16.gmra.mrb[0].mxu0 %v3747
    %v7637 = vpop.f32.mrb[0].mxu0
    %v7638 = vadd.f32 0.0, %v7637
    %v7639 = vpop.f32.mrb[0].mxu0
    %v7640 = vpop.f32.mrb[0].mxu0
    %v7641 = vadd.f32 0.0, %v7640
    %v7642 = vpop.f32.mrb[0].mxu0
    %7643 = vmatprep.mubr.bf16.mxu0 0
    %7644 = vmatmul.mubr.bf16.gmra.mrb[0].mxu0 %v3750
    %v7645 = vpop.f32.mrb[0].mxu0
    %v7646 = vadd.f32 0.0, %v7645
    %v7647 = vpop.f32.mrb[0].mxu0
    %v7648 = vpop.f32.mrb[0].mxu0
    %v7649 = vadd.f32 0.0, %v7648
    %v7650 = vpop.f32.mrb[0].mxu0
    %7651 = vmatprep.mubr.bf16.mxu0 0
    %7652 = vmatmul.mubr.bf16.gmra.mrb[0].mxu0 %v3753
    %v7653 = vpop.f32.mrb[0].mxu0
    %v7654 = vadd.f32 0.0, %v7653
    %v7655 = vpop.f32.mrb[0].mxu0
    %v7656 = vpop.f32.mrb[0].mxu0
    %v7657 = vadd.f32 0.0, %v7656
    %v7658 = vpop.f32.mrb[0].mxu0
    %7659 = vmatprep.mubr.bf16.mxu0 0
    %7660 = vmatmul.mubr.bf16.gmra.mrb[0].mxu0 %v7551
    %v7661 = vpop.f32.mrb[0].mxu0
    %v7662 = vadd.f32 0.0, %v7661
    %v7663 = vpop.f32.mrb[0].mxu0
    %v7664 = vpop.f32.mrb[0].mxu0
    %v7665 = vadd.f32 0.0, %v7664
    %v7666 = vpop.f32.mrb[0].mxu0
    %7667 = vmatprep.mubr.bf16.mxu0 0
    %7668 = vmatmul.mubr.bf16.gmra.mrb[0].mxu0 %v3759
    %v7669 = vpop.f32.mrb[0].mxu0
    %v7670 = vadd.f32 0.0, %v7669
    %v7671 = vpop.f32.mrb[0].mxu0
    %v7672 = vpop.f32.mrb[0].mxu0
    %v7673 = vadd.f32 0.0, %v7672
    %v7674 = vpop.f32.mrb[0].mxu0
    %7675 = vmatprep.mubr.bf16.mxu0 0
    %7676 = vmatmul.mubr.bf16.gmra.mrb[0].mxu0 %v3762
    %v7677 = vpop.f32.mrb[0].mxu0
    %v7678 = vadd.f32 0.0, %v7677
    %v7679 = vpop.f32.mrb[0].mxu0
    %v7680 = vpop.f32.mrb[0].mxu0
    %v7681 = vadd.f32 0.0, %v7680
    %v7682 = vpop.f32.mrb[0].mxu0
    %7683 = vmatprep.mubr.bf16.mxu0 0
    %7684 = vmatmul.mubr.bf16.gmra.mrb[0].mxu0 %v3765
    %v7685 = vpop.f32.mrb[0].mxu0
    %v7686 = vadd.f32 0.0, %v7685
    %v7687 = vpop.f32.mrb[0].mxu0
    %v7688 = vpop.f32.mrb[0].mxu0
    %v7689 = vadd.f32 0.0, %v7688
    %v7690 = vpop.f32.mrb[0].mxu0
    %7691 = vmatprep.mubr.bf16.mxu0 0
    %7692 = vmatmul.mubr.bf16.gmra.mrb[0].mxu0 %v7554
    %v7693 = vpop.f32.mrb[0].mxu0
    %v7694 = vadd.f32 0.0, %v7693
    %v7695 = vpop.f32.mrb[0].mxu0
    %v7696 = vpop.f32.mrb[0].mxu0
    %v7697 = vadd.f32 0.0, %v7696
    %v7698 = vpop.f32.mrb[0].mxu0
    %7699 = vmatprep.mubr.bf16.mxu0 0
    %7700 = vmatmul.mubr.bf16.gmra.mrb[0].mxu0 %v3771
    %v7701 = vpop.f32.mrb[0].mxu0
    %v7702 = vadd.f32 0.0, %v7701
    %v7703 = vpop.f32.mrb[0].mxu0
    %v7704 = vpop.f32.mrb[0].mxu0
    %v7705 = vadd.f32 0.0, %v7704
    %v7706 = vpop.f32.mrb[0].mxu0
    %7707 = vmatprep.mubr.bf16.mxu0 0
    %7708 = vmatmul.mubr.bf16.gmra.mrb[0].mxu0 %v3774
    %v7709 = vpop.f32.mrb[0].mxu0
    %v7710 = vadd.f32 0.0, %v7709
    %v7711 = vpop.f32.mrb[0].mxu0
    %v7712 = vpop.f32.mrb[0].mxu0
    %v7713 = vadd.f32 0.0, %v7712
    %v7714 = vpop.f32.mrb[0].mxu0
    %7715 = vmatprep.mubr.bf16.mxu0 0
    %7716 = vmatmul.mubr.bf16.gmra.mrb[0].mxu0 %v3777
    %v7717 = vpop.f32.mrb[0].mxu0
    %v7718 = vadd.f32 0.0, %v7717
    %v7719 = vpop.f32.mrb[0].mxu0
    %v7720 = vpop.f32.mrb[0].mxu0
    %v7721 = vadd.f32 0.0, %v7720
    %v7722 = vpop.f32.mrb[0].mxu0
    %7723 = vmatprep.mubr.bf16.mxu0 0
    %7724 = vmatmul.mubr.bf16.gmra.mrb[0].mxu0 %v7557
    %v7725 = vpop.f32.mrb[0].mxu0
    %v7726 = vadd.f32 0.0, %v7725
    %v7727 = vpop.f32.mrb[0].mxu0
    %v7728 = vpop.f32.mrb[0].mxu0
    %v7729 = vadd.f32 0.0, %v7728
    %v7730 = vpop.f32.mrb[0].mxu0
    %7731 = vmatprep.mubr.bf16.mxu0 0
    %7732 = vmatmul.mubr.bf16.gmra.mrb[0].mxu0 %v3783
    %v7733 = vpop.f32.mrb[0].mxu0
    %v7734 = vadd.f32 0.0, %v7733
    %v7735 = vpop.f32.mrb[0].mxu0
    %v7736 = vpop.f32.mrb[0].mxu0
    %v7737 = vadd.f32 0.0, %v7736
    %v7738 = vpop.f32.mrb[0].mxu0
    %7739 = vmatprep.mubr.bf16.mxu0 0
    %7740 = vmatmul.mubr.bf16.gmra.mrb[0].mxu0 %v3786
    %v7741 = vpop.f32.mrb[0].mxu0
    %v7742 = vadd.f32 0.0, %v7741
    %v7743 = vpop.f32.mrb[0].mxu0
    %v7744 = vpop.f32.mrb[0].mxu0
    %v7745 = vadd.f32 0.0, %v7744
    %v7746 = vpop.f32.mrb[0].mxu0
    %7747 = vmatprep.mubr.bf16.mxu0 0
    %7748 = vmatmul.mubr.bf16.gmra.mrb[0].mxu0 %v3789
    %v7749 = vpop.f32.mrb[0].mxu0
    %v7750 = vadd.f32 0.0, %v7749
    %v7751 = vpop.f32.mrb[0].mxu0
    %v7752 = vpop.f32.mrb[0].mxu0
    %v7753 = vadd.f32 0.0, %v7752
    %v7754 = vpop.f32.mrb[0].mxu0
    %7755 = vmatprep.mubr.bf16.mxu0 0
    %7756 = vmatmul.mubr.bf16.gmra.mrb[0].mxu0 %v7560
    %v7757 = vpop.f32.mrb[0].mxu0
    %v7758 = vadd.f32 0.0, %v7757
    %v7759 = vpop.f32.mrb[0].mxu0
    %v7760 = vpop.f32.mrb[0].mxu0
    %v7761 = vadd.f32 0.0, %v7760
    %v7762 = vpop.f32.mrb[0].mxu0
    %7763 = vmatprep.mubr.bf16.mxu0 0
    %7764 = vmatmul.mubr.bf16.gmra.mrb[0].mxu0 %v3795
    %v7765 = vpop.f32.mrb[0].mxu0
    %v7766 = vadd.f32 0.0, %v7765
    %v7767 = vpop.f32.mrb[0].mxu0
    %v7768 = vpop.f32.mrb[0].mxu0
    %v7769 = vadd.f32 0.0, %v7768
    %v7770 = vpop.f32.mrb[0].mxu0
    %7771 = vmatprep.mubr.bf16.mxu0 0
    %7772 = vmatmul.mubr.bf16.gmra.mrb[0].mxu0 %v3798
    %v7773 = vpop.f32.mrb[0].mxu0
    %v7774 = vadd.f32 0.0, %v7773
    %v7775 = vpop.f32.mrb[0].mxu0
    %v7776 = vpop.f32.mrb[0].mxu0
    %v7777 = vadd.f32 0.0, %v7776
    %v7778 = vpop.f32.mrb[0].mxu0
    %7779 = vmatprep.mubr.bf16.mxu0 0
    %7780 = vmatmul.mubr.bf16.gmra.mrb[0].mxu0 %v3801
    %v7781 = vpop.f32.mrb[0].mxu0
    %v7782 = vadd.f32 0.0, %v7781
    %v7783 = vpop.f32.mrb[0].mxu0
    %v7784 = vpop.f32.mrb[0].mxu0
    %v7785 = vadd.f32 0.0, %v7784
    %v7786 = vpop.f32.mrb[0].mxu0
    %7787 = vmatprep.mubr.bf16.mxu0 0
    %7788 = vmatmul.mubr.bf16.gmra.mrb[0].mxu0 %v7563
    %v7789 = vpop.f32.mrb[0].mxu0
    %v7790 = vadd.f32 0.0, %v7789
    %v7791 = vpop.f32.mrb[0].mxu0
    %v7792 = vpop.f32.mrb[0].mxu0
    %v7793 = vadd.f32 0.0, %v7792
    %v7794 = vpop.f32.mrb[0].mxu0
    %7795 = vmatprep.mubr.bf16.mxu0 0
    %7796 = vmatmul.mubr.bf16.gmra.mrb[0].mxu0 %v3807
    %v7797 = vpop.f32.mrb[0].mxu0
    %v7798 = vadd.f32 0.0, %v7797
    %v7799 = vpop.f32.mrb[0].mxu0
    %v7800 = vpop.f32.mrb[0].mxu0
    %v7801 = vadd.f32 0.0, %v7800
    %v7802 = vpop.f32.mrb[0].mxu0
    %7803 = vmatprep.mubr.bf16.mxu0 0
    %7804 = vmatmul.mubr.bf16.gmra.mrb[0].mxu0 %v3810
    %v7805 = vpop.f32.mrb[0].mxu0
    %v7806 = vadd.f32 0.0, %v7805
    %v7807 = vpop.f32.mrb[0].mxu0
    %v7808 = vpop.f32.mrb[0].mxu0
    %v7809 = vadd.f32 0.0, %v7808
    %v7810 = vpop.f32.mrb[0].mxu0
    %7811 = vmatprep.mubr.bf16.mxu0 0
    %7812 = vmatmul.mubr.bf16.gmra.mrb[0].mxu0 %v3813
    %v7813 = vpop.f32.mrb[0].mxu0
    %v7814 = vadd.f32 0.0, %v7813
    %v7815 = vpop.f32.mrb[0].mxu0
    %v7816 = vpop.f32.mrb[0].mxu0
    %v7817 = vadd.f32 0.0, %v7816
    %v7818 = vpop.f32.mrb[0].mxu0
    %7819 = vmatprep.mubr.bf16.mxu0 0
    %7820 = vmatmul.mubr.bf16.gmra.mrb[0].mxu0 %v7566
    %v7821 = vpop.f32.mrb[0].mxu0
    %v7822 = vadd.f32 0.0, %v7821
    %v7823 = vpop.f32.mrb[0].mxu0
    %v7824 = vpop.f32.mrb[0].mxu0
    %v7825 = vadd.f32 0.0, %v7824
    %v7826 = vpop.f32.mrb[0].mxu0
    %7827 = vmatprep.mubr.bf16.mxu0 0
    %7828 = vmatmul.mubr.bf16.gmra.mrb[0].mxu0 %v3819
    %v7829 = vpop.f32.mrb[0].mxu0
    %v7830 = vadd.f32 0.0, %v7829
    %v7831 = vpop.f32.mrb[0].mxu0
    %v7832 = vpop.f32.mrb[0].mxu0
    %v7833 = vadd.f32 0.0, %v7832
    %v7834 = vpop.f32.mrb[0].mxu0
    %7835 = vmatprep.mubr.bf16.mxu0 0
    %7836 = vmatmul.mubr.bf16.gmra.mrb[0].mxu0 %v3822
    %v7837 = vpop.f32.mrb[0].mxu0
    %v7838 = vadd.f32 0.0, %v7837
    %v7839 = vpop.f32.mrb[0].mxu0
    %v7840 = vpop.f32.mrb[0].mxu0
    %v7841 = vadd.f32 0.0, %v7840
    %v7842 = vpop.f32.mrb[0].mxu0
    %7843 = vmatprep.mubr.bf16.mxu0 0
    %7844 = vmatmul.mubr.bf16.gmra.mrb[0].mxu0 %v3825
    %v7845 = vpop.f32.mrb[0].mxu0
    %v7846 = vadd.f32 0.0, %v7845
    %v7847 = vpop.f32.mrb[0].mxu0
    %v7848 = vpop.f32.mrb[0].mxu0
    %v7849 = vadd.f32 0.0, %v7848
    %v7850 = vpop.f32.mrb[0].mxu0
    %7851 = vmatprep.mubr.bf16.mxu0 0
    %7852 = vmatmul.mubr.bf16.gmra.mrb[0].mxu0 %v7569
    %v7853 = vpop.f32.mrb[0].mxu0
    %v7854 = vadd.f32 0.0, %v7853
    %v7855 = vpop.f32.mrb[0].mxu0
    %v7856 = vpop.f32.mrb[0].mxu0
    %v7857 = vadd.f32 0.0, %v7856
    %v7858 = vpop.f32.mrb[0].mxu0
    %7859 = vdwg.mxu0
    %v7860 = vadd.f32 %v7458, %v7606
    %v7861 = vadd.f32 %v7459, %v7609
    %v7862 = vadd.f32 %v7460, %v7614
    %v7863 = vadd.f32 %v7461, %v7617
    %v7864 = vadd.f32 %v7462, %v7622
    %v7865 = vadd.f32 %v7463, %v7625
    %v7866 = vadd.f32 %v7464, %v7630
    %v7867 = vadd.f32 %v7465, %v7633
    %v7868 = vadd.f32 %v7466, %v7638
    %v7869 = vadd.f32 %v7467, %v7641
    %v7870 = vadd.f32 %v7468, %v7646
    %v7871 = vadd.f32 %v7469, %v7649
    %v7872 = vadd.f32 %v7470, %v7654
    %v7873 = vadd.f32 %v7471, %v7657
    %v7874 = vadd.f32 %v7472, %v7662
    %v7875 = vadd.f32 %v7473, %v7665
    %v7876 = vadd.f32 %v7474, %v7670
    %v7877 = vadd.f32 %v7475, %v7673
    %v7878 = vadd.f32 %v7476, %v7678
    %v7879 = vadd.f32 %v7477, %v7681
    %v7880 = vadd.f32 %v7478, %v7686
    %v7881 = vadd.f32 %v7479, %v7689
    %v7882 = vadd.f32 %v7480, %v7694
    %v7883 = vadd.f32 %v7481, %v7697
    %v7884 = vadd.f32 %v7482, %v7702
    %v7885 = vadd.f32 %v7483, %v7705
    %v7886 = vadd.f32 %v7484, %v7710
    %v7887 = vadd.f32 %v7485, %v7713
    %v7888 = vadd.f32 %v7486, %v7718
    %v7889 = vadd.f32 %v7487, %v7721
    %v7890 = vadd.f32 %v7488, %v7726
    %v7891 = vadd.f32 %v7489, %v7729
    %v7892 = vadd.f32 %v7490, %v7734
    %v7893 = vadd.f32 %v7491, %v7737
    %v7894 = vadd.f32 %v7492, %v7742
    %v7895 = vadd.f32 %v7493, %v7745
    %v7896 = vadd.f32 %v7494, %v7750
    %v7897 = vadd.f32 %v7495, %v7753
    %v7898 = vadd.f32 %v7496, %v7758
    %v7899 = vadd.f32 %v7497, %v7761
    %v7900 = vadd.f32 %v7498, %v7766
    %v7901 = vadd.f32 %v7499, %v7769
    %v7902 = vadd.f32 %v7500, %v7774
    %v7903 = vadd.f32 %v7501, %v7777
    %v7904 = vadd.f32 %v7502, %v7782
    %v7905 = vadd.f32 %v7503, %v7785
    %v7906 = vadd.f32 %v7504, %v7790
    %v7907 = vadd.f32 %v7505, %v7793
    %v7908 = vadd.f32 %v7506, %v7798
    %v7909 = vadd.f32 %v7507, %v7801
    %v7910 = vadd.f32 %v7508, %v7806
    %v7911 = vadd.f32 %v7509, %v7809
    %v7912 = vadd.f32 %v7510, %v7814
    %v7913 = vadd.f32 %v7511, %v7817
    %v7914 = vadd.f32 %v7512, %v7822
    %v7915 = vadd.f32 %v7513, %v7825
    %v7916 = vadd.f32 %v7514, %v7830
    %v7917 = vadd.f32 %v7515, %v7833
    %v7918 = vadd.f32 %v7516, %v7838
    %v7919 = vadd.f32 %v7517, %v7841
    %v7920 = vadd.f32 %v7518, %v7846
    %v7921 = vadd.f32 %v7519, %v7849
    %v7922 = vadd.f32 %v7520, %v7854
    %v7923 = vadd.f32 %v7521, %v7857
    %v7924 = vrot.slane %v7113, 1
    %v7925 = vor.u32 %v7110, %v7924
    %v7927 = vsel %vm4832, %v7925, 0
    %s7928 = scalar_lea.vmem %s3, 128
    %v7929 = vld [vmem:[%s7928] sm:$0xf]
    %v7930 = vld [vmem:[%s7928 + $0x4] sm:$0xf]
    %v7931 = vld [vmem:[%s7928 + $0x8] sm:$0xf]
    %v7932 = vld [vmem:[%s7928 + $0xc] sm:$0xf]
    %v7934 = vunpack.c.l.b16 %v7927
    %v7935 = vpack.c.b16 %v7934, %v6607
    %v7936 = vpack.c.b16 %v7934, %v6608
    %v7937 = vpack.c.b16 %v7934, %v6609
    %v7938 = vpack.c.b16 %v7934, %v6610
    %v7939 = vpack.c.b16 %v7934, %v6611
    %v7940 = vpack.c.b16 %v7934, %v6612
    %v7941 = vpack.c.b16 %v7934, %v6613
    %v7942 = vpack.c.b16 %v7934, %v6614
    %v7947 = vunpack.c.l.b16 %v7929
    %v7948 = vunpack.c.l.b16 %v7930
    %v7949 = vunpack.c.l.b16 %v7931
    %v7950 = vunpack.c.l.b16 %v7932
    %v7951 = vpack.c.b16 %v7948, %v7947
    %v7952 = vpack.c.b16 %v7950, %v7949
    %v7956 = vsel %vm2392, %v7935, 0
    %v7959 = vsel %vm2392, %v7936, 0
    %v7962 = vsel %vm2392, %v7937, 0
    %v7965 = vsel %vm2392, %v7938, 0
    %v7968 = vsel %vm2392, %v7939, 0
    %v7971 = vsel %vm2392, %v7940, 0
    %v7974 = vsel %vm2392, %v7941, 0
    %v7977 = vsel %vm2392, %v7942, 0
    %7979 = vmatprep.subr.bf16.mxu0 0
    %7980 = vmatpush1.bf16.msra.mxu0 %v7951
    %7981 = vmatprep.subr.bf16.mxu0 0
    %7982 = vmatpush1.bf16.msra.mxu0 %v7952
    %7983 = vmatprep.subr.bf16.mxu0 0
    %7984 = vmatpush1.bf16.msra.mxu0 0
    %7985 = vmatprep.subr.bf16.mxu0 0
    %7986 = vmatpush1.bf16.msra.mxu0 0
    %7987 = vmatprep.subr.bf16.mxu0 0
    %7988 = vmatpush1.bf16.msra.mxu0 0
    %7989 = vmatprep.subr.bf16.mxu0 0
    %7990 = vmatpush1.bf16.msra.mxu0 0
    %7991 = vmatprep.subr.bf16.mxu0 0
    %7992 = vmatpush1.bf16.msra.mxu0 0
    %7993 = vmatprep.subr.bf16.mxu0 0
    %7994 = vmatpush1.bf16.msra.mxu0 0
    %7995 = vmatprep.subr.bf16.mxu0 0
    %7996 = vmatpush1.bf16.msra.mxu0 0
    %7997 = vmatprep.subr.bf16.mxu0 0
    %7998 = vmatpush1.bf16.msra.mxu0 0
    %7999 = vmatprep.subr.bf16.mxu0 0
    %8000 = vmatpush1.bf16.msra.mxu0 0
    %8001 = vmatprep.subr.bf16.mxu0 0
    %8002 = vmatpush1.bf16.msra.mxu0 0
    %8003 = vmatprep.subr.bf16.mxu0 0
    %8004 = vmatpush1.bf16.msra.mxu0 0
    %8005 = vmatprep.subr.bf16.mxu0 0
    %8006 = vmatpush1.bf16.msra.mxu0 0
    %8007 = vmatprep.subr.bf16.mxu0 0
    %8008 = vmatpush1.bf16.msra.mxu0 0
    %8009 = vmatprep.subr.bf16.mxu0 0
    %8010 = vmatpush1.bf16.msra.mxu0 0
    %8011 = vmatprep.mubr.bf16.mxu0 0
    %8012 = vmatmul.mubr.bf16.gmra.mrb[0].mxu0 %v5057
    %v8013 = vpop.f32.mrb[0].mxu0
    %v8014 = vadd.f32 0.0, %v8013
    %v8015 = vpop.f32.mrb[0].mxu0
    %v8016 = vpop.f32.mrb[0].mxu0
    %v8017 = vadd.f32 0.0, %v8016
    %v8018 = vpop.f32.mrb[0].mxu0
    %8019 = vmatprep.mubr.bf16.mxu0 0
    %8020 = vmatmul.mubr.bf16.gmra.mrb[0].mxu0 %v5060
    %v8021 = vpop.f32.mrb[0].mxu0
    %v8022 = vadd.f32 0.0, %v8021
    %v8023 = vpop.f32.mrb[0].mxu0
    %v8024 = vpop.f32.mrb[0].mxu0
    %v8025 = vadd.f32 0.0, %v8024
    %v8026 = vpop.f32.mrb[0].mxu0
    %8027 = vmatprep.mubr.bf16.mxu0 0
    %8028 = vmatmul.mubr.bf16.gmra.mrb[0].mxu0 %v5063
    %v8029 = vpop.f32.mrb[0].mxu0
    %v8030 = vadd.f32 0.0, %v8029
    %v8031 = vpop.f32.mrb[0].mxu0
    %v8032 = vpop.f32.mrb[0].mxu0
    %v8033 = vadd.f32 0.0, %v8032
    %v8034 = vpop.f32.mrb[0].mxu0
    %8035 = vmatprep.mubr.bf16.mxu0 0
    %8036 = vmatmul.mubr.bf16.gmra.mrb[0].mxu0 %v7956
    %v8037 = vpop.f32.mrb[0].mxu0
    %v8038 = vadd.f32 0.0, %v8037
    %v8039 = vpop.f32.mrb[0].mxu0
    %v8040 = vpop.f32.mrb[0].mxu0
    %v8041 = vadd.f32 0.0, %v8040
    %v8042 = vpop.f32.mrb[0].mxu0
    %8043 = vmatprep.mubr.bf16.mxu0 0
    %8044 = vmatmul.mubr.bf16.gmra.mrb[0].mxu0 %v5069
    %v8045 = vpop.f32.mrb[0].mxu0
    %v8046 = vadd.f32 0.0, %v8045
    %v8047 = vpop.f32.mrb[0].mxu0
    %v8048 = vpop.f32.mrb[0].mxu0
    %v8049 = vadd.f32 0.0, %v8048
    %v8050 = vpop.f32.mrb[0].mxu0
    %8051 = vmatprep.mubr.bf16.mxu0 0
    %8052 = vmatmul.mubr.bf16.gmra.mrb[0].mxu0 %v5072
    %v8053 = vpop.f32.mrb[0].mxu0
    %v8054 = vadd.f32 0.0, %v8053
    %v8055 = vpop.f32.mrb[0].mxu0
    %v8056 = vpop.f32.mrb[0].mxu0
    %v8057 = vadd.f32 0.0, %v8056
    %v8058 = vpop.f32.mrb[0].mxu0
    %8059 = vmatprep.mubr.bf16.mxu0 0
    %8060 = vmatmul.mubr.bf16.gmra.mrb[0].mxu0 %v5075
    %v8061 = vpop.f32.mrb[0].mxu0
    %v8062 = vadd.f32 0.0, %v8061
    %v8063 = vpop.f32.mrb[0].mxu0
    %v8064 = vpop.f32.mrb[0].mxu0
    %v8065 = vadd.f32 0.0, %v8064
    %v8066 = vpop.f32.mrb[0].mxu0
    %8067 = vmatprep.mubr.bf16.mxu0 0
    %8068 = vmatmul.mubr.bf16.gmra.mrb[0].mxu0 %v7959
    %v8069 = vpop.f32.mrb[0].mxu0
    %v8070 = vadd.f32 0.0, %v8069
    %v8071 = vpop.f32.mrb[0].mxu0
    %v8072 = vpop.f32.mrb[0].mxu0
    %v8073 = vadd.f32 0.0, %v8072
    %v8074 = vpop.f32.mrb[0].mxu0
    %8075 = vmatprep.mubr.bf16.mxu0 0
    %8076 = vmatmul.mubr.bf16.gmra.mrb[0].mxu0 %v5081
    %v8077 = vpop.f32.mrb[0].mxu0
    %v8078 = vadd.f32 0.0, %v8077
    %v8079 = vpop.f32.mrb[0].mxu0
    %v8080 = vpop.f32.mrb[0].mxu0
    %v8081 = vadd.f32 0.0, %v8080
    %v8082 = vpop.f32.mrb[0].mxu0
    %8083 = vmatprep.mubr.bf16.mxu0 0
    %8084 = vmatmul.mubr.bf16.gmra.mrb[0].mxu0 %v5084
    %v8085 = vpop.f32.mrb[0].mxu0
    %v8086 = vadd.f32 0.0, %v8085
    %v8087 = vpop.f32.mrb[0].mxu0
    %v8088 = vpop.f32.mrb[0].mxu0
    %v8089 = vadd.f32 0.0, %v8088
    %v8090 = vpop.f32.mrb[0].mxu0
    %8091 = vmatprep.mubr.bf16.mxu0 0
    %8092 = vmatmul.mubr.bf16.gmra.mrb[0].mxu0 %v5087
    %v8093 = vpop.f32.mrb[0].mxu0
    %v8094 = vadd.f32 0.0, %v8093
    %v8095 = vpop.f32.mrb[0].mxu0
    %v8096 = vpop.f32.mrb[0].mxu0
    %v8097 = vadd.f32 0.0, %v8096
    %v8098 = vpop.f32.mrb[0].mxu0
    %8099 = vmatprep.mubr.bf16.mxu0 0
    %8100 = vmatmul.mubr.bf16.gmra.mrb[0].mxu0 %v7962
    %v8101 = vpop.f32.mrb[0].mxu0
    %v8102 = vadd.f32 0.0, %v8101
    %v8103 = vpop.f32.mrb[0].mxu0
    %v8104 = vpop.f32.mrb[0].mxu0
    %v8105 = vadd.f32 0.0, %v8104
    %v8106 = vpop.f32.mrb[0].mxu0
    %8107 = vmatprep.mubr.bf16.mxu0 0
    %8108 = vmatmul.mubr.bf16.gmra.mrb[0].mxu0 %v5093
    %v8109 = vpop.f32.mrb[0].mxu0
    %v8110 = vadd.f32 0.0, %v8109
    %v8111 = vpop.f32.mrb[0].mxu0
    %v8112 = vpop.f32.mrb[0].mxu0
    %v8113 = vadd.f32 0.0, %v8112
    %v8114 = vpop.f32.mrb[0].mxu0
    %8115 = vmatprep.mubr.bf16.mxu0 0
    %8116 = vmatmul.mubr.bf16.gmra.mrb[0].mxu0 %v5096
    %v8117 = vpop.f32.mrb[0].mxu0
    %v8118 = vadd.f32 0.0, %v8117
    %v8119 = vpop.f32.mrb[0].mxu0
    %v8120 = vpop.f32.mrb[0].mxu0
    %v8121 = vadd.f32 0.0, %v8120
    %v8122 = vpop.f32.mrb[0].mxu0
    %8123 = vmatprep.mubr.bf16.mxu0 0
    %8124 = vmatmul.mubr.bf16.gmra.mrb[0].mxu0 %v5099
    %v8125 = vpop.f32.mrb[0].mxu0
    %v8126 = vadd.f32 0.0, %v8125
    %v8127 = vpop.f32.mrb[0].mxu0
    %v8128 = vpop.f32.mrb[0].mxu0
    %v8129 = vadd.f32 0.0, %v8128
    %v8130 = vpop.f32.mrb[0].mxu0
    %8131 = vmatprep.mubr.bf16.mxu0 0
    %8132 = vmatmul.mubr.bf16.gmra.mrb[0].mxu0 %v7965
    %v8133 = vpop.f32.mrb[0].mxu0
    %v8134 = vadd.f32 0.0, %v8133
    %v8135 = vpop.f32.mrb[0].mxu0
    %v8136 = vpop.f32.mrb[0].mxu0
    %v8137 = vadd.f32 0.0, %v8136
    %v8138 = vpop.f32.mrb[0].mxu0
    %8139 = vmatprep.mubr.bf16.mxu0 0
    %8140 = vmatmul.mubr.bf16.gmra.mrb[0].mxu0 %v5105
    %v8141 = vpop.f32.mrb[0].mxu0
    %v8142 = vadd.f32 0.0, %v8141
    %v8143 = vpop.f32.mrb[0].mxu0
    %v8144 = vpop.f32.mrb[0].mxu0
    %v8145 = vadd.f32 0.0, %v8144
    %v8146 = vpop.f32.mrb[0].mxu0
    %8147 = vmatprep.mubr.bf16.mxu0 0
    %8148 = vmatmul.mubr.bf16.gmra.mrb[0].mxu0 %v5108
    %v8149 = vpop.f32.mrb[0].mxu0
    %v8150 = vadd.f32 0.0, %v8149
    %v8151 = vpop.f32.mrb[0].mxu0
    %v8152 = vpop.f32.mrb[0].mxu0
    %v8153 = vadd.f32 0.0, %v8152
    %v8154 = vpop.f32.mrb[0].mxu0
    %8155 = vmatprep.mubr.bf16.mxu0 0
    %8156 = vmatmul.mubr.bf16.gmra.mrb[0].mxu0 %v5111
    %v8157 = vpop.f32.mrb[0].mxu0
    %v8158 = vadd.f32 0.0, %v8157
    %v8159 = vpop.f32.mrb[0].mxu0
    %v8160 = vpop.f32.mrb[0].mxu0
    %v8161 = vadd.f32 0.0, %v8160
    %v8162 = vpop.f32.mrb[0].mxu0
    %8163 = vmatprep.mubr.bf16.mxu0 0
    %8164 = vmatmul.mubr.bf16.gmra.mrb[0].mxu0 %v7968
    %v8165 = vpop.f32.mrb[0].mxu0
    %v8166 = vadd.f32 0.0, %v8165
    %v8167 = vpop.f32.mrb[0].mxu0
    %v8168 = vpop.f32.mrb[0].mxu0
    %v8169 = vadd.f32 0.0, %v8168
    %v8170 = vpop.f32.mrb[0].mxu0
    %8171 = vmatprep.mubr.bf16.mxu0 0
    %8172 = vmatmul.mubr.bf16.gmra.mrb[0].mxu0 %v5117
    %v8173 = vpop.f32.mrb[0].mxu0
    %v8174 = vadd.f32 0.0, %v8173
    %v8175 = vpop.f32.mrb[0].mxu0
    %v8176 = vpop.f32.mrb[0].mxu0
    %v8177 = vadd.f32 0.0, %v8176
    %v8178 = vpop.f32.mrb[0].mxu0
    %8179 = vmatprep.mubr.bf16.mxu0 0
    %8180 = vmatmul.mubr.bf16.gmra.mrb[0].mxu0 %v5120
    %v8181 = vpop.f32.mrb[0].mxu0
    %v8182 = vadd.f32 0.0, %v8181
    %v8183 = vpop.f32.mrb[0].mxu0
    %v8184 = vpop.f32.mrb[0].mxu0
    %v8185 = vadd.f32 0.0, %v8184
    %v8186 = vpop.f32.mrb[0].mxu0
    %8187 = vmatprep.mubr.bf16.mxu0 0
    %8188 = vmatmul.mubr.bf16.gmra.mrb[0].mxu0 %v5123
    %v8189 = vpop.f32.mrb[0].mxu0
    %v8190 = vadd.f32 0.0, %v8189
    %v8191 = vpop.f32.mrb[0].mxu0
    %v8192 = vpop.f32.mrb[0].mxu0
    %v8193 = vadd.f32 0.0, %v8192
    %v8194 = vpop.f32.mrb[0].mxu0
    %8195 = vmatprep.mubr.bf16.mxu0 0
    %8196 = vmatmul.mubr.bf16.gmra.mrb[0].mxu0 %v7971
    %v8197 = vpop.f32.mrb[0].mxu0
    %v8198 = vadd.f32 0.0, %v8197
    %v8199 = vpop.f32.mrb[0].mxu0
    %v8200 = vpop.f32.mrb[0].mxu0
    %v8201 = vadd.f32 0.0, %v8200
    %v8202 = vpop.f32.mrb[0].mxu0
    %8203 = vmatprep.mubr.bf16.mxu0 0
    %8204 = vmatmul.mubr.bf16.gmra.mrb[0].mxu0 %v5129
    %v8205 = vpop.f32.mrb[0].mxu0
    %v8206 = vadd.f32 0.0, %v8205
    %v8207 = vpop.f32.mrb[0].mxu0
    %v8208 = vpop.f32.mrb[0].mxu0
    %v8209 = vadd.f32 0.0, %v8208
    %v8210 = vpop.f32.mrb[0].mxu0
    %8211 = vmatprep.mubr.bf16.mxu0 0
    %8212 = vmatmul.mubr.bf16.gmra.mrb[0].mxu0 %v5132
    %v8213 = vpop.f32.mrb[0].mxu0
    %v8214 = vadd.f32 0.0, %v8213
    %v8215 = vpop.f32.mrb[0].mxu0
    %v8216 = vpop.f32.mrb[0].mxu0
    %v8217 = vadd.f32 0.0, %v8216
    %v8218 = vpop.f32.mrb[0].mxu0
    %8219 = vmatprep.mubr.bf16.mxu0 0
    %8220 = vmatmul.mubr.bf16.gmra.mrb[0].mxu0 %v5135
    %v8221 = vpop.f32.mrb[0].mxu0
    %v8222 = vadd.f32 0.0, %v8221
    %v8223 = vpop.f32.mrb[0].mxu0
    %v8224 = vpop.f32.mrb[0].mxu0
    %v8225 = vadd.f32 0.0, %v8224
    %v8226 = vpop.f32.mrb[0].mxu0
    %8227 = vmatprep.mubr.bf16.mxu0 0
    %8228 = vmatmul.mubr.bf16.gmra.mrb[0].mxu0 %v7974
    %v8229 = vpop.f32.mrb[0].mxu0
    %v8230 = vadd.f32 0.0, %v8229
    %v8231 = vpop.f32.mrb[0].mxu0
    %v8232 = vpop.f32.mrb[0].mxu0
    %v8233 = vadd.f32 0.0, %v8232
    %v8234 = vpop.f32.mrb[0].mxu0
    %8235 = vmatprep.mubr.bf16.mxu0 0
    %8236 = vmatmul.mubr.bf16.gmra.mrb[0].mxu0 %v5141
    %v8237 = vpop.f32.mrb[0].mxu0
    %v8238 = vadd.f32 0.0, %v8237
    %v8239 = vpop.f32.mrb[0].mxu0
    %v8240 = vpop.f32.mrb[0].mxu0
    %v8241 = vadd.f32 0.0, %v8240
    %v8242 = vpop.f32.mrb[0].mxu0
    %8243 = vmatprep.mubr.bf16.mxu0 0
    %8244 = vmatmul.mubr.bf16.gmra.mrb[0].mxu0 %v5144
    %v8245 = vpop.f32.mrb[0].mxu0
    %v8246 = vadd.f32 0.0, %v8245
    %v8247 = vpop.f32.mrb[0].mxu0
    %v8248 = vpop.f32.mrb[0].mxu0
    %v8249 = vadd.f32 0.0, %v8248
    %v8250 = vpop.f32.mrb[0].mxu0
    %8251 = vmatprep.mubr.bf16.mxu0 0
    %8252 = vmatmul.mubr.bf16.gmra.mrb[0].mxu0 %v5147
    %v8253 = vpop.f32.mrb[0].mxu0
    %v8254 = vadd.f32 0.0, %v8253
    %v8255 = vpop.f32.mrb[0].mxu0
    %v8256 = vpop.f32.mrb[0].mxu0
    %v8257 = vadd.f32 0.0, %v8256
    %v8258 = vpop.f32.mrb[0].mxu0
    %8259 = vmatprep.mubr.bf16.mxu0 0
    %8260 = vmatmul.mubr.bf16.gmra.mrb[0].mxu0 %v7977
    %v8261 = vpop.f32.mrb[0].mxu0
    %v8262 = vadd.f32 0.0, %v8261
    %v8263 = vpop.f32.mrb[0].mxu0
    %v8264 = vpop.f32.mrb[0].mxu0
    %v8265 = vadd.f32 0.0, %v8264
    %v8266 = vpop.f32.mrb[0].mxu0
    %8267 = vdwg.mxu0
    %v8268 = vadd.f32 %v7860, %v8014
    %v8269 = vadd.f32 %v7861, %v8017
    %v8270 = vadd.f32 %v7862, %v8022
    %v8271 = vadd.f32 %v7863, %v8025
    %v8272 = vadd.f32 %v7864, %v8030
    %v8273 = vadd.f32 %v7865, %v8033
    %v8274 = vadd.f32 %v7866, %v8038
    %v8275 = vadd.f32 %v7867, %v8041
    %v8276 = vadd.f32 %v7868, %v8046
    %v8277 = vadd.f32 %v7869, %v8049
    %v8278 = vadd.f32 %v7870, %v8054
    %v8279 = vadd.f32 %v7871, %v8057
    %v8280 = vadd.f32 %v7872, %v8062
    %v8281 = vadd.f32 %v7873, %v8065
    %v8282 = vadd.f32 %v7874, %v8070
    %v8283 = vadd.f32 %v7875, %v8073
    %v8284 = vadd.f32 %v7876, %v8078
    %v8285 = vadd.f32 %v7877, %v8081
    %v8286 = vadd.f32 %v7878, %v8086
    %v8287 = vadd.f32 %v7879, %v8089
    %v8288 = vadd.f32 %v7880, %v8094
    %v8289 = vadd.f32 %v7881, %v8097
    %v8290 = vadd.f32 %v7882, %v8102
    %v8291 = vadd.f32 %v7883, %v8105
    %v8292 = vadd.f32 %v7884, %v8110
    %v8293 = vadd.f32 %v7885, %v8113
    %v8294 = vadd.f32 %v7886, %v8118
    %v8295 = vadd.f32 %v7887, %v8121
    %v8296 = vadd.f32 %v7888, %v8126
    %v8297 = vadd.f32 %v7889, %v8129
    %v8298 = vadd.f32 %v7890, %v8134
    %v8299 = vadd.f32 %v7891, %v8137
    %v8300 = vadd.f32 %v7892, %v8142
    %v8301 = vadd.f32 %v7893, %v8145
    %v8302 = vadd.f32 %v7894, %v8150
    %v8303 = vadd.f32 %v7895, %v8153
    %v8304 = vadd.f32 %v7896, %v8158
    %v8305 = vadd.f32 %v7897, %v8161
    %v8306 = vadd.f32 %v7898, %v8166
    %v8307 = vadd.f32 %v7899, %v8169
    %v8308 = vadd.f32 %v7900, %v8174
    %v8309 = vadd.f32 %v7901, %v8177
    %v8310 = vadd.f32 %v7902, %v8182
    %v8311 = vadd.f32 %v7903, %v8185
    %v8312 = vadd.f32 %v7904, %v8190
    %v8313 = vadd.f32 %v7905, %v8193
    %v8314 = vadd.f32 %v7906, %v8198
    %v8315 = vadd.f32 %v7907, %v8201
    %v8316 = vadd.f32 %v7908, %v8206
    %v8317 = vadd.f32 %v7909, %v8209
    %v8318 = vadd.f32 %v7910, %v8214
    %v8319 = vadd.f32 %v7911, %v8217
    %v8320 = vadd.f32 %v7912, %v8222
    %v8321 = vadd.f32 %v7913, %v8225
    %v8322 = vadd.f32 %v7914, %v8230
    %v8323 = vadd.f32 %v7915, %v8233
    %v8324 = vadd.f32 %v7916, %v8238
    %v8325 = vadd.f32 %v7917, %v8241
    %v8326 = vadd.f32 %v7918, %v8246
    %v8327 = vadd.f32 %v7919, %v8249
    %v8328 = vadd.f32 %v7920, %v8254
    %v8329 = vadd.f32 %v7921, %v8257
    %v8330 = vadd.f32 %v7922, %v8262
    %v8331 = vadd.f32 %v7923, %v8265
    %v8332 = vsel %vm950, %v8268, -inf
    %v8333 = vsel %vm950, %v8269, -inf
    %v8334 = vmax.f32 %v8332, %v8333
    %v8335 = vsel %vm950, %v8270, -inf
    %v8336 = vmax.f32 %v8334, %v8335
    %v8337 = vsel %vm950, %v8271, -inf
    %v8338 = vmax.f32 %v8336, %v8337
    %v8339 = vsel %vm950, %v8272, -inf
    %v8340 = vmax.f32 %v8338, %v8339
    %v8341 = vsel %vm950, %v8273, -inf
    %v8342 = vmax.f32 %v8340, %v8341
    %v8343 = vsel %vm950, %v8274, -inf
    %v8344 = vmax.f32 %v8342, %v8343
    %v8345 = vsel %vm950, %v8275, -inf
    %v8346 = vmax.f32 %v8344, %v8345
    %v8347 = vrot.slane %v8346, 4
    %v8348 = vmax.f32 %v8346, %v8347
    %v8349 = vrot.slane %v8348, 2
    %v8350 = vmax.f32 %v8348, %v8349
    %v8351 = vrot.slane %v8350, 1
    %v8352 = vmax.f32 %v8350, %v8351
    %v8353 = vsel %vm950, %v8276, -inf
    %v8354 = vsel %vm950, %v8277, -inf
    %v8355 = vmax.f32 %v8353, %v8354
    %v8356 = vsel %vm950, %v8278, -inf
    %v8357 = vmax.f32 %v8355, %v8356
    %v8358 = vsel %vm950, %v8279, -inf
    %v8359 = vmax.f32 %v8357, %v8358
    %v8360 = vsel %vm950, %v8280, -inf
    %v8361 = vmax.f32 %v8359, %v8360
    %v8362 = vsel %vm950, %v8281, -inf
    %v8363 = vmax.f32 %v8361, %v8362
    %v8364 = vsel %vm950, %v8282, -inf
    %v8365 = vmax.f32 %v8363, %v8364
    %v8366 = vsel %vm950, %v8283, -inf
    %v8367 = vmax.f32 %v8365, %v8366
    %v8368 = vrot.slane %v8367, 4
    %v8369 = vmax.f32 %v8367, %v8368
    %v8370 = vrot.slane %v8369, 2
    %v8371 = vmax.f32 %v8369, %v8370
    %v8372 = vrot.slane %v8371, 1
    %v8373 = vmax.f32 %v8371, %v8372
    %v8374 = vsel %vm950, %v8284, -inf
    %v8375 = vsel %vm950, %v8285, -inf
    %v8376 = vmax.f32 %v8374, %v8375
    %v8377 = vsel %vm950, %v8286, -inf
    %v8378 = vmax.f32 %v8376, %v8377
    %v8379 = vsel %vm950, %v8287, -inf
    %v8380 = vmax.f32 %v8378, %v8379
    %v8381 = vsel %vm950, %v8288, -inf
    %v8382 = vmax.f32 %v8380, %v8381
    %v8383 = vsel %vm950, %v8289, -inf
    %v8384 = vmax.f32 %v8382, %v8383
    %v8385 = vsel %vm950, %v8290, -inf
    %v8386 = vmax.f32 %v8384, %v8385
    %v8387 = vsel %vm950, %v8291, -inf
    %v8388 = vmax.f32 %v8386, %v8387
    %v8389 = vrot.slane %v8388, 4
    %v8390 = vmax.f32 %v8388, %v8389
    %v8391 = vrot.slane %v8390, 2
    %v8392 = vmax.f32 %v8390, %v8391
    %v8393 = vrot.slane %v8392, 1
    %v8394 = vmax.f32 %v8392, %v8393
    %v8395 = vsel %vm950, %v8292, -inf
    %v8396 = vsel %vm950, %v8293, -inf
    %v8397 = vmax.f32 %v8395, %v8396
    %v8398 = vsel %vm950, %v8294, -inf
    %v8399 = vmax.f32 %v8397, %v8398
    %v8400 = vsel %vm950, %v8295, -inf
    %v8401 = vmax.f32 %v8399, %v8400
    %v8402 = vsel %vm950, %v8296, -inf
    %v8403 = vmax.f32 %v8401, %v8402
    %v8404 = vsel %vm950, %v8297, -inf
    %v8405 = vmax.f32 %v8403, %v8404
    %v8406 = vsel %vm950, %v8298, -inf
    %v8407 = vmax.f32 %v8405, %v8406
    %v8408 = vsel %vm950, %v8299, -inf
    %v8409 = vmax.f32 %v8407, %v8408
    %v8410 = vrot.slane %v8409, 4
    %v8411 = vmax.f32 %v8409, %v8410
    %v8412 = vrot.slane %v8411, 2
    %v8413 = vmax.f32 %v8411, %v8412
    %v8414 = vrot.slane %v8413, 1
    %v8415 = vmax.f32 %v8413, %v8414
    %v8416 = vsel %vm950, %v8300, -inf
    %v8417 = vsel %vm950, %v8301, -inf
    %v8418 = vmax.f32 %v8416, %v8417
    %v8419 = vsel %vm950, %v8302, -inf
    %v8420 = vmax.f32 %v8418, %v8419
    %v8421 = vsel %vm950, %v8303, -inf
    %v8422 = vmax.f32 %v8420, %v8421
    %v8423 = vsel %vm950, %v8304, -inf
    %v8424 = vmax.f32 %v8422, %v8423
    %v8425 = vsel %vm950, %v8305, -inf
    %v8426 = vmax.f32 %v8424, %v8425
    %v8427 = vsel %vm950, %v8306, -inf
    %v8428 = vmax.f32 %v8426, %v8427
    %v8429 = vsel %vm950, %v8307, -inf
    %v8430 = vmax.f32 %v8428, %v8429
    %v8431 = vrot.slane %v8430, 4
    %v8432 = vmax.f32 %v8430, %v8431
    %v8433 = vrot.slane %v8432, 2
    %v8434 = vmax.f32 %v8432, %v8433
    %v8435 = vrot.slane %v8434, 1
    %v8436 = vmax.f32 %v8434, %v8435
    %v8437 = vsel %vm950, %v8308, -inf
    %v8438 = vsel %vm950, %v8309, -inf
    %v8439 = vmax.f32 %v8437, %v8438
    %v8440 = vsel %vm950, %v8310, -inf
    %v8441 = vmax.f32 %v8439, %v8440
    %v8442 = vsel %vm950, %v8311, -inf
    %v8443 = vmax.f32 %v8441, %v8442
    %v8444 = vsel %vm950, %v8312, -inf
    %v8445 = vmax.f32 %v8443, %v8444
    %v8446 = vsel %vm950, %v8313, -inf
    %v8447 = vmax.f32 %v8445, %v8446
    %v8448 = vsel %vm950, %v8314, -inf
    %v8449 = vmax.f32 %v8447, %v8448
    %v8450 = vsel %vm950, %v8315, -inf
    %v8451 = vmax.f32 %v8449, %v8450
    %v8452 = vrot.slane %v8451, 4
    %v8453 = vmax.f32 %v8451, %v8452
    %v8454 = vrot.slane %v8453, 2
    %v8455 = vmax.f32 %v8453, %v8454
    %v8456 = vrot.slane %v8455, 1
    %v8457 = vmax.f32 %v8455, %v8456
    %v8458 = vsel %vm950, %v8316, -inf
    %v8459 = vsel %vm950, %v8317, -inf
    %v8460 = vmax.f32 %v8458, %v8459
    %v8461 = vsel %vm950, %v8318, -inf
    %v8462 = vmax.f32 %v8460, %v8461
    %v8463 = vsel %vm950, %v8319, -inf
    %v8464 = vmax.f32 %v8462, %v8463
    %v8465 = vsel %vm950, %v8320, -inf
    %v8466 = vmax.f32 %v8464, %v8465
    %v8467 = vsel %vm950, %v8321, -inf
    %v8468 = vmax.f32 %v8466, %v8467
    %v8469 = vsel %vm950, %v8322, -inf
    %v8470 = vmax.f32 %v8468, %v8469
    %v8471 = vsel %vm950, %v8323, -inf
    %v8472 = vmax.f32 %v8470, %v8471
    %v8473 = vrot.slane %v8472, 4
    %v8474 = vmax.f32 %v8472, %v8473
    %v8475 = vrot.slane %v8474, 2
    %v8476 = vmax.f32 %v8474, %v8475
    %v8477 = vrot.slane %v8476, 1
    %v8478 = vmax.f32 %v8476, %v8477
    %v8479 = vsel %vm950, %v8324, -inf
    %v8480 = vsel %vm950, %v8325, -inf
    %v8481 = vmax.f32 %v8479, %v8480
    %v8482 = vsel %vm950, %v8326, -inf
    %v8483 = vmax.f32 %v8481, %v8482
    %v8484 = vsel %vm950, %v8327, -inf
    %v8485 = vmax.f32 %v8483, %v8484
    %v8486 = vsel %vm950, %v8328, -inf
    %v8487 = vmax.f32 %v8485, %v8486
    %v8488 = vsel %vm950, %v8329, -inf
    %v8489 = vmax.f32 %v8487, %v8488
    %v8490 = vsel %vm950, %v8330, -inf
    %v8491 = vmax.f32 %v8489, %v8490
    %v8492 = vsel %vm950, %v8331, -inf
    %v8493 = vmax.f32 %v8491, %v8492
    %v8494 = vrot.slane %v8493, 4
    %v8495 = vmax.f32 %v8493, %v8494
    %v8496 = vrot.slane %v8495, 2
    %v8497 = vmax.f32 %v8495, %v8496
    %v8498 = vrot.slane %v8497, 1
    %v8499 = vmax.f32 %v8497, %v8498
    %v8500 = vld [vmem:[%s4] sm:$0x1]
    %v8502 = vlaneseq
    %v8503 = vshrl.u32 %v8502, 7
    %v8504 = vsub.s32 0, %v8503
    %v8505 = vrot.slane %v8500, %v8504
    %v8507 = vadd.f32 %v8352, %v8505
    %v8508 = vadd.f32 %v8373, %v8505
    %v8509 = vadd.f32 %v8394, %v8505
    %v8510 = vadd.f32 %v8415, %v8505
    %v8511 = vadd.f32 %v8436, %v8505
    %v8512 = vadd.f32 %v8457, %v8505
    %v8513 = vadd.f32 %v8478, %v8505
    %v8514 = vadd.f32 %v8499, %v8505
    %v8515 = vmax.f32 %v8507, 0.0
    %v8516 = vmax.f32 %v8508, 0.0
    %v8517 = vmax.f32 %v8509, 0.0
    %v8518 = vmax.f32 %v8510, 0.0
    %v8519 = vmax.f32 %v8511, 0.0
    %v8520 = vmax.f32 %v8512, 0.0
    %v8521 = vmax.f32 %v8513, 0.0
    %v8522 = vmax.f32 %v8514, 0.0
    %v8531 = vrot.slane %v8516, 7
    %vm8532 = vcmask 1041409
    %v8533 = vsel %vm8532, %v8531, %v8515
    %v8534 = vrot.slane %v8517, 6
    %vm8535 = vcmask 1042434
    %v8536 = vsel %vm8535, %v8534, %v8533
    %v8537 = vrot.slane %v8518, 5
    %vm8538 = vcmask 1043459
    %v8539 = vsel %vm8538, %v8537, %v8536
    %v8540 = vrot.slane %v8519, 4
    %vm8541 = vcmask 1044484
    %v8542 = vsel %vm8541, %v8540, %v8539
    %v8543 = vrot.slane %v8520, 3
    %vm8544 = vcmask 1045509
    %v8545 = vsel %vm8544, %v8543, %v8542
    %v8546 = vrot.slane %v8521, 2
    %vm8547 = vcmask 1046534
    %v8548 = vsel %vm8547, %v8546, %v8545
    %v8549 = vrot.slane %v8522, 1
    %vm8550 = vcmask 1047559
    %v8551 = vsel %vm8550, %v8549, %v8548
    %8553 = vst.msk [vmem:[#allocation2] sm:$0xff] %vm950, %v8551
    // Predicated region
    $region22: #{tpu_custom_call.1} parent=1 // pred_check
      _
    $region23: #{tpu_custom_call.1} parent=1 // pred_check_branch
      %8555 = sbr.rel (0) target = $region25
    $region24: #{tpu_custom_call.1} parent=1 // pred_region
      %s8557 = ssub.s32 128, 128
      %8558 = vsyncadd [#allocation3], %s8557
      %s8560 = sshll.u32 [#allocation2], 4
      %s8561 = int_to_ptr.vmem [resolvable:$true] %s8560
      %8563 = dma.vmem_to_hbm [thread:$0]  %s8561, 128, %s5, [#allocation3]
    $region25: #{tpu_custom_call.1} parent=1 // pred_fallthru
      _
    // Predicated region
    $region26: #{tpu_custom_call.1} parent=1 // pred_check
      _
    $region27: #{tpu_custom_call.1} parent=1 // pred_check_branch
      %8565 = sbr.rel (0) target = $region29
    $region28: #{tpu_custom_call.1} parent=1 // pred_region
      %8566 = dma.done [#allocation3], 128
    $region29: #{tpu_custom_call.1} parent=1 // pred_fallthru
      _
    %8567 = vsyncpa [#allocation3], 1

</llo_original>
